<compile_context>
chip_gen: v5e
topology: v5e:2x2
jax: 0.10.0
libtpu: 0.0.40
codegen_flags: <defaults>
</compile_context>

<pallas_src>
import functools
import math

import jax
import jax.numpy as jnp
from jax.experimental import pallas as pl
from jax.experimental.pallas import tpu as pltpu

# ---------------- configuration (mirrors TaskModel.__init__) ----------------
S = 3              # utterances per speaker (first is the "target")
B = 64             # batch of speakers (raised per perf review -> 128 diffusion rows)
D_AUDIO = 256      # raw feature dim fed to the backbone
E = 128            # backbone.nOut == embedding_size == time_embed_dim == context_channels
MODEL_CH = 2 * E   # model_channels == bottleneck_channels
NUM_RES_BLOCKS = 2
NUM_TIMESTEPS = 1000

_SUBLANE = 8


def _round_up(x, m):
    return (x + m - 1) // m * m


NB_PAD = _round_up(S * B, _SUBLANE)       # padded backbone rows for the eval path
N_VALID = (S - 1) * B                     # real (target, paired) rows
N_PAD = _round_up(N_VALID, _SUBLANE)      # padded diffusion rows


def _choose_row_tile(n_pad):
    # largest multiple of 8 that divides n_pad and is <= 128 (full MXU row streaming)
    best, t = _SUBLANE, _SUBLANE
    while t <= min(n_pad, 128):
        if n_pad % t == 0:
            best = t
        t += _SUBLANE
    return best


TILE_M = _choose_row_tile(N_PAD)
NUM_TILES = N_PAD // TILE_M

# ----- stacked-weight layout: one (N_WSLICES, 256, 256) bf16 tensor holds every matmul -----
IW_BB = 0                                  # backbone (D_AUDIO, E), lanes >= E zero
IW_IN = 1                                  # input proj (E, MODEL_CH), rows >= E zero


def IW_TC(l):   # merged [time | context] conditioning weight, (2E, MODEL_CH)
    return 2 + 3 * l


def IW_H1(l):
    return 3 + 3 * l


def IW_H2(l):
    return 4 + 3 * l


IW_OUT = 2 + 3 * NUM_RES_BLOCKS            # output proj (MODEL_CH, E), lanes >= E zero
N_WSLICES = IW_OUT + 1                     # 9 slices of 256x256 bf16 (~1.1 MB total)

# ----- stacked-bias layout: one (8, 256) f32 tensor holds every 1-row bias -----
IB_BB = 0
IB_IN = 1


def IB_H1(l):
    return 2 + 2 * l


def IB_H2(l):
    return 3 + 2 * l


IB_OUT = 2 + 2 * NUM_RES_BLOCKS
N_BROWS = _round_up(IB_OUT + 1, _SUBLANE)  # 8


# ------------------------------ fused training kernel ------------------------------
def _fused_task_kernel(dstack_ref, aux_ref, w_ref, b_ref, out_ref):
    f32, bf16 = jnp.float32, jnp.bfloat16

    bb_w = w_ref[IW_BB]                         # (D_AUDIO, MODEL_CH); lanes >= E are zero
    bb_b = b_ref[IB_BB:IB_BB + 1, :E]           # (1, E)

    # 1) frozen backbone on the paired utterances and on the row-expanded target
    #    utterances of this row tile.
    # TODO(synk): real speakernet backbone (external conv/TDNN torch module) approximated
    # by a single frozen linear projection.
    x_start = jnp.dot(dstack_ref[0], bb_w, preferred_element_type=f32)[:, :E] + bb_b
    x_target = jnp.dot(dstack_ref[1], bb_w, preferred_element_type=f32)[:, :E] + bb_b

    # 2) q-sample: x_t = sqrt(ab_t) * x_target + sqrt(1 - ab_t) * eps
    #    (coefficients derived in-kernel from the single ab_t lane of the aux slab)
    noise = aux_ref[:, 0:E]                     # (TILE_M, E) f32
    temb = aux_ref[:, E:2 * E]                  # (TILE_M, E) f32
    ab = aux_ref[:, 2 * E:2 * E + 1]            # (TILE_M, 1) f32
    x_noisy = jnp.sqrt(ab) * x_target + jnp.sqrt(1.0 - ab) * noise

    # 3) RDMMLP.  Input projection (K zero-padded so w_in lives inside the 256x256 stack).
    x_in = jnp.concatenate(
        [x_noisy.astype(bf16), jnp.zeros((TILE_M, E), bf16)], axis=-1)
    h = (jnp.dot(x_in, w_ref[IW_IN], preferred_element_type=f32)
         + b_ref[IB_IN:IB_IN + 1, :])

    # merged conditioning operand: one K = 2E dot per block instead of two K = E dots
    tc = jnp.concatenate([temb, x_start], axis=-1).astype(bf16)   # (TILE_M, 2E)
    for l in range(NUM_RES_BLOCKS):
        cond = jnp.dot(tc, w_ref[IW_TC(l)], preferred_element_type=f32)
        hh = jax.nn.silu(h + cond)
        hh = jax.nn.silu(
            jnp.dot(hh.astype(bf16), w_ref[IW_H1(l)], preferred_element_type=f32)
            + b_ref[IB_H1(l):IB_H1(l) + 1, :])
        hh = (jnp.dot(hh.astype(bf16), w_ref[IW_H2(l)], preferred_element_type=f32)
              + b_ref[IB_H2(l):IB_H2(l) + 1, :])
        h = h + hh

    # 4) output projection (predicted noise) + masked squared error for this row tile.
    pred = (jnp.dot(h.astype(bf16), w_ref[IW_OUT], preferred_element_type=f32)[:, :E]
            + b_ref[IB_OUT:IB_OUT + 1, :E])
    row = (jax.lax.broadcasted_iota(jnp.int32, (TILE_M, E), 0)
           + pl.program_id(0) * TILE_M)
    diff = jnp.where(row < N_VALID, pred - noise, 0.0)
    # lane-dense, full-tile (8, 128) store of the per-lane partial sums (no masked vst)
    out_ref[...] = jnp.broadcast_to(jnp.sum(diff * diff, axis=0, keepdims=True), (8, E))


def fused_forward(dstack, aux, params):
    return pl.pallas_call(
        _fused_task_kernel,
        out_shape=jax.ShapeDtypeStruct((NUM_TILES * 8, E), jnp.float32),
        grid=(NUM_TILES,),
        in_specs=[
            pl.BlockSpec((2, TILE_M, D_AUDIO), lambda i: (0, i, 0)),
            pl.BlockSpec((TILE_M, 3 * E), lambda i: (i, 0)),
            pl.BlockSpec((N_WSLICES, MODEL_CH, MODEL_CH), lambda i: (0, 0, 0)),
            pl.BlockSpec((N_BROWS, MODEL_CH), lambda i: (0, 0)),
        ],
        out_specs=pl.BlockSpec((8, E), lambda i: (i, 0)),
        compiler_params=pltpu.CompilerParams(dimension_semantics=("parallel",)),
    )(dstack, aux, params["w_stack"], params["biases"])


# --------------------- backbone-only kernel (eval path) ---------------------
def _backbone_kernel(x_ref, w_ref, b_ref, o_ref):
    o_ref[...] = (
        jnp.dot(x_ref[...], w_ref[0], preferred_element_type=jnp.float32)[:, :E]
        + b_ref[IB_BB:IB_BB + 1, :E])


def backbone_forward(data_bf16, params):
    return pl.pallas_call(
        _backbone_kernel,
        out_shape=jax.ShapeDtypeStruct((NB_PAD, E), jnp.float32),
        grid=(1,),
        in_specs=[
            pl.BlockSpec((NB_PAD, D_AUDIO), lambda i: (0, 0)),
            pl.BlockSpec((1, MODEL_CH, MODEL_CH), lambda i: (IW_BB, 0, 0)),
            pl.BlockSpec((N_BROWS, MODEL_CH), lambda i: (0, 0)),
        ],
        out_specs=pl.BlockSpec((NB_PAD, E), lambda i: (0, 0)),
        compiler_params=pltpu.CompilerParams(dimension_semantics=("arbitrary",)),
    )(data_bf16, params["w_stack"], params["biases"])


# --------------------------------- glue ---------------------------------
def _sinusoidal_timestep_embedding(t, dim):
    half = dim // 2
    freqs = jnp.exp(-math.log(10000.0) * jnp.arange(half, dtype=jnp.float32) / half)
    args = t.astype(jnp.float32)[:, None] * freqs[None, :]
    return jnp.concatenate([jnp.cos(args), jnp.sin(args)], axis=-1)


def _pad_rows(x, rows):
    pad = rows - x.shape[0]
    if pad <= 0:
        return x
    return jnp.concatenate([x, jnp.zeros((pad,) + x.shape[1:], x.dtype)], axis=0)


def init_params(key):
    ks = jax.random.split(key, 16)
    scale = 0.02
    f32 = jnp.float32

    def w(k, shape):
        return scale * jax.random.normal(k, shape, f32)

    w_stack = jnp.zeros((N_WSLICES, MODEL_CH, MODEL_CH), f32)
    w_stack = w_stack.at[IW_BB, :, :E].set(w(ks[0], (D_AUDIO, E)))
    w_stack = w_stack.at[IW_IN, :E, :].set(w(ks[1], (E, MODEL_CH)))
    for l in range(NUM_RES_BLOCKS):
        w_stack = w_stack.at[IW_TC(l)].set(w(ks[2 + 3 * l], (2 * E, MODEL_CH)))
        w_stack = w_stack.at[IW_H1(l)].set(w(ks[3 + 3 * l], (MODEL_CH, MODEL_CH)))
        w_stack = w_stack.at[IW_H2(l)].set(w(ks[4 + 3 * l], (MODEL_CH, MODEL_CH)))
    w_stack = w_stack.at[IW_OUT, :, :E].set(w(ks[2 + 3 * NUM_RES_BLOCKS], (MODEL_CH, E)))

    biases = jnp.zeros((N_BROWS, MODEL_CH), f32)
    biases = biases.at[IB_BB, :E].set(w(ks[15], (E,)))

    return {"w_stack": w_stack.astype(jnp.bfloat16), "biases": biases}


@functools.partial(jax.jit, static_argnames=("eval",))
def task_model_forward(data, params, key, eval=False):
    # data: (S, B, D_AUDIO)
    s, b, d = data.shape

    if eval:
        flat = _pad_rows(data.reshape(-1, d), NB_PAD).astype(jnp.bfloat16)
        spk = backbone_forward(flat, params)
        return {"speaker_embedding": spk[: s * b]}

    # pair layout (same ordering as the reference): pair row r = utterance (1 + r//B, r%B),
    # target row r = utterance (0, r%B).  Targets are expanded wrapper-side so the kernel
    # needs no sublane shuffles and every MXU dot runs at full tile height.
    flat = data.reshape(s * b, d)
    pair = _pad_rows(flat[b:], N_PAD)
    tgt = jnp.broadcast_to(flat[:b][None, :, :], (s - 1, b, d)).reshape((s - 1) * b, d)
    tgt = _pad_rows(tgt, N_PAD)
    dstack = jnp.stack([pair, tgt], axis=0).astype(jnp.bfloat16)      # (2, N_PAD, D) bf16

    # diffusion schedule (constant-folded under jit) + per-call randomness (tiny glue)
    betas = jnp.linspace(1e-4, 0.02, NUM_TIMESTEPS, dtype=jnp.float32)
    alphas_cumprod = jnp.cumprod(1.0 - betas)
    k_t, k_eps = jax.random.split(key)
    t = jax.random.randint(k_t, (N_PAD,), 0, NUM_TIMESTEPS)
    noise = jax.random.normal(k_eps, (N_PAD, E), jnp.float32)
    ab_t = alphas_cumprod[t]
    temb = _sinusoidal_timestep_embedding(t, E)                       # (N_PAD, E)
    # single aux slab: [ noise | temb | ab_t | zero padding ]  -> one DMA
    aux = jnp.concatenate(
        [noise, temb, ab_t[:, None], jnp.zeros((N_PAD, E - 1), jnp.float32)], axis=-1)

    part = fused_forward(dstack, aux, params)                         # (NUM_TILES*8, E)
    # rows 0, 8, 16, ... hold each tile's per-lane partial sums (repeated 8x for a
    # full-tile store); reduce tiles + lanes here and normalize.
    loss = jnp.sum(part[::8, :]) / (N_VALID * E)
    return {"diffusion_loss": loss}


if __name__ == "__main__":
    root = jax.random.PRNGKey(0)
    k_data, k_params, k_diff = jax.random.split(root, 3)

    data = jax.random.normal(k_data, (S, B, D_AUDIO), jnp.float32)
    params = init_params(k_params)

    # training path (diffusion loss)
    out = task_model_forward(data, params, k_diff)
    loss = jax.block_until_ready(out["diffusion_loss"])
    assert jnp.isfinite(loss), "diffusion loss is not finite"

    # eval path (speaker embeddings only)
    emb = task_model_forward(data, params, k_diff, eval=True)["speaker_embedding"]
    jax.block_until_ready(emb)
    assert emb.shape == (S * B, E)

    print("KERNEL_OK")
</pallas_src>

<mosaic_0001>
module attributes {stable_mosaic.version = 11 : i64} {
  func.func @_fused_task_kernel(%arg0: i32, %arg1: memref<2x128x256xbf16, #tpu.memory_space<vmem>>, %arg2: memref<128x384xf32, #tpu.memory_space<vmem>>, %arg3: memref<9x256x256xbf16, #tpu.memory_space<vmem>>, %arg4: memref<8x256xf32, #tpu.memory_space<vmem>>, %arg5: memref<8x128xf32, #tpu.memory_space<vmem>>) attributes {dimension_semantics = [#tpu.dimension_semantics<parallel>], iteration_bounds = array<i64: 1>, scalar_prefetch = 0 : i64, scratch_operands = 0 : i64, tpu.core_type = #tpu.core_type<tc>, window_params = [{transform_indices = @transform_0, window_bounds = array<i64: 2, 128, 256>}, {transform_indices = @transform_1, window_bounds = array<i64: 128, 384>}, {pipeline_mode = #tpu.pipeline_mode<synchronous>, transform_indices = @transform_2, window_bounds = array<i64: 9, 256, 256>}, {pipeline_mode = #tpu.pipeline_mode<synchronous>, transform_indices = @transform_3, window_bounds = array<i64: 8, 256>}, {transform_indices = @transform_4, window_bounds = array<i64: 8, 128>}]} {
    %c0 = arith.constant 0 : index
    %c0_0 = arith.constant 0 : index
    %c0_1 = arith.constant 0 : index
    %0 = vector.load %arg3[%c0, %c0_0, %c0_1] : memref<9x256x256xbf16, #tpu.memory_space<vmem>>, vector<1x256x256xbf16>
    %1 = vector.shape_cast %0 : vector<1x256x256xbf16> to vector<256x256xbf16>
    %c0_2 = arith.constant 0 : index
    %c0_3 = arith.constant 0 : index
    %2 = vector.load %arg4[%c0_2, %c0_3] : memref<8x256xf32, #tpu.memory_space<vmem>>, vector<1x128xf32>
    %c0_4 = arith.constant 0 : index
    %c0_5 = arith.constant 0 : index
    %c0_6 = arith.constant 0 : index
    %3 = vector.load %arg1[%c0_4, %c0_5, %c0_6] : memref<2x128x256xbf16, #tpu.memory_space<vmem>>, vector<1x128x256xbf16>
    %4 = vector.shape_cast %3 : vector<1x128x256xbf16> to vector<128x256xbf16>
    %cst = arith.constant dense<0.000000e+00> : vector<128x256xf32>
    %5 = tpu.matmul %4, %1, %cst {dimension_numbers = #tpu.dot_dimension_numbers<[1], [0], [0], [1], [0, 0, 1, 1], [], []>} : vector<128x256xbf16>, vector<256x256xbf16>, vector<128x256xf32> -> vector<128x256xf32>
    %6 = vector.extract_strided_slice %5 {offsets = [0, 0], sizes = [128, 128], strides = [1, 1]} : vector<128x256xf32> to vector<128x128xf32>
    %7 = vector.broadcast %2 : vector<1x128xf32> to vector<128x128xf32>
    %8 = arith.addf %6, %7 : vector<128x128xf32>
    %c1 = arith.constant 1 : index
    %c0_7 = arith.constant 0 : index
    %c0_8 = arith.constant 0 : index
    %9 = vector.load %arg1[%c1, %c0_7, %c0_8] : memref<2x128x256xbf16, #tpu.memory_space<vmem>>, vector<1x128x256xbf16>
    %10 = vector.shape_cast %9 : vector<1x128x256xbf16> to vector<128x256xbf16>
    %cst_9 = arith.constant dense<0.000000e+00> : vector<128x256xf32>
    %11 = tpu.matmul %10, %1, %cst_9 {dimension_numbers = #tpu.dot_dimension_numbers<[1], [0], [0], [1], [0, 0, 1, 1], [], []>} : vector<128x256xbf16>, vector<256x256xbf16>, vector<128x256xf32> -> vector<128x256xf32>
    %12 = vector.extract_strided_slice %11 {offsets = [0, 0], sizes = [128, 128], strides = [1, 1]} : vector<128x256xf32> to vector<128x128xf32>
    %13 = vector.broadcast %2 : vector<1x128xf32> to vector<128x128xf32>
    %14 = arith.addf %12, %13 : vector<128x128xf32>
    %c0_10 = arith.constant 0 : index
    %c0_11 = arith.constant 0 : index
    %15 = vector.load %arg2[%c0_10, %c0_11] : memref<128x384xf32, #tpu.memory_space<vmem>>, vector<128x128xf32>
    %c0_12 = arith.constant 0 : index
    %c128 = arith.constant 128 : index
    %16 = vector.load %arg2[%c0_12, %c128] : memref<128x384xf32, #tpu.memory_space<vmem>>, vector<128x128xf32>
    %c0_13 = arith.constant 0 : index
    %c256 = arith.constant 256 : index
    %17 = vector.load %arg2[%c0_13, %c256] : memref<128x384xf32, #tpu.memory_space<vmem>>, vector<128x1xf32>
    %18 = math.sqrt %17 : vector<128x1xf32>
    %19 = vector.broadcast %18 : vector<128x1xf32> to vector<128x128xf32>
    %20 = arith.mulf %19, %14 : vector<128x128xf32>
    %cst_14 = arith.constant 1.000000e+00 : f32
    %21 = vector.broadcast %cst_14 : f32 to vector<128x1xf32>
    %22 = arith.subf %21, %17 : vector<128x1xf32>
    %23 = math.sqrt %22 : vector<128x1xf32>
    %24 = vector.broadcast %23 : vector<128x1xf32> to vector<128x128xf32>
    %25 = arith.mulf %24, %15 : vector<128x128xf32>
    %26 = arith.addf %20, %25 : vector<128x128xf32>
    %27 = arith.truncf %26 : vector<128x128xf32> to vector<128x128xbf16>
    %cst_15 = arith.constant 0.000000e+00 : bf16
    %28 = vector.broadcast %cst_15 : bf16 to vector<128x128xbf16>
    %29 = tpu.concatenate %27, %28 in 1 : vector<128x128xbf16>, vector<128x128xbf16> -> vector<128x256xbf16>
    %c1_16 = arith.constant 1 : index
    %c0_17 = arith.constant 0 : index
    %c0_18 = arith.constant 0 : index
    %30 = vector.load %arg3[%c1_16, %c0_17, %c0_18] : memref<9x256x256xbf16, #tpu.memory_space<vmem>>, vector<1x256x256xbf16>
    %31 = vector.shape_cast %30 : vector<1x256x256xbf16> to vector<256x256xbf16>
    %cst_19 = arith.constant dense<0.000000e+00> : vector<128x256xf32>
    %32 = tpu.matmul %29, %31, %cst_19 {dimension_numbers = #tpu.dot_dimension_numbers<[1], [0], [0], [1], [0, 0, 1, 1], [], []>} : vector<128x256xbf16>, vector<256x256xbf16>, vector<128x256xf32> -> vector<128x256xf32>
    %c1_20 = arith.constant 1 : index
    %c0_21 = arith.constant 0 : index
    %33 = vector.load %arg4[%c1_20, %c0_21] : memref<8x256xf32, #tpu.memory_space<vmem>>, vector<1x256xf32>
    %34 = vector.broadcast %33 : vector<1x256xf32> to vector<128x256xf32>
    %35 = arith.addf %32, %34 : vector<128x256xf32>
    %36 = tpu.concatenate %16, %8 in 1 : vector<128x128xf32>, vector<128x128xf32> -> vector<128x256xf32>
    %37 = arith.truncf %36 : vector<128x256xf32> to vector<128x256xbf16>
    %c2 = arith.constant 2 : index
    %c0_22 = arith.constant 0 : index
    %c0_23 = arith.constant 0 : index
    %38 = vector.load %arg3[%c2, %c0_22, %c0_23] : memref<9x256x256xbf16, #tpu.memory_space<vmem>>, vector<1x256x256xbf16>
    %39 = vector.shape_cast %38 : vector<1x256x256xbf16> to vector<256x256xbf16>
    %cst_24 = arith.constant dense<0.000000e+00> : vector<128x256xf32>
    %40 = tpu.matmul %37, %39, %cst_24 {dimension_numbers = #tpu.dot_dimension_numbers<[1], [0], [0], [1], [0, 0, 1, 1], [], []>} : vector<128x256xbf16>, vector<256x256xbf16>, vector<128x256xf32> -> vector<128x256xf32>
    %41 = arith.addf %35, %40 : vector<128x256xf32>
    %42 = arith.negf %41 : vector<128x256xf32>
    %43 = math.exp %42 : vector<128x256xf32>
    %cst_25 = arith.constant 1.000000e+00 : f32
    %44 = vector.broadcast %cst_25 : f32 to vector<128x256xf32>
    %45 = arith.addf %44, %43 : vector<128x256xf32>
    %46 = arith.divf %44, %45 : vector<128x256xf32>
    %47 = arith.mulf %41, %46 : vector<128x256xf32>
    %48 = arith.truncf %47 : vector<128x256xf32> to vector<128x256xbf16>
    %c3 = arith.constant 3 : index
    %c0_26 = arith.constant 0 : index
    %c0_27 = arith.constant 0 : index
    %49 = vector.load %arg3[%c3, %c0_26, %c0_27] : memref<9x256x256xbf16, #tpu.memory_space<vmem>>, vector<1x256x256xbf16>
    %50 = vector.shape_cast %49 : vector<1x256x256xbf16> to vector<256x256xbf16>
    %cst_28 = arith.constant dense<0.000000e+00> : vector<128x256xf32>
    %51 = tpu.matmul %48, %50, %cst_28 {dimension_numbers = #tpu.dot_dimension_numbers<[1], [0], [0], [1], [0, 0, 1, 1], [], []>} : vector<128x256xbf16>, vector<256x256xbf16>, vector<128x256xf32> -> vector<128x256xf32>
    %c2_29 = arith.constant 2 : index
    %c0_30 = arith.constant 0 : index
    %52 = vector.load %arg4[%c2_29, %c0_30] : memref<8x256xf32, #tpu.memory_space<vmem>>, vector<1x256xf32>
    %53 = vector.broadcast %52 : vector<1x256xf32> to vector<128x256xf32>
    %54 = arith.addf %51, %53 : vector<128x256xf32>
    %55 = arith.negf %54 : vector<128x256xf32>
    %56 = math.exp %55 : vector<128x256xf32>
    %cst_31 = arith.constant 1.000000e+00 : f32
    %57 = vector.broadcast %cst_31 : f32 to vector<128x256xf32>
    %58 = arith.addf %57, %56 : vector<128x256xf32>
    %59 = arith.divf %57, %58 : vector<128x256xf32>
    %60 = arith.mulf %54, %59 : vector<128x256xf32>
    %61 = arith.truncf %60 : vector<128x256xf32> to vector<128x256xbf16>
    %c4 = arith.constant 4 : index
    %c0_32 = arith.constant 0 : index
    %c0_33 = arith.constant 0 : index
    %62 = vector.load %arg3[%c4, %c0_32, %c0_33] : memref<9x256x256xbf16, #tpu.memory_space<vmem>>, vector<1x256x256xbf16>
    %63 = vector.shape_cast %62 : vector<1x256x256xbf16> to vector<256x256xbf16>
    %cst_34 = arith.constant dense<0.000000e+00> : vector<128x256xf32>
    %64 = tpu.matmul %61, %63, %cst_34 {dimension_numbers = #tpu.dot_dimension_numbers<[1], [0], [0], [1], [0, 0, 1, 1], [], []>} : vector<128x256xbf16>, vector<256x256xbf16>, vector<128x256xf32> -> vector<128x256xf32>
    %c3_35 = arith.constant 3 : index
    %c0_36 = arith.constant 0 : index
    %65 = vector.load %arg4[%c3_35, %c0_36] : memref<8x256xf32, #tpu.memory_space<vmem>>, vector<1x256xf32>
    %66 = vector.broadcast %65 : vector<1x256xf32> to vector<128x256xf32>
    %67 = arith.addf %64, %66 : vector<128x256xf32>
    %68 = arith.addf %35, %67 : vector<128x256xf32>
    %c5 = arith.constant 5 : index
    %c0_37 = arith.constant 0 : index
    %c0_38 = arith.constant 0 : index
    %69 = vector.load %arg3[%c5, %c0_37, %c0_38] : memref<9x256x256xbf16, #tpu.memory_space<vmem>>, vector<1x256x256xbf16>
    %70 = vector.shape_cast %69 : vector<1x256x256xbf16> to vector<256x256xbf16>
    %cst_39 = arith.constant dense<0.000000e+00> : vector<128x256xf32>
    %71 = tpu.matmul %37, %70, %cst_39 {dimension_numbers = #tpu.dot_dimension_numbers<[1], [0], [0], [1], [0, 0, 1, 1], [], []>} : vector<128x256xbf16>, vector<256x256xbf16>, vector<128x256xf32> -> vector<128x256xf32>
    %72 = arith.addf %68, %71 : vector<128x256xf32>
    %73 = arith.negf %72 : vector<128x256xf32>
    %74 = math.exp %73 : vector<128x256xf32>
    %cst_40 = arith.constant 1.000000e+00 : f32
    %75 = vector.broadcast %cst_40 : f32 to vector<128x256xf32>
    %76 = arith.addf %75, %74 : vector<128x256xf32>
    %77 = arith.divf %75, %76 : vector<128x256xf32>
    %78 = arith.mulf %72, %77 : vector<128x256xf32>
    %79 = arith.truncf %78 : vector<128x256xf32> to vector<128x256xbf16>
    %c6 = arith.constant 6 : index
    %c0_41 = arith.constant 0 : index
    %c0_42 = arith.constant 0 : index
    %80 = vector.load %arg3[%c6, %c0_41, %c0_42] : memref<9x256x256xbf16, #tpu.memory_space<vmem>>, vector<1x256x256xbf16>
    %81 = vector.shape_cast %80 : vector<1x256x256xbf16> to vector<256x256xbf16>
    %cst_43 = arith.constant dense<0.000000e+00> : vector<128x256xf32>
    %82 = tpu.matmul %79, %81, %cst_43 {dimension_numbers = #tpu.dot_dimension_numbers<[1], [0], [0], [1], [0, 0, 1, 1], [], []>} : vector<128x256xbf16>, vector<256x256xbf16>, vector<128x256xf32> -> vector<128x256xf32>
    %c4_44 = arith.constant 4 : index
    %c0_45 = arith.constant 0 : index
    %83 = vector.load %arg4[%c4_44, %c0_45] : memref<8x256xf32, #tpu.memory_space<vmem>>, vector<1x256xf32>
    %84 = vector.broadcast %83 : vector<1x256xf32> to vector<128x256xf32>
    %85 = arith.addf %82, %84 : vector<128x256xf32>
    %86 = arith.negf %85 : vector<128x256xf32>
    %87 = math.exp %86 : vector<128x256xf32>
    %cst_46 = arith.constant 1.000000e+00 : f32
    %88 = vector.broadcast %cst_46 : f32 to vector<128x256xf32>
    %89 = arith.addf %88, %87 : vector<128x256xf32>
    %90 = arith.divf %88, %89 : vector<128x256xf32>
    %91 = arith.mulf %85, %90 : vector<128x256xf32>
    %92 = arith.truncf %91 : vector<128x256xf32> to vector<128x256xbf16>
    %c7 = arith.constant 7 : index
    %c0_47 = arith.constant 0 : index
    %c0_48 = arith.constant 0 : index
    %93 = vector.load %arg3[%c7, %c0_47, %c0_48] : memref<9x256x256xbf16, #tpu.memory_space<vmem>>, vector<1x256x256xbf16>
    %94 = vector.shape_cast %93 : vector<1x256x256xbf16> to vector<256x256xbf16>
    %cst_49 = arith.constant dense<0.000000e+00> : vector<128x256xf32>
    %95 = tpu.matmul %92, %94, %cst_49 {dimension_numbers = #tpu.dot_dimension_numbers<[1], [0], [0], [1], [0, 0, 1, 1], [], []>} : vector<128x256xbf16>, vector<256x256xbf16>, vector<128x256xf32> -> vector<128x256xf32>
    %c5_50 = arith.constant 5 : index
    %c0_51 = arith.constant 0 : index
    %96 = vector.load %arg4[%c5_50, %c0_51] : memref<8x256xf32, #tpu.memory_space<vmem>>, vector<1x256xf32>
    %97 = vector.broadcast %96 : vector<1x256xf32> to vector<128x256xf32>
    %98 = arith.addf %95, %97 : vector<128x256xf32>
    %99 = arith.addf %68, %98 : vector<128x256xf32>
    %100 = arith.truncf %99 : vector<128x256xf32> to vector<128x256xbf16>
    %c8 = arith.constant 8 : index
    %c0_52 = arith.constant 0 : index
    %c0_53 = arith.constant 0 : index
    %101 = vector.load %arg3[%c8, %c0_52, %c0_53] : memref<9x256x256xbf16, #tpu.memory_space<vmem>>, vector<1x256x256xbf16>
    %102 = vector.shape_cast %101 : vector<1x256x256xbf16> to vector<256x256xbf16>
    %cst_54 = arith.constant dense<0.000000e+00> : vector<128x256xf32>
    %103 = tpu.matmul %100, %102, %cst_54 {dimension_numbers = #tpu.dot_dimension_numbers<[1], [0], [0], [1], [0, 0, 1, 1], [], []>} : vector<128x256xbf16>, vector<256x256xbf16>, vector<128x256xf32> -> vector<128x256xf32>
    %104 = vector.extract_strided_slice %103 {offsets = [0, 0], sizes = [128, 128], strides = [1, 1]} : vector<128x256xf32> to vector<128x128xf32>
    %c6_55 = arith.constant 6 : index
    %c0_56 = arith.constant 0 : index
    %105 = vector.load %arg4[%c6_55, %c0_56] : memref<8x256xf32, #tpu.memory_space<vmem>>, vector<1x128xf32>
    %106 = vector.broadcast %105 : vector<1x128xf32> to vector<128x128xf32>
    %107 = arith.addf %104, %106 : vector<128x128xf32>
    %108 = tpu.iota {dimensions = array<i32: 0>} : vector<128x128xi32>
    %c128_i32 = arith.constant 128 : i32
    %109 = arith.muli %arg0, %c128_i32 : i32
    %110 = vector.broadcast %109 : i32 to vector<128x128xi32>
    %111 = arith.addi %108, %110 : vector<128x128xi32>
    %c128_i32_57 = arith.constant 128 : i32
    %112 = vector.broadcast %c128_i32_57 : i32 to vector<128x128xi32>
    %113 = arith.cmpi slt, %111, %112 : vector<128x128xi32>
    %114 = arith.subf %107, %15 : vector<128x128xf32>
    %cst_58 = arith.constant 0.000000e+00 : f32
    %115 = vector.broadcast %cst_58 : f32 to vector<128x128xf32>
    %116 = arith.select %113, %114, %115 : vector<128x128xi1>, vector<128x128xf32>
    %117 = arith.mulf %116, %116 : vector<128x128xf32>
    %cst_59 = arith.constant dense<0.000000e+00> : vector<128xf32>
    %118 = vector.multi_reduction <add>, %117, %cst_59 [0] : vector<128x128xf32> to vector<128xf32>
    %119 = vector.shape_cast %118 : vector<128xf32> to vector<1x128xf32>
    %120 = vector.shape_cast %119 : vector<1x128xf32> to vector<1x128xf32>
    %121 = vector.broadcast %120 : vector<1x128xf32> to vector<8x128xf32>
    %c0_60 = arith.constant 0 : index
    %c0_61 = arith.constant 0 : index
    %122 = vector.load %arg5[%c0_60, %c0_61] : memref<8x128xf32, #tpu.memory_space<vmem>>, vector<8x128xf32>
    tpu.vector_store %arg5[%c0_60, %c0_61], %121 {strides = array<i32>} : memref<8x128xf32, #tpu.memory_space<vmem>>, vector<8x128xf32>,
    return
  }
  func.func @transform_0(%arg0: i32) -> (i32, i32, i32) {
    %c0_i32 = arith.constant 0 : i32
    %c0_i32_0 = arith.constant 0 : i32
    %c0_i32_1 = arith.constant 0 : i32
    return %c0_i32, %arg0, %c0_i32_0 : i32, i32, i32
  }
  func.func @transform_1(%arg0: i32) -> (i32, i32) {
    %c0_i32 = arith.constant 0 : i32
    %c0_i32_0 = arith.constant 0 : i32
    return %arg0, %c0_i32 : i32, i32
  }
  func.func @transform_2(%arg0: i32) -> (i32, i32, i32) {
    %c0_i32 = arith.constant 0 : i32
    %c0_i32_0 = arith.constant 0 : i32
    %c0_i32_1 = arith.constant 0 : i32
    %c0_i32_2 = arith.constant 0 : i32
    return %c0_i32, %c0_i32_0, %c0_i32_1 : i32, i32, i32
  }
  func.func @transform_3(%arg0: i32) -> (i32, i32) {
    %c0_i32 = arith.constant 0 : i32
    %c0_i32_0 = arith.constant 0 : i32
    %c0_i32_1 = arith.constant 0 : i32
    return %c0_i32, %c0_i32_0 : i32, i32
  }
  func.func @transform_4(%arg0: i32) -> (i32, i32) {
    %c0_i32 = arith.constant 0 : i32
    %c0_i32_0 = arith.constant 0 : i32
    return %arg0, %c0_i32 : i32, i32
  }
}

</mosaic_0001>

<llo_original>
// kernel: task_model_forward.1
$region0: #{task_model_forward.1}
  #allocation0 [shape = 'u32[]', space=smem, size = 0x4, offset = 0x4, fixed_abs, tag = 'smem constant byte address 0x4 - core index']
  #allocation1 [shape = 'u32[72,128]{1,0:T(1,128)}', space=vmem, size = 0x9000, scoped, tag = 'internal scratch']
  %s0 = inlined_call_operand.vmem [shape: bf16[2,128,256], index: 0, kind: input, shape index: {}]
  %s1 = inlined_call_operand.vmem [shape: f32[128,384], index: 1, kind: input, shape index: {}]
  %s2 = inlined_call_operand.vmem [shape: bf16[9,256,256], index: 2, kind: input, shape index: {}]
  %s3 = inlined_call_operand.vmem [shape: f32[8,256], index: 3, kind: input, shape index: {}]
  %s4 = inlined_call_operand.vmem [shape: f32[8,128], index: 4, kind: output, shape index: {}]
  %s5 = sld [smem:[#allocation0]]
  $region26: #{task_model_forward.1} parent=0
    _
  %s7 = ssub.s32 1, %s5
  %s8 = scalar_select 0, %s7, %s5
  // Predicated region
  $region2: #{task_model_forward.1} parent=0 // pred_check
    _
  $region3: #{task_model_forward.1} parent=0 // pred_check_branch
    %10 = sbr.rel (0) target = $region5
  $region4: #{task_model_forward.1} parent=0 // pred_region
    _
  $region5: #{task_model_forward.1} parent=0 // pred_fallthru
    _
  // Predicated region
  $region6: #{task_model_forward.1} parent=0 // pred_check
    _
  $region7: #{task_model_forward.1} parent=0 // pred_check_branch
    %12 = sbr.rel (0) target = $region9
  $region8: #{task_model_forward.1} parent=0 // pred_region
    _
  $region9: #{task_model_forward.1} parent=0 // pred_fallthru
    _
  // Predicated region
  $region10: #{task_model_forward.1} parent=0 // pred_check
    _
  $region11: #{task_model_forward.1} parent=0 // pred_check_branch
    %14 = sbr.rel (0) target = $region13
  $region12: #{task_model_forward.1} parent=0 // pred_region
    _
  $region13: #{task_model_forward.1} parent=0 // pred_fallthru
    _
  // Predicated region
  $region14: #{task_model_forward.1} parent=0 // pred_check
    _
  $region15: #{task_model_forward.1} parent=0 // pred_check_branch
    %16 = sbr.rel (0) target = $region17
  $region16: #{task_model_forward.1} parent=0 // pred_region
    _
  $region17: #{task_model_forward.1} parent=0 // pred_fallthru
    _
  %v18 = vld [vmem:[%s2] sm:$0xff]
  %v19 = vld [vmem:[%s2 + $0x8] sm:$0xff]
  %v20 = vld [vmem:[%s2 + $0x10] sm:$0xff]
  %v21 = vld [vmem:[%s2 + $0x18] sm:$0xff]
  %v22 = vld [vmem:[%s2 + $0x20] sm:$0xff]
  %v23 = vld [vmem:[%s2 + $0x28] sm:$0xff]
  %v24 = vld [vmem:[%s2 + $0x30] sm:$0xff]
  %v25 = vld [vmem:[%s2 + $0x38] sm:$0xff]
  %v26 = vld [vmem:[%s2 + $0x40] sm:$0xff]
  %v27 = vld [vmem:[%s2 + $0x48] sm:$0xff]
  %v28 = vld [vmem:[%s2 + $0x50] sm:$0xff]
  %v29 = vld [vmem:[%s2 + $0x58] sm:$0xff]
  %v30 = vld [vmem:[%s2 + $0x60] sm:$0xff]
  %v31 = vld [vmem:[%s2 + $0x68] sm:$0xff]
  %v32 = vld [vmem:[%s2 + $0x70] sm:$0xff]
  %v33 = vld [vmem:[%s2 + $0x78] sm:$0xff]
  %v34 = vld [vmem:[%s2 + $0x80] sm:$0xff]
  %v35 = vld [vmem:[%s2 + $0x88] sm:$0xff]
  %v36 = vld [vmem:[%s2 + $0x90] sm:$0xff]
  %v37 = vld [vmem:[%s2 + $0x98] sm:$0xff]
  %v38 = vld [vmem:[%s2 + $0xa0] sm:$0xff]
  %v39 = vld [vmem:[%s2 + $0xa8] sm:$0xff]
  %v40 = vld [vmem:[%s2 + $0xb0] sm:$0xff]
  %v41 = vld [vmem:[%s2 + $0xb8] sm:$0xff]
  %v42 = vld [vmem:[%s2 + $0xc0] sm:$0xff]
  %v43 = vld [vmem:[%s2 + $0xc8] sm:$0xff]
  %v44 = vld [vmem:[%s2 + $0xd0] sm:$0xff]
  %v45 = vld [vmem:[%s2 + $0xd8] sm:$0xff]
  %v46 = vld [vmem:[%s2 + $0xe0] sm:$0xff]
  %v47 = vld [vmem:[%s2 + $0xe8] sm:$0xff]
  %v48 = vld [vmem:[%s2 + $0xf0] sm:$0xff]
  %v49 = vld [vmem:[%s2 + $0xf8] sm:$0xff]
  %v50 = vld [vmem:[%s3] ss:$0 sm:$0xff]
  %v51 = vld [vmem:[%s0] sm:$0xff]
  %v52 = vld [vmem:[%s0 + $0x8] sm:$0xff]
  %v53 = vld [vmem:[%s0 + $0x10] sm:$0xff]
  %v54 = vld [vmem:[%s0 + $0x18] sm:$0xff]
  %v55 = vld [vmem:[%s0 + $0x20] sm:$0xff]
  %v56 = vld [vmem:[%s0 + $0x28] sm:$0xff]
  %v57 = vld [vmem:[%s0 + $0x30] sm:$0xff]
  %v58 = vld [vmem:[%s0 + $0x38] sm:$0xff]
  %v59 = vld [vmem:[%s0 + $0x40] sm:$0xff]
  %v60 = vld [vmem:[%s0 + $0x48] sm:$0xff]
  %v61 = vld [vmem:[%s0 + $0x50] sm:$0xff]
  %v62 = vld [vmem:[%s0 + $0x58] sm:$0xff]
  %v63 = vld [vmem:[%s0 + $0x60] sm:$0xff]
  %v64 = vld [vmem:[%s0 + $0x68] sm:$0xff]
  %v65 = vld [vmem:[%s0 + $0x70] sm:$0xff]
  %v66 = vld [vmem:[%s0 + $0x78] sm:$0xff]
  %v83 = vunpack.c.l.b16 %v51
  %v84 = vunpack.c.h.b16 %v51
  %v85 = vunpack.c.l.b16 %v52
  %v86 = vunpack.c.h.b16 %v52
  %v87 = vunpack.c.l.b16 %v53
  %v88 = vunpack.c.h.b16 %v53
  %v89 = vunpack.c.l.b16 %v54
  %v90 = vunpack.c.h.b16 %v54
  %v91 = vunpack.c.l.b16 %v55
  %v92 = vunpack.c.h.b16 %v55
  %v93 = vunpack.c.l.b16 %v56
  %v94 = vunpack.c.h.b16 %v56
  %v95 = vunpack.c.l.b16 %v57
  %v96 = vunpack.c.h.b16 %v57
  %v97 = vunpack.c.l.b16 %v58
  %v98 = vunpack.c.h.b16 %v58
  %v99 = vunpack.c.l.b16 %v59
  %v100 = vunpack.c.h.b16 %v59
  %v101 = vunpack.c.l.b16 %v60
  %v102 = vunpack.c.h.b16 %v60
  %v103 = vunpack.c.l.b16 %v61
  %v104 = vunpack.c.h.b16 %v61
  %v105 = vunpack.c.l.b16 %v62
  %v106 = vunpack.c.h.b16 %v62
  %v107 = vunpack.c.l.b16 %v63
  %v108 = vunpack.c.h.b16 %v63
  %v109 = vunpack.c.l.b16 %v64
  %v110 = vunpack.c.h.b16 %v64
  %v111 = vunpack.c.l.b16 %v65
  %v112 = vunpack.c.h.b16 %v65
  %v113 = vunpack.c.l.b16 %v66
  %v114 = vunpack.c.h.b16 %v66
  %v115 = vpack.c.b16 %v85, %v83
  %v116 = vpack.c.b16 %v86, %v84
  %v117 = vpack.c.b16 %v89, %v87
  %v118 = vpack.c.b16 %v90, %v88
  %v119 = vpack.c.b16 %v93, %v91
  %v120 = vpack.c.b16 %v94, %v92
  %v121 = vpack.c.b16 %v97, %v95
  %v122 = vpack.c.b16 %v98, %v96
  %v123 = vpack.c.b16 %v101, %v99
  %v124 = vpack.c.b16 %v102, %v100
  %v125 = vpack.c.b16 %v105, %v103
  %v126 = vpack.c.b16 %v106, %v104
  %v127 = vpack.c.b16 %v109, %v107
  %v128 = vpack.c.b16 %v110, %v108
  %v129 = vpack.c.b16 %v113, %v111
  %v130 = vpack.c.b16 %v114, %v112
  %v179 = vunpack.c.l.b16 %v18
  %v180 = vunpack.c.l.b16 %v19
  %v181 = vunpack.c.l.b16 %v20
  %v182 = vunpack.c.l.b16 %v21
  %v183 = vunpack.c.l.b16 %v22
  %v184 = vunpack.c.l.b16 %v23
  %v185 = vunpack.c.l.b16 %v24
  %v186 = vunpack.c.l.b16 %v25
  %v187 = vunpack.c.l.b16 %v26
  %v188 = vunpack.c.l.b16 %v27
  %v189 = vunpack.c.l.b16 %v28
  %v190 = vunpack.c.l.b16 %v29
  %v191 = vunpack.c.l.b16 %v30
  %v192 = vunpack.c.l.b16 %v31
  %v193 = vunpack.c.l.b16 %v32
  %v194 = vunpack.c.l.b16 %v33
  %v195 = vunpack.c.l.b16 %v34
  %v196 = vunpack.c.l.b16 %v35
  %v197 = vunpack.c.l.b16 %v36
  %v198 = vunpack.c.l.b16 %v37
  %v199 = vunpack.c.l.b16 %v38
  %v200 = vunpack.c.l.b16 %v39
  %v201 = vunpack.c.l.b16 %v40
  %v202 = vunpack.c.l.b16 %v41
  %v203 = vunpack.c.l.b16 %v42
  %v204 = vunpack.c.l.b16 %v43
  %v205 = vunpack.c.l.b16 %v44
  %v206 = vunpack.c.l.b16 %v45
  %v207 = vunpack.c.l.b16 %v46
  %v208 = vunpack.c.l.b16 %v47
  %v209 = vunpack.c.l.b16 %v48
  %v210 = vunpack.c.l.b16 %v49
  %v211 = vpack.c.b16 %v180, %v179
  %v212 = vpack.c.b16 %v182, %v181
  %v213 = vpack.c.b16 %v184, %v183
  %v214 = vpack.c.b16 %v186, %v185
  %v215 = vpack.c.b16 %v188, %v187
  %v216 = vpack.c.b16 %v190, %v189
  %v217 = vpack.c.b16 %v192, %v191
  %v218 = vpack.c.b16 %v194, %v193
  %v219 = vpack.c.b16 %v196, %v195
  %v220 = vpack.c.b16 %v198, %v197
  %v221 = vpack.c.b16 %v200, %v199
  %v222 = vpack.c.b16 %v202, %v201
  %v223 = vpack.c.b16 %v204, %v203
  %v224 = vpack.c.b16 %v206, %v205
  %v225 = vpack.c.b16 %v208, %v207
  %v226 = vpack.c.b16 %v210, %v209
  %243 = vmatpush.bf16.msra.mxu0 %v218
  %244 = vmatpush.bf16.msra.mxu0 %v217
  %245 = vmatpush.bf16.msra.mxu0 %v216
  %246 = vmatpush.bf16.msra.mxu0 %v215
  %247 = vmatpush.bf16.msra.mxu0 %v214
  %248 = vmatpush.bf16.msra.mxu0 %v213
  %249 = vmatpush.bf16.msra.mxu0 %v212
  %250 = vmatpush.bf16.msra.mxu0 %v211
  %251 = vmatmul.bf16.gmra.mxu0 %v115
  %v252 = vpop.f32.mrf.mxu0
  %v253 = vadd.f32 0.0, %v252
  %v254 = vpop.f32.mrf.mxu0
  %v255 = vadd.f32 0.0, %v254
  %256 = vmatmul.bf16.gmra.mxu0 %v117
  %v257 = vpop.f32.mrf.mxu0
  %v258 = vadd.f32 0.0, %v257
  %v259 = vpop.f32.mrf.mxu0
  %v260 = vadd.f32 0.0, %v259
  %261 = vmatmul.bf16.gmra.mxu0 %v119
  %v262 = vpop.f32.mrf.mxu0
  %v263 = vadd.f32 0.0, %v262
  %v264 = vpop.f32.mrf.mxu0
  %v265 = vadd.f32 0.0, %v264
  %266 = vmatmul.bf16.gmra.mxu0 %v121
  %v267 = vpop.f32.mrf.mxu0
  %v268 = vadd.f32 0.0, %v267
  %v269 = vpop.f32.mrf.mxu0
  %v270 = vadd.f32 0.0, %v269
  %271 = vmatmul.bf16.gmra.mxu0 %v123
  %v272 = vpop.f32.mrf.mxu0
  %v273 = vadd.f32 0.0, %v272
  %v274 = vpop.f32.mrf.mxu0
  %v275 = vadd.f32 0.0, %v274
  %276 = vmatmul.bf16.gmra.mxu0 %v125
  %v277 = vpop.f32.mrf.mxu0
  %v278 = vadd.f32 0.0, %v277
  %v279 = vpop.f32.mrf.mxu0
  %v280 = vadd.f32 0.0, %v279
  %281 = vmatmul.bf16.gmra.mxu0 %v127
  %v282 = vpop.f32.mrf.mxu0
  %v283 = vadd.f32 0.0, %v282
  %v284 = vpop.f32.mrf.mxu0
  %v285 = vadd.f32 0.0, %v284
  %286 = vmatmul.bf16.gmra.mxu0 %v129
  %v287 = vpop.f32.mrf.mxu0
  %v288 = vadd.f32 0.0, %v287
  %v289 = vpop.f32.mrf.mxu0
  %v290 = vadd.f32 0.0, %v289
  %291 = vdwg.mxu0
  %292 = vmatpush.bf16.msra.mxu0 %v226
  %293 = vmatpush.bf16.msra.mxu0 %v225
  %294 = vmatpush.bf16.msra.mxu0 %v224
  %295 = vmatpush.bf16.msra.mxu0 %v223
  %296 = vmatpush.bf16.msra.mxu0 %v222
  %297 = vmatpush.bf16.msra.mxu0 %v221
  %298 = vmatpush.bf16.msra.mxu0 %v220
  %299 = vmatpush.bf16.msra.mxu0 %v219
  %300 = vmatmul.bf16.gmra.mxu0 %v116
  %v301 = vpop.f32.mrf.mxu0
  %v302 = vadd.f32 %v253, %v301
  %v303 = vpop.f32.mrf.mxu0
  %v304 = vadd.f32 %v255, %v303
  %305 = vmatmul.bf16.gmra.mxu0 %v118
  %v306 = vpop.f32.mrf.mxu0
  %v307 = vadd.f32 %v258, %v306
  %v308 = vpop.f32.mrf.mxu0
  %v309 = vadd.f32 %v260, %v308
  %310 = vmatmul.bf16.gmra.mxu0 %v120
  %v311 = vpop.f32.mrf.mxu0
  %v312 = vadd.f32 %v263, %v311
  %v313 = vpop.f32.mrf.mxu0
  %v314 = vadd.f32 %v265, %v313
  %315 = vmatmul.bf16.gmra.mxu0 %v122
  %v316 = vpop.f32.mrf.mxu0
  %v317 = vadd.f32 %v268, %v316
  %v318 = vpop.f32.mrf.mxu0
  %v319 = vadd.f32 %v270, %v318
  %320 = vmatmul.bf16.gmra.mxu0 %v124
  %v321 = vpop.f32.mrf.mxu0
  %v322 = vadd.f32 %v273, %v321
  %v323 = vpop.f32.mrf.mxu0
  %v324 = vadd.f32 %v275, %v323
  %325 = vmatmul.bf16.gmra.mxu0 %v126
  %v326 = vpop.f32.mrf.mxu0
  %v327 = vadd.f32 %v278, %v326
  %v328 = vpop.f32.mrf.mxu0
  %v329 = vadd.f32 %v280, %v328
  %330 = vmatmul.bf16.gmra.mxu0 %v128
  %v331 = vpop.f32.mrf.mxu0
  %v332 = vadd.f32 %v283, %v331
  %v333 = vpop.f32.mrf.mxu0
  %v334 = vadd.f32 %v285, %v333
  %335 = vmatmul.bf16.gmra.mxu0 %v130
  %v336 = vpop.f32.mrf.mxu0
  %v337 = vadd.f32 %v288, %v336
  %v338 = vpop.f32.mrf.mxu0
  %v339 = vadd.f32 %v290, %v338
  %340 = vdwg.mxu0
  %v341 = vadd.f32 %v302, %v50
  %v342 = vadd.f32 %v304, %v50
  %v343 = vadd.f32 %v307, %v50
  %v344 = vadd.f32 %v309, %v50
  %v345 = vadd.f32 %v312, %v50
  %v346 = vadd.f32 %v314, %v50
  %v347 = vadd.f32 %v317, %v50
  %v348 = vadd.f32 %v319, %v50
  %v349 = vadd.f32 %v322, %v50
  %v350 = vadd.f32 %v324, %v50
  %v351 = vadd.f32 %v327, %v50
  %v352 = vadd.f32 %v329, %v50
  %v353 = vadd.f32 %v332, %v50
  %v354 = vadd.f32 %v334, %v50
  %v355 = vadd.f32 %v337, %v50
  %v356 = vadd.f32 %v339, %v50
  %s357 = scalar_lea.vmem %s0, 128
  %v358 = vld [vmem:[%s357] sm:$0xff]
  %v359 = vld [vmem:[%s357 + $0x8] sm:$0xff]
  %v360 = vld [vmem:[%s357 + $0x10] sm:$0xff]
  %v361 = vld [vmem:[%s357 + $0x18] sm:$0xff]
  %v362 = vld [vmem:[%s357 + $0x20] sm:$0xff]
  %v363 = vld [vmem:[%s357 + $0x28] sm:$0xff]
  %v364 = vld [vmem:[%s357 + $0x30] sm:$0xff]
  %v365 = vld [vmem:[%s357 + $0x38] sm:$0xff]
  %v366 = vld [vmem:[%s357 + $0x40] sm:$0xff]
  %v367 = vld [vmem:[%s357 + $0x48] sm:$0xff]
  %v368 = vld [vmem:[%s357 + $0x50] sm:$0xff]
  %v369 = vld [vmem:[%s357 + $0x58] sm:$0xff]
  %v370 = vld [vmem:[%s357 + $0x60] sm:$0xff]
  %v371 = vld [vmem:[%s357 + $0x68] sm:$0xff]
  %v372 = vld [vmem:[%s357 + $0x70] sm:$0xff]
  %v373 = vld [vmem:[%s357 + $0x78] sm:$0xff]
  %v390 = vunpack.c.l.b16 %v358
  %v391 = vunpack.c.h.b16 %v358
  %v392 = vunpack.c.l.b16 %v359
  %v393 = vunpack.c.h.b16 %v359
  %v394 = vunpack.c.l.b16 %v360
  %v395 = vunpack.c.h.b16 %v360
  %v396 = vunpack.c.l.b16 %v361
  %v397 = vunpack.c.h.b16 %v361
  %v398 = vunpack.c.l.b16 %v362
  %v399 = vunpack.c.h.b16 %v362
  %v400 = vunpack.c.l.b16 %v363
  %v401 = vunpack.c.h.b16 %v363
  %v402 = vunpack.c.l.b16 %v364
  %v403 = vunpack.c.h.b16 %v364
  %v404 = vunpack.c.l.b16 %v365
  %v405 = vunpack.c.h.b16 %v365
  %v406 = vunpack.c.l.b16 %v366
  %v407 = vunpack.c.h.b16 %v366
  %v408 = vunpack.c.l.b16 %v367
  %v409 = vunpack.c.h.b16 %v367
  %v410 = vunpack.c.l.b16 %v368
  %v411 = vunpack.c.h.b16 %v368
  %v412 = vunpack.c.l.b16 %v369
  %v413 = vunpack.c.h.b16 %v369
  %v414 = vunpack.c.l.b16 %v370
  %v415 = vunpack.c.h.b16 %v370
  %v416 = vunpack.c.l.b16 %v371
  %v417 = vunpack.c.h.b16 %v371
  %v418 = vunpack.c.l.b16 %v372
  %v419 = vunpack.c.h.b16 %v372
  %v420 = vunpack.c.l.b16 %v373
  %v421 = vunpack.c.h.b16 %v373
  %v422 = vpack.c.b16 %v392, %v390
  %v423 = vpack.c.b16 %v393, %v391
  %v424 = vpack.c.b16 %v396, %v394
  %v425 = vpack.c.b16 %v397, %v395
  %v426 = vpack.c.b16 %v400, %v398
  %v427 = vpack.c.b16 %v401, %v399
  %v428 = vpack.c.b16 %v404, %v402
  %v429 = vpack.c.b16 %v405, %v403
  %v430 = vpack.c.b16 %v408, %v406
  %v431 = vpack.c.b16 %v409, %v407
  %v432 = vpack.c.b16 %v412, %v410
  %v433 = vpack.c.b16 %v413, %v411
  %v434 = vpack.c.b16 %v416, %v414
  %v435 = vpack.c.b16 %v417, %v415
  %v436 = vpack.c.b16 %v420, %v418
  %v437 = vpack.c.b16 %v421, %v419
  %454 = vmatpush.bf16.msra.mxu0 %v218
  %455 = vmatpush.bf16.msra.mxu0 %v217
  %456 = vmatpush.bf16.msra.mxu0 %v216
  %457 = vmatpush.bf16.msra.mxu0 %v215
  %458 = vmatpush.bf16.msra.mxu0 %v214
  %459 = vmatpush.bf16.msra.mxu0 %v213
  %460 = vmatpush.bf16.msra.mxu0 %v212
  %461 = vmatpush.bf16.msra.mxu0 %v211
  %462 = vmatmul.bf16.gmra.mxu0 %v422
  %v463 = vpop.f32.mrf.mxu0
  %v464 = vadd.f32 0.0, %v463
  %v465 = vpop.f32.mrf.mxu0
  %v466 = vadd.f32 0.0, %v465
  %467 = vmatmul.bf16.gmra.mxu0 %v424
  %v468 = vpop.f32.mrf.mxu0
  %v469 = vadd.f32 0.0, %v468
  %v470 = vpop.f32.mrf.mxu0
  %v471 = vadd.f32 0.0, %v470
  %472 = vmatmul.bf16.gmra.mxu0 %v426
  %v473 = vpop.f32.mrf.mxu0
  %v474 = vadd.f32 0.0, %v473
  %v475 = vpop.f32.mrf.mxu0
  %v476 = vadd.f32 0.0, %v475
  %477 = vmatmul.bf16.gmra.mxu0 %v428
  %v478 = vpop.f32.mrf.mxu0
  %v479 = vadd.f32 0.0, %v478
  %v480 = vpop.f32.mrf.mxu0
  %v481 = vadd.f32 0.0, %v480
  %482 = vmatmul.bf16.gmra.mxu0 %v430
  %v483 = vpop.f32.mrf.mxu0
  %v484 = vadd.f32 0.0, %v483
  %v485 = vpop.f32.mrf.mxu0
  %v486 = vadd.f32 0.0, %v485
  %487 = vmatmul.bf16.gmra.mxu0 %v432
  %v488 = vpop.f32.mrf.mxu0
  %v489 = vadd.f32 0.0, %v488
  %v490 = vpop.f32.mrf.mxu0
  %v491 = vadd.f32 0.0, %v490
  %492 = vmatmul.bf16.gmra.mxu0 %v434
  %v493 = vpop.f32.mrf.mxu0
  %v494 = vadd.f32 0.0, %v493
  %v495 = vpop.f32.mrf.mxu0
  %v496 = vadd.f32 0.0, %v495
  %497 = vmatmul.bf16.gmra.mxu0 %v436
  %v498 = vpop.f32.mrf.mxu0
  %v499 = vadd.f32 0.0, %v498
  %v500 = vpop.f32.mrf.mxu0
  %v501 = vadd.f32 0.0, %v500
  %502 = vdwg.mxu0
  %503 = vmatpush.bf16.msra.mxu0 %v226
  %504 = vmatpush.bf16.msra.mxu0 %v225
  %505 = vmatpush.bf16.msra.mxu0 %v224
  %506 = vmatpush.bf16.msra.mxu0 %v223
  %507 = vmatpush.bf16.msra.mxu0 %v222
  %508 = vmatpush.bf16.msra.mxu0 %v221
  %509 = vmatpush.bf16.msra.mxu0 %v220
  %510 = vmatpush.bf16.msra.mxu0 %v219
  %511 = vmatmul.bf16.gmra.mxu0 %v423
  %v512 = vpop.f32.mrf.mxu0
  %v513 = vadd.f32 %v464, %v512
  %v514 = vpop.f32.mrf.mxu0
  %v515 = vadd.f32 %v466, %v514
  %516 = vmatmul.bf16.gmra.mxu0 %v425
  %v517 = vpop.f32.mrf.mxu0
  %v518 = vadd.f32 %v469, %v517
  %v519 = vpop.f32.mrf.mxu0
  %v520 = vadd.f32 %v471, %v519
  %521 = vmatmul.bf16.gmra.mxu0 %v427
  %v522 = vpop.f32.mrf.mxu0
  %v523 = vadd.f32 %v474, %v522
  %v524 = vpop.f32.mrf.mxu0
  %v525 = vadd.f32 %v476, %v524
  %526 = vmatmul.bf16.gmra.mxu0 %v429
  %v527 = vpop.f32.mrf.mxu0
  %v528 = vadd.f32 %v479, %v527
  %v529 = vpop.f32.mrf.mxu0
  %v530 = vadd.f32 %v481, %v529
  %531 = vmatmul.bf16.gmra.mxu0 %v431
  %v532 = vpop.f32.mrf.mxu0
  %v533 = vadd.f32 %v484, %v532
  %v534 = vpop.f32.mrf.mxu0
  %v535 = vadd.f32 %v486, %v534
  %536 = vmatmul.bf16.gmra.mxu0 %v433
  %v537 = vpop.f32.mrf.mxu0
  %v538 = vadd.f32 %v489, %v537
  %v539 = vpop.f32.mrf.mxu0
  %v540 = vadd.f32 %v491, %v539
  %541 = vmatmul.bf16.gmra.mxu0 %v435
  %v542 = vpop.f32.mrf.mxu0
  %v543 = vadd.f32 %v494, %v542
  %v544 = vpop.f32.mrf.mxu0
  %v545 = vadd.f32 %v496, %v544
  %546 = vmatmul.bf16.gmra.mxu0 %v437
  %v547 = vpop.f32.mrf.mxu0
  %v548 = vadd.f32 %v499, %v547
  %v549 = vpop.f32.mrf.mxu0
  %v550 = vadd.f32 %v501, %v549
  %551 = vdwg.mxu0
  %v552 = vadd.f32 %v513, %v50
  %v553 = vadd.f32 %v515, %v50
  %v554 = vadd.f32 %v518, %v50
  %v555 = vadd.f32 %v520, %v50
  %v556 = vadd.f32 %v523, %v50
  %v557 = vadd.f32 %v525, %v50
  %v558 = vadd.f32 %v528, %v50
  %v559 = vadd.f32 %v530, %v50
  %v560 = vadd.f32 %v533, %v50
  %v561 = vadd.f32 %v535, %v50
  %v562 = vadd.f32 %v538, %v50
  %v563 = vadd.f32 %v540, %v50
  %v564 = vadd.f32 %v543, %v50
  %v565 = vadd.f32 %v545, %v50
  %v566 = vadd.f32 %v548, %v50
  %v567 = vadd.f32 %v550, %v50
  %v568 = vld [vmem:[%s1] sm:$0xff]
  %v569 = vld [vmem:[%s1 + $0x18] sm:$0xff]
  %v570 = vld [vmem:[%s1 + $0x30] sm:$0xff]
  %v571 = vld [vmem:[%s1 + $0x48] sm:$0xff]
  %v572 = vld [vmem:[%s1 + $0x60] sm:$0xff]
  %v573 = vld [vmem:[%s1 + $0x78] sm:$0xff]
  %v574 = vld [vmem:[%s1 + $0x90] sm:$0xff]
  %v575 = vld [vmem:[%s1 + $0xa8] sm:$0xff]
  %v576 = vld [vmem:[%s1 + $0xc0] sm:$0xff]
  %v577 = vld [vmem:[%s1 + $0xd8] sm:$0xff]
  %v578 = vld [vmem:[%s1 + $0xf0] sm:$0xff]
  %v579 = vld [vmem:[%s1 + $0x108] sm:$0xff]
  %v580 = vld [vmem:[%s1 + $0x120] sm:$0xff]
  %v581 = vld [vmem:[%s1 + $0x138] sm:$0xff]
  %v582 = vld [vmem:[%s1 + $0x150] sm:$0xff]
  %v583 = vld [vmem:[%s1 + $0x168] sm:$0xff]
  %v584 = vld [vmem:[%s1 + $0x8] sm:$0xff]
  %v585 = vld [vmem:[%s1 + $0x20] sm:$0xff]
  %v586 = vld [vmem:[%s1 + $0x38] sm:$0xff]
  %v587 = vld [vmem:[%s1 + $0x50] sm:$0xff]
  %v588 = vld [vmem:[%s1 + $0x68] sm:$0xff]
  %v589 = vld [vmem:[%s1 + $0x80] sm:$0xff]
  %v590 = vld [vmem:[%s1 + $0x98] sm:$0xff]
  %v591 = vld [vmem:[%s1 + $0xb0] sm:$0xff]
  %v592 = vld [vmem:[%s1 + $0xc8] sm:$0xff]
  %v593 = vld [vmem:[%s1 + $0xe0] sm:$0xff]
  %v594 = vld [vmem:[%s1 + $0xf8] sm:$0xff]
  %v595 = vld [vmem:[%s1 + $0x110] sm:$0xff]
  %v596 = vld [vmem:[%s1 + $0x128] sm:$0xff]
  %v597 = vld [vmem:[%s1 + $0x140] sm:$0xff]
  %v598 = vld [vmem:[%s1 + $0x158] sm:$0xff]
  %v599 = vld [vmem:[%s1 + $0x170] sm:$0xff]
  %v600 = vld [vmem:[%s1 + $0x10] sm:$0xff]
  %v601 = vld [vmem:[%s1 + $0x28] sm:$0xff]
  %v602 = vld [vmem:[%s1 + $0x40] sm:$0xff]
  %v603 = vld [vmem:[%s1 + $0x58] sm:$0xff]
  %v604 = vld [vmem:[%s1 + $0x70] sm:$0xff]
  %v605 = vld [vmem:[%s1 + $0x88] sm:$0xff]
  %v606 = vld [vmem:[%s1 + $0xa0] sm:$0xff]
  %v607 = vld [vmem:[%s1 + $0xb8] sm:$0xff]
  %v608 = vld [vmem:[%s1 + $0xd0] sm:$0xff]
  %v609 = vld [vmem:[%s1 + $0xe8] sm:$0xff]
  %v610 = vld [vmem:[%s1 + $0x100] sm:$0xff]
  %v611 = vld [vmem:[%s1 + $0x118] sm:$0xff]
  %v612 = vld [vmem:[%s1 + $0x130] sm:$0xff]
  %v613 = vld [vmem:[%s1 + $0x148] sm:$0xff]
  %v614 = vld [vmem:[%s1 + $0x160] sm:$0xff]
  %v615 = vld [vmem:[%s1 + $0x178] sm:$0xff]
  %v616 = vrsqrt.pop %v600
  %v617 = vmul.f32 %v616, %v600
  %v618 = vmul.f32 %v617, %v616
  %v619 = vmul.f32 0.5, %v618
  %v620 = vsub.f32 1.5, %v619
  %v621 = vmul.f32 %v616, %v620
  %v622 = vmul.f32 %v600, %v621
  %vm623 = vcmp.eq.f32.partialorder %v600, inf
  %v624 = vsel %vm623, %v600, %v622
  %vm625 = vcmp.eq.f32.partialorder %v600, 0.0
  %v626 = vand.u32 %v600, 2147483648
  %v627 = vsel %vm625, %v626, %v624
  %v628 = vrsqrt.pop %v601
  %v629 = vmul.f32 %v628, %v601
  %v630 = vmul.f32 %v629, %v628
  %v631 = vmul.f32 0.5, %v630
  %v632 = vsub.f32 1.5, %v631
  %v633 = vmul.f32 %v628, %v632
  %v634 = vmul.f32 %v601, %v633
  %vm635 = vcmp.eq.f32.partialorder %v601, inf
  %v636 = vsel %vm635, %v601, %v634
  %vm637 = vcmp.eq.f32.partialorder %v601, 0.0
  %v638 = vand.u32 %v601, 2147483648
  %v639 = vsel %vm637, %v638, %v636
  %v640 = vrsqrt.pop %v602
  %v641 = vmul.f32 %v640, %v602
  %v642 = vmul.f32 %v641, %v640
  %v643 = vmul.f32 0.5, %v642
  %v644 = vsub.f32 1.5, %v643
  %v645 = vmul.f32 %v640, %v644
  %v646 = vmul.f32 %v602, %v645
  %vm647 = vcmp.eq.f32.partialorder %v602, inf
  %v648 = vsel %vm647, %v602, %v646
  %vm649 = vcmp.eq.f32.partialorder %v602, 0.0
  %v650 = vand.u32 %v602, 2147483648
  %v651 = vsel %vm649, %v650, %v648
  %v652 = vrsqrt.pop %v603
  %v653 = vmul.f32 %v652, %v603
  %v654 = vmul.f32 %v653, %v652
  %v655 = vmul.f32 0.5, %v654
  %v656 = vsub.f32 1.5, %v655
  %v657 = vmul.f32 %v652, %v656
  %v658 = vmul.f32 %v603, %v657
  %vm659 = vcmp.eq.f32.partialorder %v603, inf
  %v660 = vsel %vm659, %v603, %v658
  %vm661 = vcmp.eq.f32.partialorder %v603, 0.0
  %v662 = vand.u32 %v603, 2147483648
  %v663 = vsel %vm661, %v662, %v660
  %v664 = vrsqrt.pop %v604
  %v665 = vmul.f32 %v664, %v604
  %v666 = vmul.f32 %v665, %v664
  %v667 = vmul.f32 0.5, %v666
  %v668 = vsub.f32 1.5, %v667
  %v669 = vmul.f32 %v664, %v668
  %v670 = vmul.f32 %v604, %v669
  %vm671 = vcmp.eq.f32.partialorder %v604, inf
  %v672 = vsel %vm671, %v604, %v670
  %vm673 = vcmp.eq.f32.partialorder %v604, 0.0
  %v674 = vand.u32 %v604, 2147483648
  %v675 = vsel %vm673, %v674, %v672
  %v676 = vrsqrt.pop %v605
  %v677 = vmul.f32 %v676, %v605
  %v678 = vmul.f32 %v677, %v676
  %v679 = vmul.f32 0.5, %v678
  %v680 = vsub.f32 1.5, %v679
  %v681 = vmul.f32 %v676, %v680
  %v682 = vmul.f32 %v605, %v681
  %vm683 = vcmp.eq.f32.partialorder %v605, inf
  %v684 = vsel %vm683, %v605, %v682
  %vm685 = vcmp.eq.f32.partialorder %v605, 0.0
  %v686 = vand.u32 %v605, 2147483648
  %v687 = vsel %vm685, %v686, %v684
  %v688 = vrsqrt.pop %v606
  %v689 = vmul.f32 %v688, %v606
  %v690 = vmul.f32 %v689, %v688
  %v691 = vmul.f32 0.5, %v690
  %v692 = vsub.f32 1.5, %v691
  %v693 = vmul.f32 %v688, %v692
  %v694 = vmul.f32 %v606, %v693
  %vm695 = vcmp.eq.f32.partialorder %v606, inf
  %v696 = vsel %vm695, %v606, %v694
  %vm697 = vcmp.eq.f32.partialorder %v606, 0.0
  %v698 = vand.u32 %v606, 2147483648
  %v699 = vsel %vm697, %v698, %v696
  %v700 = vrsqrt.pop %v607
  %v701 = vmul.f32 %v700, %v607
  %v702 = vmul.f32 %v701, %v700
  %v703 = vmul.f32 0.5, %v702
  %v704 = vsub.f32 1.5, %v703
  %v705 = vmul.f32 %v700, %v704
  %v706 = vmul.f32 %v607, %v705
  %vm707 = vcmp.eq.f32.partialorder %v607, inf
  %v708 = vsel %vm707, %v607, %v706
  %vm709 = vcmp.eq.f32.partialorder %v607, 0.0
  %v710 = vand.u32 %v607, 2147483648
  %v711 = vsel %vm709, %v710, %v708
  %v712 = vrsqrt.pop %v608
  %v713 = vmul.f32 %v712, %v608
  %v714 = vmul.f32 %v713, %v712
  %v715 = vmul.f32 0.5, %v714
  %v716 = vsub.f32 1.5, %v715
  %v717 = vmul.f32 %v712, %v716
  %v718 = vmul.f32 %v608, %v717
  %vm719 = vcmp.eq.f32.partialorder %v608, inf
  %v720 = vsel %vm719, %v608, %v718
  %vm721 = vcmp.eq.f32.partialorder %v608, 0.0
  %v722 = vand.u32 %v608, 2147483648
  %v723 = vsel %vm721, %v722, %v720
  %v724 = vrsqrt.pop %v609
  %v725 = vmul.f32 %v724, %v609
  %v726 = vmul.f32 %v725, %v724
  %v727 = vmul.f32 0.5, %v726
  %v728 = vsub.f32 1.5, %v727
  %v729 = vmul.f32 %v724, %v728
  %v730 = vmul.f32 %v609, %v729
  %vm731 = vcmp.eq.f32.partialorder %v609, inf
  %v732 = vsel %vm731, %v609, %v730
  %vm733 = vcmp.eq.f32.partialorder %v609, 0.0
  %v734 = vand.u32 %v609, 2147483648
  %v735 = vsel %vm733, %v734, %v732
  %v736 = vrsqrt.pop %v610
  %v737 = vmul.f32 %v736, %v610
  %v738 = vmul.f32 %v737, %v736
  %v739 = vmul.f32 0.5, %v738
  %v740 = vsub.f32 1.5, %v739
  %v741 = vmul.f32 %v736, %v740
  %v742 = vmul.f32 %v610, %v741
  %vm743 = vcmp.eq.f32.partialorder %v610, inf
  %v744 = vsel %vm743, %v610, %v742
  %vm745 = vcmp.eq.f32.partialorder %v610, 0.0
  %v746 = vand.u32 %v610, 2147483648
  %v747 = vsel %vm745, %v746, %v744
  %v748 = vrsqrt.pop %v611
  %v749 = vmul.f32 %v748, %v611
  %v750 = vmul.f32 %v749, %v748
  %v751 = vmul.f32 0.5, %v750
  %v752 = vsub.f32 1.5, %v751
  %v753 = vmul.f32 %v748, %v752
  %v754 = vmul.f32 %v611, %v753
  %vm755 = vcmp.eq.f32.partialorder %v611, inf
  %v756 = vsel %vm755, %v611, %v754
  %vm757 = vcmp.eq.f32.partialorder %v611, 0.0
  %v758 = vand.u32 %v611, 2147483648
  %v759 = vsel %vm757, %v758, %v756
  %v760 = vrsqrt.pop %v612
  %v761 = vmul.f32 %v760, %v612
  %v762 = vmul.f32 %v761, %v760
  %v763 = vmul.f32 0.5, %v762
  %v764 = vsub.f32 1.5, %v763
  %v765 = vmul.f32 %v760, %v764
  %v766 = vmul.f32 %v612, %v765
  %vm767 = vcmp.eq.f32.partialorder %v612, inf
  %v768 = vsel %vm767, %v612, %v766
  %vm769 = vcmp.eq.f32.partialorder %v612, 0.0
  %v770 = vand.u32 %v612, 2147483648
  %v771 = vsel %vm769, %v770, %v768
  %v772 = vrsqrt.pop %v613
  %v773 = vmul.f32 %v772, %v613
  %v774 = vmul.f32 %v773, %v772
  %v775 = vmul.f32 0.5, %v774
  %v776 = vsub.f32 1.5, %v775
  %v777 = vmul.f32 %v772, %v776
  %v778 = vmul.f32 %v613, %v777
  %vm779 = vcmp.eq.f32.partialorder %v613, inf
  %v780 = vsel %vm779, %v613, %v778
  %vm781 = vcmp.eq.f32.partialorder %v613, 0.0
  %v782 = vand.u32 %v613, 2147483648
  %v783 = vsel %vm781, %v782, %v780
  %v784 = vrsqrt.pop %v614
  %v785 = vmul.f32 %v784, %v614
  %v786 = vmul.f32 %v785, %v784
  %v787 = vmul.f32 0.5, %v786
  %v788 = vsub.f32 1.5, %v787
  %v789 = vmul.f32 %v784, %v788
  %v790 = vmul.f32 %v614, %v789
  %vm791 = vcmp.eq.f32.partialorder %v614, inf
  %v792 = vsel %vm791, %v614, %v790
  %vm793 = vcmp.eq.f32.partialorder %v614, 0.0
  %v794 = vand.u32 %v614, 2147483648
  %v795 = vsel %vm793, %v794, %v792
  %v796 = vrsqrt.pop %v615
  %v797 = vmul.f32 %v796, %v615
  %v798 = vmul.f32 %v797, %v796
  %v799 = vmul.f32 0.5, %v798
  %v800 = vsub.f32 1.5, %v799
  %v801 = vmul.f32 %v796, %v800
  %v802 = vmul.f32 %v615, %v801
  %vm803 = vcmp.eq.f32.partialorder %v615, inf
  %v804 = vsel %vm803, %v615, %v802
  %vm805 = vcmp.eq.f32.partialorder %v615, 0.0
  %v806 = vand.u32 %v615, 2147483648
  %v807 = vsel %vm805, %v806, %v804
  %809 = vset.pattern.permute.xlu0 0
  %810 = vperm.xlu0 %809, %v627
  %v811 = vpop.permute.xlu0 %810
  %814 = vset.pattern.permute.xlu0 0
  %815 = vperm.xlu0 %814, %v639
  %v816 = vpop.permute.xlu0 %815
  %819 = vset.pattern.permute.xlu0 0
  %820 = vperm.xlu0 %819, %v651
  %v821 = vpop.permute.xlu0 %820
  %824 = vset.pattern.permute.xlu0 0
  %825 = vperm.xlu0 %824, %v663
  %v826 = vpop.permute.xlu0 %825
  %829 = vset.pattern.permute.xlu0 0
  %830 = vperm.xlu0 %829, %v675
  %v831 = vpop.permute.xlu0 %830
  %834 = vset.pattern.permute.xlu0 0
  %835 = vperm.xlu0 %834, %v687
  %v836 = vpop.permute.xlu0 %835
  %839 = vset.pattern.permute.xlu0 0
  %840 = vperm.xlu0 %839, %v699
  %v841 = vpop.permute.xlu0 %840
  %844 = vset.pattern.permute.xlu0 0
  %845 = vperm.xlu0 %844, %v711
  %v846 = vpop.permute.xlu0 %845
  %849 = vset.pattern.permute.xlu0 0
  %850 = vperm.xlu0 %849, %v723
  %v851 = vpop.permute.xlu0 %850
  %854 = vset.pattern.permute.xlu0 0
  %855 = vperm.xlu0 %854, %v735
  %v856 = vpop.permute.xlu0 %855
  %859 = vset.pattern.permute.xlu0 0
  %860 = vperm.xlu0 %859, %v747
  %v861 = vpop.permute.xlu0 %860
  %864 = vset.pattern.permute.xlu0 0
  %865 = vperm.xlu0 %864, %v759
  %v866 = vpop.permute.xlu0 %865
  %869 = vset.pattern.permute.xlu0 0
  %870 = vperm.xlu0 %869, %v771
  %v871 = vpop.permute.xlu0 %870
  %874 = vset.pattern.permute.xlu0 0
  %875 = vperm.xlu0 %874, %v783
  %v876 = vpop.permute.xlu0 %875
  %879 = vset.pattern.permute.xlu0 0
  %880 = vperm.xlu0 %879, %v795
  %v881 = vpop.permute.xlu0 %880
  %884 = vset.pattern.permute.xlu0 0
  %885 = vperm.xlu0 %884, %v807
  %v886 = vpop.permute.xlu0 %885
  %v888 = vmul.f32 %v811, %v552
  %v889 = vmul.f32 %v816, %v553
  %v890 = vmul.f32 %v821, %v554
  %v891 = vmul.f32 %v826, %v555
  %v892 = vmul.f32 %v831, %v556
  %v893 = vmul.f32 %v836, %v557
  %v894 = vmul.f32 %v841, %v558
  %v895 = vmul.f32 %v846, %v559
  %v896 = vmul.f32 %v851, %v560
  %v897 = vmul.f32 %v856, %v561
  %v898 = vmul.f32 %v861, %v562
  %v899 = vmul.f32 %v866, %v563
  %v900 = vmul.f32 %v871, %v564
  %v901 = vmul.f32 %v876, %v565
  %v902 = vmul.f32 %v881, %v566
  %v903 = vmul.f32 %v886, %v567
  %v904 = vsub.f32 1.0, %v600
  %v905 = vsub.f32 1.0, %v601
  %v906 = vsub.f32 1.0, %v602
  %v907 = vsub.f32 1.0, %v603
  %v908 = vsub.f32 1.0, %v604
  %v909 = vsub.f32 1.0, %v605
  %v910 = vsub.f32 1.0, %v606
  %v911 = vsub.f32 1.0, %v607
  %v912 = vsub.f32 1.0, %v608
  %v913 = vsub.f32 1.0, %v609
  %v914 = vsub.f32 1.0, %v610
  %v915 = vsub.f32 1.0, %v611
  %v916 = vsub.f32 1.0, %v612
  %v917 = vsub.f32 1.0, %v613
  %v918 = vsub.f32 1.0, %v614
  %v919 = vsub.f32 1.0, %v615
  %v920 = vrsqrt.pop %v904
  %v921 = vmul.f32 %v920, %v904
  %v922 = vmul.f32 %v921, %v920
  %v923 = vmul.f32 0.5, %v922
  %v924 = vsub.f32 1.5, %v923
  %v925 = vmul.f32 %v920, %v924
  %v926 = vmul.f32 %v904, %v925
  %vm927 = vcmp.eq.f32.partialorder %v904, inf
  %v928 = vsel %vm927, %v904, %v926
  %vm929 = vcmp.eq.f32.partialorder %v904, 0.0
  %v930 = vand.u32 %v904, 2147483648
  %v931 = vsel %vm929, %v930, %v928
  %v932 = vrsqrt.pop %v905
  %v933 = vmul.f32 %v932, %v905
  %v934 = vmul.f32 %v933, %v932
  %v935 = vmul.f32 0.5, %v934
  %v936 = vsub.f32 1.5, %v935
  %v937 = vmul.f32 %v932, %v936
  %v938 = vmul.f32 %v905, %v937
  %vm939 = vcmp.eq.f32.partialorder %v905, inf
  %v940 = vsel %vm939, %v905, %v938
  %vm941 = vcmp.eq.f32.partialorder %v905, 0.0
  %v942 = vand.u32 %v905, 2147483648
  %v943 = vsel %vm941, %v942, %v940
  %v944 = vrsqrt.pop %v906
  %v945 = vmul.f32 %v944, %v906
  %v946 = vmul.f32 %v945, %v944
  %v947 = vmul.f32 0.5, %v946
  %v948 = vsub.f32 1.5, %v947
  %v949 = vmul.f32 %v944, %v948
  %v950 = vmul.f32 %v906, %v949
  %vm951 = vcmp.eq.f32.partialorder %v906, inf
  %v952 = vsel %vm951, %v906, %v950
  %vm953 = vcmp.eq.f32.partialorder %v906, 0.0
  %v954 = vand.u32 %v906, 2147483648
  %v955 = vsel %vm953, %v954, %v952
  %v956 = vrsqrt.pop %v907
  %v957 = vmul.f32 %v956, %v907
  %v958 = vmul.f32 %v957, %v956
  %v959 = vmul.f32 0.5, %v958
  %v960 = vsub.f32 1.5, %v959
  %v961 = vmul.f32 %v956, %v960
  %v962 = vmul.f32 %v907, %v961
  %vm963 = vcmp.eq.f32.partialorder %v907, inf
  %v964 = vsel %vm963, %v907, %v962
  %vm965 = vcmp.eq.f32.partialorder %v907, 0.0
  %v966 = vand.u32 %v907, 2147483648
  %v967 = vsel %vm965, %v966, %v964
  %v968 = vrsqrt.pop %v908
  %v969 = vmul.f32 %v968, %v908
  %v970 = vmul.f32 %v969, %v968
  %v971 = vmul.f32 0.5, %v970
  %v972 = vsub.f32 1.5, %v971
  %v973 = vmul.f32 %v968, %v972
  %v974 = vmul.f32 %v908, %v973
  %vm975 = vcmp.eq.f32.partialorder %v908, inf
  %v976 = vsel %vm975, %v908, %v974
  %vm977 = vcmp.eq.f32.partialorder %v908, 0.0
  %v978 = vand.u32 %v908, 2147483648
  %v979 = vsel %vm977, %v978, %v976
  %v980 = vrsqrt.pop %v909
  %v981 = vmul.f32 %v980, %v909
  %v982 = vmul.f32 %v981, %v980
  %v983 = vmul.f32 0.5, %v982
  %v984 = vsub.f32 1.5, %v983
  %v985 = vmul.f32 %v980, %v984
  %v986 = vmul.f32 %v909, %v985
  %vm987 = vcmp.eq.f32.partialorder %v909, inf
  %v988 = vsel %vm987, %v909, %v986
  %vm989 = vcmp.eq.f32.partialorder %v909, 0.0
  %v990 = vand.u32 %v909, 2147483648
  %v991 = vsel %vm989, %v990, %v988
  %v992 = vrsqrt.pop %v910
  %v993 = vmul.f32 %v992, %v910
  %v994 = vmul.f32 %v993, %v992
  %v995 = vmul.f32 0.5, %v994
  %v996 = vsub.f32 1.5, %v995
  %v997 = vmul.f32 %v992, %v996
  %v998 = vmul.f32 %v910, %v997
  %vm999 = vcmp.eq.f32.partialorder %v910, inf
  %v1000 = vsel %vm999, %v910, %v998
  %vm1001 = vcmp.eq.f32.partialorder %v910, 0.0
  %v1002 = vand.u32 %v910, 2147483648
  %v1003 = vsel %vm1001, %v1002, %v1000
  %v1004 = vrsqrt.pop %v911
  %v1005 = vmul.f32 %v1004, %v911
  %v1006 = vmul.f32 %v1005, %v1004
  %v1007 = vmul.f32 0.5, %v1006
  %v1008 = vsub.f32 1.5, %v1007
  %v1009 = vmul.f32 %v1004, %v1008
  %v1010 = vmul.f32 %v911, %v1009
  %vm1011 = vcmp.eq.f32.partialorder %v911, inf
  %v1012 = vsel %vm1011, %v911, %v1010
  %vm1013 = vcmp.eq.f32.partialorder %v911, 0.0
  %v1014 = vand.u32 %v911, 2147483648
  %v1015 = vsel %vm1013, %v1014, %v1012
  %v1016 = vrsqrt.pop %v912
  %v1017 = vmul.f32 %v1016, %v912
  %v1018 = vmul.f32 %v1017, %v1016
  %v1019 = vmul.f32 0.5, %v1018
  %v1020 = vsub.f32 1.5, %v1019
  %v1021 = vmul.f32 %v1016, %v1020
  %v1022 = vmul.f32 %v912, %v1021
  %vm1023 = vcmp.eq.f32.partialorder %v912, inf
  %v1024 = vsel %vm1023, %v912, %v1022
  %vm1025 = vcmp.eq.f32.partialorder %v912, 0.0
  %v1026 = vand.u32 %v912, 2147483648
  %v1027 = vsel %vm1025, %v1026, %v1024
  %v1028 = vrsqrt.pop %v913
  %v1029 = vmul.f32 %v1028, %v913
  %v1030 = vmul.f32 %v1029, %v1028
  %v1031 = vmul.f32 0.5, %v1030
  %v1032 = vsub.f32 1.5, %v1031
  %v1033 = vmul.f32 %v1028, %v1032
  %v1034 = vmul.f32 %v913, %v1033
  %vm1035 = vcmp.eq.f32.partialorder %v913, inf
  %v1036 = vsel %vm1035, %v913, %v1034
  %vm1037 = vcmp.eq.f32.partialorder %v913, 0.0
  %v1038 = vand.u32 %v913, 2147483648
  %v1039 = vsel %vm1037, %v1038, %v1036
  %v1040 = vrsqrt.pop %v914
  %v1041 = vmul.f32 %v1040, %v914
  %v1042 = vmul.f32 %v1041, %v1040
  %v1043 = vmul.f32 0.5, %v1042
  %v1044 = vsub.f32 1.5, %v1043
  %v1045 = vmul.f32 %v1040, %v1044
  %v1046 = vmul.f32 %v914, %v1045
  %vm1047 = vcmp.eq.f32.partialorder %v914, inf
  %v1048 = vsel %vm1047, %v914, %v1046
  %vm1049 = vcmp.eq.f32.partialorder %v914, 0.0
  %v1050 = vand.u32 %v914, 2147483648
  %v1051 = vsel %vm1049, %v1050, %v1048
  %v1052 = vrsqrt.pop %v915
  %v1053 = vmul.f32 %v1052, %v915
  %v1054 = vmul.f32 %v1053, %v1052
  %v1055 = vmul.f32 0.5, %v1054
  %v1056 = vsub.f32 1.5, %v1055
  %v1057 = vmul.f32 %v1052, %v1056
  %v1058 = vmul.f32 %v915, %v1057
  %vm1059 = vcmp.eq.f32.partialorder %v915, inf
  %v1060 = vsel %vm1059, %v915, %v1058
  %vm1061 = vcmp.eq.f32.partialorder %v915, 0.0
  %v1062 = vand.u32 %v915, 2147483648
  %v1063 = vsel %vm1061, %v1062, %v1060
  %v1064 = vrsqrt.pop %v916
  %v1065 = vmul.f32 %v1064, %v916
  %v1066 = vmul.f32 %v1065, %v1064
  %v1067 = vmul.f32 0.5, %v1066
  %v1068 = vsub.f32 1.5, %v1067
  %v1069 = vmul.f32 %v1064, %v1068
  %v1070 = vmul.f32 %v916, %v1069
  %vm1071 = vcmp.eq.f32.partialorder %v916, inf
  %v1072 = vsel %vm1071, %v916, %v1070
  %vm1073 = vcmp.eq.f32.partialorder %v916, 0.0
  %v1074 = vand.u32 %v916, 2147483648
  %v1075 = vsel %vm1073, %v1074, %v1072
  %v1076 = vrsqrt.pop %v917
  %v1077 = vmul.f32 %v1076, %v917
  %v1078 = vmul.f32 %v1077, %v1076
  %v1079 = vmul.f32 0.5, %v1078
  %v1080 = vsub.f32 1.5, %v1079
  %v1081 = vmul.f32 %v1076, %v1080
  %v1082 = vmul.f32 %v917, %v1081
  %vm1083 = vcmp.eq.f32.partialorder %v917, inf
  %v1084 = vsel %vm1083, %v917, %v1082
  %vm1085 = vcmp.eq.f32.partialorder %v917, 0.0
  %v1086 = vand.u32 %v917, 2147483648
  %v1087 = vsel %vm1085, %v1086, %v1084
  %v1088 = vrsqrt.pop %v918
  %v1089 = vmul.f32 %v1088, %v918
  %v1090 = vmul.f32 %v1089, %v1088
  %v1091 = vmul.f32 0.5, %v1090
  %v1092 = vsub.f32 1.5, %v1091
  %v1093 = vmul.f32 %v1088, %v1092
  %v1094 = vmul.f32 %v918, %v1093
  %vm1095 = vcmp.eq.f32.partialorder %v918, inf
  %v1096 = vsel %vm1095, %v918, %v1094
  %vm1097 = vcmp.eq.f32.partialorder %v918, 0.0
  %v1098 = vand.u32 %v918, 2147483648
  %v1099 = vsel %vm1097, %v1098, %v1096
  %v1100 = vrsqrt.pop %v919
  %v1101 = vmul.f32 %v1100, %v919
  %v1102 = vmul.f32 %v1101, %v1100
  %v1103 = vmul.f32 0.5, %v1102
  %v1104 = vsub.f32 1.5, %v1103
  %v1105 = vmul.f32 %v1100, %v1104
  %v1106 = vmul.f32 %v919, %v1105
  %vm1107 = vcmp.eq.f32.partialorder %v919, inf
  %v1108 = vsel %vm1107, %v919, %v1106
  %vm1109 = vcmp.eq.f32.partialorder %v919, 0.0
  %v1110 = vand.u32 %v919, 2147483648
  %v1111 = vsel %vm1109, %v1110, %v1108
  %1113 = vset.pattern.permute.xlu0 0
  %1114 = vperm.xlu0 %1113, %v931
  %v1115 = vpop.permute.xlu0 %1114
  %1118 = vset.pattern.permute.xlu0 0
  %1119 = vperm.xlu0 %1118, %v943
  %v1120 = vpop.permute.xlu0 %1119
  %1123 = vset.pattern.permute.xlu0 0
  %1124 = vperm.xlu0 %1123, %v955
  %v1125 = vpop.permute.xlu0 %1124
  %1128 = vset.pattern.permute.xlu0 0
  %1129 = vperm.xlu0 %1128, %v967
  %v1130 = vpop.permute.xlu0 %1129
  %1133 = vset.pattern.permute.xlu0 0
  %1134 = vperm.xlu0 %1133, %v979
  %v1135 = vpop.permute.xlu0 %1134
  %1138 = vset.pattern.permute.xlu0 0
  %1139 = vperm.xlu0 %1138, %v991
  %v1140 = vpop.permute.xlu0 %1139
  %1143 = vset.pattern.permute.xlu0 0
  %1144 = vperm.xlu0 %1143, %v1003
  %v1145 = vpop.permute.xlu0 %1144
  %1148 = vset.pattern.permute.xlu0 0
  %1149 = vperm.xlu0 %1148, %v1015
  %v1150 = vpop.permute.xlu0 %1149
  %1153 = vset.pattern.permute.xlu0 0
  %1154 = vperm.xlu0 %1153, %v1027
  %v1155 = vpop.permute.xlu0 %1154
  %1158 = vset.pattern.permute.xlu0 0
  %1159 = vperm.xlu0 %1158, %v1039
  %v1160 = vpop.permute.xlu0 %1159
  %1163 = vset.pattern.permute.xlu0 0
  %1164 = vperm.xlu0 %1163, %v1051
  %v1165 = vpop.permute.xlu0 %1164
  %1168 = vset.pattern.permute.xlu0 0
  %1169 = vperm.xlu0 %1168, %v1063
  %v1170 = vpop.permute.xlu0 %1169
  %1173 = vset.pattern.permute.xlu0 0
  %1174 = vperm.xlu0 %1173, %v1075
  %v1175 = vpop.permute.xlu0 %1174
  %1178 = vset.pattern.permute.xlu0 0
  %1179 = vperm.xlu0 %1178, %v1087
  %v1180 = vpop.permute.xlu0 %1179
  %1183 = vset.pattern.permute.xlu0 0
  %1184 = vperm.xlu0 %1183, %v1099
  %v1185 = vpop.permute.xlu0 %1184
  %1188 = vset.pattern.permute.xlu0 0
  %1189 = vperm.xlu0 %1188, %v1111
  %v1190 = vpop.permute.xlu0 %1189
  %v1192 = vmul.f32 %v1115, %v568
  %v1193 = vmul.f32 %v1120, %v569
  %v1194 = vmul.f32 %v1125, %v570
  %v1195 = vmul.f32 %v1130, %v571
  %v1196 = vmul.f32 %v1135, %v572
  %v1197 = vmul.f32 %v1140, %v573
  %v1198 = vmul.f32 %v1145, %v574
  %v1199 = vmul.f32 %v1150, %v575
  %v1200 = vmul.f32 %v1155, %v576
  %v1201 = vmul.f32 %v1160, %v577
  %v1202 = vmul.f32 %v1165, %v578
  %v1203 = vmul.f32 %v1170, %v579
  %v1204 = vmul.f32 %v1175, %v580
  %v1205 = vmul.f32 %v1180, %v581
  %v1206 = vmul.f32 %v1185, %v582
  %v1207 = vmul.f32 %v1190, %v583
  %v1208 = vadd.f32 %v888, %v1192
  %v1209 = vadd.f32 %v889, %v1193
  %v1210 = vadd.f32 %v890, %v1194
  %v1211 = vadd.f32 %v891, %v1195
  %v1212 = vadd.f32 %v892, %v1196
  %v1213 = vadd.f32 %v893, %v1197
  %v1214 = vadd.f32 %v894, %v1198
  %v1215 = vadd.f32 %v895, %v1199
  %v1216 = vadd.f32 %v896, %v1200
  %v1217 = vadd.f32 %v897, %v1201
  %v1218 = vadd.f32 %v898, %v1202
  %v1219 = vadd.f32 %v899, %v1203
  %v1220 = vadd.f32 %v900, %v1204
  %v1221 = vadd.f32 %v901, %v1205
  %v1222 = vadd.f32 %v902, %v1206
  %v1223 = vadd.f32 %v903, %v1207
  %v1224 = vpack.c.bf16 %v1208, %v1208
  %v1225 = vpack.c.bf16 %v1209, %v1209
  %v1226 = vpack.c.bf16 %v1210, %v1210
  %v1227 = vpack.c.bf16 %v1211, %v1211
  %v1228 = vpack.c.bf16 %v1212, %v1212
  %v1229 = vpack.c.bf16 %v1213, %v1213
  %v1230 = vpack.c.bf16 %v1214, %v1214
  %v1231 = vpack.c.bf16 %v1215, %v1215
  %v1232 = vpack.c.bf16 %v1216, %v1216
  %v1233 = vpack.c.bf16 %v1217, %v1217
  %v1234 = vpack.c.bf16 %v1218, %v1218
  %v1235 = vpack.c.bf16 %v1219, %v1219
  %v1236 = vpack.c.bf16 %v1220, %v1220
  %v1237 = vpack.c.bf16 %v1221, %v1221
  %v1238 = vpack.c.bf16 %v1222, %v1222
  %v1239 = vpack.c.bf16 %v1223, %v1223
  %v1256 = vunpack.c.l.b16 %v1224
  %v1257 = vunpack.c.l.b16 %v1225
  %v1258 = vunpack.c.l.b16 %v1226
  %v1259 = vunpack.c.l.b16 %v1227
  %v1260 = vunpack.c.l.b16 %v1228
  %v1261 = vunpack.c.l.b16 %v1229
  %v1262 = vunpack.c.l.b16 %v1230
  %v1263 = vunpack.c.l.b16 %v1231
  %v1264 = vunpack.c.l.b16 %v1232
  %v1265 = vunpack.c.l.b16 %v1233
  %v1266 = vunpack.c.l.b16 %v1234
  %v1267 = vunpack.c.l.b16 %v1235
  %v1268 = vunpack.c.l.b16 %v1236
  %v1269 = vunpack.c.l.b16 %v1237
  %v1270 = vunpack.c.l.b16 %v1238
  %v1271 = vunpack.c.l.b16 %v1239
  %v1272 = vpack.c.b16 %v1257, %v1256
  %v1273 = vpack.c.b16 %v1259, %v1258
  %v1274 = vpack.c.b16 %v1261, %v1260
  %v1275 = vpack.c.b16 %v1263, %v1262
  %v1276 = vpack.c.b16 %v1265, %v1264
  %v1277 = vpack.c.b16 %v1267, %v1266
  %v1278 = vpack.c.b16 %v1269, %v1268
  %v1279 = vpack.c.b16 %v1271, %v1270
  %s1288 = scalar_lea.vmem %s2, 256
  %v1289 = vld [vmem:[%s1288] sm:$0xff]
  %v1290 = vld [vmem:[%s1288 + $0x8] sm:$0xff]
  %v1291 = vld [vmem:[%s1288 + $0x10] sm:$0xff]
  %v1292 = vld [vmem:[%s1288 + $0x18] sm:$0xff]
  %v1293 = vld [vmem:[%s1288 + $0x20] sm:$0xff]
  %v1294 = vld [vmem:[%s1288 + $0x28] sm:$0xff]
  %v1295 = vld [vmem:[%s1288 + $0x30] sm:$0xff]
  %v1296 = vld [vmem:[%s1288 + $0x38] sm:$0xff]
  %v1297 = vld [vmem:[%s1288 + $0x40] sm:$0xff]
  %v1298 = vld [vmem:[%s1288 + $0x48] sm:$0xff]
  %v1299 = vld [vmem:[%s1288 + $0x50] sm:$0xff]
  %v1300 = vld [vmem:[%s1288 + $0x58] sm:$0xff]
  %v1301 = vld [vmem:[%s1288 + $0x60] sm:$0xff]
  %v1302 = vld [vmem:[%s1288 + $0x68] sm:$0xff]
  %v1303 = vld [vmem:[%s1288 + $0x70] sm:$0xff]
  %v1304 = vld [vmem:[%s1288 + $0x78] sm:$0xff]
  %v1305 = vld [vmem:[%s1288 + $0x80] sm:$0xff]
  %v1306 = vld [vmem:[%s1288 + $0x88] sm:$0xff]
  %v1307 = vld [vmem:[%s1288 + $0x90] sm:$0xff]
  %v1308 = vld [vmem:[%s1288 + $0x98] sm:$0xff]
  %v1309 = vld [vmem:[%s1288 + $0xa0] sm:$0xff]
  %v1310 = vld [vmem:[%s1288 + $0xa8] sm:$0xff]
  %v1311 = vld [vmem:[%s1288 + $0xb0] sm:$0xff]
  %v1312 = vld [vmem:[%s1288 + $0xb8] sm:$0xff]
  %v1313 = vld [vmem:[%s1288 + $0xc0] sm:$0xff]
  %v1314 = vld [vmem:[%s1288 + $0xc8] sm:$0xff]
  %v1315 = vld [vmem:[%s1288 + $0xd0] sm:$0xff]
  %v1316 = vld [vmem:[%s1288 + $0xd8] sm:$0xff]
  %v1317 = vld [vmem:[%s1288 + $0xe0] sm:$0xff]
  %v1318 = vld [vmem:[%s1288 + $0xe8] sm:$0xff]
  %v1319 = vld [vmem:[%s1288 + $0xf0] sm:$0xff]
  %v1320 = vld [vmem:[%s1288 + $0xf8] sm:$0xff]
  %s1321 = scalar_lea.vmem %s3, 1
  %v1322 = vld [vmem:[%s1321] ss:$8 sm:$0x3]
  %v1324 = vperm.slane %v1322, 0
  %v1325 = vperm.slane %v1322, 1
  %v1360 = vunpack.c.l.b16 %v1289
  %v1361 = vunpack.c.h.b16 %v1289
  %v1362 = vunpack.c.l.b16 %v1290
  %v1363 = vunpack.c.h.b16 %v1290
  %v1364 = vunpack.c.l.b16 %v1291
  %v1365 = vunpack.c.h.b16 %v1291
  %v1366 = vunpack.c.l.b16 %v1292
  %v1367 = vunpack.c.h.b16 %v1292
  %v1368 = vunpack.c.l.b16 %v1293
  %v1369 = vunpack.c.h.b16 %v1293
  %v1370 = vunpack.c.l.b16 %v1294
  %v1371 = vunpack.c.h.b16 %v1294
  %v1372 = vunpack.c.l.b16 %v1295
  %v1373 = vunpack.c.h.b16 %v1295
  %v1374 = vunpack.c.l.b16 %v1296
  %v1375 = vunpack.c.h.b16 %v1296
  %v1376 = vunpack.c.l.b16 %v1297
  %v1377 = vunpack.c.h.b16 %v1297
  %v1378 = vunpack.c.l.b16 %v1298
  %v1379 = vunpack.c.h.b16 %v1298
  %v1380 = vunpack.c.l.b16 %v1299
  %v1381 = vunpack.c.h.b16 %v1299
  %v1382 = vunpack.c.l.b16 %v1300
  %v1383 = vunpack.c.h.b16 %v1300
  %v1384 = vunpack.c.l.b16 %v1301
  %v1385 = vunpack.c.h.b16 %v1301
  %v1386 = vunpack.c.l.b16 %v1302
  %v1387 = vunpack.c.h.b16 %v1302
  %v1388 = vunpack.c.l.b16 %v1303
  %v1389 = vunpack.c.h.b16 %v1303
  %v1390 = vunpack.c.l.b16 %v1304
  %v1391 = vunpack.c.h.b16 %v1304
  %v1392 = vunpack.c.l.b16 %v1305
  %v1393 = vunpack.c.h.b16 %v1305
  %v1394 = vunpack.c.l.b16 %v1306
  %v1395 = vunpack.c.h.b16 %v1306
  %v1396 = vunpack.c.l.b16 %v1307
  %v1397 = vunpack.c.h.b16 %v1307
  %v1398 = vunpack.c.l.b16 %v1308
  %v1399 = vunpack.c.h.b16 %v1308
  %v1400 = vunpack.c.l.b16 %v1309
  %v1401 = vunpack.c.h.b16 %v1309
  %v1402 = vunpack.c.l.b16 %v1310
  %v1403 = vunpack.c.h.b16 %v1310
  %v1404 = vunpack.c.l.b16 %v1311
  %v1405 = vunpack.c.h.b16 %v1311
  %v1406 = vunpack.c.l.b16 %v1312
  %v1407 = vunpack.c.h.b16 %v1312
  %v1408 = vunpack.c.l.b16 %v1313
  %v1409 = vunpack.c.h.b16 %v1313
  %v1410 = vunpack.c.l.b16 %v1314
  %v1411 = vunpack.c.h.b16 %v1314
  %v1412 = vunpack.c.l.b16 %v1315
  %v1413 = vunpack.c.h.b16 %v1315
  %v1414 = vunpack.c.l.b16 %v1316
  %v1415 = vunpack.c.h.b16 %v1316
  %v1416 = vunpack.c.l.b16 %v1317
  %v1417 = vunpack.c.h.b16 %v1317
  %v1418 = vunpack.c.l.b16 %v1318
  %v1419 = vunpack.c.h.b16 %v1318
  %v1420 = vunpack.c.l.b16 %v1319
  %v1421 = vunpack.c.h.b16 %v1319
  %v1422 = vunpack.c.l.b16 %v1320
  %v1423 = vunpack.c.h.b16 %v1320
  %v1424 = vpack.c.b16 %v1362, %v1360
  %v1425 = vpack.c.b16 %v1363, %v1361
  %v1426 = vpack.c.b16 %v1366, %v1364
  %v1427 = vpack.c.b16 %v1367, %v1365
  %v1428 = vpack.c.b16 %v1370, %v1368
  %v1429 = vpack.c.b16 %v1371, %v1369
  %v1430 = vpack.c.b16 %v1374, %v1372
  %v1431 = vpack.c.b16 %v1375, %v1373
  %v1432 = vpack.c.b16 %v1378, %v1376
  %v1433 = vpack.c.b16 %v1379, %v1377
  %v1434 = vpack.c.b16 %v1382, %v1380
  %v1435 = vpack.c.b16 %v1383, %v1381
  %v1436 = vpack.c.b16 %v1386, %v1384
  %v1437 = vpack.c.b16 %v1387, %v1385
  %v1438 = vpack.c.b16 %v1390, %v1388
  %v1439 = vpack.c.b16 %v1391, %v1389
  %v1440 = vpack.c.b16 %v1394, %v1392
  %v1441 = vpack.c.b16 %v1395, %v1393
  %v1442 = vpack.c.b16 %v1398, %v1396
  %v1443 = vpack.c.b16 %v1399, %v1397
  %v1444 = vpack.c.b16 %v1402, %v1400
  %v1445 = vpack.c.b16 %v1403, %v1401
  %v1446 = vpack.c.b16 %v1406, %v1404
  %v1447 = vpack.c.b16 %v1407, %v1405
  %v1448 = vpack.c.b16 %v1410, %v1408
  %v1449 = vpack.c.b16 %v1411, %v1409
  %v1450 = vpack.c.b16 %v1414, %v1412
  %v1451 = vpack.c.b16 %v1415, %v1413
  %v1452 = vpack.c.b16 %v1418, %v1416
  %v1453 = vpack.c.b16 %v1419, %v1417
  %v1454 = vpack.c.b16 %v1422, %v1420
  %v1455 = vpack.c.b16 %v1423, %v1421
  %1488 = vmatpush.bf16.msra.mxu0 %v1438
  %1489 = vmatpush.bf16.msra.mxu0 %v1436
  %1490 = vmatpush.bf16.msra.mxu0 %v1434
  %1491 = vmatpush.bf16.msra.mxu0 %v1432
  %1492 = vmatpush.bf16.msra.mxu0 %v1430
  %1493 = vmatpush.bf16.msra.mxu0 %v1428
  %1494 = vmatpush.bf16.msra.mxu0 %v1426
  %1495 = vmatpush.bf16.msra.mxu0 %v1424
  %1496 = vmatmul.bf16.gmra.mxu0 %v1272
  %v1497 = vpop.f32.mrf.mxu0
  %v1498 = vadd.f32 %v1324, %v1497
  %v1499 = vpop.f32.mrf.mxu0
  %v1500 = vadd.f32 %v1324, %v1499
  %1501 = vmatmul.bf16.gmra.mxu0 %v1273
  %v1502 = vpop.f32.mrf.mxu0
  %v1503 = vadd.f32 %v1324, %v1502
  %v1504 = vpop.f32.mrf.mxu0
  %v1505 = vadd.f32 %v1324, %v1504
  %1506 = vmatmul.bf16.gmra.mxu0 %v1274
  %v1507 = vpop.f32.mrf.mxu0
  %v1508 = vadd.f32 %v1324, %v1507
  %v1509 = vpop.f32.mrf.mxu0
  %v1510 = vadd.f32 %v1324, %v1509
  %1511 = vmatmul.bf16.gmra.mxu0 %v1275
  %v1512 = vpop.f32.mrf.mxu0
  %v1513 = vadd.f32 %v1324, %v1512
  %v1514 = vpop.f32.mrf.mxu0
  %v1515 = vadd.f32 %v1324, %v1514
  %1516 = vmatmul.bf16.gmra.mxu0 %v1276
  %v1517 = vpop.f32.mrf.mxu0
  %v1518 = vadd.f32 %v1324, %v1517
  %v1519 = vpop.f32.mrf.mxu0
  %v1520 = vadd.f32 %v1324, %v1519
  %1521 = vmatmul.bf16.gmra.mxu0 %v1277
  %v1522 = vpop.f32.mrf.mxu0
  %v1523 = vadd.f32 %v1324, %v1522
  %v1524 = vpop.f32.mrf.mxu0
  %v1525 = vadd.f32 %v1324, %v1524
  %1526 = vmatmul.bf16.gmra.mxu0 %v1278
  %v1527 = vpop.f32.mrf.mxu0
  %v1528 = vadd.f32 %v1324, %v1527
  %v1529 = vpop.f32.mrf.mxu0
  %v1530 = vadd.f32 %v1324, %v1529
  %1531 = vmatmul.bf16.gmra.mxu0 %v1279
  %v1532 = vpop.f32.mrf.mxu0
  %v1533 = vadd.f32 %v1324, %v1532
  %v1534 = vpop.f32.mrf.mxu0
  %v1535 = vadd.f32 %v1324, %v1534
  %1536 = vdwg.mxu0
  %1537 = vmatpush.bf16.msra.mxu0 %v1454
  %1538 = vmatpush.bf16.msra.mxu0 %v1452
  %1539 = vmatpush.bf16.msra.mxu0 %v1450
  %1540 = vmatpush.bf16.msra.mxu0 %v1448
  %1541 = vmatpush.bf16.msra.mxu0 %v1446
  %1542 = vmatpush.bf16.msra.mxu0 %v1444
  %1543 = vmatpush.bf16.msra.mxu0 %v1442
  %1544 = vmatpush.bf16.msra.mxu0 %v1440
  %1545 = vmatmul.bf16.gmra.mxu0 0
  %v1546 = vpop.f32.mrf.mxu0
  %v1547 = vadd.f32 %v1498, %v1546
  %v1548 = vpop.f32.mrf.mxu0
  %v1549 = vadd.f32 %v1500, %v1548
  %1550 = vmatmul.bf16.gmra.mxu0 0
  %v1551 = vpop.f32.mrf.mxu0
  %v1552 = vadd.f32 %v1503, %v1551
  %v1553 = vpop.f32.mrf.mxu0
  %v1554 = vadd.f32 %v1505, %v1553
  %1555 = vmatmul.bf16.gmra.mxu0 0
  %v1556 = vpop.f32.mrf.mxu0
  %v1557 = vadd.f32 %v1508, %v1556
  %v1558 = vpop.f32.mrf.mxu0
  %v1559 = vadd.f32 %v1510, %v1558
  %1560 = vmatmul.bf16.gmra.mxu0 0
  %v1561 = vpop.f32.mrf.mxu0
  %v1562 = vadd.f32 %v1513, %v1561
  %v1563 = vpop.f32.mrf.mxu0
  %v1564 = vadd.f32 %v1515, %v1563
  %1565 = vmatmul.bf16.gmra.mxu0 0
  %v1566 = vpop.f32.mrf.mxu0
  %v1567 = vadd.f32 %v1518, %v1566
  %v1568 = vpop.f32.mrf.mxu0
  %v1569 = vadd.f32 %v1520, %v1568
  %1570 = vmatmul.bf16.gmra.mxu0 0
  %v1571 = vpop.f32.mrf.mxu0
  %v1572 = vadd.f32 %v1523, %v1571
  %v1573 = vpop.f32.mrf.mxu0
  %v1574 = vadd.f32 %v1525, %v1573
  %1575 = vmatmul.bf16.gmra.mxu0 0
  %v1576 = vpop.f32.mrf.mxu0
  %v1577 = vadd.f32 %v1528, %v1576
  %v1578 = vpop.f32.mrf.mxu0
  %v1579 = vadd.f32 %v1530, %v1578
  %1580 = vmatmul.bf16.gmra.mxu0 0
  %v1581 = vpop.f32.mrf.mxu0
  %v1582 = vadd.f32 %v1533, %v1581
  %v1583 = vpop.f32.mrf.mxu0
  %v1584 = vadd.f32 %v1535, %v1583
  %1585 = vdwg.mxu0
  %1586 = vmatpush.bf16.msra.mxu0 %v1439
  %1587 = vmatpush.bf16.msra.mxu0 %v1437
  %1588 = vmatpush.bf16.msra.mxu0 %v1435
  %1589 = vmatpush.bf16.msra.mxu0 %v1433
  %1590 = vmatpush.bf16.msra.mxu0 %v1431
  %1591 = vmatpush.bf16.msra.mxu0 %v1429
  %1592 = vmatpush.bf16.msra.mxu0 %v1427
  %1593 = vmatpush.bf16.msra.mxu0 %v1425
  %1594 = vmatmul.bf16.gmra.mxu0 %v1272
  %v1595 = vpop.f32.mrf.mxu0
  %v1596 = vadd.f32 %v1325, %v1595
  %v1597 = vpop.f32.mrf.mxu0
  %v1598 = vadd.f32 %v1325, %v1597
  %1599 = vmatmul.bf16.gmra.mxu0 %v1273
  %v1600 = vpop.f32.mrf.mxu0
  %v1601 = vadd.f32 %v1325, %v1600
  %v1602 = vpop.f32.mrf.mxu0
  %v1603 = vadd.f32 %v1325, %v1602
  %1604 = vmatmul.bf16.gmra.mxu0 %v1274
  %v1605 = vpop.f32.mrf.mxu0
  %v1606 = vadd.f32 %v1325, %v1605
  %v1607 = vpop.f32.mrf.mxu0
  %v1608 = vadd.f32 %v1325, %v1607
  %1609 = vmatmul.bf16.gmra.mxu0 %v1275
  %v1610 = vpop.f32.mrf.mxu0
  %v1611 = vadd.f32 %v1325, %v1610
  %v1612 = vpop.f32.mrf.mxu0
  %v1613 = vadd.f32 %v1325, %v1612
  %1614 = vmatmul.bf16.gmra.mxu0 %v1276
  %v1615 = vpop.f32.mrf.mxu0
  %v1616 = vadd.f32 %v1325, %v1615
  %v1617 = vpop.f32.mrf.mxu0
  %v1618 = vadd.f32 %v1325, %v1617
  %1619 = vmatmul.bf16.gmra.mxu0 %v1277
  %v1620 = vpop.f32.mrf.mxu0
  %v1621 = vadd.f32 %v1325, %v1620
  %v1622 = vpop.f32.mrf.mxu0
  %v1623 = vadd.f32 %v1325, %v1622
  %1624 = vmatmul.bf16.gmra.mxu0 %v1278
  %v1625 = vpop.f32.mrf.mxu0
  %v1626 = vadd.f32 %v1325, %v1625
  %v1627 = vpop.f32.mrf.mxu0
  %v1628 = vadd.f32 %v1325, %v1627
  %1629 = vmatmul.bf16.gmra.mxu0 %v1279
  %v1630 = vpop.f32.mrf.mxu0
  %v1631 = vadd.f32 %v1325, %v1630
  %v1632 = vpop.f32.mrf.mxu0
  %v1633 = vadd.f32 %v1325, %v1632
  %1634 = vdwg.mxu0
  %1635 = vmatpush.bf16.msra.mxu0 %v1455
  %1636 = vmatpush.bf16.msra.mxu0 %v1453
  %1637 = vmatpush.bf16.msra.mxu0 %v1451
  %1638 = vmatpush.bf16.msra.mxu0 %v1449
  %1639 = vmatpush.bf16.msra.mxu0 %v1447
  %1640 = vmatpush.bf16.msra.mxu0 %v1445
  %1641 = vmatpush.bf16.msra.mxu0 %v1443
  %1642 = vmatpush.bf16.msra.mxu0 %v1441
  %1643 = vmatmul.bf16.gmra.mxu0 0
  %v1644 = vpop.f32.mrf.mxu0
  %v1645 = vadd.f32 %v1596, %v1644
  %v1646 = vpop.f32.mrf.mxu0
  %v1647 = vadd.f32 %v1598, %v1646
  %1648 = vmatmul.bf16.gmra.mxu0 0
  %v1649 = vpop.f32.mrf.mxu0
  %v1650 = vadd.f32 %v1601, %v1649
  %v1651 = vpop.f32.mrf.mxu0
  %v1652 = vadd.f32 %v1603, %v1651
  %1653 = vmatmul.bf16.gmra.mxu0 0
  %v1654 = vpop.f32.mrf.mxu0
  %v1655 = vadd.f32 %v1606, %v1654
  %v1656 = vpop.f32.mrf.mxu0
  %v1657 = vadd.f32 %v1608, %v1656
  %1658 = vmatmul.bf16.gmra.mxu0 0
  %v1659 = vpop.f32.mrf.mxu0
  %v1660 = vadd.f32 %v1611, %v1659
  %v1661 = vpop.f32.mrf.mxu0
  %v1662 = vadd.f32 %v1613, %v1661
  %1663 = vmatmul.bf16.gmra.mxu0 0
  %v1664 = vpop.f32.mrf.mxu0
  %v1665 = vadd.f32 %v1616, %v1664
  %v1666 = vpop.f32.mrf.mxu0
  %v1667 = vadd.f32 %v1618, %v1666
  %1668 = vmatmul.bf16.gmra.mxu0 0
  %v1669 = vpop.f32.mrf.mxu0
  %v1670 = vadd.f32 %v1621, %v1669
  %v1671 = vpop.f32.mrf.mxu0
  %v1672 = vadd.f32 %v1623, %v1671
  %1673 = vmatmul.bf16.gmra.mxu0 0
  %v1674 = vpop.f32.mrf.mxu0
  %v1675 = vadd.f32 %v1626, %v1674
  %v1676 = vpop.f32.mrf.mxu0
  %v1677 = vadd.f32 %v1628, %v1676
  %1678 = vmatmul.bf16.gmra.mxu0 0
  %v1679 = vpop.f32.mrf.mxu0
  %v1680 = vadd.f32 %v1631, %v1679
  %v1681 = vpop.f32.mrf.mxu0
  %v1682 = vadd.f32 %v1633, %v1681
  %1683 = vdwg.mxu0
  %v1684 = vpack.c.bf16 %v585, %v584
  %v1685 = vpack.c.bf16 %v342, %v341
  %v1686 = vpack.c.bf16 %v587, %v586
  %v1687 = vpack.c.bf16 %v344, %v343
  %v1688 = vpack.c.bf16 %v589, %v588
  %v1689 = vpack.c.bf16 %v346, %v345
  %v1690 = vpack.c.bf16 %v591, %v590
  %v1691 = vpack.c.bf16 %v348, %v347
  %v1692 = vpack.c.bf16 %v593, %v592
  %v1693 = vpack.c.bf16 %v350, %v349
  %v1694 = vpack.c.bf16 %v595, %v594
  %v1695 = vpack.c.bf16 %v352, %v351
  %v1696 = vpack.c.bf16 %v597, %v596
  %v1697 = vpack.c.bf16 %v354, %v353
  %v1698 = vpack.c.bf16 %v599, %v598
  %v1699 = vpack.c.bf16 %v356, %v355
  %s1700 = scalar_lea.vmem %s2, 512
  %v1701 = vld [vmem:[%s1700] sm:$0xff]
  %v1702 = vld [vmem:[%s1700 + $0x8] sm:$0xff]
  %v1703 = vld [vmem:[%s1700 + $0x10] sm:$0xff]
  %v1704 = vld [vmem:[%s1700 + $0x18] sm:$0xff]
  %v1705 = vld [vmem:[%s1700 + $0x20] sm:$0xff]
  %v1706 = vld [vmem:[%s1700 + $0x28] sm:$0xff]
  %v1707 = vld [vmem:[%s1700 + $0x30] sm:$0xff]
  %v1708 = vld [vmem:[%s1700 + $0x38] sm:$0xff]
  %v1709 = vld [vmem:[%s1700 + $0x40] sm:$0xff]
  %v1710 = vld [vmem:[%s1700 + $0x48] sm:$0xff]
  %v1711 = vld [vmem:[%s1700 + $0x50] sm:$0xff]
  %v1712 = vld [vmem:[%s1700 + $0x58] sm:$0xff]
  %v1713 = vld [vmem:[%s1700 + $0x60] sm:$0xff]
  %v1714 = vld [vmem:[%s1700 + $0x68] sm:$0xff]
  %v1715 = vld [vmem:[%s1700 + $0x70] sm:$0xff]
  %v1716 = vld [vmem:[%s1700 + $0x78] sm:$0xff]
  %v1717 = vld [vmem:[%s1700 + $0x80] sm:$0xff]
  %v1718 = vld [vmem:[%s1700 + $0x88] sm:$0xff]
  %v1719 = vld [vmem:[%s1700 + $0x90] sm:$0xff]
  %v1720 = vld [vmem:[%s1700 + $0x98] sm:$0xff]
  %v1721 = vld [vmem:[%s1700 + $0xa0] sm:$0xff]
  %v1722 = vld [vmem:[%s1700 + $0xa8] sm:$0xff]
  %v1723 = vld [vmem:[%s1700 + $0xb0] sm:$0xff]
  %v1724 = vld [vmem:[%s1700 + $0xb8] sm:$0xff]
  %v1725 = vld [vmem:[%s1700 + $0xc0] sm:$0xff]
  %v1726 = vld [vmem:[%s1700 + $0xc8] sm:$0xff]
  %v1727 = vld [vmem:[%s1700 + $0xd0] sm:$0xff]
  %v1728 = vld [vmem:[%s1700 + $0xd8] sm:$0xff]
  %v1729 = vld [vmem:[%s1700 + $0xe0] sm:$0xff]
  %v1730 = vld [vmem:[%s1700 + $0xe8] sm:$0xff]
  %v1731 = vld [vmem:[%s1700 + $0xf0] sm:$0xff]
  %v1732 = vld [vmem:[%s1700 + $0xf8] sm:$0xff]
  %v1765 = vunpack.c.l.b16 %v1701
  %v1766 = vunpack.c.h.b16 %v1701
  %v1767 = vunpack.c.l.b16 %v1702
  %v1768 = vunpack.c.h.b16 %v1702
  %v1769 = vunpack.c.l.b16 %v1703
  %v1770 = vunpack.c.h.b16 %v1703
  %v1771 = vunpack.c.l.b16 %v1704
  %v1772 = vunpack.c.h.b16 %v1704
  %v1773 = vunpack.c.l.b16 %v1705
  %v1774 = vunpack.c.h.b16 %v1705
  %v1775 = vunpack.c.l.b16 %v1706
  %v1776 = vunpack.c.h.b16 %v1706
  %v1777 = vunpack.c.l.b16 %v1707
  %v1778 = vunpack.c.h.b16 %v1707
  %v1779 = vunpack.c.l.b16 %v1708
  %v1780 = vunpack.c.h.b16 %v1708
  %v1781 = vunpack.c.l.b16 %v1709
  %v1782 = vunpack.c.h.b16 %v1709
  %v1783 = vunpack.c.l.b16 %v1710
  %v1784 = vunpack.c.h.b16 %v1710
  %v1785 = vunpack.c.l.b16 %v1711
  %v1786 = vunpack.c.h.b16 %v1711
  %v1787 = vunpack.c.l.b16 %v1712
  %v1788 = vunpack.c.h.b16 %v1712
  %v1789 = vunpack.c.l.b16 %v1713
  %v1790 = vunpack.c.h.b16 %v1713
  %v1791 = vunpack.c.l.b16 %v1714
  %v1792 = vunpack.c.h.b16 %v1714
  %v1793 = vunpack.c.l.b16 %v1715
  %v1794 = vunpack.c.h.b16 %v1715
  %v1795 = vunpack.c.l.b16 %v1716
  %v1796 = vunpack.c.h.b16 %v1716
  %v1797 = vunpack.c.l.b16 %v1717
  %v1798 = vunpack.c.h.b16 %v1717
  %v1799 = vunpack.c.l.b16 %v1718
  %v1800 = vunpack.c.h.b16 %v1718
  %v1801 = vunpack.c.l.b16 %v1719
  %v1802 = vunpack.c.h.b16 %v1719
  %v1803 = vunpack.c.l.b16 %v1720
  %v1804 = vunpack.c.h.b16 %v1720
  %v1805 = vunpack.c.l.b16 %v1721
  %v1806 = vunpack.c.h.b16 %v1721
  %v1807 = vunpack.c.l.b16 %v1722
  %v1808 = vunpack.c.h.b16 %v1722
  %v1809 = vunpack.c.l.b16 %v1723
  %v1810 = vunpack.c.h.b16 %v1723
  %v1811 = vunpack.c.l.b16 %v1724
  %v1812 = vunpack.c.h.b16 %v1724
  %v1813 = vunpack.c.l.b16 %v1725
  %v1814 = vunpack.c.h.b16 %v1725
  %v1815 = vunpack.c.l.b16 %v1726
  %v1816 = vunpack.c.h.b16 %v1726
  %v1817 = vunpack.c.l.b16 %v1727
  %v1818 = vunpack.c.h.b16 %v1727
  %v1819 = vunpack.c.l.b16 %v1728
  %v1820 = vunpack.c.h.b16 %v1728
  %v1821 = vunpack.c.l.b16 %v1729
  %v1822 = vunpack.c.h.b16 %v1729
  %v1823 = vunpack.c.l.b16 %v1730
  %v1824 = vunpack.c.h.b16 %v1730
  %v1825 = vunpack.c.l.b16 %v1731
  %v1826 = vunpack.c.h.b16 %v1731
  %v1827 = vunpack.c.l.b16 %v1732
  %v1828 = vunpack.c.h.b16 %v1732
  %v1829 = vpack.c.b16 %v1767, %v1765
  %v1830 = vpack.c.b16 %v1768, %v1766
  %v1831 = vpack.c.b16 %v1771, %v1769
  %v1832 = vpack.c.b16 %v1772, %v1770
  %v1833 = vpack.c.b16 %v1775, %v1773
  %v1834 = vpack.c.b16 %v1776, %v1774
  %v1835 = vpack.c.b16 %v1779, %v1777
  %v1836 = vpack.c.b16 %v1780, %v1778
  %v1837 = vpack.c.b16 %v1783, %v1781
  %v1838 = vpack.c.b16 %v1784, %v1782
  %v1839 = vpack.c.b16 %v1787, %v1785
  %v1840 = vpack.c.b16 %v1788, %v1786
  %v1841 = vpack.c.b16 %v1791, %v1789
  %v1842 = vpack.c.b16 %v1792, %v1790
  %v1843 = vpack.c.b16 %v1795, %v1793
  %v1844 = vpack.c.b16 %v1796, %v1794
  %v1845 = vpack.c.b16 %v1799, %v1797
  %v1846 = vpack.c.b16 %v1800, %v1798
  %v1847 = vpack.c.b16 %v1803, %v1801
  %v1848 = vpack.c.b16 %v1804, %v1802
  %v1849 = vpack.c.b16 %v1807, %v1805
  %v1850 = vpack.c.b16 %v1808, %v1806
  %v1851 = vpack.c.b16 %v1811, %v1809
  %v1852 = vpack.c.b16 %v1812, %v1810
  %v1853 = vpack.c.b16 %v1815, %v1813
  %v1854 = vpack.c.b16 %v1816, %v1814
  %v1855 = vpack.c.b16 %v1819, %v1817
  %v1856 = vpack.c.b16 %v1820, %v1818
  %v1857 = vpack.c.b16 %v1823, %v1821
  %v1858 = vpack.c.b16 %v1824, %v1822
  %v1859 = vpack.c.b16 %v1827, %v1825
  %v1860 = vpack.c.b16 %v1828, %v1826
  %1893 = vmatpush.bf16.msra.mxu0 %v1843
  %1894 = vmatpush.bf16.msra.mxu0 %v1841
  %1895 = vmatpush.bf16.msra.mxu0 %v1839
  %1896 = vmatpush.bf16.msra.mxu0 %v1837
  %1897 = vmatpush.bf16.msra.mxu0 %v1835
  %1898 = vmatpush.bf16.msra.mxu0 %v1833
  %1899 = vmatpush.bf16.msra.mxu0 %v1831
  %1900 = vmatpush.bf16.msra.mxu0 %v1829
  %1901 = vmatmul.bf16.gmra.mxu0 %v1684
  %v1902 = vpop.f32.mrf.mxu0
  %v1903 = vadd.f32 0.0, %v1902
  %v1904 = vpop.f32.mrf.mxu0
  %v1905 = vadd.f32 0.0, %v1904
  %1906 = vmatmul.bf16.gmra.mxu0 %v1686
  %v1907 = vpop.f32.mrf.mxu0
  %v1908 = vadd.f32 0.0, %v1907
  %v1909 = vpop.f32.mrf.mxu0
  %v1910 = vadd.f32 0.0, %v1909
  %1911 = vmatmul.bf16.gmra.mxu0 %v1688
  %v1912 = vpop.f32.mrf.mxu0
  %v1913 = vadd.f32 0.0, %v1912
  %v1914 = vpop.f32.mrf.mxu0
  %v1915 = vadd.f32 0.0, %v1914
  %1916 = vmatmul.bf16.gmra.mxu0 %v1690
  %v1917 = vpop.f32.mrf.mxu0
  %v1918 = vadd.f32 0.0, %v1917
  %v1919 = vpop.f32.mrf.mxu0
  %v1920 = vadd.f32 0.0, %v1919
  %1921 = vmatmul.bf16.gmra.mxu0 %v1692
  %v1922 = vpop.f32.mrf.mxu0
  %v1923 = vadd.f32 0.0, %v1922
  %v1924 = vpop.f32.mrf.mxu0
  %v1925 = vadd.f32 0.0, %v1924
  %1926 = vmatmul.bf16.gmra.mxu0 %v1694
  %v1927 = vpop.f32.mrf.mxu0
  %v1928 = vadd.f32 0.0, %v1927
  %v1929 = vpop.f32.mrf.mxu0
  %v1930 = vadd.f32 0.0, %v1929
  %1931 = vmatmul.bf16.gmra.mxu0 %v1696
  %v1932 = vpop.f32.mrf.mxu0
  %v1933 = vadd.f32 0.0, %v1932
  %v1934 = vpop.f32.mrf.mxu0
  %v1935 = vadd.f32 0.0, %v1934
  %1936 = vmatmul.bf16.gmra.mxu0 %v1698
  %v1937 = vpop.f32.mrf.mxu0
  %v1938 = vadd.f32 0.0, %v1937
  %v1939 = vpop.f32.mrf.mxu0
  %v1940 = vadd.f32 0.0, %v1939
  %1941 = vdwg.mxu0
  %1942 = vmatpush.bf16.msra.mxu0 %v1859
  %1943 = vmatpush.bf16.msra.mxu0 %v1857
  %1944 = vmatpush.bf16.msra.mxu0 %v1855
  %1945 = vmatpush.bf16.msra.mxu0 %v1853
  %1946 = vmatpush.bf16.msra.mxu0 %v1851
  %1947 = vmatpush.bf16.msra.mxu0 %v1849
  %1948 = vmatpush.bf16.msra.mxu0 %v1847
  %1949 = vmatpush.bf16.msra.mxu0 %v1845
  %1950 = vmatmul.bf16.gmra.mxu0 %v1685
  %v1951 = vpop.f32.mrf.mxu0
  %v1952 = vadd.f32 %v1903, %v1951
  %v1953 = vpop.f32.mrf.mxu0
  %v1954 = vadd.f32 %v1905, %v1953
  %1955 = vmatmul.bf16.gmra.mxu0 %v1687
  %v1956 = vpop.f32.mrf.mxu0
  %v1957 = vadd.f32 %v1908, %v1956
  %v1958 = vpop.f32.mrf.mxu0
  %v1959 = vadd.f32 %v1910, %v1958
  %1960 = vmatmul.bf16.gmra.mxu0 %v1689
  %v1961 = vpop.f32.mrf.mxu0
  %v1962 = vadd.f32 %v1913, %v1961
  %v1963 = vpop.f32.mrf.mxu0
  %v1964 = vadd.f32 %v1915, %v1963
  %1965 = vmatmul.bf16.gmra.mxu0 %v1691
  %v1966 = vpop.f32.mrf.mxu0
  %v1967 = vadd.f32 %v1918, %v1966
  %v1968 = vpop.f32.mrf.mxu0
  %v1969 = vadd.f32 %v1920, %v1968
  %1970 = vmatmul.bf16.gmra.mxu0 %v1693
  %v1971 = vpop.f32.mrf.mxu0
  %v1972 = vadd.f32 %v1923, %v1971
  %v1973 = vpop.f32.mrf.mxu0
  %v1974 = vadd.f32 %v1925, %v1973
  %1975 = vmatmul.bf16.gmra.mxu0 %v1695
  %v1976 = vpop.f32.mrf.mxu0
  %v1977 = vadd.f32 %v1928, %v1976
  %v1978 = vpop.f32.mrf.mxu0
  %v1979 = vadd.f32 %v1930, %v1978
  %1980 = vmatmul.bf16.gmra.mxu0 %v1697
  %v1981 = vpop.f32.mrf.mxu0
  %v1982 = vadd.f32 %v1933, %v1981
  %v1983 = vpop.f32.mrf.mxu0
  %v1984 = vadd.f32 %v1935, %v1983
  %1985 = vmatmul.bf16.gmra.mxu0 %v1699
  %v1986 = vpop.f32.mrf.mxu0
  %v1987 = vadd.f32 %v1938, %v1986
  %v1988 = vpop.f32.mrf.mxu0
  %v1989 = vadd.f32 %v1940, %v1988
  %1990 = vdwg.mxu0
  %1991 = vmatpush.bf16.msra.mxu0 %v1844
  %1992 = vmatpush.bf16.msra.mxu0 %v1842
  %1993 = vmatpush.bf16.msra.mxu0 %v1840
  %1994 = vmatpush.bf16.msra.mxu0 %v1838
  %1995 = vmatpush.bf16.msra.mxu0 %v1836
  %1996 = vmatpush.bf16.msra.mxu0 %v1834
  %1997 = vmatpush.bf16.msra.mxu0 %v1832
  %1998 = vmatpush.bf16.msra.mxu0 %v1830
  %1999 = vmatmul.bf16.gmra.mxu0 %v1684
  %v2000 = vpop.f32.mrf.mxu0
  %v2001 = vadd.f32 0.0, %v2000
  %v2002 = vpop.f32.mrf.mxu0
  %v2003 = vadd.f32 0.0, %v2002
  %2004 = vmatmul.bf16.gmra.mxu0 %v1686
  %v2005 = vpop.f32.mrf.mxu0
  %v2006 = vadd.f32 0.0, %v2005
  %v2007 = vpop.f32.mrf.mxu0
  %v2008 = vadd.f32 0.0, %v2007
  %2009 = vmatmul.bf16.gmra.mxu0 %v1688
  %v2010 = vpop.f32.mrf.mxu0
  %v2011 = vadd.f32 0.0, %v2010
  %v2012 = vpop.f32.mrf.mxu0
  %v2013 = vadd.f32 0.0, %v2012
  %2014 = vmatmul.bf16.gmra.mxu0 %v1690
  %v2015 = vpop.f32.mrf.mxu0
  %v2016 = vadd.f32 0.0, %v2015
  %v2017 = vpop.f32.mrf.mxu0
  %v2018 = vadd.f32 0.0, %v2017
  %2019 = vmatmul.bf16.gmra.mxu0 %v1692
  %v2020 = vpop.f32.mrf.mxu0
  %v2021 = vadd.f32 0.0, %v2020
  %v2022 = vpop.f32.mrf.mxu0
  %v2023 = vadd.f32 0.0, %v2022
  %2024 = vmatmul.bf16.gmra.mxu0 %v1694
  %v2025 = vpop.f32.mrf.mxu0
  %v2026 = vadd.f32 0.0, %v2025
  %v2027 = vpop.f32.mrf.mxu0
  %v2028 = vadd.f32 0.0, %v2027
  %2029 = vmatmul.bf16.gmra.mxu0 %v1696
  %v2030 = vpop.f32.mrf.mxu0
  %v2031 = vadd.f32 0.0, %v2030
  %v2032 = vpop.f32.mrf.mxu0
  %v2033 = vadd.f32 0.0, %v2032
  %2034 = vmatmul.bf16.gmra.mxu0 %v1698
  %v2035 = vpop.f32.mrf.mxu0
  %v2036 = vadd.f32 0.0, %v2035
  %v2037 = vpop.f32.mrf.mxu0
  %v2038 = vadd.f32 0.0, %v2037
  %2039 = vdwg.mxu0
  %2040 = vmatpush.bf16.msra.mxu0 %v1860
  %2041 = vmatpush.bf16.msra.mxu0 %v1858
  %2042 = vmatpush.bf16.msra.mxu0 %v1856
  %2043 = vmatpush.bf16.msra.mxu0 %v1854
  %2044 = vmatpush.bf16.msra.mxu0 %v1852
  %2045 = vmatpush.bf16.msra.mxu0 %v1850
  %2046 = vmatpush.bf16.msra.mxu0 %v1848
  %2047 = vmatpush.bf16.msra.mxu0 %v1846
  %2048 = vmatmul.bf16.gmra.mxu0 %v1685
  %v2049 = vpop.f32.mrf.mxu0
  %v2050 = vadd.f32 %v2001, %v2049
  %v2051 = vpop.f32.mrf.mxu0
  %v2052 = vadd.f32 %v2003, %v2051
  %2053 = vmatmul.bf16.gmra.mxu0 %v1687
  %v2054 = vpop.f32.mrf.mxu0
  %v2055 = vadd.f32 %v2006, %v2054
  %v2056 = vpop.f32.mrf.mxu0
  %v2057 = vadd.f32 %v2008, %v2056
  %2058 = vmatmul.bf16.gmra.mxu0 %v1689
  %v2059 = vpop.f32.mrf.mxu0
  %v2060 = vadd.f32 %v2011, %v2059
  %v2061 = vpop.f32.mrf.mxu0
  %v2062 = vadd.f32 %v2013, %v2061
  %2063 = vmatmul.bf16.gmra.mxu0 %v1691
  %v2064 = vpop.f32.mrf.mxu0
  %v2065 = vadd.f32 %v2016, %v2064
  %v2066 = vpop.f32.mrf.mxu0
  %v2067 = vadd.f32 %v2018, %v2066
  %2068 = vmatmul.bf16.gmra.mxu0 %v1693
  %v2069 = vpop.f32.mrf.mxu0
  %v2070 = vadd.f32 %v2021, %v2069
  %v2071 = vpop.f32.mrf.mxu0
  %v2072 = vadd.f32 %v2023, %v2071
  %2073 = vmatmul.bf16.gmra.mxu0 %v1695
  %v2074 = vpop.f32.mrf.mxu0
  %v2075 = vadd.f32 %v2026, %v2074
  %v2076 = vpop.f32.mrf.mxu0
  %v2077 = vadd.f32 %v2028, %v2076
  %2078 = vmatmul.bf16.gmra.mxu0 %v1697
  %v2079 = vpop.f32.mrf.mxu0
  %v2080 = vadd.f32 %v2031, %v2079
  %v2081 = vpop.f32.mrf.mxu0
  %v2082 = vadd.f32 %v2033, %v2081
  %2083 = vmatmul.bf16.gmra.mxu0 %v1699
  %v2084 = vpop.f32.mrf.mxu0
  %v2085 = vadd.f32 %v2036, %v2084
  %v2086 = vpop.f32.mrf.mxu0
  %v2087 = vadd.f32 %v2038, %v2086
  %2088 = vdwg.mxu0
  %v2089 = vadd.f32 %v1547, %v1952
  %v2090 = vadd.f32 %v1645, %v2050
  %v2091 = vadd.f32 %v1549, %v1954
  %v2092 = vadd.f32 %v1647, %v2052
  %v2093 = vadd.f32 %v1552, %v1957
  %v2094 = vadd.f32 %v1650, %v2055
  %v2095 = vadd.f32 %v1554, %v1959
  %v2096 = vadd.f32 %v1652, %v2057
  %v2097 = vadd.f32 %v1557, %v1962
  %v2098 = vadd.f32 %v1655, %v2060
  %v2099 = vadd.f32 %v1559, %v1964
  %v2100 = vadd.f32 %v1657, %v2062
  %v2101 = vadd.f32 %v1562, %v1967
  %v2102 = vadd.f32 %v1660, %v2065
  %v2103 = vadd.f32 %v1564, %v1969
  %v2104 = vadd.f32 %v1662, %v2067
  %v2105 = vadd.f32 %v1567, %v1972
  %v2106 = vadd.f32 %v1665, %v2070
  %v2107 = vadd.f32 %v1569, %v1974
  %v2108 = vadd.f32 %v1667, %v2072
  %v2109 = vadd.f32 %v1572, %v1977
  %v2110 = vadd.f32 %v1670, %v2075
  %v2111 = vadd.f32 %v1574, %v1979
  %v2112 = vadd.f32 %v1672, %v2077
  %v2113 = vadd.f32 %v1577, %v1982
  %v2114 = vadd.f32 %v1675, %v2080
  %v2115 = vadd.f32 %v1579, %v1984
  %v2116 = vadd.f32 %v1677, %v2082
  %v2117 = vadd.f32 %v1582, %v1987
  %v2118 = vadd.f32 %v1680, %v2085
  %v2119 = vadd.f32 %v1584, %v1989
  %v2120 = vadd.f32 %v1682, %v2087
  %v2121 = vxor.u32 %v2089, 2147483648
  %v2122 = vxor.u32 %v2090, 2147483648
  %v2123 = vxor.u32 %v2091, 2147483648
  %v2124 = vxor.u32 %v2092, 2147483648
  %v2125 = vxor.u32 %v2093, 2147483648
  %v2126 = vxor.u32 %v2094, 2147483648
  %v2127 = vxor.u32 %v2095, 2147483648
  %v2128 = vxor.u32 %v2096, 2147483648
  %v2129 = vxor.u32 %v2097, 2147483648
  %v2130 = vxor.u32 %v2098, 2147483648
  %v2131 = vxor.u32 %v2099, 2147483648
  %v2132 = vxor.u32 %v2100, 2147483648
  %v2133 = vxor.u32 %v2101, 2147483648
  %v2134 = vxor.u32 %v2102, 2147483648
  %v2135 = vxor.u32 %v2103, 2147483648
  %v2136 = vxor.u32 %v2104, 2147483648
  %v2137 = vxor.u32 %v2105, 2147483648
  %v2138 = vxor.u32 %v2106, 2147483648
  %v2139 = vxor.u32 %v2107, 2147483648
  %v2140 = vxor.u32 %v2108, 2147483648
  %v2141 = vxor.u32 %v2109, 2147483648
  %v2142 = vxor.u32 %v2110, 2147483648
  %v2143 = vxor.u32 %v2111, 2147483648
  %v2144 = vxor.u32 %v2112, 2147483648
  %v2145 = vxor.u32 %v2113, 2147483648
  %v2146 = vxor.u32 %v2114, 2147483648
  %v2147 = vxor.u32 %v2115, 2147483648
  %v2148 = vxor.u32 %v2116, 2147483648
  %v2149 = vxor.u32 %v2117, 2147483648
  %v2150 = vxor.u32 %v2118, 2147483648
  %v2151 = vxor.u32 %v2119, 2147483648
  %v2152 = vxor.u32 %v2120, 2147483648
  %v2153 = vmul.f32 %v2121, 1.442695
  %v2154 = vpow.pop %v2153
  %v2155 = vmul.f32 %v2122, 1.442695
  %v2156 = vpow.pop %v2155
  %v2157 = vmul.f32 %v2123, 1.442695
  %v2158 = vpow.pop %v2157
  %v2159 = vmul.f32 %v2124, 1.442695
  %v2160 = vpow.pop %v2159
  %v2161 = vmul.f32 %v2125, 1.442695
  %v2162 = vpow.pop %v2161
  %v2163 = vmul.f32 %v2126, 1.442695
  %v2164 = vpow.pop %v2163
  %v2165 = vmul.f32 %v2127, 1.442695
  %v2166 = vpow.pop %v2165
  %v2167 = vmul.f32 %v2128, 1.442695
  %v2168 = vpow.pop %v2167
  %v2169 = vmul.f32 %v2129, 1.442695
  %v2170 = vpow.pop %v2169
  %v2171 = vmul.f32 %v2130, 1.442695
  %v2172 = vpow.pop %v2171
  %v2173 = vmul.f32 %v2131, 1.442695
  %v2174 = vpow.pop %v2173
  %v2175 = vmul.f32 %v2132, 1.442695
  %v2176 = vpow.pop %v2175
  %v2177 = vmul.f32 %v2133, 1.442695
  %v2178 = vpow.pop %v2177
  %v2179 = vmul.f32 %v2134, 1.442695
  %v2180 = vpow.pop %v2179
  %v2181 = vmul.f32 %v2135, 1.442695
  %v2182 = vpow.pop %v2181
  %v2183 = vmul.f32 %v2136, 1.442695
  %v2184 = vpow.pop %v2183
  %v2185 = vmul.f32 %v2137, 1.442695
  %v2186 = vpow.pop %v2185
  %v2187 = vmul.f32 %v2138, 1.442695
  %v2188 = vpow.pop %v2187
  %v2189 = vmul.f32 %v2139, 1.442695
  %v2190 = vpow.pop %v2189
  %v2191 = vmul.f32 %v2140, 1.442695
  %v2192 = vpow.pop %v2191
  %v2193 = vmul.f32 %v2141, 1.442695
  %v2194 = vpow.pop %v2193
  %v2195 = vmul.f32 %v2142, 1.442695
  %v2196 = vpow.pop %v2195
  %v2197 = vmul.f32 %v2143, 1.442695
  %v2198 = vpow.pop %v2197
  %v2199 = vmul.f32 %v2144, 1.442695
  %v2200 = vpow.pop %v2199
  %v2201 = vmul.f32 %v2145, 1.442695
  %v2202 = vpow.pop %v2201
  %v2203 = vmul.f32 %v2146, 1.442695
  %v2204 = vpow.pop %v2203
  %v2205 = vmul.f32 %v2147, 1.442695
  %v2206 = vpow.pop %v2205
  %v2207 = vmul.f32 %v2148, 1.442695
  %v2208 = vpow.pop %v2207
  %v2209 = vmul.f32 %v2149, 1.442695
  %v2210 = vpow.pop %v2209
  %v2211 = vmul.f32 %v2150, 1.442695
  %v2212 = vpow.pop %v2211
  %v2213 = vmul.f32 %v2151, 1.442695
  %v2214 = vpow.pop %v2213
  %v2215 = vmul.f32 %v2152, 1.442695
  %v2216 = vpow.pop %v2215
  %v2217 = vadd.f32 %v2154, 1.0
  %v2218 = vadd.f32 %v2156, 1.0
  %v2219 = vadd.f32 %v2158, 1.0
  %v2220 = vadd.f32 %v2160, 1.0
  %v2221 = vadd.f32 %v2162, 1.0
  %v2222 = vadd.f32 %v2164, 1.0
  %v2223 = vadd.f32 %v2166, 1.0
  %v2224 = vadd.f32 %v2168, 1.0
  %v2225 = vadd.f32 %v2170, 1.0
  %v2226 = vadd.f32 %v2172, 1.0
  %v2227 = vadd.f32 %v2174, 1.0
  %v2228 = vadd.f32 %v2176, 1.0
  %v2229 = vadd.f32 %v2178, 1.0
  %v2230 = vadd.f32 %v2180, 1.0
  %v2231 = vadd.f32 %v2182, 1.0
  %v2232 = vadd.f32 %v2184, 1.0
  %v2233 = vadd.f32 %v2186, 1.0
  %v2234 = vadd.f32 %v2188, 1.0
  %v2235 = vadd.f32 %v2190, 1.0
  %v2236 = vadd.f32 %v2192, 1.0
  %v2237 = vadd.f32 %v2194, 1.0
  %v2238 = vadd.f32 %v2196, 1.0
  %v2239 = vadd.f32 %v2198, 1.0
  %v2240 = vadd.f32 %v2200, 1.0
  %v2241 = vadd.f32 %v2202, 1.0
  %v2242 = vadd.f32 %v2204, 1.0
  %v2243 = vadd.f32 %v2206, 1.0
  %v2244 = vadd.f32 %v2208, 1.0
  %v2245 = vadd.f32 %v2210, 1.0
  %v2246 = vadd.f32 %v2212, 1.0
  %v2247 = vadd.f32 %v2214, 1.0
  %v2248 = vadd.f32 %v2216, 1.0
  %v2249 = vrcp.pop %v2217
  %v2250 = vmul.f32 %v2217, %v2249
  %v2251 = vsub.f32 1.0, %v2250
  %v2252 = vmul.f32 %v2249, %v2251
  %v2253 = vadd.f32 %v2249, %v2252
  %vm2254 = vweird.f32 %v2217
  %vm2255 = vweird.f32 %v2249
  %vm2256 = vmor %vm2254, %vm2255
  %v2257 = vsel %vm2256, %v2249, %v2253
  %v2258 = vand.u32 2147483647, %v2217
  %vm2259 = vcmp.eq.f32.partialorder %v2258, 8.507059e+37
  %v2260 = vand.u32 %v2217, 2147483648
  %v2261 = vor.u32 1.1754944e-38, %v2260
  %v2262 = vsel %vm2259, %v2261, %v2257
  %v2263 = vmul.f32 1.0, %v2262
  %v2264 = vrcp.pop %v2218
  %v2265 = vmul.f32 %v2218, %v2264
  %v2266 = vsub.f32 1.0, %v2265
  %v2267 = vmul.f32 %v2264, %v2266
  %v2268 = vadd.f32 %v2264, %v2267
  %vm2269 = vweird.f32 %v2218
  %vm2270 = vweird.f32 %v2264
  %vm2271 = vmor %vm2269, %vm2270
  %v2272 = vsel %vm2271, %v2264, %v2268
  %v2273 = vand.u32 2147483647, %v2218
  %vm2274 = vcmp.eq.f32.partialorder %v2273, 8.507059e+37
  %v2275 = vand.u32 %v2218, 2147483648
  %v2276 = vor.u32 1.1754944e-38, %v2275
  %v2277 = vsel %vm2274, %v2276, %v2272
  %v2278 = vmul.f32 1.0, %v2277
  %v2279 = vrcp.pop %v2219
  %v2280 = vmul.f32 %v2219, %v2279
  %v2281 = vsub.f32 1.0, %v2280
  %v2282 = vmul.f32 %v2279, %v2281
  %v2283 = vadd.f32 %v2279, %v2282
  %vm2284 = vweird.f32 %v2219
  %vm2285 = vweird.f32 %v2279
  %vm2286 = vmor %vm2284, %vm2285
  %v2287 = vsel %vm2286, %v2279, %v2283
  %v2288 = vand.u32 2147483647, %v2219
  %vm2289 = vcmp.eq.f32.partialorder %v2288, 8.507059e+37
  %v2290 = vand.u32 %v2219, 2147483648
  %v2291 = vor.u32 1.1754944e-38, %v2290
  %v2292 = vsel %vm2289, %v2291, %v2287
  %v2293 = vmul.f32 1.0, %v2292
  %v2294 = vrcp.pop %v2220
  %v2295 = vmul.f32 %v2220, %v2294
  %v2296 = vsub.f32 1.0, %v2295
  %v2297 = vmul.f32 %v2294, %v2296
  %v2298 = vadd.f32 %v2294, %v2297
  %vm2299 = vweird.f32 %v2220
  %vm2300 = vweird.f32 %v2294
  %vm2301 = vmor %vm2299, %vm2300
  %v2302 = vsel %vm2301, %v2294, %v2298
  %v2303 = vand.u32 2147483647, %v2220
  %vm2304 = vcmp.eq.f32.partialorder %v2303, 8.507059e+37
  %v2305 = vand.u32 %v2220, 2147483648
  %v2306 = vor.u32 1.1754944e-38, %v2305
  %v2307 = vsel %vm2304, %v2306, %v2302
  %v2308 = vmul.f32 1.0, %v2307
  %v2309 = vrcp.pop %v2221
  %v2310 = vmul.f32 %v2221, %v2309
  %v2311 = vsub.f32 1.0, %v2310
  %v2312 = vmul.f32 %v2309, %v2311
  %v2313 = vadd.f32 %v2309, %v2312
  %vm2314 = vweird.f32 %v2221
  %vm2315 = vweird.f32 %v2309
  %vm2316 = vmor %vm2314, %vm2315
  %v2317 = vsel %vm2316, %v2309, %v2313
  %v2318 = vand.u32 2147483647, %v2221
  %vm2319 = vcmp.eq.f32.partialorder %v2318, 8.507059e+37
  %v2320 = vand.u32 %v2221, 2147483648
  %v2321 = vor.u32 1.1754944e-38, %v2320
  %v2322 = vsel %vm2319, %v2321, %v2317
  %v2323 = vmul.f32 1.0, %v2322
  %v2324 = vrcp.pop %v2222
  %v2325 = vmul.f32 %v2222, %v2324
  %v2326 = vsub.f32 1.0, %v2325
  %v2327 = vmul.f32 %v2324, %v2326
  %v2328 = vadd.f32 %v2324, %v2327
  %vm2329 = vweird.f32 %v2222
  %vm2330 = vweird.f32 %v2324
  %vm2331 = vmor %vm2329, %vm2330
  %v2332 = vsel %vm2331, %v2324, %v2328
  %v2333 = vand.u32 2147483647, %v2222
  %vm2334 = vcmp.eq.f32.partialorder %v2333, 8.507059e+37
  %v2335 = vand.u32 %v2222, 2147483648
  %v2336 = vor.u32 1.1754944e-38, %v2335
  %v2337 = vsel %vm2334, %v2336, %v2332
  %v2338 = vmul.f32 1.0, %v2337
  %v2339 = vrcp.pop %v2223
  %v2340 = vmul.f32 %v2223, %v2339
  %v2341 = vsub.f32 1.0, %v2340
  %v2342 = vmul.f32 %v2339, %v2341
  %v2343 = vadd.f32 %v2339, %v2342
  %vm2344 = vweird.f32 %v2223
  %vm2345 = vweird.f32 %v2339
  %vm2346 = vmor %vm2344, %vm2345
  %v2347 = vsel %vm2346, %v2339, %v2343
  %v2348 = vand.u32 2147483647, %v2223
  %vm2349 = vcmp.eq.f32.partialorder %v2348, 8.507059e+37
  %v2350 = vand.u32 %v2223, 2147483648
  %v2351 = vor.u32 1.1754944e-38, %v2350
  %v2352 = vsel %vm2349, %v2351, %v2347
  %v2353 = vmul.f32 1.0, %v2352
  %v2354 = vrcp.pop %v2224
  %v2355 = vmul.f32 %v2224, %v2354
  %v2356 = vsub.f32 1.0, %v2355
  %v2357 = vmul.f32 %v2354, %v2356
  %v2358 = vadd.f32 %v2354, %v2357
  %vm2359 = vweird.f32 %v2224
  %vm2360 = vweird.f32 %v2354
  %vm2361 = vmor %vm2359, %vm2360
  %v2362 = vsel %vm2361, %v2354, %v2358
  %v2363 = vand.u32 2147483647, %v2224
  %vm2364 = vcmp.eq.f32.partialorder %v2363, 8.507059e+37
  %v2365 = vand.u32 %v2224, 2147483648
  %v2366 = vor.u32 1.1754944e-38, %v2365
  %v2367 = vsel %vm2364, %v2366, %v2362
  %v2368 = vmul.f32 1.0, %v2367
  %v2369 = vrcp.pop %v2225
  %v2370 = vmul.f32 %v2225, %v2369
  %v2371 = vsub.f32 1.0, %v2370
  %v2372 = vmul.f32 %v2369, %v2371
  %v2373 = vadd.f32 %v2369, %v2372
  %vm2374 = vweird.f32 %v2225
  %vm2375 = vweird.f32 %v2369
  %vm2376 = vmor %vm2374, %vm2375
  %v2377 = vsel %vm2376, %v2369, %v2373
  %v2378 = vand.u32 2147483647, %v2225
  %vm2379 = vcmp.eq.f32.partialorder %v2378, 8.507059e+37
  %v2380 = vand.u32 %v2225, 2147483648
  %v2381 = vor.u32 1.1754944e-38, %v2380
  %v2382 = vsel %vm2379, %v2381, %v2377
  %v2383 = vmul.f32 1.0, %v2382
  %v2384 = vrcp.pop %v2226
  %v2385 = vmul.f32 %v2226, %v2384
  %v2386 = vsub.f32 1.0, %v2385
  %v2387 = vmul.f32 %v2384, %v2386
  %v2388 = vadd.f32 %v2384, %v2387
  %vm2389 = vweird.f32 %v2226
  %vm2390 = vweird.f32 %v2384
  %vm2391 = vmor %vm2389, %vm2390
  %v2392 = vsel %vm2391, %v2384, %v2388
  %v2393 = vand.u32 2147483647, %v2226
  %vm2394 = vcmp.eq.f32.partialorder %v2393, 8.507059e+37
  %v2395 = vand.u32 %v2226, 2147483648
  %v2396 = vor.u32 1.1754944e-38, %v2395
  %v2397 = vsel %vm2394, %v2396, %v2392
  %v2398 = vmul.f32 1.0, %v2397
  %v2399 = vrcp.pop %v2227
  %v2400 = vmul.f32 %v2227, %v2399
  %v2401 = vsub.f32 1.0, %v2400
  %v2402 = vmul.f32 %v2399, %v2401
  %v2403 = vadd.f32 %v2399, %v2402
  %vm2404 = vweird.f32 %v2227
  %vm2405 = vweird.f32 %v2399
  %vm2406 = vmor %vm2404, %vm2405
  %v2407 = vsel %vm2406, %v2399, %v2403
  %v2408 = vand.u32 2147483647, %v2227
  %vm2409 = vcmp.eq.f32.partialorder %v2408, 8.507059e+37
  %v2410 = vand.u32 %v2227, 2147483648
  %v2411 = vor.u32 1.1754944e-38, %v2410
  %v2412 = vsel %vm2409, %v2411, %v2407
  %v2413 = vmul.f32 1.0, %v2412
  %v2414 = vrcp.pop %v2228
  %v2415 = vmul.f32 %v2228, %v2414
  %v2416 = vsub.f32 1.0, %v2415
  %v2417 = vmul.f32 %v2414, %v2416
  %v2418 = vadd.f32 %v2414, %v2417
  %vm2419 = vweird.f32 %v2228
  %vm2420 = vweird.f32 %v2414
  %vm2421 = vmor %vm2419, %vm2420
  %v2422 = vsel %vm2421, %v2414, %v2418
  %v2423 = vand.u32 2147483647, %v2228
  %vm2424 = vcmp.eq.f32.partialorder %v2423, 8.507059e+37
  %v2425 = vand.u32 %v2228, 2147483648
  %v2426 = vor.u32 1.1754944e-38, %v2425
  %v2427 = vsel %vm2424, %v2426, %v2422
  %v2428 = vmul.f32 1.0, %v2427
  %v2429 = vrcp.pop %v2229
  %v2430 = vmul.f32 %v2229, %v2429
  %v2431 = vsub.f32 1.0, %v2430
  %v2432 = vmul.f32 %v2429, %v2431
  %v2433 = vadd.f32 %v2429, %v2432
  %vm2434 = vweird.f32 %v2229
  %vm2435 = vweird.f32 %v2429
  %vm2436 = vmor %vm2434, %vm2435
  %v2437 = vsel %vm2436, %v2429, %v2433
  %v2438 = vand.u32 2147483647, %v2229
  %vm2439 = vcmp.eq.f32.partialorder %v2438, 8.507059e+37
  %v2440 = vand.u32 %v2229, 2147483648
  %v2441 = vor.u32 1.1754944e-38, %v2440
  %v2442 = vsel %vm2439, %v2441, %v2437
  %v2443 = vmul.f32 1.0, %v2442
  %v2444 = vrcp.pop %v2230
  %v2445 = vmul.f32 %v2230, %v2444
  %v2446 = vsub.f32 1.0, %v2445
  %v2447 = vmul.f32 %v2444, %v2446
  %v2448 = vadd.f32 %v2444, %v2447
  %vm2449 = vweird.f32 %v2230
  %vm2450 = vweird.f32 %v2444
  %vm2451 = vmor %vm2449, %vm2450
  %v2452 = vsel %vm2451, %v2444, %v2448
  %v2453 = vand.u32 2147483647, %v2230
  %vm2454 = vcmp.eq.f32.partialorder %v2453, 8.507059e+37
  %v2455 = vand.u32 %v2230, 2147483648
  %v2456 = vor.u32 1.1754944e-38, %v2455
  %v2457 = vsel %vm2454, %v2456, %v2452
  %v2458 = vmul.f32 1.0, %v2457
  %v2459 = vrcp.pop %v2231
  %v2460 = vmul.f32 %v2231, %v2459
  %v2461 = vsub.f32 1.0, %v2460
  %v2462 = vmul.f32 %v2459, %v2461
  %v2463 = vadd.f32 %v2459, %v2462
  %vm2464 = vweird.f32 %v2231
  %vm2465 = vweird.f32 %v2459
  %vm2466 = vmor %vm2464, %vm2465
  %v2467 = vsel %vm2466, %v2459, %v2463
  %v2468 = vand.u32 2147483647, %v2231
  %vm2469 = vcmp.eq.f32.partialorder %v2468, 8.507059e+37
  %v2470 = vand.u32 %v2231, 2147483648
  %v2471 = vor.u32 1.1754944e-38, %v2470
  %v2472 = vsel %vm2469, %v2471, %v2467
  %v2473 = vmul.f32 1.0, %v2472
  %v2474 = vrcp.pop %v2232
  %v2475 = vmul.f32 %v2232, %v2474
  %v2476 = vsub.f32 1.0, %v2475
  %v2477 = vmul.f32 %v2474, %v2476
  %v2478 = vadd.f32 %v2474, %v2477
  %vm2479 = vweird.f32 %v2232
  %vm2480 = vweird.f32 %v2474
  %vm2481 = vmor %vm2479, %vm2480
  %v2482 = vsel %vm2481, %v2474, %v2478
  %v2483 = vand.u32 2147483647, %v2232
  %vm2484 = vcmp.eq.f32.partialorder %v2483, 8.507059e+37
  %v2485 = vand.u32 %v2232, 2147483648
  %v2486 = vor.u32 1.1754944e-38, %v2485
  %v2487 = vsel %vm2484, %v2486, %v2482
  %v2488 = vmul.f32 1.0, %v2487
  %v2489 = vrcp.pop %v2233
  %v2490 = vmul.f32 %v2233, %v2489
  %v2491 = vsub.f32 1.0, %v2490
  %v2492 = vmul.f32 %v2489, %v2491
  %v2493 = vadd.f32 %v2489, %v2492
  %vm2494 = vweird.f32 %v2233
  %vm2495 = vweird.f32 %v2489
  %vm2496 = vmor %vm2494, %vm2495
  %v2497 = vsel %vm2496, %v2489, %v2493
  %v2498 = vand.u32 2147483647, %v2233
  %vm2499 = vcmp.eq.f32.partialorder %v2498, 8.507059e+37
  %v2500 = vand.u32 %v2233, 2147483648
  %v2501 = vor.u32 1.1754944e-38, %v2500
  %v2502 = vsel %vm2499, %v2501, %v2497
  %v2503 = vmul.f32 1.0, %v2502
  %v2504 = vrcp.pop %v2234
  %v2505 = vmul.f32 %v2234, %v2504
  %v2506 = vsub.f32 1.0, %v2505
  %v2507 = vmul.f32 %v2504, %v2506
  %v2508 = vadd.f32 %v2504, %v2507
  %vm2509 = vweird.f32 %v2234
  %vm2510 = vweird.f32 %v2504
  %vm2511 = vmor %vm2509, %vm2510
  %v2512 = vsel %vm2511, %v2504, %v2508
  %v2513 = vand.u32 2147483647, %v2234
  %vm2514 = vcmp.eq.f32.partialorder %v2513, 8.507059e+37
  %v2515 = vand.u32 %v2234, 2147483648
  %v2516 = vor.u32 1.1754944e-38, %v2515
  %v2517 = vsel %vm2514, %v2516, %v2512
  %v2518 = vmul.f32 1.0, %v2517
  %v2519 = vrcp.pop %v2235
  %v2520 = vmul.f32 %v2235, %v2519
  %v2521 = vsub.f32 1.0, %v2520
  %v2522 = vmul.f32 %v2519, %v2521
  %v2523 = vadd.f32 %v2519, %v2522
  %vm2524 = vweird.f32 %v2235
  %vm2525 = vweird.f32 %v2519
  %vm2526 = vmor %vm2524, %vm2525
  %v2527 = vsel %vm2526, %v2519, %v2523
  %v2528 = vand.u32 2147483647, %v2235
  %vm2529 = vcmp.eq.f32.partialorder %v2528, 8.507059e+37
  %v2530 = vand.u32 %v2235, 2147483648
  %v2531 = vor.u32 1.1754944e-38, %v2530
  %v2532 = vsel %vm2529, %v2531, %v2527
  %v2533 = vmul.f32 1.0, %v2532
  %v2534 = vrcp.pop %v2236
  %v2535 = vmul.f32 %v2236, %v2534
  %v2536 = vsub.f32 1.0, %v2535
  %v2537 = vmul.f32 %v2534, %v2536
  %v2538 = vadd.f32 %v2534, %v2537
  %vm2539 = vweird.f32 %v2236
  %vm2540 = vweird.f32 %v2534
  %vm2541 = vmor %vm2539, %vm2540
  %v2542 = vsel %vm2541, %v2534, %v2538
  %v2543 = vand.u32 2147483647, %v2236
  %vm2544 = vcmp.eq.f32.partialorder %v2543, 8.507059e+37
  %v2545 = vand.u32 %v2236, 2147483648
  %v2546 = vor.u32 1.1754944e-38, %v2545
  %v2547 = vsel %vm2544, %v2546, %v2542
  %v2548 = vmul.f32 1.0, %v2547
  %v2549 = vrcp.pop %v2237
  %v2550 = vmul.f32 %v2237, %v2549
  %v2551 = vsub.f32 1.0, %v2550
  %v2552 = vmul.f32 %v2549, %v2551
  %v2553 = vadd.f32 %v2549, %v2552
  %vm2554 = vweird.f32 %v2237
  %vm2555 = vweird.f32 %v2549
  %vm2556 = vmor %vm2554, %vm2555
  %v2557 = vsel %vm2556, %v2549, %v2553
  %v2558 = vand.u32 2147483647, %v2237
  %vm2559 = vcmp.eq.f32.partialorder %v2558, 8.507059e+37
  %v2560 = vand.u32 %v2237, 2147483648
  %v2561 = vor.u32 1.1754944e-38, %v2560
  %v2562 = vsel %vm2559, %v2561, %v2557
  %v2563 = vmul.f32 1.0, %v2562
  %v2564 = vrcp.pop %v2238
  %v2565 = vmul.f32 %v2238, %v2564
  %v2566 = vsub.f32 1.0, %v2565
  %v2567 = vmul.f32 %v2564, %v2566
  %v2568 = vadd.f32 %v2564, %v2567
  %vm2569 = vweird.f32 %v2238
  %vm2570 = vweird.f32 %v2564
  %vm2571 = vmor %vm2569, %vm2570
  %v2572 = vsel %vm2571, %v2564, %v2568
  %v2573 = vand.u32 2147483647, %v2238
  %vm2574 = vcmp.eq.f32.partialorder %v2573, 8.507059e+37
  %v2575 = vand.u32 %v2238, 2147483648
  %v2576 = vor.u32 1.1754944e-38, %v2575
  %v2577 = vsel %vm2574, %v2576, %v2572
  %v2578 = vmul.f32 1.0, %v2577
  %v2579 = vrcp.pop %v2239
  %v2580 = vmul.f32 %v2239, %v2579
  %v2581 = vsub.f32 1.0, %v2580
  %v2582 = vmul.f32 %v2579, %v2581
  %v2583 = vadd.f32 %v2579, %v2582
  %vm2584 = vweird.f32 %v2239
  %vm2585 = vweird.f32 %v2579
  %vm2586 = vmor %vm2584, %vm2585
  %v2587 = vsel %vm2586, %v2579, %v2583
  %v2588 = vand.u32 2147483647, %v2239
  %vm2589 = vcmp.eq.f32.partialorder %v2588, 8.507059e+37
  %v2590 = vand.u32 %v2239, 2147483648
  %v2591 = vor.u32 1.1754944e-38, %v2590
  %v2592 = vsel %vm2589, %v2591, %v2587
  %v2593 = vmul.f32 1.0, %v2592
  %v2594 = vrcp.pop %v2240
  %v2595 = vmul.f32 %v2240, %v2594
  %v2596 = vsub.f32 1.0, %v2595
  %v2597 = vmul.f32 %v2594, %v2596
  %v2598 = vadd.f32 %v2594, %v2597
  %vm2599 = vweird.f32 %v2240
  %vm2600 = vweird.f32 %v2594
  %vm2601 = vmor %vm2599, %vm2600
  %v2602 = vsel %vm2601, %v2594, %v2598
  %v2603 = vand.u32 2147483647, %v2240
  %vm2604 = vcmp.eq.f32.partialorder %v2603, 8.507059e+37
  %v2605 = vand.u32 %v2240, 2147483648
  %v2606 = vor.u32 1.1754944e-38, %v2605
  %v2607 = vsel %vm2604, %v2606, %v2602
  %v2608 = vmul.f32 1.0, %v2607
  %v2609 = vrcp.pop %v2241
  %v2610 = vmul.f32 %v2241, %v2609
  %v2611 = vsub.f32 1.0, %v2610
  %v2612 = vmul.f32 %v2609, %v2611
  %v2613 = vadd.f32 %v2609, %v2612
  %vm2614 = vweird.f32 %v2241
  %vm2615 = vweird.f32 %v2609
  %vm2616 = vmor %vm2614, %vm2615
  %v2617 = vsel %vm2616, %v2609, %v2613
  %v2618 = vand.u32 2147483647, %v2241
  %vm2619 = vcmp.eq.f32.partialorder %v2618, 8.507059e+37
  %v2620 = vand.u32 %v2241, 2147483648
  %v2621 = vor.u32 1.1754944e-38, %v2620
  %v2622 = vsel %vm2619, %v2621, %v2617
  %v2623 = vmul.f32 1.0, %v2622
  %v2624 = vrcp.pop %v2242
  %v2625 = vmul.f32 %v2242, %v2624
  %v2626 = vsub.f32 1.0, %v2625
  %v2627 = vmul.f32 %v2624, %v2626
  %v2628 = vadd.f32 %v2624, %v2627
  %vm2629 = vweird.f32 %v2242
  %vm2630 = vweird.f32 %v2624
  %vm2631 = vmor %vm2629, %vm2630
  %v2632 = vsel %vm2631, %v2624, %v2628
  %v2633 = vand.u32 2147483647, %v2242
  %vm2634 = vcmp.eq.f32.partialorder %v2633, 8.507059e+37
  %v2635 = vand.u32 %v2242, 2147483648
  %v2636 = vor.u32 1.1754944e-38, %v2635
  %v2637 = vsel %vm2634, %v2636, %v2632
  %v2638 = vmul.f32 1.0, %v2637
  %v2639 = vrcp.pop %v2243
  %v2640 = vmul.f32 %v2243, %v2639
  %v2641 = vsub.f32 1.0, %v2640
  %v2642 = vmul.f32 %v2639, %v2641
  %v2643 = vadd.f32 %v2639, %v2642
  %vm2644 = vweird.f32 %v2243
  %vm2645 = vweird.f32 %v2639
  %vm2646 = vmor %vm2644, %vm2645
  %v2647 = vsel %vm2646, %v2639, %v2643
  %v2648 = vand.u32 2147483647, %v2243
  %vm2649 = vcmp.eq.f32.partialorder %v2648, 8.507059e+37
  %v2650 = vand.u32 %v2243, 2147483648
  %v2651 = vor.u32 1.1754944e-38, %v2650
  %v2652 = vsel %vm2649, %v2651, %v2647
  %v2653 = vmul.f32 1.0, %v2652
  %v2654 = vrcp.pop %v2244
  %v2655 = vmul.f32 %v2244, %v2654
  %v2656 = vsub.f32 1.0, %v2655
  %v2657 = vmul.f32 %v2654, %v2656
  %v2658 = vadd.f32 %v2654, %v2657
  %vm2659 = vweird.f32 %v2244
  %vm2660 = vweird.f32 %v2654
  %vm2661 = vmor %vm2659, %vm2660
  %v2662 = vsel %vm2661, %v2654, %v2658
  %v2663 = vand.u32 2147483647, %v2244
  %vm2664 = vcmp.eq.f32.partialorder %v2663, 8.507059e+37
  %v2665 = vand.u32 %v2244, 2147483648
  %v2666 = vor.u32 1.1754944e-38, %v2665
  %v2667 = vsel %vm2664, %v2666, %v2662
  %v2668 = vmul.f32 1.0, %v2667
  %v2669 = vrcp.pop %v2245
  %v2670 = vmul.f32 %v2245, %v2669
  %v2671 = vsub.f32 1.0, %v2670
  %v2672 = vmul.f32 %v2669, %v2671
  %v2673 = vadd.f32 %v2669, %v2672
  %vm2674 = vweird.f32 %v2245
  %vm2675 = vweird.f32 %v2669
  %vm2676 = vmor %vm2674, %vm2675
  %v2677 = vsel %vm2676, %v2669, %v2673
  %v2678 = vand.u32 2147483647, %v2245
  %vm2679 = vcmp.eq.f32.partialorder %v2678, 8.507059e+37
  %v2680 = vand.u32 %v2245, 2147483648
  %v2681 = vor.u32 1.1754944e-38, %v2680
  %v2682 = vsel %vm2679, %v2681, %v2677
  %v2683 = vmul.f32 1.0, %v2682
  %v2684 = vrcp.pop %v2246
  %v2685 = vmul.f32 %v2246, %v2684
  %v2686 = vsub.f32 1.0, %v2685
  %v2687 = vmul.f32 %v2684, %v2686
  %v2688 = vadd.f32 %v2684, %v2687
  %vm2689 = vweird.f32 %v2246
  %vm2690 = vweird.f32 %v2684
  %vm2691 = vmor %vm2689, %vm2690
  %v2692 = vsel %vm2691, %v2684, %v2688
  %v2693 = vand.u32 2147483647, %v2246
  %vm2694 = vcmp.eq.f32.partialorder %v2693, 8.507059e+37
  %v2695 = vand.u32 %v2246, 2147483648
  %v2696 = vor.u32 1.1754944e-38, %v2695
  %v2697 = vsel %vm2694, %v2696, %v2692
  %v2698 = vmul.f32 1.0, %v2697
  %v2699 = vrcp.pop %v2247
  %v2700 = vmul.f32 %v2247, %v2699
  %v2701 = vsub.f32 1.0, %v2700
  %v2702 = vmul.f32 %v2699, %v2701
  %v2703 = vadd.f32 %v2699, %v2702
  %vm2704 = vweird.f32 %v2247
  %vm2705 = vweird.f32 %v2699
  %vm2706 = vmor %vm2704, %vm2705
  %v2707 = vsel %vm2706, %v2699, %v2703
  %v2708 = vand.u32 2147483647, %v2247
  %vm2709 = vcmp.eq.f32.partialorder %v2708, 8.507059e+37
  %v2710 = vand.u32 %v2247, 2147483648
  %v2711 = vor.u32 1.1754944e-38, %v2710
  %v2712 = vsel %vm2709, %v2711, %v2707
  %v2713 = vmul.f32 1.0, %v2712
  %v2714 = vrcp.pop %v2248
  %v2715 = vmul.f32 %v2248, %v2714
  %v2716 = vsub.f32 1.0, %v2715
  %v2717 = vmul.f32 %v2714, %v2716
  %v2718 = vadd.f32 %v2714, %v2717
  %vm2719 = vweird.f32 %v2248
  %vm2720 = vweird.f32 %v2714
  %vm2721 = vmor %vm2719, %vm2720
  %v2722 = vsel %vm2721, %v2714, %v2718
  %v2723 = vand.u32 2147483647, %v2248
  %vm2724 = vcmp.eq.f32.partialorder %v2723, 8.507059e+37
  %v2725 = vand.u32 %v2248, 2147483648
  %v2726 = vor.u32 1.1754944e-38, %v2725
  %v2727 = vsel %vm2724, %v2726, %v2722
  %v2728 = vmul.f32 1.0, %v2727
  %v2729 = vmul.f32 %v2089, %v2263
  %v2730 = vmul.f32 %v2090, %v2278
  %v2731 = vmul.f32 %v2091, %v2293
  %v2732 = vmul.f32 %v2092, %v2308
  %v2733 = vmul.f32 %v2093, %v2323
  %v2734 = vmul.f32 %v2094, %v2338
  %v2735 = vmul.f32 %v2095, %v2353
  %v2736 = vmul.f32 %v2096, %v2368
  %v2737 = vmul.f32 %v2097, %v2383
  %v2738 = vmul.f32 %v2098, %v2398
  %v2739 = vmul.f32 %v2099, %v2413
  %v2740 = vmul.f32 %v2100, %v2428
  %v2741 = vmul.f32 %v2101, %v2443
  %v2742 = vmul.f32 %v2102, %v2458
  %v2743 = vmul.f32 %v2103, %v2473
  %v2744 = vmul.f32 %v2104, %v2488
  %v2745 = vmul.f32 %v2105, %v2503
  %v2746 = vmul.f32 %v2106, %v2518
  %v2747 = vmul.f32 %v2107, %v2533
  %v2748 = vmul.f32 %v2108, %v2548
  %v2749 = vmul.f32 %v2109, %v2563
  %v2750 = vmul.f32 %v2110, %v2578
  %v2751 = vmul.f32 %v2111, %v2593
  %v2752 = vmul.f32 %v2112, %v2608
  %v2753 = vmul.f32 %v2113, %v2623
  %v2754 = vmul.f32 %v2114, %v2638
  %v2755 = vmul.f32 %v2115, %v2653
  %v2756 = vmul.f32 %v2116, %v2668
  %v2757 = vmul.f32 %v2117, %v2683
  %v2758 = vmul.f32 %v2118, %v2698
  %v2759 = vmul.f32 %v2119, %v2713
  %v2760 = vmul.f32 %v2120, %v2728
  %v2761 = vpack.c.bf16 %v2731, %v2729
  %v2762 = vpack.c.bf16 %v2732, %v2730
  %v2763 = vpack.c.bf16 %v2735, %v2733
  %v2764 = vpack.c.bf16 %v2736, %v2734
  %v2765 = vpack.c.bf16 %v2739, %v2737
  %v2766 = vpack.c.bf16 %v2740, %v2738
  %v2767 = vpack.c.bf16 %v2743, %v2741
  %v2768 = vpack.c.bf16 %v2744, %v2742
  %v2769 = vpack.c.bf16 %v2747, %v2745
  %v2770 = vpack.c.bf16 %v2748, %v2746
  %v2771 = vpack.c.bf16 %v2751, %v2749
  %v2772 = vpack.c.bf16 %v2752, %v2750
  %v2773 = vpack.c.bf16 %v2755, %v2753
  %v2774 = vpack.c.bf16 %v2756, %v2754
  %v2775 = vpack.c.bf16 %v2759, %v2757
  %v2776 = vpack.c.bf16 %v2760, %v2758
  %s2777 = scalar_lea.vmem %s2, 768
  %v2778 = vld [vmem:[%s2777] sm:$0xff]
  %v2779 = vld [vmem:[%s2777 + $0x8] sm:$0xff]
  %v2780 = vld [vmem:[%s2777 + $0x10] sm:$0xff]
  %v2781 = vld [vmem:[%s2777 + $0x18] sm:$0xff]
  %v2782 = vld [vmem:[%s2777 + $0x20] sm:$0xff]
  %v2783 = vld [vmem:[%s2777 + $0x28] sm:$0xff]
  %v2784 = vld [vmem:[%s2777 + $0x30] sm:$0xff]
  %v2785 = vld [vmem:[%s2777 + $0x38] sm:$0xff]
  %v2786 = vld [vmem:[%s2777 + $0x40] sm:$0xff]
  %v2787 = vld [vmem:[%s2777 + $0x48] sm:$0xff]
  %v2788 = vld [vmem:[%s2777 + $0x50] sm:$0xff]
  %v2789 = vld [vmem:[%s2777 + $0x58] sm:$0xff]
  %v2790 = vld [vmem:[%s2777 + $0x60] sm:$0xff]
  %v2791 = vld [vmem:[%s2777 + $0x68] sm:$0xff]
  %v2792 = vld [vmem:[%s2777 + $0x70] sm:$0xff]
  %v2793 = vld [vmem:[%s2777 + $0x78] sm:$0xff]
  %v2794 = vld [vmem:[%s2777 + $0x80] sm:$0xff]
  %v2795 = vld [vmem:[%s2777 + $0x88] sm:$0xff]
  %v2796 = vld [vmem:[%s2777 + $0x90] sm:$0xff]
  %v2797 = vld [vmem:[%s2777 + $0x98] sm:$0xff]
  %v2798 = vld [vmem:[%s2777 + $0xa0] sm:$0xff]
  %v2799 = vld [vmem:[%s2777 + $0xa8] sm:$0xff]
  %v2800 = vld [vmem:[%s2777 + $0xb0] sm:$0xff]
  %v2801 = vld [vmem:[%s2777 + $0xb8] sm:$0xff]
  %v2802 = vld [vmem:[%s2777 + $0xc0] sm:$0xff]
  %v2803 = vld [vmem:[%s2777 + $0xc8] sm:$0xff]
  %v2804 = vld [vmem:[%s2777 + $0xd0] sm:$0xff]
  %v2805 = vld [vmem:[%s2777 + $0xd8] sm:$0xff]
  %v2806 = vld [vmem:[%s2777 + $0xe0] sm:$0xff]
  %v2807 = vld [vmem:[%s2777 + $0xe8] sm:$0xff]
  %v2808 = vld [vmem:[%s2777 + $0xf0] sm:$0xff]
  %v2809 = vld [vmem:[%s2777 + $0xf8] sm:$0xff]
  %s2810 = scalar_lea.vmem %s3, 2
  %v2811 = vld [vmem:[%s2810] ss:$8 sm:$0x3]
  %v2813 = vperm.slane %v2811, 0
  %v2814 = vperm.slane %v2811, 1
  %v2849 = vunpack.c.l.b16 %v2778
  %v2850 = vunpack.c.h.b16 %v2778
  %v2851 = vunpack.c.l.b16 %v2779
  %v2852 = vunpack.c.h.b16 %v2779
  %v2853 = vunpack.c.l.b16 %v2780
  %v2854 = vunpack.c.h.b16 %v2780
  %v2855 = vunpack.c.l.b16 %v2781
  %v2856 = vunpack.c.h.b16 %v2781
  %v2857 = vunpack.c.l.b16 %v2782
  %v2858 = vunpack.c.h.b16 %v2782
  %v2859 = vunpack.c.l.b16 %v2783
  %v2860 = vunpack.c.h.b16 %v2783
  %v2861 = vunpack.c.l.b16 %v2784
  %v2862 = vunpack.c.h.b16 %v2784
  %v2863 = vunpack.c.l.b16 %v2785
  %v2864 = vunpack.c.h.b16 %v2785
  %v2865 = vunpack.c.l.b16 %v2786
  %v2866 = vunpack.c.h.b16 %v2786
  %v2867 = vunpack.c.l.b16 %v2787
  %v2868 = vunpack.c.h.b16 %v2787
  %v2869 = vunpack.c.l.b16 %v2788
  %v2870 = vunpack.c.h.b16 %v2788
  %v2871 = vunpack.c.l.b16 %v2789
  %v2872 = vunpack.c.h.b16 %v2789
  %v2873 = vunpack.c.l.b16 %v2790
  %v2874 = vunpack.c.h.b16 %v2790
  %v2875 = vunpack.c.l.b16 %v2791
  %v2876 = vunpack.c.h.b16 %v2791
  %v2877 = vunpack.c.l.b16 %v2792
  %v2878 = vunpack.c.h.b16 %v2792
  %v2879 = vunpack.c.l.b16 %v2793
  %v2880 = vunpack.c.h.b16 %v2793
  %v2881 = vunpack.c.l.b16 %v2794
  %v2882 = vunpack.c.h.b16 %v2794
  %v2883 = vunpack.c.l.b16 %v2795
  %v2884 = vunpack.c.h.b16 %v2795
  %v2885 = vunpack.c.l.b16 %v2796
  %v2886 = vunpack.c.h.b16 %v2796
  %v2887 = vunpack.c.l.b16 %v2797
  %v2888 = vunpack.c.h.b16 %v2797
  %v2889 = vunpack.c.l.b16 %v2798
  %v2890 = vunpack.c.h.b16 %v2798
  %v2891 = vunpack.c.l.b16 %v2799
  %v2892 = vunpack.c.h.b16 %v2799
  %v2893 = vunpack.c.l.b16 %v2800
  %v2894 = vunpack.c.h.b16 %v2800
  %v2895 = vunpack.c.l.b16 %v2801
  %v2896 = vunpack.c.h.b16 %v2801
  %v2897 = vunpack.c.l.b16 %v2802
  %v2898 = vunpack.c.h.b16 %v2802
  %v2899 = vunpack.c.l.b16 %v2803
  %v2900 = vunpack.c.h.b16 %v2803
  %v2901 = vunpack.c.l.b16 %v2804
  %v2902 = vunpack.c.h.b16 %v2804
  %v2903 = vunpack.c.l.b16 %v2805
  %v2904 = vunpack.c.h.b16 %v2805
  %v2905 = vunpack.c.l.b16 %v2806
  %v2906 = vunpack.c.h.b16 %v2806
  %v2907 = vunpack.c.l.b16 %v2807
  %v2908 = vunpack.c.h.b16 %v2807
  %v2909 = vunpack.c.l.b16 %v2808
  %v2910 = vunpack.c.h.b16 %v2808
  %v2911 = vunpack.c.l.b16 %v2809
  %v2912 = vunpack.c.h.b16 %v2809
  %v2913 = vpack.c.b16 %v2851, %v2849
  %v2914 = vpack.c.b16 %v2852, %v2850
  %v2915 = vpack.c.b16 %v2855, %v2853
  %v2916 = vpack.c.b16 %v2856, %v2854
  %v2917 = vpack.c.b16 %v2859, %v2857
  %v2918 = vpack.c.b16 %v2860, %v2858
  %v2919 = vpack.c.b16 %v2863, %v2861
  %v2920 = vpack.c.b16 %v2864, %v2862
  %v2921 = vpack.c.b16 %v2867, %v2865
  %v2922 = vpack.c.b16 %v2868, %v2866
  %v2923 = vpack.c.b16 %v2871, %v2869
  %v2924 = vpack.c.b16 %v2872, %v2870
  %v2925 = vpack.c.b16 %v2875, %v2873
  %v2926 = vpack.c.b16 %v2876, %v2874
  %v2927 = vpack.c.b16 %v2879, %v2877
  %v2928 = vpack.c.b16 %v2880, %v2878
  %v2929 = vpack.c.b16 %v2883, %v2881
  %v2930 = vpack.c.b16 %v2884, %v2882
  %v2931 = vpack.c.b16 %v2887, %v2885
  %v2932 = vpack.c.b16 %v2888, %v2886
  %v2933 = vpack.c.b16 %v2891, %v2889
  %v2934 = vpack.c.b16 %v2892, %v2890
  %v2935 = vpack.c.b16 %v2895, %v2893
  %v2936 = vpack.c.b16 %v2896, %v2894
  %v2937 = vpack.c.b16 %v2899, %v2897
  %v2938 = vpack.c.b16 %v2900, %v2898
  %v2939 = vpack.c.b16 %v2903, %v2901
  %v2940 = vpack.c.b16 %v2904, %v2902
  %v2941 = vpack.c.b16 %v2907, %v2905
  %v2942 = vpack.c.b16 %v2908, %v2906
  %v2943 = vpack.c.b16 %v2911, %v2909
  %v2944 = vpack.c.b16 %v2912, %v2910
  %2977 = vmatpush.bf16.msra.mxu0 %v2927
  %2978 = vmatpush.bf16.msra.mxu0 %v2925
  %2979 = vmatpush.bf16.msra.mxu0 %v2923
  %2980 = vmatpush.bf16.msra.mxu0 %v2921
  %2981 = vmatpush.bf16.msra.mxu0 %v2919
  %2982 = vmatpush.bf16.msra.mxu0 %v2917
  %2983 = vmatpush.bf16.msra.mxu0 %v2915
  %2984 = vmatpush.bf16.msra.mxu0 %v2913
  %2985 = vmatmul.bf16.gmra.mxu0 %v2761
  %v2986 = vpop.f32.mrf.mxu0
  %v2987 = vadd.f32 %v2813, %v2986
  %v2988 = vpop.f32.mrf.mxu0
  %v2989 = vadd.f32 %v2813, %v2988
  %2990 = vmatmul.bf16.gmra.mxu0 %v2763
  %v2991 = vpop.f32.mrf.mxu0
  %v2992 = vadd.f32 %v2813, %v2991
  %v2993 = vpop.f32.mrf.mxu0
  %v2994 = vadd.f32 %v2813, %v2993
  %2995 = vmatmul.bf16.gmra.mxu0 %v2765
  %v2996 = vpop.f32.mrf.mxu0
  %v2997 = vadd.f32 %v2813, %v2996
  %v2998 = vpop.f32.mrf.mxu0
  %v2999 = vadd.f32 %v2813, %v2998
  %3000 = vmatmul.bf16.gmra.mxu0 %v2767
  %v3001 = vpop.f32.mrf.mxu0
  %v3002 = vadd.f32 %v2813, %v3001
  %v3003 = vpop.f32.mrf.mxu0
  %v3004 = vadd.f32 %v2813, %v3003
  %3005 = vmatmul.bf16.gmra.mxu0 %v2769
  %v3006 = vpop.f32.mrf.mxu0
  %v3007 = vadd.f32 %v2813, %v3006
  %v3008 = vpop.f32.mrf.mxu0
  %v3009 = vadd.f32 %v2813, %v3008
  %3010 = vmatmul.bf16.gmra.mxu0 %v2771
  %v3011 = vpop.f32.mrf.mxu0
  %v3012 = vadd.f32 %v2813, %v3011
  %v3013 = vpop.f32.mrf.mxu0
  %v3014 = vadd.f32 %v2813, %v3013
  %3015 = vmatmul.bf16.gmra.mxu0 %v2773
  %v3016 = vpop.f32.mrf.mxu0
  %v3017 = vadd.f32 %v2813, %v3016
  %v3018 = vpop.f32.mrf.mxu0
  %v3019 = vadd.f32 %v2813, %v3018
  %3020 = vmatmul.bf16.gmra.mxu0 %v2775
  %v3021 = vpop.f32.mrf.mxu0
  %v3022 = vadd.f32 %v2813, %v3021
  %v3023 = vpop.f32.mrf.mxu0
  %v3024 = vadd.f32 %v2813, %v3023
  %3025 = vdwg.mxu0
  %3026 = vmatpush.bf16.msra.mxu0 %v2943
  %3027 = vmatpush.bf16.msra.mxu0 %v2941
  %3028 = vmatpush.bf16.msra.mxu0 %v2939
  %3029 = vmatpush.bf16.msra.mxu0 %v2937
  %3030 = vmatpush.bf16.msra.mxu0 %v2935
  %3031 = vmatpush.bf16.msra.mxu0 %v2933
  %3032 = vmatpush.bf16.msra.mxu0 %v2931
  %3033 = vmatpush.bf16.msra.mxu0 %v2929
  %3034 = vmatmul.bf16.gmra.mxu0 %v2762
  %v3035 = vpop.f32.mrf.mxu0
  %v3036 = vadd.f32 %v2987, %v3035
  %v3037 = vpop.f32.mrf.mxu0
  %v3038 = vadd.f32 %v2989, %v3037
  %3039 = vmatmul.bf16.gmra.mxu0 %v2764
  %v3040 = vpop.f32.mrf.mxu0
  %v3041 = vadd.f32 %v2992, %v3040
  %v3042 = vpop.f32.mrf.mxu0
  %v3043 = vadd.f32 %v2994, %v3042
  %3044 = vmatmul.bf16.gmra.mxu0 %v2766
  %v3045 = vpop.f32.mrf.mxu0
  %v3046 = vadd.f32 %v2997, %v3045
  %v3047 = vpop.f32.mrf.mxu0
  %v3048 = vadd.f32 %v2999, %v3047
  %3049 = vmatmul.bf16.gmra.mxu0 %v2768
  %v3050 = vpop.f32.mrf.mxu0
  %v3051 = vadd.f32 %v3002, %v3050
  %v3052 = vpop.f32.mrf.mxu0
  %v3053 = vadd.f32 %v3004, %v3052
  %3054 = vmatmul.bf16.gmra.mxu0 %v2770
  %v3055 = vpop.f32.mrf.mxu0
  %v3056 = vadd.f32 %v3007, %v3055
  %v3057 = vpop.f32.mrf.mxu0
  %v3058 = vadd.f32 %v3009, %v3057
  %3059 = vmatmul.bf16.gmra.mxu0 %v2772
  %v3060 = vpop.f32.mrf.mxu0
  %v3061 = vadd.f32 %v3012, %v3060
  %v3062 = vpop.f32.mrf.mxu0
  %v3063 = vadd.f32 %v3014, %v3062
  %3064 = vmatmul.bf16.gmra.mxu0 %v2774
  %v3065 = vpop.f32.mrf.mxu0
  %v3066 = vadd.f32 %v3017, %v3065
  %v3067 = vpop.f32.mrf.mxu0
  %v3068 = vadd.f32 %v3019, %v3067
  %3069 = vmatmul.bf16.gmra.mxu0 %v2776
  %v3070 = vpop.f32.mrf.mxu0
  %v3071 = vadd.f32 %v3022, %v3070
  %v3072 = vpop.f32.mrf.mxu0
  %v3073 = vadd.f32 %v3024, %v3072
  %3074 = vdwg.mxu0
  %3075 = vmatpush.bf16.msra.mxu0 %v2928
  %3076 = vmatpush.bf16.msra.mxu0 %v2926
  %3077 = vmatpush.bf16.msra.mxu0 %v2924
  %3078 = vmatpush.bf16.msra.mxu0 %v2922
  %3079 = vmatpush.bf16.msra.mxu0 %v2920
  %3080 = vmatpush.bf16.msra.mxu0 %v2918
  %3081 = vmatpush.bf16.msra.mxu0 %v2916
  %3082 = vmatpush.bf16.msra.mxu0 %v2914
  %3083 = vmatmul.bf16.gmra.mxu0 %v2761
  %v3084 = vpop.f32.mrf.mxu0
  %v3085 = vadd.f32 %v2814, %v3084
  %v3086 = vpop.f32.mrf.mxu0
  %v3087 = vadd.f32 %v2814, %v3086
  %3088 = vmatmul.bf16.gmra.mxu0 %v2763
  %v3089 = vpop.f32.mrf.mxu0
  %v3090 = vadd.f32 %v2814, %v3089
  %v3091 = vpop.f32.mrf.mxu0
  %v3092 = vadd.f32 %v2814, %v3091
  %3093 = vmatmul.bf16.gmra.mxu0 %v2765
  %v3094 = vpop.f32.mrf.mxu0
  %v3095 = vadd.f32 %v2814, %v3094
  %v3096 = vpop.f32.mrf.mxu0
  %v3097 = vadd.f32 %v2814, %v3096
  %3098 = vmatmul.bf16.gmra.mxu0 %v2767
  %v3099 = vpop.f32.mrf.mxu0
  %v3100 = vadd.f32 %v2814, %v3099
  %v3101 = vpop.f32.mrf.mxu0
  %v3102 = vadd.f32 %v2814, %v3101
  %3103 = vmatmul.bf16.gmra.mxu0 %v2769
  %v3104 = vpop.f32.mrf.mxu0
  %v3105 = vadd.f32 %v2814, %v3104
  %v3106 = vpop.f32.mrf.mxu0
  %v3107 = vadd.f32 %v2814, %v3106
  %3108 = vmatmul.bf16.gmra.mxu0 %v2771
  %v3109 = vpop.f32.mrf.mxu0
  %v3110 = vadd.f32 %v2814, %v3109
  %v3111 = vpop.f32.mrf.mxu0
  %v3112 = vadd.f32 %v2814, %v3111
  %3113 = vmatmul.bf16.gmra.mxu0 %v2773
  %v3114 = vpop.f32.mrf.mxu0
  %v3115 = vadd.f32 %v2814, %v3114
  %v3116 = vpop.f32.mrf.mxu0
  %v3117 = vadd.f32 %v2814, %v3116
  %3118 = vmatmul.bf16.gmra.mxu0 %v2775
  %v3119 = vpop.f32.mrf.mxu0
  %v3120 = vadd.f32 %v2814, %v3119
  %v3121 = vpop.f32.mrf.mxu0
  %v3122 = vadd.f32 %v2814, %v3121
  %3123 = vdwg.mxu0
  %3124 = vmatpush.bf16.msra.mxu0 %v2944
  %3125 = vmatpush.bf16.msra.mxu0 %v2942
  %3126 = vmatpush.bf16.msra.mxu0 %v2940
  %3127 = vmatpush.bf16.msra.mxu0 %v2938
  %3128 = vmatpush.bf16.msra.mxu0 %v2936
  %3129 = vmatpush.bf16.msra.mxu0 %v2934
  %3130 = vmatpush.bf16.msra.mxu0 %v2932
  %3131 = vmatpush.bf16.msra.mxu0 %v2930
  %3132 = vmatmul.bf16.gmra.mxu0 %v2762
  %v3133 = vpop.f32.mrf.mxu0
  %v3134 = vadd.f32 %v3085, %v3133
  %v3135 = vpop.f32.mrf.mxu0
  %v3136 = vadd.f32 %v3087, %v3135
  %3137 = vmatmul.bf16.gmra.mxu0 %v2764
  %v3138 = vpop.f32.mrf.mxu0
  %v3139 = vadd.f32 %v3090, %v3138
  %v3140 = vpop.f32.mrf.mxu0
  %v3141 = vadd.f32 %v3092, %v3140
  %3142 = vmatmul.bf16.gmra.mxu0 %v2766
  %v3143 = vpop.f32.mrf.mxu0
  %v3144 = vadd.f32 %v3095, %v3143
  %v3145 = vpop.f32.mrf.mxu0
  %v3146 = vadd.f32 %v3097, %v3145
  %3147 = vmatmul.bf16.gmra.mxu0 %v2768
  %v3148 = vpop.f32.mrf.mxu0
  %v3149 = vadd.f32 %v3100, %v3148
  %v3150 = vpop.f32.mrf.mxu0
  %v3151 = vadd.f32 %v3102, %v3150
  %3152 = vmatmul.bf16.gmra.mxu0 %v2770
  %v3153 = vpop.f32.mrf.mxu0
  %v3154 = vadd.f32 %v3105, %v3153
  %v3155 = vpop.f32.mrf.mxu0
  %v3156 = vadd.f32 %v3107, %v3155
  %3157 = vmatmul.bf16.gmra.mxu0 %v2772
  %v3158 = vpop.f32.mrf.mxu0
  %v3159 = vadd.f32 %v3110, %v3158
  %v3160 = vpop.f32.mrf.mxu0
  %v3161 = vadd.f32 %v3112, %v3160
  %3162 = vmatmul.bf16.gmra.mxu0 %v2774
  %v3163 = vpop.f32.mrf.mxu0
  %v3164 = vadd.f32 %v3115, %v3163
  %v3165 = vpop.f32.mrf.mxu0
  %v3166 = vadd.f32 %v3117, %v3165
  %3167 = vmatmul.bf16.gmra.mxu0 %v2776
  %v3168 = vpop.f32.mrf.mxu0
  %v3169 = vadd.f32 %v3120, %v3168
  %v3170 = vpop.f32.mrf.mxu0
  %v3171 = vadd.f32 %v3122, %v3170
  %3172 = vdwg.mxu0
  %v3173 = vxor.u32 %v3036, 2147483648
  %v3174 = vxor.u32 %v3134, 2147483648
  %v3175 = vxor.u32 %v3038, 2147483648
  %v3176 = vxor.u32 %v3136, 2147483648
  %v3177 = vxor.u32 %v3041, 2147483648
  %v3178 = vxor.u32 %v3139, 2147483648
  %v3179 = vxor.u32 %v3043, 2147483648
  %v3180 = vxor.u32 %v3141, 2147483648
  %v3181 = vxor.u32 %v3046, 2147483648
  %v3182 = vxor.u32 %v3144, 2147483648
  %v3183 = vxor.u32 %v3048, 2147483648
  %v3184 = vxor.u32 %v3146, 2147483648
  %v3185 = vxor.u32 %v3051, 2147483648
  %v3186 = vxor.u32 %v3149, 2147483648
  %v3187 = vxor.u32 %v3053, 2147483648
  %v3188 = vxor.u32 %v3151, 2147483648
  %v3189 = vxor.u32 %v3056, 2147483648
  %v3190 = vxor.u32 %v3154, 2147483648
  %v3191 = vxor.u32 %v3058, 2147483648
  %v3192 = vxor.u32 %v3156, 2147483648
  %v3193 = vxor.u32 %v3061, 2147483648
  %v3194 = vxor.u32 %v3159, 2147483648
  %v3195 = vxor.u32 %v3063, 2147483648
  %v3196 = vxor.u32 %v3161, 2147483648
  %v3197 = vxor.u32 %v3066, 2147483648
  %v3198 = vxor.u32 %v3164, 2147483648
  %v3199 = vxor.u32 %v3068, 2147483648
  %v3200 = vxor.u32 %v3166, 2147483648
  %v3201 = vxor.u32 %v3071, 2147483648
  %v3202 = vxor.u32 %v3169, 2147483648
  %v3203 = vxor.u32 %v3073, 2147483648
  %v3204 = vxor.u32 %v3171, 2147483648
  %v3205 = vmul.f32 %v3173, 1.442695
  %v3206 = vpow.pop %v3205
  %v3207 = vmul.f32 %v3174, 1.442695
  %v3208 = vpow.pop %v3207
  %v3209 = vmul.f32 %v3175, 1.442695
  %v3210 = vpow.pop %v3209
  %v3211 = vmul.f32 %v3176, 1.442695
  %v3212 = vpow.pop %v3211
  %v3213 = vmul.f32 %v3177, 1.442695
  %v3214 = vpow.pop %v3213
  %v3215 = vmul.f32 %v3178, 1.442695
  %v3216 = vpow.pop %v3215
  %v3217 = vmul.f32 %v3179, 1.442695
  %v3218 = vpow.pop %v3217
  %v3219 = vmul.f32 %v3180, 1.442695
  %v3220 = vpow.pop %v3219
  %v3221 = vmul.f32 %v3181, 1.442695
  %v3222 = vpow.pop %v3221
  %v3223 = vmul.f32 %v3182, 1.442695
  %v3224 = vpow.pop %v3223
  %v3225 = vmul.f32 %v3183, 1.442695
  %v3226 = vpow.pop %v3225
  %v3227 = vmul.f32 %v3184, 1.442695
  %v3228 = vpow.pop %v3227
  %v3229 = vmul.f32 %v3185, 1.442695
  %v3230 = vpow.pop %v3229
  %v3231 = vmul.f32 %v3186, 1.442695
  %v3232 = vpow.pop %v3231
  %v3233 = vmul.f32 %v3187, 1.442695
  %v3234 = vpow.pop %v3233
  %v3235 = vmul.f32 %v3188, 1.442695
  %v3236 = vpow.pop %v3235
  %v3237 = vmul.f32 %v3189, 1.442695
  %v3238 = vpow.pop %v3237
  %v3239 = vmul.f32 %v3190, 1.442695
  %v3240 = vpow.pop %v3239
  %v3241 = vmul.f32 %v3191, 1.442695
  %v3242 = vpow.pop %v3241
  %v3243 = vmul.f32 %v3192, 1.442695
  %v3244 = vpow.pop %v3243
  %v3245 = vmul.f32 %v3193, 1.442695
  %v3246 = vpow.pop %v3245
  %v3247 = vmul.f32 %v3194, 1.442695
  %v3248 = vpow.pop %v3247
  %v3249 = vmul.f32 %v3195, 1.442695
  %v3250 = vpow.pop %v3249
  %v3251 = vmul.f32 %v3196, 1.442695
  %v3252 = vpow.pop %v3251
  %v3253 = vmul.f32 %v3197, 1.442695
  %v3254 = vpow.pop %v3253
  %v3255 = vmul.f32 %v3198, 1.442695
  %v3256 = vpow.pop %v3255
  %v3257 = vmul.f32 %v3199, 1.442695
  %v3258 = vpow.pop %v3257
  %v3259 = vmul.f32 %v3200, 1.442695
  %v3260 = vpow.pop %v3259
  %v3261 = vmul.f32 %v3201, 1.442695
  %v3262 = vpow.pop %v3261
  %v3263 = vmul.f32 %v3202, 1.442695
  %v3264 = vpow.pop %v3263
  %v3265 = vmul.f32 %v3203, 1.442695
  %v3266 = vpow.pop %v3265
  %v3267 = vmul.f32 %v3204, 1.442695
  %v3268 = vpow.pop %v3267
  %v3269 = vadd.f32 %v3206, 1.0
  %v3270 = vadd.f32 %v3208, 1.0
  %v3271 = vadd.f32 %v3210, 1.0
  %v3272 = vadd.f32 %v3212, 1.0
  %v3273 = vadd.f32 %v3214, 1.0
  %v3274 = vadd.f32 %v3216, 1.0
  %v3275 = vadd.f32 %v3218, 1.0
  %v3276 = vadd.f32 %v3220, 1.0
  %v3277 = vadd.f32 %v3222, 1.0
  %v3278 = vadd.f32 %v3224, 1.0
  %v3279 = vadd.f32 %v3226, 1.0
  %v3280 = vadd.f32 %v3228, 1.0
  %v3281 = vadd.f32 %v3230, 1.0
  %v3282 = vadd.f32 %v3232, 1.0
  %v3283 = vadd.f32 %v3234, 1.0
  %v3284 = vadd.f32 %v3236, 1.0
  %v3285 = vadd.f32 %v3238, 1.0
  %v3286 = vadd.f32 %v3240, 1.0
  %v3287 = vadd.f32 %v3242, 1.0
  %v3288 = vadd.f32 %v3244, 1.0
  %v3289 = vadd.f32 %v3246, 1.0
  %v3290 = vadd.f32 %v3248, 1.0
  %v3291 = vadd.f32 %v3250, 1.0
  %v3292 = vadd.f32 %v3252, 1.0
  %v3293 = vadd.f32 %v3254, 1.0
  %v3294 = vadd.f32 %v3256, 1.0
  %v3295 = vadd.f32 %v3258, 1.0
  %v3296 = vadd.f32 %v3260, 1.0
  %v3297 = vadd.f32 %v3262, 1.0
  %v3298 = vadd.f32 %v3264, 1.0
  %v3299 = vadd.f32 %v3266, 1.0
  %v3300 = vadd.f32 %v3268, 1.0
  %v3301 = vrcp.pop %v3269
  %v3302 = vmul.f32 %v3269, %v3301
  %v3303 = vsub.f32 1.0, %v3302
  %v3304 = vmul.f32 %v3301, %v3303
  %v3305 = vadd.f32 %v3301, %v3304
  %vm3306 = vweird.f32 %v3269
  %vm3307 = vweird.f32 %v3301
  %vm3308 = vmor %vm3306, %vm3307
  %v3309 = vsel %vm3308, %v3301, %v3305
  %v3310 = vand.u32 2147483647, %v3269
  %vm3311 = vcmp.eq.f32.partialorder %v3310, 8.507059e+37
  %v3312 = vand.u32 %v3269, 2147483648
  %v3313 = vor.u32 1.1754944e-38, %v3312
  %v3314 = vsel %vm3311, %v3313, %v3309
  %v3315 = vmul.f32 1.0, %v3314
  %v3316 = vrcp.pop %v3270
  %v3317 = vmul.f32 %v3270, %v3316
  %v3318 = vsub.f32 1.0, %v3317
  %v3319 = vmul.f32 %v3316, %v3318
  %v3320 = vadd.f32 %v3316, %v3319
  %vm3321 = vweird.f32 %v3270
  %vm3322 = vweird.f32 %v3316
  %vm3323 = vmor %vm3321, %vm3322
  %v3324 = vsel %vm3323, %v3316, %v3320
  %v3325 = vand.u32 2147483647, %v3270
  %vm3326 = vcmp.eq.f32.partialorder %v3325, 8.507059e+37
  %v3327 = vand.u32 %v3270, 2147483648
  %v3328 = vor.u32 1.1754944e-38, %v3327
  %v3329 = vsel %vm3326, %v3328, %v3324
  %v3330 = vmul.f32 1.0, %v3329
  %v3331 = vrcp.pop %v3271
  %v3332 = vmul.f32 %v3271, %v3331
  %v3333 = vsub.f32 1.0, %v3332
  %v3334 = vmul.f32 %v3331, %v3333
  %v3335 = vadd.f32 %v3331, %v3334
  %vm3336 = vweird.f32 %v3271
  %vm3337 = vweird.f32 %v3331
  %vm3338 = vmor %vm3336, %vm3337
  %v3339 = vsel %vm3338, %v3331, %v3335
  %v3340 = vand.u32 2147483647, %v3271
  %vm3341 = vcmp.eq.f32.partialorder %v3340, 8.507059e+37
  %v3342 = vand.u32 %v3271, 2147483648
  %v3343 = vor.u32 1.1754944e-38, %v3342
  %v3344 = vsel %vm3341, %v3343, %v3339
  %v3345 = vmul.f32 1.0, %v3344
  %v3346 = vrcp.pop %v3272
  %v3347 = vmul.f32 %v3272, %v3346
  %v3348 = vsub.f32 1.0, %v3347
  %v3349 = vmul.f32 %v3346, %v3348
  %v3350 = vadd.f32 %v3346, %v3349
  %vm3351 = vweird.f32 %v3272
  %vm3352 = vweird.f32 %v3346
  %vm3353 = vmor %vm3351, %vm3352
  %v3354 = vsel %vm3353, %v3346, %v3350
  %v3355 = vand.u32 2147483647, %v3272
  %vm3356 = vcmp.eq.f32.partialorder %v3355, 8.507059e+37
  %v3357 = vand.u32 %v3272, 2147483648
  %v3358 = vor.u32 1.1754944e-38, %v3357
  %v3359 = vsel %vm3356, %v3358, %v3354
  %v3360 = vmul.f32 1.0, %v3359
  %v3361 = vrcp.pop %v3273
  %v3362 = vmul.f32 %v3273, %v3361
  %v3363 = vsub.f32 1.0, %v3362
  %v3364 = vmul.f32 %v3361, %v3363
  %v3365 = vadd.f32 %v3361, %v3364
  %vm3366 = vweird.f32 %v3273
  %vm3367 = vweird.f32 %v3361
  %vm3368 = vmor %vm3366, %vm3367
  %v3369 = vsel %vm3368, %v3361, %v3365
  %v3370 = vand.u32 2147483647, %v3273
  %vm3371 = vcmp.eq.f32.partialorder %v3370, 8.507059e+37
  %v3372 = vand.u32 %v3273, 2147483648
  %v3373 = vor.u32 1.1754944e-38, %v3372
  %v3374 = vsel %vm3371, %v3373, %v3369
  %v3375 = vmul.f32 1.0, %v3374
  %v3376 = vrcp.pop %v3274
  %v3377 = vmul.f32 %v3274, %v3376
  %v3378 = vsub.f32 1.0, %v3377
  %v3379 = vmul.f32 %v3376, %v3378
  %v3380 = vadd.f32 %v3376, %v3379
  %vm3381 = vweird.f32 %v3274
  %vm3382 = vweird.f32 %v3376
  %vm3383 = vmor %vm3381, %vm3382
  %v3384 = vsel %vm3383, %v3376, %v3380
  %v3385 = vand.u32 2147483647, %v3274
  %vm3386 = vcmp.eq.f32.partialorder %v3385, 8.507059e+37
  %v3387 = vand.u32 %v3274, 2147483648
  %v3388 = vor.u32 1.1754944e-38, %v3387
  %v3389 = vsel %vm3386, %v3388, %v3384
  %v3390 = vmul.f32 1.0, %v3389
  %v3391 = vrcp.pop %v3275
  %v3392 = vmul.f32 %v3275, %v3391
  %v3393 = vsub.f32 1.0, %v3392
  %v3394 = vmul.f32 %v3391, %v3393
  %v3395 = vadd.f32 %v3391, %v3394
  %vm3396 = vweird.f32 %v3275
  %vm3397 = vweird.f32 %v3391
  %vm3398 = vmor %vm3396, %vm3397
  %v3399 = vsel %vm3398, %v3391, %v3395
  %v3400 = vand.u32 2147483647, %v3275
  %vm3401 = vcmp.eq.f32.partialorder %v3400, 8.507059e+37
  %v3402 = vand.u32 %v3275, 2147483648
  %v3403 = vor.u32 1.1754944e-38, %v3402
  %v3404 = vsel %vm3401, %v3403, %v3399
  %v3405 = vmul.f32 1.0, %v3404
  %v3406 = vrcp.pop %v3276
  %v3407 = vmul.f32 %v3276, %v3406
  %v3408 = vsub.f32 1.0, %v3407
  %v3409 = vmul.f32 %v3406, %v3408
  %v3410 = vadd.f32 %v3406, %v3409
  %vm3411 = vweird.f32 %v3276
  %vm3412 = vweird.f32 %v3406
  %vm3413 = vmor %vm3411, %vm3412
  %v3414 = vsel %vm3413, %v3406, %v3410
  %v3415 = vand.u32 2147483647, %v3276
  %vm3416 = vcmp.eq.f32.partialorder %v3415, 8.507059e+37
  %v3417 = vand.u32 %v3276, 2147483648
  %v3418 = vor.u32 1.1754944e-38, %v3417
  %v3419 = vsel %vm3416, %v3418, %v3414
  %v3420 = vmul.f32 1.0, %v3419
  %v3421 = vrcp.pop %v3277
  %v3422 = vmul.f32 %v3277, %v3421
  %v3423 = vsub.f32 1.0, %v3422
  %v3424 = vmul.f32 %v3421, %v3423
  %v3425 = vadd.f32 %v3421, %v3424
  %vm3426 = vweird.f32 %v3277
  %vm3427 = vweird.f32 %v3421
  %vm3428 = vmor %vm3426, %vm3427
  %v3429 = vsel %vm3428, %v3421, %v3425
  %v3430 = vand.u32 2147483647, %v3277
  %vm3431 = vcmp.eq.f32.partialorder %v3430, 8.507059e+37
  %v3432 = vand.u32 %v3277, 2147483648
  %v3433 = vor.u32 1.1754944e-38, %v3432
  %v3434 = vsel %vm3431, %v3433, %v3429
  %v3435 = vmul.f32 1.0, %v3434
  %v3436 = vrcp.pop %v3278
  %v3437 = vmul.f32 %v3278, %v3436
  %v3438 = vsub.f32 1.0, %v3437
  %v3439 = vmul.f32 %v3436, %v3438
  %v3440 = vadd.f32 %v3436, %v3439
  %vm3441 = vweird.f32 %v3278
  %vm3442 = vweird.f32 %v3436
  %vm3443 = vmor %vm3441, %vm3442
  %v3444 = vsel %vm3443, %v3436, %v3440
  %v3445 = vand.u32 2147483647, %v3278
  %vm3446 = vcmp.eq.f32.partialorder %v3445, 8.507059e+37
  %v3447 = vand.u32 %v3278, 2147483648
  %v3448 = vor.u32 1.1754944e-38, %v3447
  %v3449 = vsel %vm3446, %v3448, %v3444
  %v3450 = vmul.f32 1.0, %v3449
  %v3451 = vrcp.pop %v3279
  %v3452 = vmul.f32 %v3279, %v3451
  %v3453 = vsub.f32 1.0, %v3452
  %v3454 = vmul.f32 %v3451, %v3453
  %v3455 = vadd.f32 %v3451, %v3454
  %vm3456 = vweird.f32 %v3279
  %vm3457 = vweird.f32 %v3451
  %vm3458 = vmor %vm3456, %vm3457
  %v3459 = vsel %vm3458, %v3451, %v3455
  %v3460 = vand.u32 2147483647, %v3279
  %vm3461 = vcmp.eq.f32.partialorder %v3460, 8.507059e+37
  %v3462 = vand.u32 %v3279, 2147483648
  %v3463 = vor.u32 1.1754944e-38, %v3462
  %v3464 = vsel %vm3461, %v3463, %v3459
  %v3465 = vmul.f32 1.0, %v3464
  %v3466 = vrcp.pop %v3280
  %v3467 = vmul.f32 %v3280, %v3466
  %v3468 = vsub.f32 1.0, %v3467
  %v3469 = vmul.f32 %v3466, %v3468
  %v3470 = vadd.f32 %v3466, %v3469
  %vm3471 = vweird.f32 %v3280
  %vm3472 = vweird.f32 %v3466
  %vm3473 = vmor %vm3471, %vm3472
  %v3474 = vsel %vm3473, %v3466, %v3470
  %v3475 = vand.u32 2147483647, %v3280
  %vm3476 = vcmp.eq.f32.partialorder %v3475, 8.507059e+37
  %v3477 = vand.u32 %v3280, 2147483648
  %v3478 = vor.u32 1.1754944e-38, %v3477
  %v3479 = vsel %vm3476, %v3478, %v3474
  %v3480 = vmul.f32 1.0, %v3479
  %v3481 = vrcp.pop %v3281
  %v3482 = vmul.f32 %v3281, %v3481
  %v3483 = vsub.f32 1.0, %v3482
  %v3484 = vmul.f32 %v3481, %v3483
  %v3485 = vadd.f32 %v3481, %v3484
  %vm3486 = vweird.f32 %v3281
  %vm3487 = vweird.f32 %v3481
  %vm3488 = vmor %vm3486, %vm3487
  %v3489 = vsel %vm3488, %v3481, %v3485
  %v3490 = vand.u32 2147483647, %v3281
  %vm3491 = vcmp.eq.f32.partialorder %v3490, 8.507059e+37
  %v3492 = vand.u32 %v3281, 2147483648
  %v3493 = vor.u32 1.1754944e-38, %v3492
  %v3494 = vsel %vm3491, %v3493, %v3489
  %v3495 = vmul.f32 1.0, %v3494
  %v3496 = vrcp.pop %v3282
  %v3497 = vmul.f32 %v3282, %v3496
  %v3498 = vsub.f32 1.0, %v3497
  %v3499 = vmul.f32 %v3496, %v3498
  %v3500 = vadd.f32 %v3496, %v3499
  %vm3501 = vweird.f32 %v3282
  %vm3502 = vweird.f32 %v3496
  %vm3503 = vmor %vm3501, %vm3502
  %v3504 = vsel %vm3503, %v3496, %v3500
  %v3505 = vand.u32 2147483647, %v3282
  %vm3506 = vcmp.eq.f32.partialorder %v3505, 8.507059e+37
  %v3507 = vand.u32 %v3282, 2147483648
  %v3508 = vor.u32 1.1754944e-38, %v3507
  %v3509 = vsel %vm3506, %v3508, %v3504
  %v3510 = vmul.f32 1.0, %v3509
  %v3511 = vrcp.pop %v3283
  %v3512 = vmul.f32 %v3283, %v3511
  %v3513 = vsub.f32 1.0, %v3512
  %v3514 = vmul.f32 %v3511, %v3513
  %v3515 = vadd.f32 %v3511, %v3514
  %vm3516 = vweird.f32 %v3283
  %vm3517 = vweird.f32 %v3511
  %vm3518 = vmor %vm3516, %vm3517
  %v3519 = vsel %vm3518, %v3511, %v3515
  %v3520 = vand.u32 2147483647, %v3283
  %vm3521 = vcmp.eq.f32.partialorder %v3520, 8.507059e+37
  %v3522 = vand.u32 %v3283, 2147483648
  %v3523 = vor.u32 1.1754944e-38, %v3522
  %v3524 = vsel %vm3521, %v3523, %v3519
  %v3525 = vmul.f32 1.0, %v3524
  %v3526 = vrcp.pop %v3284
  %v3527 = vmul.f32 %v3284, %v3526
  %v3528 = vsub.f32 1.0, %v3527
  %v3529 = vmul.f32 %v3526, %v3528
  %v3530 = vadd.f32 %v3526, %v3529
  %vm3531 = vweird.f32 %v3284
  %vm3532 = vweird.f32 %v3526
  %vm3533 = vmor %vm3531, %vm3532
  %v3534 = vsel %vm3533, %v3526, %v3530
  %v3535 = vand.u32 2147483647, %v3284
  %vm3536 = vcmp.eq.f32.partialorder %v3535, 8.507059e+37
  %v3537 = vand.u32 %v3284, 2147483648
  %v3538 = vor.u32 1.1754944e-38, %v3537
  %v3539 = vsel %vm3536, %v3538, %v3534
  %v3540 = vmul.f32 1.0, %v3539
  %v3541 = vrcp.pop %v3285
  %v3542 = vmul.f32 %v3285, %v3541
  %v3543 = vsub.f32 1.0, %v3542
  %v3544 = vmul.f32 %v3541, %v3543
  %v3545 = vadd.f32 %v3541, %v3544
  %vm3546 = vweird.f32 %v3285
  %vm3547 = vweird.f32 %v3541
  %vm3548 = vmor %vm3546, %vm3547
  %v3549 = vsel %vm3548, %v3541, %v3545
  %v3550 = vand.u32 2147483647, %v3285
  %vm3551 = vcmp.eq.f32.partialorder %v3550, 8.507059e+37
  %v3552 = vand.u32 %v3285, 2147483648
  %v3553 = vor.u32 1.1754944e-38, %v3552
  %v3554 = vsel %vm3551, %v3553, %v3549
  %v3555 = vmul.f32 1.0, %v3554
  %v3556 = vrcp.pop %v3286
  %v3557 = vmul.f32 %v3286, %v3556
  %v3558 = vsub.f32 1.0, %v3557
  %v3559 = vmul.f32 %v3556, %v3558
  %v3560 = vadd.f32 %v3556, %v3559
  %vm3561 = vweird.f32 %v3286
  %vm3562 = vweird.f32 %v3556
  %vm3563 = vmor %vm3561, %vm3562
  %v3564 = vsel %vm3563, %v3556, %v3560
  %v3565 = vand.u32 2147483647, %v3286
  %vm3566 = vcmp.eq.f32.partialorder %v3565, 8.507059e+37
  %v3567 = vand.u32 %v3286, 2147483648
  %v3568 = vor.u32 1.1754944e-38, %v3567
  %v3569 = vsel %vm3566, %v3568, %v3564
  %v3570 = vmul.f32 1.0, %v3569
  %v3571 = vrcp.pop %v3287
  %v3572 = vmul.f32 %v3287, %v3571
  %v3573 = vsub.f32 1.0, %v3572
  %v3574 = vmul.f32 %v3571, %v3573
  %v3575 = vadd.f32 %v3571, %v3574
  %vm3576 = vweird.f32 %v3287
  %vm3577 = vweird.f32 %v3571
  %vm3578 = vmor %vm3576, %vm3577
  %v3579 = vsel %vm3578, %v3571, %v3575
  %v3580 = vand.u32 2147483647, %v3287
  %vm3581 = vcmp.eq.f32.partialorder %v3580, 8.507059e+37
  %v3582 = vand.u32 %v3287, 2147483648
  %v3583 = vor.u32 1.1754944e-38, %v3582
  %v3584 = vsel %vm3581, %v3583, %v3579
  %v3585 = vmul.f32 1.0, %v3584
  %v3586 = vrcp.pop %v3288
  %v3587 = vmul.f32 %v3288, %v3586
  %v3588 = vsub.f32 1.0, %v3587
  %v3589 = vmul.f32 %v3586, %v3588
  %v3590 = vadd.f32 %v3586, %v3589
  %vm3591 = vweird.f32 %v3288
  %vm3592 = vweird.f32 %v3586
  %vm3593 = vmor %vm3591, %vm3592
  %v3594 = vsel %vm3593, %v3586, %v3590
  %v3595 = vand.u32 2147483647, %v3288
  %vm3596 = vcmp.eq.f32.partialorder %v3595, 8.507059e+37
  %v3597 = vand.u32 %v3288, 2147483648
  %v3598 = vor.u32 1.1754944e-38, %v3597
  %v3599 = vsel %vm3596, %v3598, %v3594
  %v3600 = vmul.f32 1.0, %v3599
  %v3601 = vrcp.pop %v3289
  %v3602 = vmul.f32 %v3289, %v3601
  %v3603 = vsub.f32 1.0, %v3602
  %v3604 = vmul.f32 %v3601, %v3603
  %v3605 = vadd.f32 %v3601, %v3604
  %vm3606 = vweird.f32 %v3289
  %vm3607 = vweird.f32 %v3601
  %vm3608 = vmor %vm3606, %vm3607
  %v3609 = vsel %vm3608, %v3601, %v3605
  %v3610 = vand.u32 2147483647, %v3289
  %vm3611 = vcmp.eq.f32.partialorder %v3610, 8.507059e+37
  %v3612 = vand.u32 %v3289, 2147483648
  %v3613 = vor.u32 1.1754944e-38, %v3612
  %v3614 = vsel %vm3611, %v3613, %v3609
  %v3615 = vmul.f32 1.0, %v3614
  %v3616 = vrcp.pop %v3290
  %v3617 = vmul.f32 %v3290, %v3616
  %v3618 = vsub.f32 1.0, %v3617
  %v3619 = vmul.f32 %v3616, %v3618
  %v3620 = vadd.f32 %v3616, %v3619
  %vm3621 = vweird.f32 %v3290
  %vm3622 = vweird.f32 %v3616
  %vm3623 = vmor %vm3621, %vm3622
  %v3624 = vsel %vm3623, %v3616, %v3620
  %v3625 = vand.u32 2147483647, %v3290
  %vm3626 = vcmp.eq.f32.partialorder %v3625, 8.507059e+37
  %v3627 = vand.u32 %v3290, 2147483648
  %v3628 = vor.u32 1.1754944e-38, %v3627
  %v3629 = vsel %vm3626, %v3628, %v3624
  %v3630 = vmul.f32 1.0, %v3629
  %v3631 = vrcp.pop %v3291
  %v3632 = vmul.f32 %v3291, %v3631
  %v3633 = vsub.f32 1.0, %v3632
  %v3634 = vmul.f32 %v3631, %v3633
  %v3635 = vadd.f32 %v3631, %v3634
  %vm3636 = vweird.f32 %v3291
  %vm3637 = vweird.f32 %v3631
  %vm3638 = vmor %vm3636, %vm3637
  %v3639 = vsel %vm3638, %v3631, %v3635
  %v3640 = vand.u32 2147483647, %v3291
  %vm3641 = vcmp.eq.f32.partialorder %v3640, 8.507059e+37
  %v3642 = vand.u32 %v3291, 2147483648
  %v3643 = vor.u32 1.1754944e-38, %v3642
  %v3644 = vsel %vm3641, %v3643, %v3639
  %v3645 = vmul.f32 1.0, %v3644
  %v3646 = vrcp.pop %v3292
  %v3647 = vmul.f32 %v3292, %v3646
  %v3648 = vsub.f32 1.0, %v3647
  %v3649 = vmul.f32 %v3646, %v3648
  %v3650 = vadd.f32 %v3646, %v3649
  %vm3651 = vweird.f32 %v3292
  %vm3652 = vweird.f32 %v3646
  %vm3653 = vmor %vm3651, %vm3652
  %v3654 = vsel %vm3653, %v3646, %v3650
  %v3655 = vand.u32 2147483647, %v3292
  %vm3656 = vcmp.eq.f32.partialorder %v3655, 8.507059e+37
  %v3657 = vand.u32 %v3292, 2147483648
  %v3658 = vor.u32 1.1754944e-38, %v3657
  %v3659 = vsel %vm3656, %v3658, %v3654
  %v3660 = vmul.f32 1.0, %v3659
  %v3661 = vrcp.pop %v3293
  %v3662 = vmul.f32 %v3293, %v3661
  %v3663 = vsub.f32 1.0, %v3662
  %v3664 = vmul.f32 %v3661, %v3663
  %v3665 = vadd.f32 %v3661, %v3664
  %vm3666 = vweird.f32 %v3293
  %vm3667 = vweird.f32 %v3661
  %vm3668 = vmor %vm3666, %vm3667
  %v3669 = vsel %vm3668, %v3661, %v3665
  %v3670 = vand.u32 2147483647, %v3293
  %vm3671 = vcmp.eq.f32.partialorder %v3670, 8.507059e+37
  %v3672 = vand.u32 %v3293, 2147483648
  %v3673 = vor.u32 1.1754944e-38, %v3672
  %v3674 = vsel %vm3671, %v3673, %v3669
  %v3675 = vmul.f32 1.0, %v3674
  %v3676 = vrcp.pop %v3294
  %v3677 = vmul.f32 %v3294, %v3676
  %v3678 = vsub.f32 1.0, %v3677
  %v3679 = vmul.f32 %v3676, %v3678
  %v3680 = vadd.f32 %v3676, %v3679
  %vm3681 = vweird.f32 %v3294
  %vm3682 = vweird.f32 %v3676
  %vm3683 = vmor %vm3681, %vm3682
  %v3684 = vsel %vm3683, %v3676, %v3680
  %v3685 = vand.u32 2147483647, %v3294
  %vm3686 = vcmp.eq.f32.partialorder %v3685, 8.507059e+37
  %v3687 = vand.u32 %v3294, 2147483648
  %v3688 = vor.u32 1.1754944e-38, %v3687
  %v3689 = vsel %vm3686, %v3688, %v3684
  %v3690 = vmul.f32 1.0, %v3689
  %v3691 = vrcp.pop %v3295
  %v3692 = vmul.f32 %v3295, %v3691
  %v3693 = vsub.f32 1.0, %v3692
  %v3694 = vmul.f32 %v3691, %v3693
  %v3695 = vadd.f32 %v3691, %v3694
  %vm3696 = vweird.f32 %v3295
  %vm3697 = vweird.f32 %v3691
  %vm3698 = vmor %vm3696, %vm3697
  %v3699 = vsel %vm3698, %v3691, %v3695
  %v3700 = vand.u32 2147483647, %v3295
  %vm3701 = vcmp.eq.f32.partialorder %v3700, 8.507059e+37
  %v3702 = vand.u32 %v3295, 2147483648
  %v3703 = vor.u32 1.1754944e-38, %v3702
  %v3704 = vsel %vm3701, %v3703, %v3699
  %v3705 = vmul.f32 1.0, %v3704
  %v3706 = vrcp.pop %v3296
  %v3707 = vmul.f32 %v3296, %v3706
  %v3708 = vsub.f32 1.0, %v3707
  %v3709 = vmul.f32 %v3706, %v3708
  %v3710 = vadd.f32 %v3706, %v3709
  %vm3711 = vweird.f32 %v3296
  %vm3712 = vweird.f32 %v3706
  %vm3713 = vmor %vm3711, %vm3712
  %v3714 = vsel %vm3713, %v3706, %v3710
  %v3715 = vand.u32 2147483647, %v3296
  %vm3716 = vcmp.eq.f32.partialorder %v3715, 8.507059e+37
  %v3717 = vand.u32 %v3296, 2147483648
  %v3718 = vor.u32 1.1754944e-38, %v3717
  %v3719 = vsel %vm3716, %v3718, %v3714
  %v3720 = vmul.f32 1.0, %v3719
  %v3721 = vrcp.pop %v3297
  %v3722 = vmul.f32 %v3297, %v3721
  %v3723 = vsub.f32 1.0, %v3722
  %v3724 = vmul.f32 %v3721, %v3723
  %v3725 = vadd.f32 %v3721, %v3724
  %vm3726 = vweird.f32 %v3297
  %vm3727 = vweird.f32 %v3721
  %vm3728 = vmor %vm3726, %vm3727
  %v3729 = vsel %vm3728, %v3721, %v3725
  %v3730 = vand.u32 2147483647, %v3297
  %vm3731 = vcmp.eq.f32.partialorder %v3730, 8.507059e+37
  %v3732 = vand.u32 %v3297, 2147483648
  %v3733 = vor.u32 1.1754944e-38, %v3732
  %v3734 = vsel %vm3731, %v3733, %v3729
  %v3735 = vmul.f32 1.0, %v3734
  %v3736 = vrcp.pop %v3298
  %v3737 = vmul.f32 %v3298, %v3736
  %v3738 = vsub.f32 1.0, %v3737
  %v3739 = vmul.f32 %v3736, %v3738
  %v3740 = vadd.f32 %v3736, %v3739
  %vm3741 = vweird.f32 %v3298
  %vm3742 = vweird.f32 %v3736
  %vm3743 = vmor %vm3741, %vm3742
  %v3744 = vsel %vm3743, %v3736, %v3740
  %v3745 = vand.u32 2147483647, %v3298
  %vm3746 = vcmp.eq.f32.partialorder %v3745, 8.507059e+37
  %v3747 = vand.u32 %v3298, 2147483648
  %v3748 = vor.u32 1.1754944e-38, %v3747
  %v3749 = vsel %vm3746, %v3748, %v3744
  %v3750 = vmul.f32 1.0, %v3749
  %v3751 = vrcp.pop %v3299
  %v3752 = vmul.f32 %v3299, %v3751
  %v3753 = vsub.f32 1.0, %v3752
  %v3754 = vmul.f32 %v3751, %v3753
  %v3755 = vadd.f32 %v3751, %v3754
  %vm3756 = vweird.f32 %v3299
  %vm3757 = vweird.f32 %v3751
  %vm3758 = vmor %vm3756, %vm3757
  %v3759 = vsel %vm3758, %v3751, %v3755
  %v3760 = vand.u32 2147483647, %v3299
  %vm3761 = vcmp.eq.f32.partialorder %v3760, 8.507059e+37
  %v3762 = vand.u32 %v3299, 2147483648
  %v3763 = vor.u32 1.1754944e-38, %v3762
  %v3764 = vsel %vm3761, %v3763, %v3759
  %v3765 = vmul.f32 1.0, %v3764
  %v3766 = vrcp.pop %v3300
  %v3767 = vmul.f32 %v3300, %v3766
  %v3768 = vsub.f32 1.0, %v3767
  %v3769 = vmul.f32 %v3766, %v3768
  %v3770 = vadd.f32 %v3766, %v3769
  %vm3771 = vweird.f32 %v3300
  %vm3772 = vweird.f32 %v3766
  %vm3773 = vmor %vm3771, %vm3772
  %v3774 = vsel %vm3773, %v3766, %v3770
  %v3775 = vand.u32 2147483647, %v3300
  %vm3776 = vcmp.eq.f32.partialorder %v3775, 8.507059e+37
  %v3777 = vand.u32 %v3300, 2147483648
  %v3778 = vor.u32 1.1754944e-38, %v3777
  %v3779 = vsel %vm3776, %v3778, %v3774
  %v3780 = vmul.f32 1.0, %v3779
  %v3781 = vmul.f32 %v3036, %v3315
  %v3782 = vmul.f32 %v3134, %v3330
  %v3783 = vmul.f32 %v3038, %v3345
  %v3784 = vmul.f32 %v3136, %v3360
  %v3785 = vmul.f32 %v3041, %v3375
  %v3786 = vmul.f32 %v3139, %v3390
  %v3787 = vmul.f32 %v3043, %v3405
  %v3788 = vmul.f32 %v3141, %v3420
  %v3789 = vmul.f32 %v3046, %v3435
  %v3790 = vmul.f32 %v3144, %v3450
  %v3791 = vmul.f32 %v3048, %v3465
  %v3792 = vmul.f32 %v3146, %v3480
  %v3793 = vmul.f32 %v3051, %v3495
  %v3794 = vmul.f32 %v3149, %v3510
  %v3795 = vmul.f32 %v3053, %v3525
  %v3796 = vmul.f32 %v3151, %v3540
  %v3797 = vmul.f32 %v3056, %v3555
  %v3798 = vmul.f32 %v3154, %v3570
  %v3799 = vmul.f32 %v3058, %v3585
  %v3800 = vmul.f32 %v3156, %v3600
  %v3801 = vmul.f32 %v3061, %v3615
  %v3802 = vmul.f32 %v3159, %v3630
  %v3803 = vmul.f32 %v3063, %v3645
  %v3804 = vmul.f32 %v3161, %v3660
  %v3805 = vmul.f32 %v3066, %v3675
  %v3806 = vmul.f32 %v3164, %v3690
  %v3807 = vmul.f32 %v3068, %v3705
  %v3808 = vmul.f32 %v3166, %v3720
  %v3809 = vmul.f32 %v3071, %v3735
  %v3810 = vmul.f32 %v3169, %v3750
  %v3811 = vmul.f32 %v3073, %v3765
  %v3812 = vmul.f32 %v3171, %v3780
  %v3813 = vpack.c.bf16 %v3783, %v3781
  %v3814 = vpack.c.bf16 %v3784, %v3782
  %v3815 = vpack.c.bf16 %v3787, %v3785
  %v3816 = vpack.c.bf16 %v3788, %v3786
  %v3817 = vpack.c.bf16 %v3791, %v3789
  %v3818 = vpack.c.bf16 %v3792, %v3790
  %v3819 = vpack.c.bf16 %v3795, %v3793
  %v3820 = vpack.c.bf16 %v3796, %v3794
  %v3821 = vpack.c.bf16 %v3799, %v3797
  %v3822 = vpack.c.bf16 %v3800, %v3798
  %v3823 = vpack.c.bf16 %v3803, %v3801
  %v3824 = vpack.c.bf16 %v3804, %v3802
  %v3825 = vpack.c.bf16 %v3807, %v3805
  %v3826 = vpack.c.bf16 %v3808, %v3806
  %v3827 = vpack.c.bf16 %v3811, %v3809
  %v3828 = vpack.c.bf16 %v3812, %v3810
  %s3829 = scalar_lea.vmem %s2, 1024
  %v3830 = vld [vmem:[%s3829] sm:$0xff]
  %v3831 = vld [vmem:[%s3829 + $0x8] sm:$0xff]
  %v3832 = vld [vmem:[%s3829 + $0x10] sm:$0xff]
  %v3833 = vld [vmem:[%s3829 + $0x18] sm:$0xff]
  %v3834 = vld [vmem:[%s3829 + $0x20] sm:$0xff]
  %v3835 = vld [vmem:[%s3829 + $0x28] sm:$0xff]
  %v3836 = vld [vmem:[%s3829 + $0x30] sm:$0xff]
  %v3837 = vld [vmem:[%s3829 + $0x38] sm:$0xff]
  %v3838 = vld [vmem:[%s3829 + $0x40] sm:$0xff]
  %v3839 = vld [vmem:[%s3829 + $0x48] sm:$0xff]
  %v3840 = vld [vmem:[%s3829 + $0x50] sm:$0xff]
  %v3841 = vld [vmem:[%s3829 + $0x58] sm:$0xff]
  %v3842 = vld [vmem:[%s3829 + $0x60] sm:$0xff]
  %v3843 = vld [vmem:[%s3829 + $0x68] sm:$0xff]
  %v3844 = vld [vmem:[%s3829 + $0x70] sm:$0xff]
  %v3845 = vld [vmem:[%s3829 + $0x78] sm:$0xff]
  %v3846 = vld [vmem:[%s3829 + $0x80] sm:$0xff]
  %v3847 = vld [vmem:[%s3829 + $0x88] sm:$0xff]
  %v3848 = vld [vmem:[%s3829 + $0x90] sm:$0xff]
  %v3849 = vld [vmem:[%s3829 + $0x98] sm:$0xff]
  %v3850 = vld [vmem:[%s3829 + $0xa0] sm:$0xff]
  %v3851 = vld [vmem:[%s3829 + $0xa8] sm:$0xff]
  %v3852 = vld [vmem:[%s3829 + $0xb0] sm:$0xff]
  %v3853 = vld [vmem:[%s3829 + $0xb8] sm:$0xff]
  %v3854 = vld [vmem:[%s3829 + $0xc0] sm:$0xff]
  %v3855 = vld [vmem:[%s3829 + $0xc8] sm:$0xff]
  %v3856 = vld [vmem:[%s3829 + $0xd0] sm:$0xff]
  %v3857 = vld [vmem:[%s3829 + $0xd8] sm:$0xff]
  %v3858 = vld [vmem:[%s3829 + $0xe0] sm:$0xff]
  %v3859 = vld [vmem:[%s3829 + $0xe8] sm:$0xff]
  %v3860 = vld [vmem:[%s3829 + $0xf0] sm:$0xff]
  %v3861 = vld [vmem:[%s3829 + $0xf8] sm:$0xff]
  %s3862 = scalar_lea.vmem %s3, 3
  %v3863 = vld [vmem:[%s3862] ss:$8 sm:$0x3]
  %v3865 = vperm.slane %v3863, 0
  %v3866 = vperm.slane %v3863, 1
  %v3901 = vunpack.c.l.b16 %v3830
  %v3902 = vunpack.c.h.b16 %v3830
  %v3903 = vunpack.c.l.b16 %v3831
  %v3904 = vunpack.c.h.b16 %v3831
  %v3905 = vunpack.c.l.b16 %v3832
  %v3906 = vunpack.c.h.b16 %v3832
  %v3907 = vunpack.c.l.b16 %v3833
  %v3908 = vunpack.c.h.b16 %v3833
  %v3909 = vunpack.c.l.b16 %v3834
  %v3910 = vunpack.c.h.b16 %v3834
  %v3911 = vunpack.c.l.b16 %v3835
  %v3912 = vunpack.c.h.b16 %v3835
  %v3913 = vunpack.c.l.b16 %v3836
  %v3914 = vunpack.c.h.b16 %v3836
  %v3915 = vunpack.c.l.b16 %v3837
  %v3916 = vunpack.c.h.b16 %v3837
  %v3917 = vunpack.c.l.b16 %v3838
  %v3918 = vunpack.c.h.b16 %v3838
  %v3919 = vunpack.c.l.b16 %v3839
  %v3920 = vunpack.c.h.b16 %v3839
  %v3921 = vunpack.c.l.b16 %v3840
  %v3922 = vunpack.c.h.b16 %v3840
  %v3923 = vunpack.c.l.b16 %v3841
  %v3924 = vunpack.c.h.b16 %v3841
  %v3925 = vunpack.c.l.b16 %v3842
  %v3926 = vunpack.c.h.b16 %v3842
  %v3927 = vunpack.c.l.b16 %v3843
  %v3928 = vunpack.c.h.b16 %v3843
  %v3929 = vunpack.c.l.b16 %v3844
  %v3930 = vunpack.c.h.b16 %v3844
  %v3931 = vunpack.c.l.b16 %v3845
  %v3932 = vunpack.c.h.b16 %v3845
  %v3933 = vunpack.c.l.b16 %v3846
  %v3934 = vunpack.c.h.b16 %v3846
  %v3935 = vunpack.c.l.b16 %v3847
  %v3936 = vunpack.c.h.b16 %v3847
  %v3937 = vunpack.c.l.b16 %v3848
  %v3938 = vunpack.c.h.b16 %v3848
  %v3939 = vunpack.c.l.b16 %v3849
  %v3940 = vunpack.c.h.b16 %v3849
  %v3941 = vunpack.c.l.b16 %v3850
  %v3942 = vunpack.c.h.b16 %v3850
  %v3943 = vunpack.c.l.b16 %v3851
  %v3944 = vunpack.c.h.b16 %v3851
  %v3945 = vunpack.c.l.b16 %v3852
  %v3946 = vunpack.c.h.b16 %v3852
  %v3947 = vunpack.c.l.b16 %v3853
  %v3948 = vunpack.c.h.b16 %v3853
  %v3949 = vunpack.c.l.b16 %v3854
  %v3950 = vunpack.c.h.b16 %v3854
  %v3951 = vunpack.c.l.b16 %v3855
  %v3952 = vunpack.c.h.b16 %v3855
  %v3953 = vunpack.c.l.b16 %v3856
  %v3954 = vunpack.c.h.b16 %v3856
  %v3955 = vunpack.c.l.b16 %v3857
  %v3956 = vunpack.c.h.b16 %v3857
  %v3957 = vunpack.c.l.b16 %v3858
  %v3958 = vunpack.c.h.b16 %v3858
  %v3959 = vunpack.c.l.b16 %v3859
  %v3960 = vunpack.c.h.b16 %v3859
  %v3961 = vunpack.c.l.b16 %v3860
  %v3962 = vunpack.c.h.b16 %v3860
  %v3963 = vunpack.c.l.b16 %v3861
  %v3964 = vunpack.c.h.b16 %v3861
  %v3965 = vpack.c.b16 %v3903, %v3901
  %v3966 = vpack.c.b16 %v3904, %v3902
  %v3967 = vpack.c.b16 %v3907, %v3905
  %v3968 = vpack.c.b16 %v3908, %v3906
  %v3969 = vpack.c.b16 %v3911, %v3909
  %v3970 = vpack.c.b16 %v3912, %v3910
  %v3971 = vpack.c.b16 %v3915, %v3913
  %v3972 = vpack.c.b16 %v3916, %v3914
  %v3973 = vpack.c.b16 %v3919, %v3917
  %v3974 = vpack.c.b16 %v3920, %v3918
  %v3975 = vpack.c.b16 %v3923, %v3921
  %v3976 = vpack.c.b16 %v3924, %v3922
  %v3977 = vpack.c.b16 %v3927, %v3925
  %v3978 = vpack.c.b16 %v3928, %v3926
  %v3979 = vpack.c.b16 %v3931, %v3929
  %v3980 = vpack.c.b16 %v3932, %v3930
  %v3981 = vpack.c.b16 %v3935, %v3933
  %v3982 = vpack.c.b16 %v3936, %v3934
  %v3983 = vpack.c.b16 %v3939, %v3937
  %v3984 = vpack.c.b16 %v3940, %v3938
  %v3985 = vpack.c.b16 %v3943, %v3941
  %v3986 = vpack.c.b16 %v3944, %v3942
  %v3987 = vpack.c.b16 %v3947, %v3945
  %v3988 = vpack.c.b16 %v3948, %v3946
  %v3989 = vpack.c.b16 %v3951, %v3949
  %v3990 = vpack.c.b16 %v3952, %v3950
  %v3991 = vpack.c.b16 %v3955, %v3953
  %v3992 = vpack.c.b16 %v3956, %v3954
  %v3993 = vpack.c.b16 %v3959, %v3957
  %v3994 = vpack.c.b16 %v3960, %v3958
  %v3995 = vpack.c.b16 %v3963, %v3961
  %v3996 = vpack.c.b16 %v3964, %v3962
  %4029 = vmatpush.bf16.msra.mxu0 %v3979
  %4030 = vmatpush.bf16.msra.mxu0 %v3977
  %4031 = vmatpush.bf16.msra.mxu0 %v3975
  %4032 = vmatpush.bf16.msra.mxu0 %v3973
  %4033 = vmatpush.bf16.msra.mxu0 %v3971
  %4034 = vmatpush.bf16.msra.mxu0 %v3969
  %4035 = vmatpush.bf16.msra.mxu0 %v3967
  %4036 = vmatpush.bf16.msra.mxu0 %v3965
  %4037 = vmatmul.bf16.gmra.mxu0 %v3813
  %v4038 = vpop.f32.mrf.mxu0
  %v4039 = vadd.f32 %v3865, %v4038
  %v4040 = vpop.f32.mrf.mxu0
  %v4041 = vadd.f32 %v3865, %v4040
  %4042 = vmatmul.bf16.gmra.mxu0 %v3815
  %v4043 = vpop.f32.mrf.mxu0
  %v4044 = vadd.f32 %v3865, %v4043
  %v4045 = vpop.f32.mrf.mxu0
  %v4046 = vadd.f32 %v3865, %v4045
  %4047 = vmatmul.bf16.gmra.mxu0 %v3817
  %v4048 = vpop.f32.mrf.mxu0
  %v4049 = vadd.f32 %v3865, %v4048
  %v4050 = vpop.f32.mrf.mxu0
  %v4051 = vadd.f32 %v3865, %v4050
  %4052 = vmatmul.bf16.gmra.mxu0 %v3819
  %v4053 = vpop.f32.mrf.mxu0
  %v4054 = vadd.f32 %v3865, %v4053
  %v4055 = vpop.f32.mrf.mxu0
  %v4056 = vadd.f32 %v3865, %v4055
  %4057 = vmatmul.bf16.gmra.mxu0 %v3821
  %v4058 = vpop.f32.mrf.mxu0
  %v4059 = vadd.f32 %v3865, %v4058
  %v4060 = vpop.f32.mrf.mxu0
  %v4061 = vadd.f32 %v3865, %v4060
  %4062 = vmatmul.bf16.gmra.mxu0 %v3823
  %v4063 = vpop.f32.mrf.mxu0
  %v4064 = vadd.f32 %v3865, %v4063
  %v4065 = vpop.f32.mrf.mxu0
  %v4066 = vadd.f32 %v3865, %v4065
  %4067 = vmatmul.bf16.gmra.mxu0 %v3825
  %v4068 = vpop.f32.mrf.mxu0
  %v4069 = vadd.f32 %v3865, %v4068
  %v4070 = vpop.f32.mrf.mxu0
  %v4071 = vadd.f32 %v3865, %v4070
  %4072 = vmatmul.bf16.gmra.mxu0 %v3827
  %v4073 = vpop.f32.mrf.mxu0
  %v4074 = vadd.f32 %v3865, %v4073
  %v4075 = vpop.f32.mrf.mxu0
  %v4076 = vadd.f32 %v3865, %v4075
  %4077 = vdwg.mxu0
  %4078 = vmatpush.bf16.msra.mxu0 %v3995
  %4079 = vmatpush.bf16.msra.mxu0 %v3993
  %4080 = vmatpush.bf16.msra.mxu0 %v3991
  %4081 = vmatpush.bf16.msra.mxu0 %v3989
  %4082 = vmatpush.bf16.msra.mxu0 %v3987
  %4083 = vmatpush.bf16.msra.mxu0 %v3985
  %4084 = vmatpush.bf16.msra.mxu0 %v3983
  %4085 = vmatpush.bf16.msra.mxu0 %v3981
  %4086 = vmatmul.bf16.gmra.mxu0 %v3814
  %v4087 = vpop.f32.mrf.mxu0
  %v4088 = vadd.f32 %v4039, %v4087
  %v4089 = vpop.f32.mrf.mxu0
  %v4090 = vadd.f32 %v4041, %v4089
  %4091 = vmatmul.bf16.gmra.mxu0 %v3816
  %v4092 = vpop.f32.mrf.mxu0
  %v4093 = vadd.f32 %v4044, %v4092
  %v4094 = vpop.f32.mrf.mxu0
  %v4095 = vadd.f32 %v4046, %v4094
  %4096 = vmatmul.bf16.gmra.mxu0 %v3818
  %v4097 = vpop.f32.mrf.mxu0
  %v4098 = vadd.f32 %v4049, %v4097
  %v4099 = vpop.f32.mrf.mxu0
  %v4100 = vadd.f32 %v4051, %v4099
  %4101 = vmatmul.bf16.gmra.mxu0 %v3820
  %v4102 = vpop.f32.mrf.mxu0
  %v4103 = vadd.f32 %v4054, %v4102
  %v4104 = vpop.f32.mrf.mxu0
  %v4105 = vadd.f32 %v4056, %v4104
  %4106 = vmatmul.bf16.gmra.mxu0 %v3822
  %v4107 = vpop.f32.mrf.mxu0
  %v4108 = vadd.f32 %v4059, %v4107
  %v4109 = vpop.f32.mrf.mxu0
  %v4110 = vadd.f32 %v4061, %v4109
  %4111 = vmatmul.bf16.gmra.mxu0 %v3824
  %v4112 = vpop.f32.mrf.mxu0
  %v4113 = vadd.f32 %v4064, %v4112
  %v4114 = vpop.f32.mrf.mxu0
  %v4115 = vadd.f32 %v4066, %v4114
  %4116 = vmatmul.bf16.gmra.mxu0 %v3826
  %v4117 = vpop.f32.mrf.mxu0
  %v4118 = vadd.f32 %v4069, %v4117
  %v4119 = vpop.f32.mrf.mxu0
  %v4120 = vadd.f32 %v4071, %v4119
  %4121 = vmatmul.bf16.gmra.mxu0 %v3828
  %v4122 = vpop.f32.mrf.mxu0
  %v4123 = vadd.f32 %v4074, %v4122
  %v4124 = vpop.f32.mrf.mxu0
  %v4125 = vadd.f32 %v4076, %v4124
  %4126 = vdwg.mxu0
  %4127 = vmatpush.bf16.msra.mxu0 %v3980
  %4128 = vmatpush.bf16.msra.mxu0 %v3978
  %4129 = vmatpush.bf16.msra.mxu0 %v3976
  %4130 = vmatpush.bf16.msra.mxu0 %v3974
  %4131 = vmatpush.bf16.msra.mxu0 %v3972
  %4132 = vmatpush.bf16.msra.mxu0 %v3970
  %4133 = vmatpush.bf16.msra.mxu0 %v3968
  %4134 = vmatpush.bf16.msra.mxu0 %v3966
  %4135 = vmatmul.bf16.gmra.mxu0 %v3813
  %v4136 = vpop.f32.mrf.mxu0
  %v4137 = vadd.f32 %v3866, %v4136
  %v4138 = vpop.f32.mrf.mxu0
  %v4139 = vadd.f32 %v3866, %v4138
  %4140 = vmatmul.bf16.gmra.mxu0 %v3815
  %v4141 = vpop.f32.mrf.mxu0
  %v4142 = vadd.f32 %v3866, %v4141
  %v4143 = vpop.f32.mrf.mxu0
  %v4144 = vadd.f32 %v3866, %v4143
  %4145 = vmatmul.bf16.gmra.mxu0 %v3817
  %v4146 = vpop.f32.mrf.mxu0
  %v4147 = vadd.f32 %v3866, %v4146
  %v4148 = vpop.f32.mrf.mxu0
  %v4149 = vadd.f32 %v3866, %v4148
  %4150 = vmatmul.bf16.gmra.mxu0 %v3819
  %v4151 = vpop.f32.mrf.mxu0
  %v4152 = vadd.f32 %v3866, %v4151
  %v4153 = vpop.f32.mrf.mxu0
  %v4154 = vadd.f32 %v3866, %v4153
  %4155 = vmatmul.bf16.gmra.mxu0 %v3821
  %v4156 = vpop.f32.mrf.mxu0
  %v4157 = vadd.f32 %v3866, %v4156
  %v4158 = vpop.f32.mrf.mxu0
  %v4159 = vadd.f32 %v3866, %v4158
  %4160 = vmatmul.bf16.gmra.mxu0 %v3823
  %v4161 = vpop.f32.mrf.mxu0
  %v4162 = vadd.f32 %v3866, %v4161
  %v4163 = vpop.f32.mrf.mxu0
  %v4164 = vadd.f32 %v3866, %v4163
  %4165 = vmatmul.bf16.gmra.mxu0 %v3825
  %v4166 = vpop.f32.mrf.mxu0
  %v4167 = vadd.f32 %v3866, %v4166
  %v4168 = vpop.f32.mrf.mxu0
  %v4169 = vadd.f32 %v3866, %v4168
  %4170 = vmatmul.bf16.gmra.mxu0 %v3827
  %v4171 = vpop.f32.mrf.mxu0
  %v4172 = vadd.f32 %v3866, %v4171
  %v4173 = vpop.f32.mrf.mxu0
  %v4174 = vadd.f32 %v3866, %v4173
  %4175 = vdwg.mxu0
  %4176 = vmatpush.bf16.msra.mxu0 %v3996
  %4177 = vmatpush.bf16.msra.mxu0 %v3994
  %4178 = vmatpush.bf16.msra.mxu0 %v3992
  %4179 = vmatpush.bf16.msra.mxu0 %v3990
  %4180 = vmatpush.bf16.msra.mxu0 %v3988
  %4181 = vmatpush.bf16.msra.mxu0 %v3986
  %4182 = vmatpush.bf16.msra.mxu0 %v3984
  %4183 = vmatpush.bf16.msra.mxu0 %v3982
  %4184 = vmatmul.bf16.gmra.mxu0 %v3814
  %v4185 = vpop.f32.mrf.mxu0
  %v4186 = vadd.f32 %v4137, %v4185
  %v4187 = vpop.f32.mrf.mxu0
  %v4188 = vadd.f32 %v4139, %v4187
  %4189 = vmatmul.bf16.gmra.mxu0 %v3816
  %v4190 = vpop.f32.mrf.mxu0
  %v4191 = vadd.f32 %v4142, %v4190
  %v4192 = vpop.f32.mrf.mxu0
  %v4193 = vadd.f32 %v4144, %v4192
  %4194 = vmatmul.bf16.gmra.mxu0 %v3818
  %v4195 = vpop.f32.mrf.mxu0
  %v4196 = vadd.f32 %v4147, %v4195
  %v4197 = vpop.f32.mrf.mxu0
  %v4198 = vadd.f32 %v4149, %v4197
  %4199 = vmatmul.bf16.gmra.mxu0 %v3820
  %v4200 = vpop.f32.mrf.mxu0
  %v4201 = vadd.f32 %v4152, %v4200
  %v4202 = vpop.f32.mrf.mxu0
  %v4203 = vadd.f32 %v4154, %v4202
  %4204 = vmatmul.bf16.gmra.mxu0 %v3822
  %v4205 = vpop.f32.mrf.mxu0
  %v4206 = vadd.f32 %v4157, %v4205
  %v4207 = vpop.f32.mrf.mxu0
  %v4208 = vadd.f32 %v4159, %v4207
  %4209 = vmatmul.bf16.gmra.mxu0 %v3824
  %v4210 = vpop.f32.mrf.mxu0
  %v4211 = vadd.f32 %v4162, %v4210
  %v4212 = vpop.f32.mrf.mxu0
  %v4213 = vadd.f32 %v4164, %v4212
  %4214 = vmatmul.bf16.gmra.mxu0 %v3826
  %v4215 = vpop.f32.mrf.mxu0
  %v4216 = vadd.f32 %v4167, %v4215
  %v4217 = vpop.f32.mrf.mxu0
  %v4218 = vadd.f32 %v4169, %v4217
  %4219 = vmatmul.bf16.gmra.mxu0 %v3828
  %v4220 = vpop.f32.mrf.mxu0
  %v4221 = vadd.f32 %v4172, %v4220
  %v4222 = vpop.f32.mrf.mxu0
  %v4223 = vadd.f32 %v4174, %v4222
  %4224 = vdwg.mxu0
  %v4225 = vadd.f32 %v1547, %v4088
  %v4226 = vadd.f32 %v1645, %v4186
  %v4227 = vadd.f32 %v1549, %v4090
  %v4228 = vadd.f32 %v1647, %v4188
  %v4229 = vadd.f32 %v1552, %v4093
  %v4230 = vadd.f32 %v1650, %v4191
  %v4231 = vadd.f32 %v1554, %v4095
  %v4232 = vadd.f32 %v1652, %v4193
  %v4233 = vadd.f32 %v1557, %v4098
  %v4234 = vadd.f32 %v1655, %v4196
  %v4235 = vadd.f32 %v1559, %v4100
  %v4236 = vadd.f32 %v1657, %v4198
  %v4237 = vadd.f32 %v1562, %v4103
  %v4238 = vadd.f32 %v1660, %v4201
  %v4239 = vadd.f32 %v1564, %v4105
  %v4240 = vadd.f32 %v1662, %v4203
  %v4241 = vadd.f32 %v1567, %v4108
  %v4242 = vadd.f32 %v1665, %v4206
  %v4243 = vadd.f32 %v1569, %v4110
  %v4244 = vadd.f32 %v1667, %v4208
  %v4245 = vadd.f32 %v1572, %v4113
  %v4246 = vadd.f32 %v1670, %v4211
  %v4247 = vadd.f32 %v1574, %v4115
  %v4248 = vadd.f32 %v1672, %v4213
  %v4249 = vadd.f32 %v1577, %v4118
  %v4250 = vadd.f32 %v1675, %v4216
  %v4251 = vadd.f32 %v1579, %v4120
  %v4252 = vadd.f32 %v1677, %v4218
  %v4253 = vadd.f32 %v1582, %v4123
  %v4254 = vadd.f32 %v1680, %v4221
  %v4255 = vadd.f32 %v1584, %v4125
  %v4256 = vadd.f32 %v1682, %v4223
  %s4257 = scalar_lea.vmem %s2, 1280
  %v4258 = vld [vmem:[%s4257] sm:$0xff]
  %v4259 = vld [vmem:[%s4257 + $0x8] sm:$0xff]
  %v4260 = vld [vmem:[%s4257 + $0x10] sm:$0xff]
  %v4261 = vld [vmem:[%s4257 + $0x18] sm:$0xff]
  %v4262 = vld [vmem:[%s4257 + $0x20] sm:$0xff]
  %v4263 = vld [vmem:[%s4257 + $0x28] sm:$0xff]
  %v4264 = vld [vmem:[%s4257 + $0x30] sm:$0xff]
  %v4265 = vld [vmem:[%s4257 + $0x38] sm:$0xff]
  %v4266 = vld [vmem:[%s4257 + $0x40] sm:$0xff]
  %v4267 = vld [vmem:[%s4257 + $0x48] sm:$0xff]
  %v4268 = vld [vmem:[%s4257 + $0x50] sm:$0xff]
  %v4269 = vld [vmem:[%s4257 + $0x58] sm:$0xff]
  %v4270 = vld [vmem:[%s4257 + $0x60] sm:$0xff]
  %v4271 = vld [vmem:[%s4257 + $0x68] sm:$0xff]
  %v4272 = vld [vmem:[%s4257 + $0x70] sm:$0xff]
  %v4273 = vld [vmem:[%s4257 + $0x78] sm:$0xff]
  %v4274 = vld [vmem:[%s4257 + $0x80] sm:$0xff]
  %v4275 = vld [vmem:[%s4257 + $0x88] sm:$0xff]
  %v4276 = vld [vmem:[%s4257 + $0x90] sm:$0xff]
  %v4277 = vld [vmem:[%s4257 + $0x98] sm:$0xff]
  %v4278 = vld [vmem:[%s4257 + $0xa0] sm:$0xff]
  %v4279 = vld [vmem:[%s4257 + $0xa8] sm:$0xff]
  %v4280 = vld [vmem:[%s4257 + $0xb0] sm:$0xff]
  %v4281 = vld [vmem:[%s4257 + $0xb8] sm:$0xff]
  %v4282 = vld [vmem:[%s4257 + $0xc0] sm:$0xff]
  %v4283 = vld [vmem:[%s4257 + $0xc8] sm:$0xff]
  %v4284 = vld [vmem:[%s4257 + $0xd0] sm:$0xff]
  %v4285 = vld [vmem:[%s4257 + $0xd8] sm:$0xff]
  %v4286 = vld [vmem:[%s4257 + $0xe0] sm:$0xff]
  %v4287 = vld [vmem:[%s4257 + $0xe8] sm:$0xff]
  %v4288 = vld [vmem:[%s4257 + $0xf0] sm:$0xff]
  %v4289 = vld [vmem:[%s4257 + $0xf8] sm:$0xff]
  %v4322 = vunpack.c.l.b16 %v4258
  %v4323 = vunpack.c.h.b16 %v4258
  %v4324 = vunpack.c.l.b16 %v4259
  %v4325 = vunpack.c.h.b16 %v4259
  %v4326 = vunpack.c.l.b16 %v4260
  %v4327 = vunpack.c.h.b16 %v4260
  %v4328 = vunpack.c.l.b16 %v4261
  %v4329 = vunpack.c.h.b16 %v4261
  %v4330 = vunpack.c.l.b16 %v4262
  %v4331 = vunpack.c.h.b16 %v4262
  %v4332 = vunpack.c.l.b16 %v4263
  %v4333 = vunpack.c.h.b16 %v4263
  %v4334 = vunpack.c.l.b16 %v4264
  %v4335 = vunpack.c.h.b16 %v4264
  %v4336 = vunpack.c.l.b16 %v4265
  %v4337 = vunpack.c.h.b16 %v4265
  %v4338 = vunpack.c.l.b16 %v4266
  %v4339 = vunpack.c.h.b16 %v4266
  %v4340 = vunpack.c.l.b16 %v4267
  %v4341 = vunpack.c.h.b16 %v4267
  %v4342 = vunpack.c.l.b16 %v4268
  %v4343 = vunpack.c.h.b16 %v4268
  %v4344 = vunpack.c.l.b16 %v4269
  %v4345 = vunpack.c.h.b16 %v4269
  %v4346 = vunpack.c.l.b16 %v4270
  %v4347 = vunpack.c.h.b16 %v4270
  %v4348 = vunpack.c.l.b16 %v4271
  %v4349 = vunpack.c.h.b16 %v4271
  %v4350 = vunpack.c.l.b16 %v4272
  %v4351 = vunpack.c.h.b16 %v4272
  %v4352 = vunpack.c.l.b16 %v4273
  %v4353 = vunpack.c.h.b16 %v4273
  %v4354 = vunpack.c.l.b16 %v4274
  %v4355 = vunpack.c.h.b16 %v4274
  %v4356 = vunpack.c.l.b16 %v4275
  %v4357 = vunpack.c.h.b16 %v4275
  %v4358 = vunpack.c.l.b16 %v4276
  %v4359 = vunpack.c.h.b16 %v4276
  %v4360 = vunpack.c.l.b16 %v4277
  %v4361 = vunpack.c.h.b16 %v4277
  %v4362 = vunpack.c.l.b16 %v4278
  %v4363 = vunpack.c.h.b16 %v4278
  %v4364 = vunpack.c.l.b16 %v4279
  %v4365 = vunpack.c.h.b16 %v4279
  %v4366 = vunpack.c.l.b16 %v4280
  %v4367 = vunpack.c.h.b16 %v4280
  %v4368 = vunpack.c.l.b16 %v4281
  %v4369 = vunpack.c.h.b16 %v4281
  %v4370 = vunpack.c.l.b16 %v4282
  %v4371 = vunpack.c.h.b16 %v4282
  %v4372 = vunpack.c.l.b16 %v4283
  %v4373 = vunpack.c.h.b16 %v4283
  %v4374 = vunpack.c.l.b16 %v4284
  %v4375 = vunpack.c.h.b16 %v4284
  %v4376 = vunpack.c.l.b16 %v4285
  %v4377 = vunpack.c.h.b16 %v4285
  %v4378 = vunpack.c.l.b16 %v4286
  %v4379 = vunpack.c.h.b16 %v4286
  %v4380 = vunpack.c.l.b16 %v4287
  %v4381 = vunpack.c.h.b16 %v4287
  %v4382 = vunpack.c.l.b16 %v4288
  %v4383 = vunpack.c.h.b16 %v4288
  %v4384 = vunpack.c.l.b16 %v4289
  %v4385 = vunpack.c.h.b16 %v4289
  %v4386 = vpack.c.b16 %v4324, %v4322
  %v4387 = vpack.c.b16 %v4325, %v4323
  %v4388 = vpack.c.b16 %v4328, %v4326
  %v4389 = vpack.c.b16 %v4329, %v4327
  %v4390 = vpack.c.b16 %v4332, %v4330
  %v4391 = vpack.c.b16 %v4333, %v4331
  %v4392 = vpack.c.b16 %v4336, %v4334
  %v4393 = vpack.c.b16 %v4337, %v4335
  %v4394 = vpack.c.b16 %v4340, %v4338
  %v4395 = vpack.c.b16 %v4341, %v4339
  %v4396 = vpack.c.b16 %v4344, %v4342
  %v4397 = vpack.c.b16 %v4345, %v4343
  %v4398 = vpack.c.b16 %v4348, %v4346
  %v4399 = vpack.c.b16 %v4349, %v4347
  %v4400 = vpack.c.b16 %v4352, %v4350
  %v4401 = vpack.c.b16 %v4353, %v4351
  %v4402 = vpack.c.b16 %v4356, %v4354
  %v4403 = vpack.c.b16 %v4357, %v4355
  %v4404 = vpack.c.b16 %v4360, %v4358
  %v4405 = vpack.c.b16 %v4361, %v4359
  %v4406 = vpack.c.b16 %v4364, %v4362
  %v4407 = vpack.c.b16 %v4365, %v4363
  %v4408 = vpack.c.b16 %v4368, %v4366
  %v4409 = vpack.c.b16 %v4369, %v4367
  %v4410 = vpack.c.b16 %v4372, %v4370
  %v4411 = vpack.c.b16 %v4373, %v4371
  %v4412 = vpack.c.b16 %v4376, %v4374
  %v4413 = vpack.c.b16 %v4377, %v4375
  %v4414 = vpack.c.b16 %v4380, %v4378
  %v4415 = vpack.c.b16 %v4381, %v4379
  %v4416 = vpack.c.b16 %v4384, %v4382
  %v4417 = vpack.c.b16 %v4385, %v4383
  %4450 = vmatpush.bf16.msra.mxu0 %v4400
  %4451 = vmatpush.bf16.msra.mxu0 %v4398
  %4452 = vmatpush.bf16.msra.mxu0 %v4396
  %4453 = vmatpush.bf16.msra.mxu0 %v4394
  %4454 = vmatpush.bf16.msra.mxu0 %v4392
  %4455 = vmatpush.bf16.msra.mxu0 %v4390
  %4456 = vmatpush.bf16.msra.mxu0 %v4388
  %4457 = vmatpush.bf16.msra.mxu0 %v4386
  %4458 = vmatmul.bf16.gmra.mxu0 %v1684
  %v4459 = vpop.f32.mrf.mxu0
  %v4460 = vadd.f32 0.0, %v4459
  %v4461 = vpop.f32.mrf.mxu0
  %v4462 = vadd.f32 0.0, %v4461
  %4463 = vmatmul.bf16.gmra.mxu0 %v1686
  %v4464 = vpop.f32.mrf.mxu0
  %v4465 = vadd.f32 0.0, %v4464
  %v4466 = vpop.f32.mrf.mxu0
  %v4467 = vadd.f32 0.0, %v4466
  %4468 = vmatmul.bf16.gmra.mxu0 %v1688
  %v4469 = vpop.f32.mrf.mxu0
  %v4470 = vadd.f32 0.0, %v4469
  %v4471 = vpop.f32.mrf.mxu0
  %v4472 = vadd.f32 0.0, %v4471
  %4473 = vmatmul.bf16.gmra.mxu0 %v1690
  %v4474 = vpop.f32.mrf.mxu0
  %v4475 = vadd.f32 0.0, %v4474
  %v4476 = vpop.f32.mrf.mxu0
  %v4477 = vadd.f32 0.0, %v4476
  %4478 = vmatmul.bf16.gmra.mxu0 %v1692
  %v4479 = vpop.f32.mrf.mxu0
  %v4480 = vadd.f32 0.0, %v4479
  %v4481 = vpop.f32.mrf.mxu0
  %v4482 = vadd.f32 0.0, %v4481
  %4483 = vmatmul.bf16.gmra.mxu0 %v1694
  %v4484 = vpop.f32.mrf.mxu0
  %v4485 = vadd.f32 0.0, %v4484
  %v4486 = vpop.f32.mrf.mxu0
  %v4487 = vadd.f32 0.0, %v4486
  %4488 = vmatmul.bf16.gmra.mxu0 %v1696
  %v4489 = vpop.f32.mrf.mxu0
  %v4490 = vadd.f32 0.0, %v4489
  %v4491 = vpop.f32.mrf.mxu0
  %v4492 = vadd.f32 0.0, %v4491
  %4493 = vmatmul.bf16.gmra.mxu0 %v1698
  %v4494 = vpop.f32.mrf.mxu0
  %v4495 = vadd.f32 0.0, %v4494
  %v4496 = vpop.f32.mrf.mxu0
  %v4497 = vadd.f32 0.0, %v4496
  %4498 = vdwg.mxu0
  %4499 = vmatpush.bf16.msra.mxu0 %v4416
  %4500 = vmatpush.bf16.msra.mxu0 %v4414
  %4501 = vmatpush.bf16.msra.mxu0 %v4412
  %4502 = vmatpush.bf16.msra.mxu0 %v4410
  %4503 = vmatpush.bf16.msra.mxu0 %v4408
  %4504 = vmatpush.bf16.msra.mxu0 %v4406
  %4505 = vmatpush.bf16.msra.mxu0 %v4404
  %4506 = vmatpush.bf16.msra.mxu0 %v4402
  %4507 = vmatmul.bf16.gmra.mxu0 %v1685
  %v4508 = vpop.f32.mrf.mxu0
  %v4509 = vadd.f32 %v4460, %v4508
  %v4510 = vpop.f32.mrf.mxu0
  %v4511 = vadd.f32 %v4462, %v4510
  %4512 = vmatmul.bf16.gmra.mxu0 %v1687
  %v4513 = vpop.f32.mrf.mxu0
  %v4514 = vadd.f32 %v4465, %v4513
  %v4515 = vpop.f32.mrf.mxu0
  %v4516 = vadd.f32 %v4467, %v4515
  %4517 = vmatmul.bf16.gmra.mxu0 %v1689
  %v4518 = vpop.f32.mrf.mxu0
  %v4519 = vadd.f32 %v4470, %v4518
  %v4520 = vpop.f32.mrf.mxu0
  %v4521 = vadd.f32 %v4472, %v4520
  %4522 = vmatmul.bf16.gmra.mxu0 %v1691
  %v4523 = vpop.f32.mrf.mxu0
  %v4524 = vadd.f32 %v4475, %v4523
  %v4525 = vpop.f32.mrf.mxu0
  %v4526 = vadd.f32 %v4477, %v4525
  %4527 = vmatmul.bf16.gmra.mxu0 %v1693
  %v4528 = vpop.f32.mrf.mxu0
  %v4529 = vadd.f32 %v4480, %v4528
  %v4530 = vpop.f32.mrf.mxu0
  %v4531 = vadd.f32 %v4482, %v4530
  %4532 = vmatmul.bf16.gmra.mxu0 %v1695
  %v4533 = vpop.f32.mrf.mxu0
  %v4534 = vadd.f32 %v4485, %v4533
  %v4535 = vpop.f32.mrf.mxu0
  %v4536 = vadd.f32 %v4487, %v4535
  %4537 = vmatmul.bf16.gmra.mxu0 %v1697
  %v4538 = vpop.f32.mrf.mxu0
  %v4539 = vadd.f32 %v4490, %v4538
  %v4540 = vpop.f32.mrf.mxu0
  %v4541 = vadd.f32 %v4492, %v4540
  %4542 = vmatmul.bf16.gmra.mxu0 %v1699
  %v4543 = vpop.f32.mrf.mxu0
  %v4544 = vadd.f32 %v4495, %v4543
  %v4545 = vpop.f32.mrf.mxu0
  %v4546 = vadd.f32 %v4497, %v4545
  %4547 = vdwg.mxu0
  %4548 = vmatpush.bf16.msra.mxu0 %v4401
  %4549 = vmatpush.bf16.msra.mxu0 %v4399
  %4550 = vmatpush.bf16.msra.mxu0 %v4397
  %4551 = vmatpush.bf16.msra.mxu0 %v4395
  %4552 = vmatpush.bf16.msra.mxu0 %v4393
  %4553 = vmatpush.bf16.msra.mxu0 %v4391
  %4554 = vmatpush.bf16.msra.mxu0 %v4389
  %4555 = vmatpush.bf16.msra.mxu0 %v4387
  %4556 = vmatmul.bf16.gmra.mxu0 %v1684
  %v4557 = vpop.f32.mrf.mxu0
  %v4558 = vadd.f32 0.0, %v4557
  %v4559 = vpop.f32.mrf.mxu0
  %v4560 = vadd.f32 0.0, %v4559
  %4561 = vmatmul.bf16.gmra.mxu0 %v1686
  %v4562 = vpop.f32.mrf.mxu0
  %v4563 = vadd.f32 0.0, %v4562
  %v4564 = vpop.f32.mrf.mxu0
  %v4565 = vadd.f32 0.0, %v4564
  %4566 = vmatmul.bf16.gmra.mxu0 %v1688
  %v4567 = vpop.f32.mrf.mxu0
  %v4568 = vadd.f32 0.0, %v4567
  %v4569 = vpop.f32.mrf.mxu0
  %v4570 = vadd.f32 0.0, %v4569
  %4571 = vmatmul.bf16.gmra.mxu0 %v1690
  %v4572 = vpop.f32.mrf.mxu0
  %v4573 = vadd.f32 0.0, %v4572
  %v4574 = vpop.f32.mrf.mxu0
  %v4575 = vadd.f32 0.0, %v4574
  %4576 = vmatmul.bf16.gmra.mxu0 %v1692
  %v4577 = vpop.f32.mrf.mxu0
  %v4578 = vadd.f32 0.0, %v4577
  %v4579 = vpop.f32.mrf.mxu0
  %v4580 = vadd.f32 0.0, %v4579
  %4581 = vmatmul.bf16.gmra.mxu0 %v1694
  %v4582 = vpop.f32.mrf.mxu0
  %v4583 = vadd.f32 0.0, %v4582
  %v4584 = vpop.f32.mrf.mxu0
  %v4585 = vadd.f32 0.0, %v4584
  %4586 = vmatmul.bf16.gmra.mxu0 %v1696
  %v4587 = vpop.f32.mrf.mxu0
  %v4588 = vadd.f32 0.0, %v4587
  %v4589 = vpop.f32.mrf.mxu0
  %v4590 = vadd.f32 0.0, %v4589
  %4591 = vmatmul.bf16.gmra.mxu0 %v1698
  %v4592 = vpop.f32.mrf.mxu0
  %v4593 = vadd.f32 0.0, %v4592
  %v4594 = vpop.f32.mrf.mxu0
  %v4595 = vadd.f32 0.0, %v4594
  %4596 = vdwg.mxu0
  %4597 = vmatpush.bf16.msra.mxu0 %v4417
  %4598 = vmatpush.bf16.msra.mxu0 %v4415
  %4599 = vmatpush.bf16.msra.mxu0 %v4413
  %4600 = vmatpush.bf16.msra.mxu0 %v4411
  %4601 = vmatpush.bf16.msra.mxu0 %v4409
  %4602 = vmatpush.bf16.msra.mxu0 %v4407
  %4603 = vmatpush.bf16.msra.mxu0 %v4405
  %4604 = vmatpush.bf16.msra.mxu0 %v4403
  %4605 = vmatmul.bf16.gmra.mxu0 %v1685
  %v4606 = vpop.f32.mrf.mxu0
  %v4607 = vadd.f32 %v4558, %v4606
  %v4608 = vpop.f32.mrf.mxu0
  %v4609 = vadd.f32 %v4560, %v4608
  %4610 = vmatmul.bf16.gmra.mxu0 %v1687
  %v4611 = vpop.f32.mrf.mxu0
  %v4612 = vadd.f32 %v4563, %v4611
  %v4613 = vpop.f32.mrf.mxu0
  %v4614 = vadd.f32 %v4565, %v4613
  %4615 = vmatmul.bf16.gmra.mxu0 %v1689
  %v4616 = vpop.f32.mrf.mxu0
  %v4617 = vadd.f32 %v4568, %v4616
  %v4618 = vpop.f32.mrf.mxu0
  %v4619 = vadd.f32 %v4570, %v4618
  %4620 = vmatmul.bf16.gmra.mxu0 %v1691
  %v4621 = vpop.f32.mrf.mxu0
  %v4622 = vadd.f32 %v4573, %v4621
  %v4623 = vpop.f32.mrf.mxu0
  %v4624 = vadd.f32 %v4575, %v4623
  %4625 = vmatmul.bf16.gmra.mxu0 %v1693
  %v4626 = vpop.f32.mrf.mxu0
  %v4627 = vadd.f32 %v4578, %v4626
  %v4628 = vpop.f32.mrf.mxu0
  %v4629 = vadd.f32 %v4580, %v4628
  %4630 = vmatmul.bf16.gmra.mxu0 %v1695
  %v4631 = vpop.f32.mrf.mxu0
  %v4632 = vadd.f32 %v4583, %v4631
  %v4633 = vpop.f32.mrf.mxu0
  %v4634 = vadd.f32 %v4585, %v4633
  %4635 = vmatmul.bf16.gmra.mxu0 %v1697
  %v4636 = vpop.f32.mrf.mxu0
  %v4637 = vadd.f32 %v4588, %v4636
  %v4638 = vpop.f32.mrf.mxu0
  %v4639 = vadd.f32 %v4590, %v4638
  %4640 = vmatmul.bf16.gmra.mxu0 %v1699
  %v4641 = vpop.f32.mrf.mxu0
  %v4642 = vadd.f32 %v4593, %v4641
  %v4643 = vpop.f32.mrf.mxu0
  %v4644 = vadd.f32 %v4595, %v4643
  %4645 = vdwg.mxu0
  %v4646 = vadd.f32 %v4225, %v4509
  %v4647 = vadd.f32 %v4226, %v4607
  %v4648 = vadd.f32 %v4227, %v4511
  %v4649 = vadd.f32 %v4228, %v4609
  %v4650 = vadd.f32 %v4229, %v4514
  %v4651 = vadd.f32 %v4230, %v4612
  %v4652 = vadd.f32 %v4231, %v4516
  %v4653 = vadd.f32 %v4232, %v4614
  %v4654 = vadd.f32 %v4233, %v4519
  %v4655 = vadd.f32 %v4234, %v4617
  %v4656 = vadd.f32 %v4235, %v4521
  %v4657 = vadd.f32 %v4236, %v4619
  %v4658 = vadd.f32 %v4237, %v4524
  %v4659 = vadd.f32 %v4238, %v4622
  %v4660 = vadd.f32 %v4239, %v4526
  %v4661 = vadd.f32 %v4240, %v4624
  %v4662 = vadd.f32 %v4241, %v4529
  %v4663 = vadd.f32 %v4242, %v4627
  %v4664 = vadd.f32 %v4243, %v4531
  %v4665 = vadd.f32 %v4244, %v4629
  %v4666 = vadd.f32 %v4245, %v4534
  %v4667 = vadd.f32 %v4246, %v4632
  %v4668 = vadd.f32 %v4247, %v4536
  %v4669 = vadd.f32 %v4248, %v4634
  %v4670 = vadd.f32 %v4249, %v4539
  %v4671 = vadd.f32 %v4250, %v4637
  %v4672 = vadd.f32 %v4251, %v4541
  %v4673 = vadd.f32 %v4252, %v4639
  %v4674 = vadd.f32 %v4253, %v4544
  %v4675 = vadd.f32 %v4254, %v4642
  %v4676 = vadd.f32 %v4255, %v4546
  %v4677 = vadd.f32 %v4256, %v4644
  %v4678 = vxor.u32 %v4646, 2147483648
  %v4679 = vxor.u32 %v4647, 2147483648
  %v4680 = vxor.u32 %v4648, 2147483648
  %v4681 = vxor.u32 %v4649, 2147483648
  %v4682 = vxor.u32 %v4650, 2147483648
  %v4683 = vxor.u32 %v4651, 2147483648
  %v4684 = vxor.u32 %v4652, 2147483648
  %v4685 = vxor.u32 %v4653, 2147483648
  %v4686 = vxor.u32 %v4654, 2147483648
  %v4687 = vxor.u32 %v4655, 2147483648
  %v4688 = vxor.u32 %v4656, 2147483648
  %v4689 = vxor.u32 %v4657, 2147483648
  %v4690 = vxor.u32 %v4658, 2147483648
  %v4691 = vxor.u32 %v4659, 2147483648
  %v4692 = vxor.u32 %v4660, 2147483648
  %v4693 = vxor.u32 %v4661, 2147483648
  %v4694 = vxor.u32 %v4662, 2147483648
  %v4695 = vxor.u32 %v4663, 2147483648
  %v4696 = vxor.u32 %v4664, 2147483648
  %v4697 = vxor.u32 %v4665, 2147483648
  %v4698 = vxor.u32 %v4666, 2147483648
  %v4699 = vxor.u32 %v4667, 2147483648
  %v4700 = vxor.u32 %v4668, 2147483648
  %v4701 = vxor.u32 %v4669, 2147483648
  %v4702 = vxor.u32 %v4670, 2147483648
  %v4703 = vxor.u32 %v4671, 2147483648
  %v4704 = vxor.u32 %v4672, 2147483648
  %v4705 = vxor.u32 %v4673, 2147483648
  %v4706 = vxor.u32 %v4674, 2147483648
  %v4707 = vxor.u32 %v4675, 2147483648
  %v4708 = vxor.u32 %v4676, 2147483648
  %v4709 = vxor.u32 %v4677, 2147483648
  %v4710 = vmul.f32 %v4678, 1.442695
  %v4711 = vpow.pop %v4710
  %v4712 = vmul.f32 %v4679, 1.442695
  %v4713 = vpow.pop %v4712
  %v4714 = vmul.f32 %v4680, 1.442695
  %v4715 = vpow.pop %v4714
  %v4716 = vmul.f32 %v4681, 1.442695
  %v4717 = vpow.pop %v4716
  %v4718 = vmul.f32 %v4682, 1.442695
  %v4719 = vpow.pop %v4718
  %v4720 = vmul.f32 %v4683, 1.442695
  %v4721 = vpow.pop %v4720
  %v4722 = vmul.f32 %v4684, 1.442695
  %v4723 = vpow.pop %v4722
  %v4724 = vmul.f32 %v4685, 1.442695
  %v4725 = vpow.pop %v4724
  %v4726 = vmul.f32 %v4686, 1.442695
  %v4727 = vpow.pop %v4726
  %v4728 = vmul.f32 %v4687, 1.442695
  %v4729 = vpow.pop %v4728
  %v4730 = vmul.f32 %v4688, 1.442695
  %v4731 = vpow.pop %v4730
  %v4732 = vmul.f32 %v4689, 1.442695
  %v4733 = vpow.pop %v4732
  %v4734 = vmul.f32 %v4690, 1.442695
  %v4735 = vpow.pop %v4734
  %v4736 = vmul.f32 %v4691, 1.442695
  %v4737 = vpow.pop %v4736
  %v4738 = vmul.f32 %v4692, 1.442695
  %v4739 = vpow.pop %v4738
  %v4740 = vmul.f32 %v4693, 1.442695
  %v4741 = vpow.pop %v4740
  %v4742 = vmul.f32 %v4694, 1.442695
  %v4743 = vpow.pop %v4742
  %v4744 = vmul.f32 %v4695, 1.442695
  %v4745 = vpow.pop %v4744
  %v4746 = vmul.f32 %v4696, 1.442695
  %v4747 = vpow.pop %v4746
  %v4748 = vmul.f32 %v4697, 1.442695
  %v4749 = vpow.pop %v4748
  %v4750 = vmul.f32 %v4698, 1.442695
  %v4751 = vpow.pop %v4750
  %v4752 = vmul.f32 %v4699, 1.442695
  %v4753 = vpow.pop %v4752
  %v4754 = vmul.f32 %v4700, 1.442695
  %v4755 = vpow.pop %v4754
  %v4756 = vmul.f32 %v4701, 1.442695
  %v4757 = vpow.pop %v4756
  %v4758 = vmul.f32 %v4702, 1.442695
  %v4759 = vpow.pop %v4758
  %v4760 = vmul.f32 %v4703, 1.442695
  %v4761 = vpow.pop %v4760
  %v4762 = vmul.f32 %v4704, 1.442695
  %v4763 = vpow.pop %v4762
  %v4764 = vmul.f32 %v4705, 1.442695
  %v4765 = vpow.pop %v4764
  %v4766 = vmul.f32 %v4706, 1.442695
  %v4767 = vpow.pop %v4766
  %v4768 = vmul.f32 %v4707, 1.442695
  %v4769 = vpow.pop %v4768
  %v4770 = vmul.f32 %v4708, 1.442695
  %v4771 = vpow.pop %v4770
  %v4772 = vmul.f32 %v4709, 1.442695
  %v4773 = vpow.pop %v4772
  %v4774 = vadd.f32 %v4711, 1.0
  %v4775 = vadd.f32 %v4713, 1.0
  %v4776 = vadd.f32 %v4715, 1.0
  %v4777 = vadd.f32 %v4717, 1.0
  %v4778 = vadd.f32 %v4719, 1.0
  %v4779 = vadd.f32 %v4721, 1.0
  %v4780 = vadd.f32 %v4723, 1.0
  %v4781 = vadd.f32 %v4725, 1.0
  %v4782 = vadd.f32 %v4727, 1.0
  %v4783 = vadd.f32 %v4729, 1.0
  %v4784 = vadd.f32 %v4731, 1.0
  %v4785 = vadd.f32 %v4733, 1.0
  %v4786 = vadd.f32 %v4735, 1.0
  %v4787 = vadd.f32 %v4737, 1.0
  %v4788 = vadd.f32 %v4739, 1.0
  %v4789 = vadd.f32 %v4741, 1.0
  %v4790 = vadd.f32 %v4743, 1.0
  %v4791 = vadd.f32 %v4745, 1.0
  %v4792 = vadd.f32 %v4747, 1.0
  %v4793 = vadd.f32 %v4749, 1.0
  %v4794 = vadd.f32 %v4751, 1.0
  %v4795 = vadd.f32 %v4753, 1.0
  %v4796 = vadd.f32 %v4755, 1.0
  %v4797 = vadd.f32 %v4757, 1.0
  %v4798 = vadd.f32 %v4759, 1.0
  %v4799 = vadd.f32 %v4761, 1.0
  %v4800 = vadd.f32 %v4763, 1.0
  %v4801 = vadd.f32 %v4765, 1.0
  %v4802 = vadd.f32 %v4767, 1.0
  %v4803 = vadd.f32 %v4769, 1.0
  %v4804 = vadd.f32 %v4771, 1.0
  %v4805 = vadd.f32 %v4773, 1.0
  %v4806 = vrcp.pop %v4774
  %v4807 = vmul.f32 %v4774, %v4806
  %v4808 = vsub.f32 1.0, %v4807
  %v4809 = vmul.f32 %v4806, %v4808
  %v4810 = vadd.f32 %v4806, %v4809
  %vm4811 = vweird.f32 %v4774
  %vm4812 = vweird.f32 %v4806
  %vm4813 = vmor %vm4811, %vm4812
  %v4814 = vsel %vm4813, %v4806, %v4810
  %v4815 = vand.u32 2147483647, %v4774
  %vm4816 = vcmp.eq.f32.partialorder %v4815, 8.507059e+37
  %v4817 = vand.u32 %v4774, 2147483648
  %v4818 = vor.u32 1.1754944e-38, %v4817
  %v4819 = vsel %vm4816, %v4818, %v4814
  %v4820 = vmul.f32 1.0, %v4819
  %v4821 = vrcp.pop %v4775
  %v4822 = vmul.f32 %v4775, %v4821
  %v4823 = vsub.f32 1.0, %v4822
  %v4824 = vmul.f32 %v4821, %v4823
  %v4825 = vadd.f32 %v4821, %v4824
  %vm4826 = vweird.f32 %v4775
  %vm4827 = vweird.f32 %v4821
  %vm4828 = vmor %vm4826, %vm4827
  %v4829 = vsel %vm4828, %v4821, %v4825
  %v4830 = vand.u32 2147483647, %v4775
  %vm4831 = vcmp.eq.f32.partialorder %v4830, 8.507059e+37
  %v4832 = vand.u32 %v4775, 2147483648
  %v4833 = vor.u32 1.1754944e-38, %v4832
  %v4834 = vsel %vm4831, %v4833, %v4829
  %v4835 = vmul.f32 1.0, %v4834
  %v4836 = vrcp.pop %v4776
  %v4837 = vmul.f32 %v4776, %v4836
  %v4838 = vsub.f32 1.0, %v4837
  %v4839 = vmul.f32 %v4836, %v4838
  %v4840 = vadd.f32 %v4836, %v4839
  %vm4841 = vweird.f32 %v4776
  %vm4842 = vweird.f32 %v4836
  %vm4843 = vmor %vm4841, %vm4842
  %v4844 = vsel %vm4843, %v4836, %v4840
  %v4845 = vand.u32 2147483647, %v4776
  %vm4846 = vcmp.eq.f32.partialorder %v4845, 8.507059e+37
  %v4847 = vand.u32 %v4776, 2147483648
  %v4848 = vor.u32 1.1754944e-38, %v4847
  %v4849 = vsel %vm4846, %v4848, %v4844
  %v4850 = vmul.f32 1.0, %v4849
  %v4851 = vrcp.pop %v4777
  %v4852 = vmul.f32 %v4777, %v4851
  %v4853 = vsub.f32 1.0, %v4852
  %v4854 = vmul.f32 %v4851, %v4853
  %v4855 = vadd.f32 %v4851, %v4854
  %vm4856 = vweird.f32 %v4777
  %vm4857 = vweird.f32 %v4851
  %vm4858 = vmor %vm4856, %vm4857
  %v4859 = vsel %vm4858, %v4851, %v4855
  %v4860 = vand.u32 2147483647, %v4777
  %vm4861 = vcmp.eq.f32.partialorder %v4860, 8.507059e+37
  %v4862 = vand.u32 %v4777, 2147483648
  %v4863 = vor.u32 1.1754944e-38, %v4862
  %v4864 = vsel %vm4861, %v4863, %v4859
  %v4865 = vmul.f32 1.0, %v4864
  %v4866 = vrcp.pop %v4778
  %v4867 = vmul.f32 %v4778, %v4866
  %v4868 = vsub.f32 1.0, %v4867
  %v4869 = vmul.f32 %v4866, %v4868
  %v4870 = vadd.f32 %v4866, %v4869
  %vm4871 = vweird.f32 %v4778
  %vm4872 = vweird.f32 %v4866
  %vm4873 = vmor %vm4871, %vm4872
  %v4874 = vsel %vm4873, %v4866, %v4870
  %v4875 = vand.u32 2147483647, %v4778
  %vm4876 = vcmp.eq.f32.partialorder %v4875, 8.507059e+37
  %v4877 = vand.u32 %v4778, 2147483648
  %v4878 = vor.u32 1.1754944e-38, %v4877
  %v4879 = vsel %vm4876, %v4878, %v4874
  %v4880 = vmul.f32 1.0, %v4879
  %v4881 = vrcp.pop %v4779
  %v4882 = vmul.f32 %v4779, %v4881
  %v4883 = vsub.f32 1.0, %v4882
  %v4884 = vmul.f32 %v4881, %v4883
  %v4885 = vadd.f32 %v4881, %v4884
  %vm4886 = vweird.f32 %v4779
  %vm4887 = vweird.f32 %v4881
  %vm4888 = vmor %vm4886, %vm4887
  %v4889 = vsel %vm4888, %v4881, %v4885
  %v4890 = vand.u32 2147483647, %v4779
  %vm4891 = vcmp.eq.f32.partialorder %v4890, 8.507059e+37
  %v4892 = vand.u32 %v4779, 2147483648
  %v4893 = vor.u32 1.1754944e-38, %v4892
  %v4894 = vsel %vm4891, %v4893, %v4889
  %v4895 = vmul.f32 1.0, %v4894
  %v4896 = vrcp.pop %v4780
  %v4897 = vmul.f32 %v4780, %v4896
  %v4898 = vsub.f32 1.0, %v4897
  %v4899 = vmul.f32 %v4896, %v4898
  %v4900 = vadd.f32 %v4896, %v4899
  %vm4901 = vweird.f32 %v4780
  %vm4902 = vweird.f32 %v4896
  %vm4903 = vmor %vm4901, %vm4902
  %v4904 = vsel %vm4903, %v4896, %v4900
  %v4905 = vand.u32 2147483647, %v4780
  %vm4906 = vcmp.eq.f32.partialorder %v4905, 8.507059e+37
  %v4907 = vand.u32 %v4780, 2147483648
  %v4908 = vor.u32 1.1754944e-38, %v4907
  %v4909 = vsel %vm4906, %v4908, %v4904
  %v4910 = vmul.f32 1.0, %v4909
  %v4911 = vrcp.pop %v4781
  %v4912 = vmul.f32 %v4781, %v4911
  %v4913 = vsub.f32 1.0, %v4912
  %v4914 = vmul.f32 %v4911, %v4913
  %v4915 = vadd.f32 %v4911, %v4914
  %vm4916 = vweird.f32 %v4781
  %vm4917 = vweird.f32 %v4911
  %vm4918 = vmor %vm4916, %vm4917
  %v4919 = vsel %vm4918, %v4911, %v4915
  %v4920 = vand.u32 2147483647, %v4781
  %vm4921 = vcmp.eq.f32.partialorder %v4920, 8.507059e+37
  %v4922 = vand.u32 %v4781, 2147483648
  %v4923 = vor.u32 1.1754944e-38, %v4922
  %v4924 = vsel %vm4921, %v4923, %v4919
  %v4925 = vmul.f32 1.0, %v4924
  %v4926 = vrcp.pop %v4782
  %v4927 = vmul.f32 %v4782, %v4926
  %v4928 = vsub.f32 1.0, %v4927
  %v4929 = vmul.f32 %v4926, %v4928
  %v4930 = vadd.f32 %v4926, %v4929
  %vm4931 = vweird.f32 %v4782
  %vm4932 = vweird.f32 %v4926
  %vm4933 = vmor %vm4931, %vm4932
  %v4934 = vsel %vm4933, %v4926, %v4930
  %v4935 = vand.u32 2147483647, %v4782
  %vm4936 = vcmp.eq.f32.partialorder %v4935, 8.507059e+37
  %v4937 = vand.u32 %v4782, 2147483648
  %v4938 = vor.u32 1.1754944e-38, %v4937
  %v4939 = vsel %vm4936, %v4938, %v4934
  %v4940 = vmul.f32 1.0, %v4939
  %v4941 = vrcp.pop %v4783
  %v4942 = vmul.f32 %v4783, %v4941
  %v4943 = vsub.f32 1.0, %v4942
  %v4944 = vmul.f32 %v4941, %v4943
  %v4945 = vadd.f32 %v4941, %v4944
  %vm4946 = vweird.f32 %v4783
  %vm4947 = vweird.f32 %v4941
  %vm4948 = vmor %vm4946, %vm4947
  %v4949 = vsel %vm4948, %v4941, %v4945
  %v4950 = vand.u32 2147483647, %v4783
  %vm4951 = vcmp.eq.f32.partialorder %v4950, 8.507059e+37
  %v4952 = vand.u32 %v4783, 2147483648
  %v4953 = vor.u32 1.1754944e-38, %v4952
  %v4954 = vsel %vm4951, %v4953, %v4949
  %v4955 = vmul.f32 1.0, %v4954
  %v4956 = vrcp.pop %v4784
  %v4957 = vmul.f32 %v4784, %v4956
  %v4958 = vsub.f32 1.0, %v4957
  %v4959 = vmul.f32 %v4956, %v4958
  %v4960 = vadd.f32 %v4956, %v4959
  %vm4961 = vweird.f32 %v4784
  %vm4962 = vweird.f32 %v4956
  %vm4963 = vmor %vm4961, %vm4962
  %v4964 = vsel %vm4963, %v4956, %v4960
  %v4965 = vand.u32 2147483647, %v4784
  %vm4966 = vcmp.eq.f32.partialorder %v4965, 8.507059e+37
  %v4967 = vand.u32 %v4784, 2147483648
  %v4968 = vor.u32 1.1754944e-38, %v4967
  %v4969 = vsel %vm4966, %v4968, %v4964
  %v4970 = vmul.f32 1.0, %v4969
  %v4971 = vrcp.pop %v4785
  %v4972 = vmul.f32 %v4785, %v4971
  %v4973 = vsub.f32 1.0, %v4972
  %v4974 = vmul.f32 %v4971, %v4973
  %v4975 = vadd.f32 %v4971, %v4974
  %vm4976 = vweird.f32 %v4785
  %vm4977 = vweird.f32 %v4971
  %vm4978 = vmor %vm4976, %vm4977
  %v4979 = vsel %vm4978, %v4971, %v4975
  %v4980 = vand.u32 2147483647, %v4785
  %vm4981 = vcmp.eq.f32.partialorder %v4980, 8.507059e+37
  %v4982 = vand.u32 %v4785, 2147483648
  %v4983 = vor.u32 1.1754944e-38, %v4982
  %v4984 = vsel %vm4981, %v4983, %v4979
  %v4985 = vmul.f32 1.0, %v4984
  %v4986 = vrcp.pop %v4786
  %v4987 = vmul.f32 %v4786, %v4986
  %v4988 = vsub.f32 1.0, %v4987
  %v4989 = vmul.f32 %v4986, %v4988
  %v4990 = vadd.f32 %v4986, %v4989
  %vm4991 = vweird.f32 %v4786
  %vm4992 = vweird.f32 %v4986
  %vm4993 = vmor %vm4991, %vm4992
  %v4994 = vsel %vm4993, %v4986, %v4990
  %v4995 = vand.u32 2147483647, %v4786
  %vm4996 = vcmp.eq.f32.partialorder %v4995, 8.507059e+37
  %v4997 = vand.u32 %v4786, 2147483648
  %v4998 = vor.u32 1.1754944e-38, %v4997
  %v4999 = vsel %vm4996, %v4998, %v4994
  %v5000 = vmul.f32 1.0, %v4999
  %v5001 = vrcp.pop %v4787
  %v5002 = vmul.f32 %v4787, %v5001
  %v5003 = vsub.f32 1.0, %v5002
  %v5004 = vmul.f32 %v5001, %v5003
  %v5005 = vadd.f32 %v5001, %v5004
  %vm5006 = vweird.f32 %v4787
  %vm5007 = vweird.f32 %v5001
  %vm5008 = vmor %vm5006, %vm5007
  %v5009 = vsel %vm5008, %v5001, %v5005
  %v5010 = vand.u32 2147483647, %v4787
  %vm5011 = vcmp.eq.f32.partialorder %v5010, 8.507059e+37
  %v5012 = vand.u32 %v4787, 2147483648
  %v5013 = vor.u32 1.1754944e-38, %v5012
  %v5014 = vsel %vm5011, %v5013, %v5009
  %v5015 = vmul.f32 1.0, %v5014
  %v5016 = vrcp.pop %v4788
  %v5017 = vmul.f32 %v4788, %v5016
  %v5018 = vsub.f32 1.0, %v5017
  %v5019 = vmul.f32 %v5016, %v5018
  %v5020 = vadd.f32 %v5016, %v5019
  %vm5021 = vweird.f32 %v4788
  %vm5022 = vweird.f32 %v5016
  %vm5023 = vmor %vm5021, %vm5022
  %v5024 = vsel %vm5023, %v5016, %v5020
  %v5025 = vand.u32 2147483647, %v4788
  %vm5026 = vcmp.eq.f32.partialorder %v5025, 8.507059e+37
  %v5027 = vand.u32 %v4788, 2147483648
  %v5028 = vor.u32 1.1754944e-38, %v5027
  %v5029 = vsel %vm5026, %v5028, %v5024
  %v5030 = vmul.f32 1.0, %v5029
  %v5031 = vrcp.pop %v4789
  %v5032 = vmul.f32 %v4789, %v5031
  %v5033 = vsub.f32 1.0, %v5032
  %v5034 = vmul.f32 %v5031, %v5033
  %v5035 = vadd.f32 %v5031, %v5034
  %vm5036 = vweird.f32 %v4789
  %vm5037 = vweird.f32 %v5031
  %vm5038 = vmor %vm5036, %vm5037
  %v5039 = vsel %vm5038, %v5031, %v5035
  %v5040 = vand.u32 2147483647, %v4789
  %vm5041 = vcmp.eq.f32.partialorder %v5040, 8.507059e+37
  %v5042 = vand.u32 %v4789, 2147483648
  %v5043 = vor.u32 1.1754944e-38, %v5042
  %v5044 = vsel %vm5041, %v5043, %v5039
  %v5045 = vmul.f32 1.0, %v5044
  %v5046 = vrcp.pop %v4790
  %v5047 = vmul.f32 %v4790, %v5046
  %v5048 = vsub.f32 1.0, %v5047
  %v5049 = vmul.f32 %v5046, %v5048
  %v5050 = vadd.f32 %v5046, %v5049
  %vm5051 = vweird.f32 %v4790
  %vm5052 = vweird.f32 %v5046
  %vm5053 = vmor %vm5051, %vm5052
  %v5054 = vsel %vm5053, %v5046, %v5050
  %v5055 = vand.u32 2147483647, %v4790
  %vm5056 = vcmp.eq.f32.partialorder %v5055, 8.507059e+37
  %v5057 = vand.u32 %v4790, 2147483648
  %v5058 = vor.u32 1.1754944e-38, %v5057
  %v5059 = vsel %vm5056, %v5058, %v5054
  %v5060 = vmul.f32 1.0, %v5059
  %v5061 = vrcp.pop %v4791
  %v5062 = vmul.f32 %v4791, %v5061
  %v5063 = vsub.f32 1.0, %v5062
  %v5064 = vmul.f32 %v5061, %v5063
  %v5065 = vadd.f32 %v5061, %v5064
  %vm5066 = vweird.f32 %v4791
  %vm5067 = vweird.f32 %v5061
  %vm5068 = vmor %vm5066, %vm5067
  %v5069 = vsel %vm5068, %v5061, %v5065
  %v5070 = vand.u32 2147483647, %v4791
  %vm5071 = vcmp.eq.f32.partialorder %v5070, 8.507059e+37
  %v5072 = vand.u32 %v4791, 2147483648
  %v5073 = vor.u32 1.1754944e-38, %v5072
  %v5074 = vsel %vm5071, %v5073, %v5069
  %v5075 = vmul.f32 1.0, %v5074
  %v5076 = vrcp.pop %v4792
  %v5077 = vmul.f32 %v4792, %v5076
  %v5078 = vsub.f32 1.0, %v5077
  %v5079 = vmul.f32 %v5076, %v5078
  %v5080 = vadd.f32 %v5076, %v5079
  %vm5081 = vweird.f32 %v4792
  %vm5082 = vweird.f32 %v5076
  %vm5083 = vmor %vm5081, %vm5082
  %v5084 = vsel %vm5083, %v5076, %v5080
  %v5085 = vand.u32 2147483647, %v4792
  %vm5086 = vcmp.eq.f32.partialorder %v5085, 8.507059e+37
  %v5087 = vand.u32 %v4792, 2147483648
  %v5088 = vor.u32 1.1754944e-38, %v5087
  %v5089 = vsel %vm5086, %v5088, %v5084
  %v5090 = vmul.f32 1.0, %v5089
  %v5091 = vrcp.pop %v4793
  %v5092 = vmul.f32 %v4793, %v5091
  %v5093 = vsub.f32 1.0, %v5092
  %v5094 = vmul.f32 %v5091, %v5093
  %v5095 = vadd.f32 %v5091, %v5094
  %vm5096 = vweird.f32 %v4793
  %vm5097 = vweird.f32 %v5091
  %vm5098 = vmor %vm5096, %vm5097
  %v5099 = vsel %vm5098, %v5091, %v5095
  %v5100 = vand.u32 2147483647, %v4793
  %vm5101 = vcmp.eq.f32.partialorder %v5100, 8.507059e+37
  %v5102 = vand.u32 %v4793, 2147483648
  %v5103 = vor.u32 1.1754944e-38, %v5102
  %v5104 = vsel %vm5101, %v5103, %v5099
  %v5105 = vmul.f32 1.0, %v5104
  %v5106 = vrcp.pop %v4794
  %v5107 = vmul.f32 %v4794, %v5106
  %v5108 = vsub.f32 1.0, %v5107
  %v5109 = vmul.f32 %v5106, %v5108
  %v5110 = vadd.f32 %v5106, %v5109
  %vm5111 = vweird.f32 %v4794
  %vm5112 = vweird.f32 %v5106
  %vm5113 = vmor %vm5111, %vm5112
  %v5114 = vsel %vm5113, %v5106, %v5110
  %v5115 = vand.u32 2147483647, %v4794
  %vm5116 = vcmp.eq.f32.partialorder %v5115, 8.507059e+37
  %v5117 = vand.u32 %v4794, 2147483648
  %v5118 = vor.u32 1.1754944e-38, %v5117
  %v5119 = vsel %vm5116, %v5118, %v5114
  %v5120 = vmul.f32 1.0, %v5119
  %v5121 = vrcp.pop %v4795
  %v5122 = vmul.f32 %v4795, %v5121
  %v5123 = vsub.f32 1.0, %v5122
  %v5124 = vmul.f32 %v5121, %v5123
  %v5125 = vadd.f32 %v5121, %v5124
  %vm5126 = vweird.f32 %v4795
  %vm5127 = vweird.f32 %v5121
  %vm5128 = vmor %vm5126, %vm5127
  %v5129 = vsel %vm5128, %v5121, %v5125
  %v5130 = vand.u32 2147483647, %v4795
  %vm5131 = vcmp.eq.f32.partialorder %v5130, 8.507059e+37
  %v5132 = vand.u32 %v4795, 2147483648
  %v5133 = vor.u32 1.1754944e-38, %v5132
  %v5134 = vsel %vm5131, %v5133, %v5129
  %v5135 = vmul.f32 1.0, %v5134
  %v5136 = vrcp.pop %v4796
  %v5137 = vmul.f32 %v4796, %v5136
  %v5138 = vsub.f32 1.0, %v5137
  %v5139 = vmul.f32 %v5136, %v5138
  %v5140 = vadd.f32 %v5136, %v5139
  %vm5141 = vweird.f32 %v4796
  %vm5142 = vweird.f32 %v5136
  %vm5143 = vmor %vm5141, %vm5142
  %v5144 = vsel %vm5143, %v5136, %v5140
  %v5145 = vand.u32 2147483647, %v4796
  %vm5146 = vcmp.eq.f32.partialorder %v5145, 8.507059e+37
  %v5147 = vand.u32 %v4796, 2147483648
  %v5148 = vor.u32 1.1754944e-38, %v5147
  %v5149 = vsel %vm5146, %v5148, %v5144
  %v5150 = vmul.f32 1.0, %v5149
  %v5151 = vrcp.pop %v4797
  %v5152 = vmul.f32 %v4797, %v5151
  %v5153 = vsub.f32 1.0, %v5152
  %v5154 = vmul.f32 %v5151, %v5153
  %v5155 = vadd.f32 %v5151, %v5154
  %vm5156 = vweird.f32 %v4797
  %vm5157 = vweird.f32 %v5151
  %vm5158 = vmor %vm5156, %vm5157
  %v5159 = vsel %vm5158, %v5151, %v5155
  %v5160 = vand.u32 2147483647, %v4797
  %vm5161 = vcmp.eq.f32.partialorder %v5160, 8.507059e+37
  %v5162 = vand.u32 %v4797, 2147483648
  %v5163 = vor.u32 1.1754944e-38, %v5162
  %v5164 = vsel %vm5161, %v5163, %v5159
  %v5165 = vmul.f32 1.0, %v5164
  %v5166 = vrcp.pop %v4798
  %v5167 = vmul.f32 %v4798, %v5166
  %v5168 = vsub.f32 1.0, %v5167
  %v5169 = vmul.f32 %v5166, %v5168
  %v5170 = vadd.f32 %v5166, %v5169
  %vm5171 = vweird.f32 %v4798
  %vm5172 = vweird.f32 %v5166
  %vm5173 = vmor %vm5171, %vm5172
  %v5174 = vsel %vm5173, %v5166, %v5170
  %v5175 = vand.u32 2147483647, %v4798
  %vm5176 = vcmp.eq.f32.partialorder %v5175, 8.507059e+37
  %v5177 = vand.u32 %v4798, 2147483648
  %v5178 = vor.u32 1.1754944e-38, %v5177
  %v5179 = vsel %vm5176, %v5178, %v5174
  %v5180 = vmul.f32 1.0, %v5179
  %v5181 = vrcp.pop %v4799
  %v5182 = vmul.f32 %v4799, %v5181
  %v5183 = vsub.f32 1.0, %v5182
  %v5184 = vmul.f32 %v5181, %v5183
  %v5185 = vadd.f32 %v5181, %v5184
  %vm5186 = vweird.f32 %v4799
  %vm5187 = vweird.f32 %v5181
  %vm5188 = vmor %vm5186, %vm5187
  %v5189 = vsel %vm5188, %v5181, %v5185
  %v5190 = vand.u32 2147483647, %v4799
  %vm5191 = vcmp.eq.f32.partialorder %v5190, 8.507059e+37
  %v5192 = vand.u32 %v4799, 2147483648
  %v5193 = vor.u32 1.1754944e-38, %v5192
  %v5194 = vsel %vm5191, %v5193, %v5189
  %v5195 = vmul.f32 1.0, %v5194
  %v5196 = vrcp.pop %v4800
  %v5197 = vmul.f32 %v4800, %v5196
  %v5198 = vsub.f32 1.0, %v5197
  %v5199 = vmul.f32 %v5196, %v5198
  %v5200 = vadd.f32 %v5196, %v5199
  %vm5201 = vweird.f32 %v4800
  %vm5202 = vweird.f32 %v5196
  %vm5203 = vmor %vm5201, %vm5202
  %v5204 = vsel %vm5203, %v5196, %v5200
  %v5205 = vand.u32 2147483647, %v4800
  %vm5206 = vcmp.eq.f32.partialorder %v5205, 8.507059e+37
  %v5207 = vand.u32 %v4800, 2147483648
  %v5208 = vor.u32 1.1754944e-38, %v5207
  %v5209 = vsel %vm5206, %v5208, %v5204
  %v5210 = vmul.f32 1.0, %v5209
  %v5211 = vrcp.pop %v4801
  %v5212 = vmul.f32 %v4801, %v5211
  %v5213 = vsub.f32 1.0, %v5212
  %v5214 = vmul.f32 %v5211, %v5213
  %v5215 = vadd.f32 %v5211, %v5214
  %vm5216 = vweird.f32 %v4801
  %vm5217 = vweird.f32 %v5211
  %vm5218 = vmor %vm5216, %vm5217
  %v5219 = vsel %vm5218, %v5211, %v5215
  %v5220 = vand.u32 2147483647, %v4801
  %vm5221 = vcmp.eq.f32.partialorder %v5220, 8.507059e+37
  %v5222 = vand.u32 %v4801, 2147483648
  %v5223 = vor.u32 1.1754944e-38, %v5222
  %v5224 = vsel %vm5221, %v5223, %v5219
  %v5225 = vmul.f32 1.0, %v5224
  %v5226 = vrcp.pop %v4802
  %v5227 = vmul.f32 %v4802, %v5226
  %v5228 = vsub.f32 1.0, %v5227
  %v5229 = vmul.f32 %v5226, %v5228
  %v5230 = vadd.f32 %v5226, %v5229
  %vm5231 = vweird.f32 %v4802
  %vm5232 = vweird.f32 %v5226
  %vm5233 = vmor %vm5231, %vm5232
  %v5234 = vsel %vm5233, %v5226, %v5230
  %v5235 = vand.u32 2147483647, %v4802
  %vm5236 = vcmp.eq.f32.partialorder %v5235, 8.507059e+37
  %v5237 = vand.u32 %v4802, 2147483648
  %v5238 = vor.u32 1.1754944e-38, %v5237
  %v5239 = vsel %vm5236, %v5238, %v5234
  %v5240 = vmul.f32 1.0, %v5239
  %v5241 = vrcp.pop %v4803
  %v5242 = vmul.f32 %v4803, %v5241
  %v5243 = vsub.f32 1.0, %v5242
  %v5244 = vmul.f32 %v5241, %v5243
  %v5245 = vadd.f32 %v5241, %v5244
  %vm5246 = vweird.f32 %v4803
  %vm5247 = vweird.f32 %v5241
  %vm5248 = vmor %vm5246, %vm5247
  %v5249 = vsel %vm5248, %v5241, %v5245
  %v5250 = vand.u32 2147483647, %v4803
  %vm5251 = vcmp.eq.f32.partialorder %v5250, 8.507059e+37
  %v5252 = vand.u32 %v4803, 2147483648
  %v5253 = vor.u32 1.1754944e-38, %v5252
  %v5254 = vsel %vm5251, %v5253, %v5249
  %v5255 = vmul.f32 1.0, %v5254
  %v5256 = vrcp.pop %v4804
  %v5257 = vmul.f32 %v4804, %v5256
  %v5258 = vsub.f32 1.0, %v5257
  %v5259 = vmul.f32 %v5256, %v5258
  %v5260 = vadd.f32 %v5256, %v5259
  %vm5261 = vweird.f32 %v4804
  %vm5262 = vweird.f32 %v5256
  %vm5263 = vmor %vm5261, %vm5262
  %v5264 = vsel %vm5263, %v5256, %v5260
  %v5265 = vand.u32 2147483647, %v4804
  %vm5266 = vcmp.eq.f32.partialorder %v5265, 8.507059e+37
  %v5267 = vand.u32 %v4804, 2147483648
  %v5268 = vor.u32 1.1754944e-38, %v5267
  %v5269 = vsel %vm5266, %v5268, %v5264
  %v5270 = vmul.f32 1.0, %v5269
  %v5271 = vrcp.pop %v4805
  %v5272 = vmul.f32 %v4805, %v5271
  %v5273 = vsub.f32 1.0, %v5272
  %v5274 = vmul.f32 %v5271, %v5273
  %v5275 = vadd.f32 %v5271, %v5274
  %vm5276 = vweird.f32 %v4805
  %vm5277 = vweird.f32 %v5271
  %vm5278 = vmor %vm5276, %vm5277
  %v5279 = vsel %vm5278, %v5271, %v5275
  %v5280 = vand.u32 2147483647, %v4805
  %vm5281 = vcmp.eq.f32.partialorder %v5280, 8.507059e+37
  %v5282 = vand.u32 %v4805, 2147483648
  %v5283 = vor.u32 1.1754944e-38, %v5282
  %v5284 = vsel %vm5281, %v5283, %v5279
  %v5285 = vmul.f32 1.0, %v5284
  %v5286 = vmul.f32 %v4646, %v4820
  %v5287 = vmul.f32 %v4647, %v4835
  %v5288 = vmul.f32 %v4648, %v4850
  %v5289 = vmul.f32 %v4649, %v4865
  %v5290 = vmul.f32 %v4650, %v4880
  %v5291 = vmul.f32 %v4651, %v4895
  %v5292 = vmul.f32 %v4652, %v4910
  %v5293 = vmul.f32 %v4653, %v4925
  %v5294 = vmul.f32 %v4654, %v4940
  %v5295 = vmul.f32 %v4655, %v4955
  %v5296 = vmul.f32 %v4656, %v4970
  %v5297 = vmul.f32 %v4657, %v4985
  %v5298 = vmul.f32 %v4658, %v5000
  %v5299 = vmul.f32 %v4659, %v5015
  %v5300 = vmul.f32 %v4660, %v5030
  %v5301 = vmul.f32 %v4661, %v5045
  %v5302 = vmul.f32 %v4662, %v5060
  %v5303 = vmul.f32 %v4663, %v5075
  %v5304 = vmul.f32 %v4664, %v5090
  %v5305 = vmul.f32 %v4665, %v5105
  %v5306 = vmul.f32 %v4666, %v5120
  %v5307 = vmul.f32 %v4667, %v5135
  %v5308 = vmul.f32 %v4668, %v5150
  %v5309 = vmul.f32 %v4669, %v5165
  %v5310 = vmul.f32 %v4670, %v5180
  %v5311 = vmul.f32 %v4671, %v5195
  %v5312 = vmul.f32 %v4672, %v5210
  %v5313 = vmul.f32 %v4673, %v5225
  %v5314 = vmul.f32 %v4674, %v5240
  %v5315 = vmul.f32 %v4675, %v5255
  %v5316 = vmul.f32 %v4676, %v5270
  %v5317 = vmul.f32 %v4677, %v5285
  %v5318 = vpack.c.bf16 %v5288, %v5286
  %v5319 = vpack.c.bf16 %v5289, %v5287
  %v5320 = vpack.c.bf16 %v5292, %v5290
  %v5321 = vpack.c.bf16 %v5293, %v5291
  %v5322 = vpack.c.bf16 %v5296, %v5294
  %v5323 = vpack.c.bf16 %v5297, %v5295
  %v5324 = vpack.c.bf16 %v5300, %v5298
  %v5325 = vpack.c.bf16 %v5301, %v5299
  %v5326 = vpack.c.bf16 %v5304, %v5302
  %v5327 = vpack.c.bf16 %v5305, %v5303
  %v5328 = vpack.c.bf16 %v5308, %v5306
  %v5329 = vpack.c.bf16 %v5309, %v5307
  %v5330 = vpack.c.bf16 %v5312, %v5310
  %v5331 = vpack.c.bf16 %v5313, %v5311
  %v5332 = vpack.c.bf16 %v5316, %v5314
  %v5333 = vpack.c.bf16 %v5317, %v5315
  %s5334 = scalar_lea.vmem %s2, 1536
  %v5335 = vld [vmem:[%s5334] sm:$0xff]
  %v5336 = vld [vmem:[%s5334 + $0x8] sm:$0xff]
  %v5337 = vld [vmem:[%s5334 + $0x10] sm:$0xff]
  %v5338 = vld [vmem:[%s5334 + $0x18] sm:$0xff]
  %v5339 = vld [vmem:[%s5334 + $0x20] sm:$0xff]
  %v5340 = vld [vmem:[%s5334 + $0x28] sm:$0xff]
  %v5341 = vld [vmem:[%s5334 + $0x30] sm:$0xff]
  %v5342 = vld [vmem:[%s5334 + $0x38] sm:$0xff]
  %v5343 = vld [vmem:[%s5334 + $0x40] sm:$0xff]
  %v5344 = vld [vmem:[%s5334 + $0x48] sm:$0xff]
  %v5345 = vld [vmem:[%s5334 + $0x50] sm:$0xff]
  %v5346 = vld [vmem:[%s5334 + $0x58] sm:$0xff]
  %v5347 = vld [vmem:[%s5334 + $0x60] sm:$0xff]
  %v5348 = vld [vmem:[%s5334 + $0x68] sm:$0xff]
  %v5349 = vld [vmem:[%s5334 + $0x70] sm:$0xff]
  %v5350 = vld [vmem:[%s5334 + $0x78] sm:$0xff]
  %v5351 = vld [vmem:[%s5334 + $0x80] sm:$0xff]
  %v5352 = vld [vmem:[%s5334 + $0x88] sm:$0xff]
  %v5353 = vld [vmem:[%s5334 + $0x90] sm:$0xff]
  %v5354 = vld [vmem:[%s5334 + $0x98] sm:$0xff]
  %v5355 = vld [vmem:[%s5334 + $0xa0] sm:$0xff]
  %v5356 = vld [vmem:[%s5334 + $0xa8] sm:$0xff]
  %v5357 = vld [vmem:[%s5334 + $0xb0] sm:$0xff]
  %v5358 = vld [vmem:[%s5334 + $0xb8] sm:$0xff]
  %v5359 = vld [vmem:[%s5334 + $0xc0] sm:$0xff]
  %v5360 = vld [vmem:[%s5334 + $0xc8] sm:$0xff]
  %v5361 = vld [vmem:[%s5334 + $0xd0] sm:$0xff]
  %v5362 = vld [vmem:[%s5334 + $0xd8] sm:$0xff]
  %v5363 = vld [vmem:[%s5334 + $0xe0] sm:$0xff]
  %v5364 = vld [vmem:[%s5334 + $0xe8] sm:$0xff]
  %v5365 = vld [vmem:[%s5334 + $0xf0] sm:$0xff]
  %v5366 = vld [vmem:[%s5334 + $0xf8] sm:$0xff]
  %s5367 = scalar_lea.vmem %s3, 4
  %v5368 = vld [vmem:[%s5367] ss:$8 sm:$0x3]
  %v5370 = vperm.slane %v5368, 0
  %v5371 = vperm.slane %v5368, 1
  %v5406 = vunpack.c.l.b16 %v5335
  %v5407 = vunpack.c.h.b16 %v5335
  %v5408 = vunpack.c.l.b16 %v5336
  %v5409 = vunpack.c.h.b16 %v5336
  %v5410 = vunpack.c.l.b16 %v5337
  %v5411 = vunpack.c.h.b16 %v5337
  %v5412 = vunpack.c.l.b16 %v5338
  %v5413 = vunpack.c.h.b16 %v5338
  %v5414 = vunpack.c.l.b16 %v5339
  %v5415 = vunpack.c.h.b16 %v5339
  %v5416 = vunpack.c.l.b16 %v5340
  %v5417 = vunpack.c.h.b16 %v5340
  %v5418 = vunpack.c.l.b16 %v5341
  %v5419 = vunpack.c.h.b16 %v5341
  %v5420 = vunpack.c.l.b16 %v5342
  %v5421 = vunpack.c.h.b16 %v5342
  %v5422 = vunpack.c.l.b16 %v5343
  %v5423 = vunpack.c.h.b16 %v5343
  %v5424 = vunpack.c.l.b16 %v5344
  %v5425 = vunpack.c.h.b16 %v5344
  %v5426 = vunpack.c.l.b16 %v5345
  %v5427 = vunpack.c.h.b16 %v5345
  %v5428 = vunpack.c.l.b16 %v5346
  %v5429 = vunpack.c.h.b16 %v5346
  %v5430 = vunpack.c.l.b16 %v5347
  %v5431 = vunpack.c.h.b16 %v5347
  %v5432 = vunpack.c.l.b16 %v5348
  %v5433 = vunpack.c.h.b16 %v5348
  %v5434 = vunpack.c.l.b16 %v5349
  %v5435 = vunpack.c.h.b16 %v5349
  %v5436 = vunpack.c.l.b16 %v5350
  %v5437 = vunpack.c.h.b16 %v5350
  %v5438 = vunpack.c.l.b16 %v5351
  %v5439 = vunpack.c.h.b16 %v5351
  %v5440 = vunpack.c.l.b16 %v5352
  %v5441 = vunpack.c.h.b16 %v5352
  %v5442 = vunpack.c.l.b16 %v5353
  %v5443 = vunpack.c.h.b16 %v5353
  %v5444 = vunpack.c.l.b16 %v5354
  %v5445 = vunpack.c.h.b16 %v5354
  %v5446 = vunpack.c.l.b16 %v5355
  %v5447 = vunpack.c.h.b16 %v5355
  %v5448 = vunpack.c.l.b16 %v5356
  %v5449 = vunpack.c.h.b16 %v5356
  %v5450 = vunpack.c.l.b16 %v5357
  %v5451 = vunpack.c.h.b16 %v5357
  %v5452 = vunpack.c.l.b16 %v5358
  %v5453 = vunpack.c.h.b16 %v5358
  %v5454 = vunpack.c.l.b16 %v5359
  %v5455 = vunpack.c.h.b16 %v5359
  %v5456 = vunpack.c.l.b16 %v5360
  %v5457 = vunpack.c.h.b16 %v5360
  %v5458 = vunpack.c.l.b16 %v5361
  %v5459 = vunpack.c.h.b16 %v5361
  %v5460 = vunpack.c.l.b16 %v5362
  %v5461 = vunpack.c.h.b16 %v5362
  %v5462 = vunpack.c.l.b16 %v5363
  %v5463 = vunpack.c.h.b16 %v5363
  %v5464 = vunpack.c.l.b16 %v5364
  %v5465 = vunpack.c.h.b16 %v5364
  %v5466 = vunpack.c.l.b16 %v5365
  %v5467 = vunpack.c.h.b16 %v5365
  %v5468 = vunpack.c.l.b16 %v5366
  %v5469 = vunpack.c.h.b16 %v5366
  %v5470 = vpack.c.b16 %v5408, %v5406
  %v5471 = vpack.c.b16 %v5409, %v5407
  %v5472 = vpack.c.b16 %v5412, %v5410
  %v5473 = vpack.c.b16 %v5413, %v5411
  %v5474 = vpack.c.b16 %v5416, %v5414
  %v5475 = vpack.c.b16 %v5417, %v5415
  %v5476 = vpack.c.b16 %v5420, %v5418
  %v5477 = vpack.c.b16 %v5421, %v5419
  %v5478 = vpack.c.b16 %v5424, %v5422
  %v5479 = vpack.c.b16 %v5425, %v5423
  %v5480 = vpack.c.b16 %v5428, %v5426
  %v5481 = vpack.c.b16 %v5429, %v5427
  %v5482 = vpack.c.b16 %v5432, %v5430
  %v5483 = vpack.c.b16 %v5433, %v5431
  %v5484 = vpack.c.b16 %v5436, %v5434
  %v5485 = vpack.c.b16 %v5437, %v5435
  %v5486 = vpack.c.b16 %v5440, %v5438
  %v5487 = vpack.c.b16 %v5441, %v5439
  %v5488 = vpack.c.b16 %v5444, %v5442
  %v5489 = vpack.c.b16 %v5445, %v5443
  %v5490 = vpack.c.b16 %v5448, %v5446
  %v5491 = vpack.c.b16 %v5449, %v5447
  %v5492 = vpack.c.b16 %v5452, %v5450
  %v5493 = vpack.c.b16 %v5453, %v5451
  %v5494 = vpack.c.b16 %v5456, %v5454
  %v5495 = vpack.c.b16 %v5457, %v5455
  %v5496 = vpack.c.b16 %v5460, %v5458
  %v5497 = vpack.c.b16 %v5461, %v5459
  %v5498 = vpack.c.b16 %v5464, %v5462
  %v5499 = vpack.c.b16 %v5465, %v5463
  %v5500 = vpack.c.b16 %v5468, %v5466
  %v5501 = vpack.c.b16 %v5469, %v5467
  %5534 = vmatpush.bf16.msra.mxu0 %v5484
  %5535 = vmatpush.bf16.msra.mxu0 %v5482
  %5536 = vmatpush.bf16.msra.mxu0 %v5480
  %5537 = vmatpush.bf16.msra.mxu0 %v5478
  %5538 = vmatpush.bf16.msra.mxu0 %v5476
  %5539 = vmatpush.bf16.msra.mxu0 %v5474
  %5540 = vmatpush.bf16.msra.mxu0 %v5472
  %5541 = vmatpush.bf16.msra.mxu0 %v5470
  %5542 = vmatmul.bf16.gmra.mxu0 %v5318
  %v5543 = vpop.f32.mrf.mxu0
  %v5544 = vadd.f32 %v5370, %v5543
  %v5545 = vpop.f32.mrf.mxu0
  %v5546 = vadd.f32 %v5370, %v5545
  %5547 = vmatmul.bf16.gmra.mxu0 %v5320
  %v5548 = vpop.f32.mrf.mxu0
  %v5549 = vadd.f32 %v5370, %v5548
  %v5550 = vpop.f32.mrf.mxu0
  %v5551 = vadd.f32 %v5370, %v5550
  %5552 = vmatmul.bf16.gmra.mxu0 %v5322
  %v5553 = vpop.f32.mrf.mxu0
  %v5554 = vadd.f32 %v5370, %v5553
  %v5555 = vpop.f32.mrf.mxu0
  %v5556 = vadd.f32 %v5370, %v5555
  %5557 = vmatmul.bf16.gmra.mxu0 %v5324
  %v5558 = vpop.f32.mrf.mxu0
  %v5559 = vadd.f32 %v5370, %v5558
  %v5560 = vpop.f32.mrf.mxu0
  %v5561 = vadd.f32 %v5370, %v5560
  %5562 = vmatmul.bf16.gmra.mxu0 %v5326
  %v5563 = vpop.f32.mrf.mxu0
  %v5564 = vadd.f32 %v5370, %v5563
  %v5565 = vpop.f32.mrf.mxu0
  %v5566 = vadd.f32 %v5370, %v5565
  %5567 = vmatmul.bf16.gmra.mxu0 %v5328
  %v5568 = vpop.f32.mrf.mxu0
  %v5569 = vadd.f32 %v5370, %v5568
  %v5570 = vpop.f32.mrf.mxu0
  %v5571 = vadd.f32 %v5370, %v5570
  %5572 = vmatmul.bf16.gmra.mxu0 %v5330
  %v5573 = vpop.f32.mrf.mxu0
  %v5574 = vadd.f32 %v5370, %v5573
  %v5575 = vpop.f32.mrf.mxu0
  %v5576 = vadd.f32 %v5370, %v5575
  %5577 = vmatmul.bf16.gmra.mxu0 %v5332
  %v5578 = vpop.f32.mrf.mxu0
  %v5579 = vadd.f32 %v5370, %v5578
  %v5580 = vpop.f32.mrf.mxu0
  %v5581 = vadd.f32 %v5370, %v5580
  %5582 = vdwg.mxu0
  %5583 = vmatpush.bf16.msra.mxu0 %v5500
  %5584 = vmatpush.bf16.msra.mxu0 %v5498
  %5585 = vmatpush.bf16.msra.mxu0 %v5496
  %5586 = vmatpush.bf16.msra.mxu0 %v5494
  %5587 = vmatpush.bf16.msra.mxu0 %v5492
  %5588 = vmatpush.bf16.msra.mxu0 %v5490
  %5589 = vmatpush.bf16.msra.mxu0 %v5488
  %5590 = vmatpush.bf16.msra.mxu0 %v5486
  %5591 = vmatmul.bf16.gmra.mxu0 %v5319
  %v5592 = vpop.f32.mrf.mxu0
  %v5593 = vadd.f32 %v5544, %v5592
  %v5594 = vpop.f32.mrf.mxu0
  %v5595 = vadd.f32 %v5546, %v5594
  %5596 = vmatmul.bf16.gmra.mxu0 %v5321
  %v5597 = vpop.f32.mrf.mxu0
  %v5598 = vadd.f32 %v5549, %v5597
  %v5599 = vpop.f32.mrf.mxu0
  %v5600 = vadd.f32 %v5551, %v5599
  %5601 = vmatmul.bf16.gmra.mxu0 %v5323
  %v5602 = vpop.f32.mrf.mxu0
  %v5603 = vadd.f32 %v5554, %v5602
  %v5604 = vpop.f32.mrf.mxu0
  %v5605 = vadd.f32 %v5556, %v5604
  %5606 = vmatmul.bf16.gmra.mxu0 %v5325
  %v5607 = vpop.f32.mrf.mxu0
  %v5608 = vadd.f32 %v5559, %v5607
  %v5609 = vpop.f32.mrf.mxu0
  %v5610 = vadd.f32 %v5561, %v5609
  %5611 = vmatmul.bf16.gmra.mxu0 %v5327
  %v5612 = vpop.f32.mrf.mxu0
  %v5613 = vadd.f32 %v5564, %v5612
  %v5614 = vpop.f32.mrf.mxu0
  %v5615 = vadd.f32 %v5566, %v5614
  %5616 = vmatmul.bf16.gmra.mxu0 %v5329
  %v5617 = vpop.f32.mrf.mxu0
  %v5618 = vadd.f32 %v5569, %v5617
  %v5619 = vpop.f32.mrf.mxu0
  %v5620 = vadd.f32 %v5571, %v5619
  %5621 = vmatmul.bf16.gmra.mxu0 %v5331
  %v5622 = vpop.f32.mrf.mxu0
  %v5623 = vadd.f32 %v5574, %v5622
  %v5624 = vpop.f32.mrf.mxu0
  %v5625 = vadd.f32 %v5576, %v5624
  %5626 = vmatmul.bf16.gmra.mxu0 %v5333
  %v5627 = vpop.f32.mrf.mxu0
  %v5628 = vadd.f32 %v5579, %v5627
  %v5629 = vpop.f32.mrf.mxu0
  %v5630 = vadd.f32 %v5581, %v5629
  %5631 = vdwg.mxu0
  %5632 = vmatpush.bf16.msra.mxu0 %v5485
  %5633 = vmatpush.bf16.msra.mxu0 %v5483
  %5634 = vmatpush.bf16.msra.mxu0 %v5481
  %5635 = vmatpush.bf16.msra.mxu0 %v5479
  %5636 = vmatpush.bf16.msra.mxu0 %v5477
  %5637 = vmatpush.bf16.msra.mxu0 %v5475
  %5638 = vmatpush.bf16.msra.mxu0 %v5473
  %5639 = vmatpush.bf16.msra.mxu0 %v5471
  %5640 = vmatmul.bf16.gmra.mxu0 %v5318
  %v5641 = vpop.f32.mrf.mxu0
  %v5642 = vadd.f32 %v5371, %v5641
  %v5643 = vpop.f32.mrf.mxu0
  %v5644 = vadd.f32 %v5371, %v5643
  %5645 = vmatmul.bf16.gmra.mxu0 %v5320
  %v5646 = vpop.f32.mrf.mxu0
  %v5647 = vadd.f32 %v5371, %v5646
  %v5648 = vpop.f32.mrf.mxu0
  %v5649 = vadd.f32 %v5371, %v5648
  %5650 = vmatmul.bf16.gmra.mxu0 %v5322
  %v5651 = vpop.f32.mrf.mxu0
  %v5652 = vadd.f32 %v5371, %v5651
  %v5653 = vpop.f32.mrf.mxu0
  %v5654 = vadd.f32 %v5371, %v5653
  %5655 = vmatmul.bf16.gmra.mxu0 %v5324
  %v5656 = vpop.f32.mrf.mxu0
  %v5657 = vadd.f32 %v5371, %v5656
  %v5658 = vpop.f32.mrf.mxu0
  %v5659 = vadd.f32 %v5371, %v5658
  %5660 = vmatmul.bf16.gmra.mxu0 %v5326
  %v5661 = vpop.f32.mrf.mxu0
  %v5662 = vadd.f32 %v5371, %v5661
  %v5663 = vpop.f32.mrf.mxu0
  %v5664 = vadd.f32 %v5371, %v5663
  %5665 = vmatmul.bf16.gmra.mxu0 %v5328
  %v5666 = vpop.f32.mrf.mxu0
  %v5667 = vadd.f32 %v5371, %v5666
  %v5668 = vpop.f32.mrf.mxu0
  %v5669 = vadd.f32 %v5371, %v5668
  %5670 = vmatmul.bf16.gmra.mxu0 %v5330
  %v5671 = vpop.f32.mrf.mxu0
  %v5672 = vadd.f32 %v5371, %v5671
  %v5673 = vpop.f32.mrf.mxu0
  %v5674 = vadd.f32 %v5371, %v5673
  %5675 = vmatmul.bf16.gmra.mxu0 %v5332
  %v5676 = vpop.f32.mrf.mxu0
  %v5677 = vadd.f32 %v5371, %v5676
  %v5678 = vpop.f32.mrf.mxu0
  %v5679 = vadd.f32 %v5371, %v5678
  %5680 = vdwg.mxu0
  %5681 = vmatpush.bf16.msra.mxu0 %v5501
  %5682 = vmatpush.bf16.msra.mxu0 %v5499
  %5683 = vmatpush.bf16.msra.mxu0 %v5497
  %5684 = vmatpush.bf16.msra.mxu0 %v5495
  %5685 = vmatpush.bf16.msra.mxu0 %v5493
  %5686 = vmatpush.bf16.msra.mxu0 %v5491
  %5687 = vmatpush.bf16.msra.mxu0 %v5489
  %5688 = vmatpush.bf16.msra.mxu0 %v5487
  %5689 = vmatmul.bf16.gmra.mxu0 %v5319
  %v5690 = vpop.f32.mrf.mxu0
  %v5691 = vadd.f32 %v5642, %v5690
  %v5692 = vpop.f32.mrf.mxu0
  %v5693 = vadd.f32 %v5644, %v5692
  %5694 = vmatmul.bf16.gmra.mxu0 %v5321
  %v5695 = vpop.f32.mrf.mxu0
  %v5696 = vadd.f32 %v5647, %v5695
  %v5697 = vpop.f32.mrf.mxu0
  %v5698 = vadd.f32 %v5649, %v5697
  %5699 = vmatmul.bf16.gmra.mxu0 %v5323
  %v5700 = vpop.f32.mrf.mxu0
  %v5701 = vadd.f32 %v5652, %v5700
  %v5702 = vpop.f32.mrf.mxu0
  %v5703 = vadd.f32 %v5654, %v5702
  %5704 = vmatmul.bf16.gmra.mxu0 %v5325
  %v5705 = vpop.f32.mrf.mxu0
  %v5706 = vadd.f32 %v5657, %v5705
  %v5707 = vpop.f32.mrf.mxu0
  %v5708 = vadd.f32 %v5659, %v5707
  %5709 = vmatmul.bf16.gmra.mxu0 %v5327
  %v5710 = vpop.f32.mrf.mxu0
  %v5711 = vadd.f32 %v5662, %v5710
  %v5712 = vpop.f32.mrf.mxu0
  %v5713 = vadd.f32 %v5664, %v5712
  %5714 = vmatmul.bf16.gmra.mxu0 %v5329
  %v5715 = vpop.f32.mrf.mxu0
  %v5716 = vadd.f32 %v5667, %v5715
  %v5717 = vpop.f32.mrf.mxu0
  %v5718 = vadd.f32 %v5669, %v5717
  %5719 = vmatmul.bf16.gmra.mxu0 %v5331
  %v5720 = vpop.f32.mrf.mxu0
  %v5721 = vadd.f32 %v5672, %v5720
  %v5722 = vpop.f32.mrf.mxu0
  %v5723 = vadd.f32 %v5674, %v5722
  %5724 = vmatmul.bf16.gmra.mxu0 %v5333
  %v5725 = vpop.f32.mrf.mxu0
  %v5726 = vadd.f32 %v5677, %v5725
  %v5727 = vpop.f32.mrf.mxu0
  %v5728 = vadd.f32 %v5679, %v5727
  %5729 = vdwg.mxu0
  %v5730 = vxor.u32 %v5593, 2147483648
  %v5731 = vxor.u32 %v5691, 2147483648
  %v5732 = vxor.u32 %v5595, 2147483648
  %v5733 = vxor.u32 %v5693, 2147483648
  %v5734 = vxor.u32 %v5598, 2147483648
  %v5735 = vxor.u32 %v5696, 2147483648
  %v5736 = vxor.u32 %v5600, 2147483648
  %v5737 = vxor.u32 %v5698, 2147483648
  %v5738 = vxor.u32 %v5603, 2147483648
  %v5739 = vxor.u32 %v5701, 2147483648
  %v5740 = vxor.u32 %v5605, 2147483648
  %v5741 = vxor.u32 %v5703, 2147483648
  %v5742 = vxor.u32 %v5608, 2147483648
  %v5743 = vxor.u32 %v5706, 2147483648
  %v5744 = vxor.u32 %v5610, 2147483648
  %v5745 = vxor.u32 %v5708, 2147483648
  %v5746 = vxor.u32 %v5613, 2147483648
  %v5747 = vxor.u32 %v5711, 2147483648
  %v5748 = vxor.u32 %v5615, 2147483648
  %v5749 = vxor.u32 %v5713, 2147483648
  %v5750 = vxor.u32 %v5618, 2147483648
  %v5751 = vxor.u32 %v5716, 2147483648
  %v5752 = vxor.u32 %v5620, 2147483648
  %v5753 = vxor.u32 %v5718, 2147483648
  %v5754 = vxor.u32 %v5623, 2147483648
  %v5755 = vxor.u32 %v5721, 2147483648
  %v5756 = vxor.u32 %v5625, 2147483648
  %v5757 = vxor.u32 %v5723, 2147483648
  %v5758 = vxor.u32 %v5628, 2147483648
  %v5759 = vxor.u32 %v5726, 2147483648
  %v5760 = vxor.u32 %v5630, 2147483648
  %v5761 = vxor.u32 %v5728, 2147483648
  %v5762 = vmul.f32 %v5730, 1.442695
  %v5763 = vpow.pop %v5762
  %v5764 = vmul.f32 %v5731, 1.442695
  %v5765 = vpow.pop %v5764
  %v5766 = vmul.f32 %v5732, 1.442695
  %v5767 = vpow.pop %v5766
  %v5768 = vmul.f32 %v5733, 1.442695
  %v5769 = vpow.pop %v5768
  %v5770 = vmul.f32 %v5734, 1.442695
  %v5771 = vpow.pop %v5770
  %v5772 = vmul.f32 %v5735, 1.442695
  %v5773 = vpow.pop %v5772
  %v5774 = vmul.f32 %v5736, 1.442695
  %v5775 = vpow.pop %v5774
  %v5776 = vmul.f32 %v5737, 1.442695
  %v5777 = vpow.pop %v5776
  %v5778 = vmul.f32 %v5738, 1.442695
  %v5779 = vpow.pop %v5778
  %v5780 = vmul.f32 %v5739, 1.442695
  %v5781 = vpow.pop %v5780
  %v5782 = vmul.f32 %v5740, 1.442695
  %v5783 = vpow.pop %v5782
  %v5784 = vmul.f32 %v5741, 1.442695
  %v5785 = vpow.pop %v5784
  %v5786 = vmul.f32 %v5742, 1.442695
  %v5787 = vpow.pop %v5786
  %v5788 = vmul.f32 %v5743, 1.442695
  %v5789 = vpow.pop %v5788
  %v5790 = vmul.f32 %v5744, 1.442695
  %v5791 = vpow.pop %v5790
  %v5792 = vmul.f32 %v5745, 1.442695
  %v5793 = vpow.pop %v5792
  %v5794 = vmul.f32 %v5746, 1.442695
  %v5795 = vpow.pop %v5794
  %v5796 = vmul.f32 %v5747, 1.442695
  %v5797 = vpow.pop %v5796
  %v5798 = vmul.f32 %v5748, 1.442695
  %v5799 = vpow.pop %v5798
  %v5800 = vmul.f32 %v5749, 1.442695
  %v5801 = vpow.pop %v5800
  %v5802 = vmul.f32 %v5750, 1.442695
  %v5803 = vpow.pop %v5802
  %v5804 = vmul.f32 %v5751, 1.442695
  %v5805 = vpow.pop %v5804
  %v5806 = vmul.f32 %v5752, 1.442695
  %v5807 = vpow.pop %v5806
  %v5808 = vmul.f32 %v5753, 1.442695
  %v5809 = vpow.pop %v5808
  %v5810 = vmul.f32 %v5754, 1.442695
  %v5811 = vpow.pop %v5810
  %v5812 = vmul.f32 %v5755, 1.442695
  %v5813 = vpow.pop %v5812
  %v5814 = vmul.f32 %v5756, 1.442695
  %v5815 = vpow.pop %v5814
  %v5816 = vmul.f32 %v5757, 1.442695
  %v5817 = vpow.pop %v5816
  %v5818 = vmul.f32 %v5758, 1.442695
  %v5819 = vpow.pop %v5818
  %v5820 = vmul.f32 %v5759, 1.442695
  %v5821 = vpow.pop %v5820
  %v5822 = vmul.f32 %v5760, 1.442695
  %v5823 = vpow.pop %v5822
  %v5824 = vmul.f32 %v5761, 1.442695
  %v5825 = vpow.pop %v5824
  %v5826 = vadd.f32 %v5763, 1.0
  %v5827 = vadd.f32 %v5765, 1.0
  %v5828 = vadd.f32 %v5767, 1.0
  %v5829 = vadd.f32 %v5769, 1.0
  %v5830 = vadd.f32 %v5771, 1.0
  %v5831 = vadd.f32 %v5773, 1.0
  %v5832 = vadd.f32 %v5775, 1.0
  %v5833 = vadd.f32 %v5777, 1.0
  %v5834 = vadd.f32 %v5779, 1.0
  %v5835 = vadd.f32 %v5781, 1.0
  %v5836 = vadd.f32 %v5783, 1.0
  %v5837 = vadd.f32 %v5785, 1.0
  %v5838 = vadd.f32 %v5787, 1.0
  %v5839 = vadd.f32 %v5789, 1.0
  %v5840 = vadd.f32 %v5791, 1.0
  %v5841 = vadd.f32 %v5793, 1.0
  %v5842 = vadd.f32 %v5795, 1.0
  %v5843 = vadd.f32 %v5797, 1.0
  %v5844 = vadd.f32 %v5799, 1.0
  %v5845 = vadd.f32 %v5801, 1.0
  %v5846 = vadd.f32 %v5803, 1.0
  %v5847 = vadd.f32 %v5805, 1.0
  %v5848 = vadd.f32 %v5807, 1.0
  %v5849 = vadd.f32 %v5809, 1.0
  %v5850 = vadd.f32 %v5811, 1.0
  %v5851 = vadd.f32 %v5813, 1.0
  %v5852 = vadd.f32 %v5815, 1.0
  %v5853 = vadd.f32 %v5817, 1.0
  %v5854 = vadd.f32 %v5819, 1.0
  %v5855 = vadd.f32 %v5821, 1.0
  %v5856 = vadd.f32 %v5823, 1.0
  %v5857 = vadd.f32 %v5825, 1.0
  %v5858 = vrcp.pop %v5826
  %v5859 = vmul.f32 %v5826, %v5858
  %v5860 = vsub.f32 1.0, %v5859
  %v5861 = vmul.f32 %v5858, %v5860
  %v5862 = vadd.f32 %v5858, %v5861
  %vm5863 = vweird.f32 %v5826
  %vm5864 = vweird.f32 %v5858
  %vm5865 = vmor %vm5863, %vm5864
  %v5866 = vsel %vm5865, %v5858, %v5862
  %v5867 = vand.u32 2147483647, %v5826
  %vm5868 = vcmp.eq.f32.partialorder %v5867, 8.507059e+37
  %v5869 = vand.u32 %v5826, 2147483648
  %v5870 = vor.u32 1.1754944e-38, %v5869
  %v5871 = vsel %vm5868, %v5870, %v5866
  %v5872 = vmul.f32 1.0, %v5871
  %v5873 = vrcp.pop %v5827
  %v5874 = vmul.f32 %v5827, %v5873
  %v5875 = vsub.f32 1.0, %v5874
  %v5876 = vmul.f32 %v5873, %v5875
  %v5877 = vadd.f32 %v5873, %v5876
  %vm5878 = vweird.f32 %v5827
  %vm5879 = vweird.f32 %v5873
  %vm5880 = vmor %vm5878, %vm5879
  %v5881 = vsel %vm5880, %v5873, %v5877
  %v5882 = vand.u32 2147483647, %v5827
  %vm5883 = vcmp.eq.f32.partialorder %v5882, 8.507059e+37
  %v5884 = vand.u32 %v5827, 2147483648
  %v5885 = vor.u32 1.1754944e-38, %v5884
  %v5886 = vsel %vm5883, %v5885, %v5881
  %v5887 = vmul.f32 1.0, %v5886
  %v5888 = vrcp.pop %v5828
  %v5889 = vmul.f32 %v5828, %v5888
  %v5890 = vsub.f32 1.0, %v5889
  %v5891 = vmul.f32 %v5888, %v5890
  %v5892 = vadd.f32 %v5888, %v5891
  %vm5893 = vweird.f32 %v5828
  %vm5894 = vweird.f32 %v5888
  %vm5895 = vmor %vm5893, %vm5894
  %v5896 = vsel %vm5895, %v5888, %v5892
  %v5897 = vand.u32 2147483647, %v5828
  %vm5898 = vcmp.eq.f32.partialorder %v5897, 8.507059e+37
  %v5899 = vand.u32 %v5828, 2147483648
  %v5900 = vor.u32 1.1754944e-38, %v5899
  %v5901 = vsel %vm5898, %v5900, %v5896
  %v5902 = vmul.f32 1.0, %v5901
  %v5903 = vrcp.pop %v5829
  %v5904 = vmul.f32 %v5829, %v5903
  %v5905 = vsub.f32 1.0, %v5904
  %v5906 = vmul.f32 %v5903, %v5905
  %v5907 = vadd.f32 %v5903, %v5906
  %vm5908 = vweird.f32 %v5829
  %vm5909 = vweird.f32 %v5903
  %vm5910 = vmor %vm5908, %vm5909
  %v5911 = vsel %vm5910, %v5903, %v5907
  %v5912 = vand.u32 2147483647, %v5829
  %vm5913 = vcmp.eq.f32.partialorder %v5912, 8.507059e+37
  %v5914 = vand.u32 %v5829, 2147483648
  %v5915 = vor.u32 1.1754944e-38, %v5914
  %v5916 = vsel %vm5913, %v5915, %v5911
  %v5917 = vmul.f32 1.0, %v5916
  %v5918 = vrcp.pop %v5830
  %v5919 = vmul.f32 %v5830, %v5918
  %v5920 = vsub.f32 1.0, %v5919
  %v5921 = vmul.f32 %v5918, %v5920
  %v5922 = vadd.f32 %v5918, %v5921
  %vm5923 = vweird.f32 %v5830
  %vm5924 = vweird.f32 %v5918
  %vm5925 = vmor %vm5923, %vm5924
  %v5926 = vsel %vm5925, %v5918, %v5922
  %v5927 = vand.u32 2147483647, %v5830
  %vm5928 = vcmp.eq.f32.partialorder %v5927, 8.507059e+37
  %v5929 = vand.u32 %v5830, 2147483648
  %v5930 = vor.u32 1.1754944e-38, %v5929
  %v5931 = vsel %vm5928, %v5930, %v5926
  %v5932 = vmul.f32 1.0, %v5931
  %v5933 = vrcp.pop %v5831
  %v5934 = vmul.f32 %v5831, %v5933
  %v5935 = vsub.f32 1.0, %v5934
  %v5936 = vmul.f32 %v5933, %v5935
  %v5937 = vadd.f32 %v5933, %v5936
  %vm5938 = vweird.f32 %v5831
  %vm5939 = vweird.f32 %v5933
  %vm5940 = vmor %vm5938, %vm5939
  %v5941 = vsel %vm5940, %v5933, %v5937
  %v5942 = vand.u32 2147483647, %v5831
  %vm5943 = vcmp.eq.f32.partialorder %v5942, 8.507059e+37
  %v5944 = vand.u32 %v5831, 2147483648
  %v5945 = vor.u32 1.1754944e-38, %v5944
  %v5946 = vsel %vm5943, %v5945, %v5941
  %v5947 = vmul.f32 1.0, %v5946
  %v5948 = vrcp.pop %v5832
  %v5949 = vmul.f32 %v5832, %v5948
  %v5950 = vsub.f32 1.0, %v5949
  %v5951 = vmul.f32 %v5948, %v5950
  %v5952 = vadd.f32 %v5948, %v5951
  %vm5953 = vweird.f32 %v5832
  %vm5954 = vweird.f32 %v5948
  %vm5955 = vmor %vm5953, %vm5954
  %v5956 = vsel %vm5955, %v5948, %v5952
  %v5957 = vand.u32 2147483647, %v5832
  %vm5958 = vcmp.eq.f32.partialorder %v5957, 8.507059e+37
  %v5959 = vand.u32 %v5832, 2147483648
  %v5960 = vor.u32 1.1754944e-38, %v5959
  %v5961 = vsel %vm5958, %v5960, %v5956
  %v5962 = vmul.f32 1.0, %v5961
  %v5963 = vrcp.pop %v5833
  %v5964 = vmul.f32 %v5833, %v5963
  %v5965 = vsub.f32 1.0, %v5964
  %v5966 = vmul.f32 %v5963, %v5965
  %v5967 = vadd.f32 %v5963, %v5966
  %vm5968 = vweird.f32 %v5833
  %vm5969 = vweird.f32 %v5963
  %vm5970 = vmor %vm5968, %vm5969
  %v5971 = vsel %vm5970, %v5963, %v5967
  %v5972 = vand.u32 2147483647, %v5833
  %vm5973 = vcmp.eq.f32.partialorder %v5972, 8.507059e+37
  %v5974 = vand.u32 %v5833, 2147483648
  %v5975 = vor.u32 1.1754944e-38, %v5974
  %v5976 = vsel %vm5973, %v5975, %v5971
  %v5977 = vmul.f32 1.0, %v5976
  %v5978 = vrcp.pop %v5834
  %v5979 = vmul.f32 %v5834, %v5978
  %v5980 = vsub.f32 1.0, %v5979
  %v5981 = vmul.f32 %v5978, %v5980
  %v5982 = vadd.f32 %v5978, %v5981
  %vm5983 = vweird.f32 %v5834
  %vm5984 = vweird.f32 %v5978
  %vm5985 = vmor %vm5983, %vm5984
  %v5986 = vsel %vm5985, %v5978, %v5982
  %v5987 = vand.u32 2147483647, %v5834
  %vm5988 = vcmp.eq.f32.partialorder %v5987, 8.507059e+37
  %v5989 = vand.u32 %v5834, 2147483648
  %v5990 = vor.u32 1.1754944e-38, %v5989
  %v5991 = vsel %vm5988, %v5990, %v5986
  %v5992 = vmul.f32 1.0, %v5991
  %v5993 = vrcp.pop %v5835
  %v5994 = vmul.f32 %v5835, %v5993
  %v5995 = vsub.f32 1.0, %v5994
  %v5996 = vmul.f32 %v5993, %v5995
  %v5997 = vadd.f32 %v5993, %v5996
  %vm5998 = vweird.f32 %v5835
  %vm5999 = vweird.f32 %v5993
  %vm6000 = vmor %vm5998, %vm5999
  %v6001 = vsel %vm6000, %v5993, %v5997
  %v6002 = vand.u32 2147483647, %v5835
  %vm6003 = vcmp.eq.f32.partialorder %v6002, 8.507059e+37
  %v6004 = vand.u32 %v5835, 2147483648
  %v6005 = vor.u32 1.1754944e-38, %v6004
  %v6006 = vsel %vm6003, %v6005, %v6001
  %v6007 = vmul.f32 1.0, %v6006
  %v6008 = vrcp.pop %v5836
  %v6009 = vmul.f32 %v5836, %v6008
  %v6010 = vsub.f32 1.0, %v6009
  %v6011 = vmul.f32 %v6008, %v6010
  %v6012 = vadd.f32 %v6008, %v6011
  %vm6013 = vweird.f32 %v5836
  %vm6014 = vweird.f32 %v6008
  %vm6015 = vmor %vm6013, %vm6014
  %v6016 = vsel %vm6015, %v6008, %v6012
  %v6017 = vand.u32 2147483647, %v5836
  %vm6018 = vcmp.eq.f32.partialorder %v6017, 8.507059e+37
  %v6019 = vand.u32 %v5836, 2147483648
  %v6020 = vor.u32 1.1754944e-38, %v6019
  %v6021 = vsel %vm6018, %v6020, %v6016
  %v6022 = vmul.f32 1.0, %v6021
  %v6023 = vrcp.pop %v5837
  %v6024 = vmul.f32 %v5837, %v6023
  %v6025 = vsub.f32 1.0, %v6024
  %v6026 = vmul.f32 %v6023, %v6025
  %v6027 = vadd.f32 %v6023, %v6026
  %vm6028 = vweird.f32 %v5837
  %vm6029 = vweird.f32 %v6023
  %vm6030 = vmor %vm6028, %vm6029
  %v6031 = vsel %vm6030, %v6023, %v6027
  %v6032 = vand.u32 2147483647, %v5837
  %vm6033 = vcmp.eq.f32.partialorder %v6032, 8.507059e+37
  %v6034 = vand.u32 %v5837, 2147483648
  %v6035 = vor.u32 1.1754944e-38, %v6034
  %v6036 = vsel %vm6033, %v6035, %v6031
  %v6037 = vmul.f32 1.0, %v6036
  %v6038 = vrcp.pop %v5838
  %v6039 = vmul.f32 %v5838, %v6038
  %v6040 = vsub.f32 1.0, %v6039
  %v6041 = vmul.f32 %v6038, %v6040
  %v6042 = vadd.f32 %v6038, %v6041
  %vm6043 = vweird.f32 %v5838
  %vm6044 = vweird.f32 %v6038
  %vm6045 = vmor %vm6043, %vm6044
  %v6046 = vsel %vm6045, %v6038, %v6042
  %v6047 = vand.u32 2147483647, %v5838
  %vm6048 = vcmp.eq.f32.partialorder %v6047, 8.507059e+37
  %v6049 = vand.u32 %v5838, 2147483648
  %v6050 = vor.u32 1.1754944e-38, %v6049
  %v6051 = vsel %vm6048, %v6050, %v6046
  %v6052 = vmul.f32 1.0, %v6051
  %v6053 = vrcp.pop %v5839
  %v6054 = vmul.f32 %v5839, %v6053
  %v6055 = vsub.f32 1.0, %v6054
  %v6056 = vmul.f32 %v6053, %v6055
  %v6057 = vadd.f32 %v6053, %v6056
  %vm6058 = vweird.f32 %v5839
  %vm6059 = vweird.f32 %v6053
  %vm6060 = vmor %vm6058, %vm6059
  %v6061 = vsel %vm6060, %v6053, %v6057
  %v6062 = vand.u32 2147483647, %v5839
  %vm6063 = vcmp.eq.f32.partialorder %v6062, 8.507059e+37
  %v6064 = vand.u32 %v5839, 2147483648
  %v6065 = vor.u32 1.1754944e-38, %v6064
  %v6066 = vsel %vm6063, %v6065, %v6061
  %v6067 = vmul.f32 1.0, %v6066
  %v6068 = vrcp.pop %v5840
  %v6069 = vmul.f32 %v5840, %v6068
  %v6070 = vsub.f32 1.0, %v6069
  %v6071 = vmul.f32 %v6068, %v6070
  %v6072 = vadd.f32 %v6068, %v6071
  %vm6073 = vweird.f32 %v5840
  %vm6074 = vweird.f32 %v6068
  %vm6075 = vmor %vm6073, %vm6074
  %v6076 = vsel %vm6075, %v6068, %v6072
  %v6077 = vand.u32 2147483647, %v5840
  %vm6078 = vcmp.eq.f32.partialorder %v6077, 8.507059e+37
  %v6079 = vand.u32 %v5840, 2147483648
  %v6080 = vor.u32 1.1754944e-38, %v6079
  %v6081 = vsel %vm6078, %v6080, %v6076
  %v6082 = vmul.f32 1.0, %v6081
  %v6083 = vrcp.pop %v5841
  %v6084 = vmul.f32 %v5841, %v6083
  %v6085 = vsub.f32 1.0, %v6084
  %v6086 = vmul.f32 %v6083, %v6085
  %v6087 = vadd.f32 %v6083, %v6086
  %vm6088 = vweird.f32 %v5841
  %vm6089 = vweird.f32 %v6083
  %vm6090 = vmor %vm6088, %vm6089
  %v6091 = vsel %vm6090, %v6083, %v6087
  %v6092 = vand.u32 2147483647, %v5841
  %vm6093 = vcmp.eq.f32.partialorder %v6092, 8.507059e+37
  %v6094 = vand.u32 %v5841, 2147483648
  %v6095 = vor.u32 1.1754944e-38, %v6094
  %v6096 = vsel %vm6093, %v6095, %v6091
  %v6097 = vmul.f32 1.0, %v6096
  %v6098 = vrcp.pop %v5842
  %v6099 = vmul.f32 %v5842, %v6098
  %v6100 = vsub.f32 1.0, %v6099
  %v6101 = vmul.f32 %v6098, %v6100
  %v6102 = vadd.f32 %v6098, %v6101
  %vm6103 = vweird.f32 %v5842
  %vm6104 = vweird.f32 %v6098
  %vm6105 = vmor %vm6103, %vm6104
  %v6106 = vsel %vm6105, %v6098, %v6102
  %v6107 = vand.u32 2147483647, %v5842
  %vm6108 = vcmp.eq.f32.partialorder %v6107, 8.507059e+37
  %v6109 = vand.u32 %v5842, 2147483648
  %v6110 = vor.u32 1.1754944e-38, %v6109
  %v6111 = vsel %vm6108, %v6110, %v6106
  %v6112 = vmul.f32 1.0, %v6111
  %v6113 = vrcp.pop %v5843
  %v6114 = vmul.f32 %v5843, %v6113
  %v6115 = vsub.f32 1.0, %v6114
  %v6116 = vmul.f32 %v6113, %v6115
  %v6117 = vadd.f32 %v6113, %v6116
  %vm6118 = vweird.f32 %v5843
  %vm6119 = vweird.f32 %v6113
  %vm6120 = vmor %vm6118, %vm6119
  %v6121 = vsel %vm6120, %v6113, %v6117
  %v6122 = vand.u32 2147483647, %v5843
  %vm6123 = vcmp.eq.f32.partialorder %v6122, 8.507059e+37
  %v6124 = vand.u32 %v5843, 2147483648
  %v6125 = vor.u32 1.1754944e-38, %v6124
  %v6126 = vsel %vm6123, %v6125, %v6121
  %v6127 = vmul.f32 1.0, %v6126
  %v6128 = vrcp.pop %v5844
  %v6129 = vmul.f32 %v5844, %v6128
  %v6130 = vsub.f32 1.0, %v6129
  %v6131 = vmul.f32 %v6128, %v6130
  %v6132 = vadd.f32 %v6128, %v6131
  %vm6133 = vweird.f32 %v5844
  %vm6134 = vweird.f32 %v6128
  %vm6135 = vmor %vm6133, %vm6134
  %v6136 = vsel %vm6135, %v6128, %v6132
  %v6137 = vand.u32 2147483647, %v5844
  %vm6138 = vcmp.eq.f32.partialorder %v6137, 8.507059e+37
  %v6139 = vand.u32 %v5844, 2147483648
  %v6140 = vor.u32 1.1754944e-38, %v6139
  %v6141 = vsel %vm6138, %v6140, %v6136
  %v6142 = vmul.f32 1.0, %v6141
  %v6143 = vrcp.pop %v5845
  %v6144 = vmul.f32 %v5845, %v6143
  %v6145 = vsub.f32 1.0, %v6144
  %v6146 = vmul.f32 %v6143, %v6145
  %v6147 = vadd.f32 %v6143, %v6146
  %vm6148 = vweird.f32 %v5845
  %vm6149 = vweird.f32 %v6143
  %vm6150 = vmor %vm6148, %vm6149
  %v6151 = vsel %vm6150, %v6143, %v6147
  %v6152 = vand.u32 2147483647, %v5845
  %vm6153 = vcmp.eq.f32.partialorder %v6152, 8.507059e+37
  %v6154 = vand.u32 %v5845, 2147483648
  %v6155 = vor.u32 1.1754944e-38, %v6154
  %v6156 = vsel %vm6153, %v6155, %v6151
  %v6157 = vmul.f32 1.0, %v6156
  %v6158 = vrcp.pop %v5846
  %v6159 = vmul.f32 %v5846, %v6158
  %v6160 = vsub.f32 1.0, %v6159
  %v6161 = vmul.f32 %v6158, %v6160
  %v6162 = vadd.f32 %v6158, %v6161
  %vm6163 = vweird.f32 %v5846
  %vm6164 = vweird.f32 %v6158
  %vm6165 = vmor %vm6163, %vm6164
  %v6166 = vsel %vm6165, %v6158, %v6162
  %v6167 = vand.u32 2147483647, %v5846
  %vm6168 = vcmp.eq.f32.partialorder %v6167, 8.507059e+37
  %v6169 = vand.u32 %v5846, 2147483648
  %v6170 = vor.u32 1.1754944e-38, %v6169
  %v6171 = vsel %vm6168, %v6170, %v6166
  %v6172 = vmul.f32 1.0, %v6171
  %v6173 = vrcp.pop %v5847
  %v6174 = vmul.f32 %v5847, %v6173
  %v6175 = vsub.f32 1.0, %v6174
  %v6176 = vmul.f32 %v6173, %v6175
  %v6177 = vadd.f32 %v6173, %v6176
  %vm6178 = vweird.f32 %v5847
  %vm6179 = vweird.f32 %v6173
  %vm6180 = vmor %vm6178, %vm6179
  %v6181 = vsel %vm6180, %v6173, %v6177
  %v6182 = vand.u32 2147483647, %v5847
  %vm6183 = vcmp.eq.f32.partialorder %v6182, 8.507059e+37
  %v6184 = vand.u32 %v5847, 2147483648
  %v6185 = vor.u32 1.1754944e-38, %v6184
  %v6186 = vsel %vm6183, %v6185, %v6181
  %v6187 = vmul.f32 1.0, %v6186
  %v6188 = vrcp.pop %v5848
  %v6189 = vmul.f32 %v5848, %v6188
  %v6190 = vsub.f32 1.0, %v6189
  %v6191 = vmul.f32 %v6188, %v6190
  %v6192 = vadd.f32 %v6188, %v6191
  %vm6193 = vweird.f32 %v5848
  %vm6194 = vweird.f32 %v6188
  %vm6195 = vmor %vm6193, %vm6194
  %v6196 = vsel %vm6195, %v6188, %v6192
  %v6197 = vand.u32 2147483647, %v5848
  %vm6198 = vcmp.eq.f32.partialorder %v6197, 8.507059e+37
  %v6199 = vand.u32 %v5848, 2147483648
  %v6200 = vor.u32 1.1754944e-38, %v6199
  %v6201 = vsel %vm6198, %v6200, %v6196
  %v6202 = vmul.f32 1.0, %v6201
  %v6203 = vrcp.pop %v5849
  %v6204 = vmul.f32 %v5849, %v6203
  %v6205 = vsub.f32 1.0, %v6204
  %v6206 = vmul.f32 %v6203, %v6205
  %v6207 = vadd.f32 %v6203, %v6206
  %vm6208 = vweird.f32 %v5849
  %vm6209 = vweird.f32 %v6203
  %vm6210 = vmor %vm6208, %vm6209
  %v6211 = vsel %vm6210, %v6203, %v6207
  %v6212 = vand.u32 2147483647, %v5849
  %vm6213 = vcmp.eq.f32.partialorder %v6212, 8.507059e+37
  %v6214 = vand.u32 %v5849, 2147483648
  %v6215 = vor.u32 1.1754944e-38, %v6214
  %v6216 = vsel %vm6213, %v6215, %v6211
  %v6217 = vmul.f32 1.0, %v6216
  %v6218 = vrcp.pop %v5850
  %v6219 = vmul.f32 %v5850, %v6218
  %v6220 = vsub.f32 1.0, %v6219
  %v6221 = vmul.f32 %v6218, %v6220
  %v6222 = vadd.f32 %v6218, %v6221
  %vm6223 = vweird.f32 %v5850
  %vm6224 = vweird.f32 %v6218
  %vm6225 = vmor %vm6223, %vm6224
  %v6226 = vsel %vm6225, %v6218, %v6222
  %v6227 = vand.u32 2147483647, %v5850
  %vm6228 = vcmp.eq.f32.partialorder %v6227, 8.507059e+37
  %v6229 = vand.u32 %v5850, 2147483648
  %v6230 = vor.u32 1.1754944e-38, %v6229
  %v6231 = vsel %vm6228, %v6230, %v6226
  %v6232 = vmul.f32 1.0, %v6231
  %v6233 = vrcp.pop %v5851
  %v6234 = vmul.f32 %v5851, %v6233
  %v6235 = vsub.f32 1.0, %v6234
  %v6236 = vmul.f32 %v6233, %v6235
  %v6237 = vadd.f32 %v6233, %v6236
  %vm6238 = vweird.f32 %v5851
  %vm6239 = vweird.f32 %v6233
  %vm6240 = vmor %vm6238, %vm6239
  %v6241 = vsel %vm6240, %v6233, %v6237
  %v6242 = vand.u32 2147483647, %v5851
  %vm6243 = vcmp.eq.f32.partialorder %v6242, 8.507059e+37
  %v6244 = vand.u32 %v5851, 2147483648
  %v6245 = vor.u32 1.1754944e-38, %v6244
  %v6246 = vsel %vm6243, %v6245, %v6241
  %v6247 = vmul.f32 1.0, %v6246
  %v6248 = vrcp.pop %v5852
  %v6249 = vmul.f32 %v5852, %v6248
  %v6250 = vsub.f32 1.0, %v6249
  %v6251 = vmul.f32 %v6248, %v6250
  %v6252 = vadd.f32 %v6248, %v6251
  %vm6253 = vweird.f32 %v5852
  %vm6254 = vweird.f32 %v6248
  %vm6255 = vmor %vm6253, %vm6254
  %v6256 = vsel %vm6255, %v6248, %v6252
  %v6257 = vand.u32 2147483647, %v5852
  %vm6258 = vcmp.eq.f32.partialorder %v6257, 8.507059e+37
  %v6259 = vand.u32 %v5852, 2147483648
  %v6260 = vor.u32 1.1754944e-38, %v6259
  %v6261 = vsel %vm6258, %v6260, %v6256
  %v6262 = vmul.f32 1.0, %v6261
  %v6263 = vrcp.pop %v5853
  %v6264 = vmul.f32 %v5853, %v6263
  %v6265 = vsub.f32 1.0, %v6264
  %v6266 = vmul.f32 %v6263, %v6265
  %v6267 = vadd.f32 %v6263, %v6266
  %vm6268 = vweird.f32 %v5853
  %vm6269 = vweird.f32 %v6263
  %vm6270 = vmor %vm6268, %vm6269
  %v6271 = vsel %vm6270, %v6263, %v6267
  %v6272 = vand.u32 2147483647, %v5853
  %vm6273 = vcmp.eq.f32.partialorder %v6272, 8.507059e+37
  %v6274 = vand.u32 %v5853, 2147483648
  %v6275 = vor.u32 1.1754944e-38, %v6274
  %v6276 = vsel %vm6273, %v6275, %v6271
  %v6277 = vmul.f32 1.0, %v6276
  %v6278 = vrcp.pop %v5854
  %v6279 = vmul.f32 %v5854, %v6278
  %v6280 = vsub.f32 1.0, %v6279
  %v6281 = vmul.f32 %v6278, %v6280
  %v6282 = vadd.f32 %v6278, %v6281
  %vm6283 = vweird.f32 %v5854
  %vm6284 = vweird.f32 %v6278
  %vm6285 = vmor %vm6283, %vm6284
  %v6286 = vsel %vm6285, %v6278, %v6282
  %v6287 = vand.u32 2147483647, %v5854
  %vm6288 = vcmp.eq.f32.partialorder %v6287, 8.507059e+37
  %v6289 = vand.u32 %v5854, 2147483648
  %v6290 = vor.u32 1.1754944e-38, %v6289
  %v6291 = vsel %vm6288, %v6290, %v6286
  %v6292 = vmul.f32 1.0, %v6291
  %v6293 = vrcp.pop %v5855
  %v6294 = vmul.f32 %v5855, %v6293
  %v6295 = vsub.f32 1.0, %v6294
  %v6296 = vmul.f32 %v6293, %v6295
  %v6297 = vadd.f32 %v6293, %v6296
  %vm6298 = vweird.f32 %v5855
  %vm6299 = vweird.f32 %v6293
  %vm6300 = vmor %vm6298, %vm6299
  %v6301 = vsel %vm6300, %v6293, %v6297
  %v6302 = vand.u32 2147483647, %v5855
  %vm6303 = vcmp.eq.f32.partialorder %v6302, 8.507059e+37
  %v6304 = vand.u32 %v5855, 2147483648
  %v6305 = vor.u32 1.1754944e-38, %v6304
  %v6306 = vsel %vm6303, %v6305, %v6301
  %v6307 = vmul.f32 1.0, %v6306
  %v6308 = vrcp.pop %v5856
  %v6309 = vmul.f32 %v5856, %v6308
  %v6310 = vsub.f32 1.0, %v6309
  %v6311 = vmul.f32 %v6308, %v6310
  %v6312 = vadd.f32 %v6308, %v6311
  %vm6313 = vweird.f32 %v5856
  %vm6314 = vweird.f32 %v6308
  %vm6315 = vmor %vm6313, %vm6314
  %v6316 = vsel %vm6315, %v6308, %v6312
  %v6317 = vand.u32 2147483647, %v5856
  %vm6318 = vcmp.eq.f32.partialorder %v6317, 8.507059e+37
  %v6319 = vand.u32 %v5856, 2147483648
  %v6320 = vor.u32 1.1754944e-38, %v6319
  %v6321 = vsel %vm6318, %v6320, %v6316
  %v6322 = vmul.f32 1.0, %v6321
  %v6323 = vrcp.pop %v5857
  %v6324 = vmul.f32 %v5857, %v6323
  %v6325 = vsub.f32 1.0, %v6324
  %v6326 = vmul.f32 %v6323, %v6325
  %v6327 = vadd.f32 %v6323, %v6326
  %vm6328 = vweird.f32 %v5857
  %vm6329 = vweird.f32 %v6323
  %vm6330 = vmor %vm6328, %vm6329
  %v6331 = vsel %vm6330, %v6323, %v6327
  %v6332 = vand.u32 2147483647, %v5857
  %vm6333 = vcmp.eq.f32.partialorder %v6332, 8.507059e+37
  %v6334 = vand.u32 %v5857, 2147483648
  %v6335 = vor.u32 1.1754944e-38, %v6334
  %v6336 = vsel %vm6333, %v6335, %v6331
  %v6337 = vmul.f32 1.0, %v6336
  %v6338 = vmul.f32 %v5593, %v5872
  %v6339 = vmul.f32 %v5691, %v5887
  %v6340 = vmul.f32 %v5595, %v5902
  %v6341 = vmul.f32 %v5693, %v5917
  %v6342 = vmul.f32 %v5598, %v5932
  %v6343 = vmul.f32 %v5696, %v5947
  %v6344 = vmul.f32 %v5600, %v5962
  %v6345 = vmul.f32 %v5698, %v5977
  %v6346 = vmul.f32 %v5603, %v5992
  %v6347 = vmul.f32 %v5701, %v6007
  %v6348 = vmul.f32 %v5605, %v6022
  %v6349 = vmul.f32 %v5703, %v6037
  %v6350 = vmul.f32 %v5608, %v6052
  %v6351 = vmul.f32 %v5706, %v6067
  %v6352 = vmul.f32 %v5610, %v6082
  %v6353 = vmul.f32 %v5708, %v6097
  %v6354 = vmul.f32 %v5613, %v6112
  %v6355 = vmul.f32 %v5711, %v6127
  %v6356 = vmul.f32 %v5615, %v6142
  %v6357 = vmul.f32 %v5713, %v6157
  %v6358 = vmul.f32 %v5618, %v6172
  %v6359 = vmul.f32 %v5716, %v6187
  %v6360 = vmul.f32 %v5620, %v6202
  %v6361 = vmul.f32 %v5718, %v6217
  %v6362 = vmul.f32 %v5623, %v6232
  %v6363 = vmul.f32 %v5721, %v6247
  %v6364 = vmul.f32 %v5625, %v6262
  %v6365 = vmul.f32 %v5723, %v6277
  %v6366 = vmul.f32 %v5628, %v6292
  %v6367 = vmul.f32 %v5726, %v6307
  %v6368 = vmul.f32 %v5630, %v6322
  %v6369 = vmul.f32 %v5728, %v6337
  %v6370 = vpack.c.bf16 %v6340, %v6338
  %v6371 = vpack.c.bf16 %v6341, %v6339
  %v6372 = vpack.c.bf16 %v6344, %v6342
  %v6373 = vpack.c.bf16 %v6345, %v6343
  %v6374 = vpack.c.bf16 %v6348, %v6346
  %v6375 = vpack.c.bf16 %v6349, %v6347
  %v6376 = vpack.c.bf16 %v6352, %v6350
  %v6377 = vpack.c.bf16 %v6353, %v6351
  %v6378 = vpack.c.bf16 %v6356, %v6354
  %v6379 = vpack.c.bf16 %v6357, %v6355
  %v6380 = vpack.c.bf16 %v6360, %v6358
  %v6381 = vpack.c.bf16 %v6361, %v6359
  %v6382 = vpack.c.bf16 %v6364, %v6362
  %v6383 = vpack.c.bf16 %v6365, %v6363
  %v6384 = vpack.c.bf16 %v6368, %v6366
  %v6385 = vpack.c.bf16 %v6369, %v6367
  %s6386 = scalar_lea.vmem %s2, 1792
  %v6387 = vld [vmem:[%s6386] sm:$0xff]
  %v6388 = vld [vmem:[%s6386 + $0x8] sm:$0xff]
  %v6389 = vld [vmem:[%s6386 + $0x10] sm:$0xff]
  %v6390 = vld [vmem:[%s6386 + $0x18] sm:$0xff]
  %v6391 = vld [vmem:[%s6386 + $0x20] sm:$0xff]
  %v6392 = vld [vmem:[%s6386 + $0x28] sm:$0xff]
  %v6393 = vld [vmem:[%s6386 + $0x30] sm:$0xff]
  %v6394 = vld [vmem:[%s6386 + $0x38] sm:$0xff]
  %v6395 = vld [vmem:[%s6386 + $0x40] sm:$0xff]
  %v6396 = vld [vmem:[%s6386 + $0x48] sm:$0xff]
  %v6397 = vld [vmem:[%s6386 + $0x50] sm:$0xff]
  %v6398 = vld [vmem:[%s6386 + $0x58] sm:$0xff]
  %v6399 = vld [vmem:[%s6386 + $0x60] sm:$0xff]
  %v6400 = vld [vmem:[%s6386 + $0x68] sm:$0xff]
  %v6401 = vld [vmem:[%s6386 + $0x70] sm:$0xff]
  %v6402 = vld [vmem:[%s6386 + $0x78] sm:$0xff]
  %v6403 = vld [vmem:[%s6386 + $0x80] sm:$0xff]
  %v6404 = vld [vmem:[%s6386 + $0x88] sm:$0xff]
  %v6405 = vld [vmem:[%s6386 + $0x90] sm:$0xff]
  %v6406 = vld [vmem:[%s6386 + $0x98] sm:$0xff]
  %v6407 = vld [vmem:[%s6386 + $0xa0] sm:$0xff]
  %v6408 = vld [vmem:[%s6386 + $0xa8] sm:$0xff]
  %v6409 = vld [vmem:[%s6386 + $0xb0] sm:$0xff]
  %v6410 = vld [vmem:[%s6386 + $0xb8] sm:$0xff]
  %v6411 = vld [vmem:[%s6386 + $0xc0] sm:$0xff]
  %v6412 = vld [vmem:[%s6386 + $0xc8] sm:$0xff]
  %v6413 = vld [vmem:[%s6386 + $0xd0] sm:$0xff]
  %v6414 = vld [vmem:[%s6386 + $0xd8] sm:$0xff]
  %v6415 = vld [vmem:[%s6386 + $0xe0] sm:$0xff]
  %v6416 = vld [vmem:[%s6386 + $0xe8] sm:$0xff]
  %v6417 = vld [vmem:[%s6386 + $0xf0] sm:$0xff]
  %v6418 = vld [vmem:[%s6386 + $0xf8] sm:$0xff]
  %s6419 = scalar_lea.vmem %s3, 5
  %v6420 = vld [vmem:[%s6419] ss:$8 sm:$0x3]
  %v6422 = vperm.slane %v6420, 0
  %v6423 = vperm.slane %v6420, 1
  %v6458 = vunpack.c.l.b16 %v6387
  %v6459 = vunpack.c.h.b16 %v6387
  %v6460 = vunpack.c.l.b16 %v6388
  %v6461 = vunpack.c.h.b16 %v6388
  %v6462 = vunpack.c.l.b16 %v6389
  %v6463 = vunpack.c.h.b16 %v6389
  %v6464 = vunpack.c.l.b16 %v6390
  %v6465 = vunpack.c.h.b16 %v6390
  %v6466 = vunpack.c.l.b16 %v6391
  %v6467 = vunpack.c.h.b16 %v6391
  %v6468 = vunpack.c.l.b16 %v6392
  %v6469 = vunpack.c.h.b16 %v6392
  %v6470 = vunpack.c.l.b16 %v6393
  %v6471 = vunpack.c.h.b16 %v6393
  %v6472 = vunpack.c.l.b16 %v6394
  %v6473 = vunpack.c.h.b16 %v6394
  %v6474 = vunpack.c.l.b16 %v6395
  %v6475 = vunpack.c.h.b16 %v6395
  %v6476 = vunpack.c.l.b16 %v6396
  %v6477 = vunpack.c.h.b16 %v6396
  %v6478 = vunpack.c.l.b16 %v6397
  %v6479 = vunpack.c.h.b16 %v6397
  %v6480 = vunpack.c.l.b16 %v6398
  %v6481 = vunpack.c.h.b16 %v6398
  %v6482 = vunpack.c.l.b16 %v6399
  %v6483 = vunpack.c.h.b16 %v6399
  %v6484 = vunpack.c.l.b16 %v6400
  %v6485 = vunpack.c.h.b16 %v6400
  %v6486 = vunpack.c.l.b16 %v6401
  %v6487 = vunpack.c.h.b16 %v6401
  %v6488 = vunpack.c.l.b16 %v6402
  %v6489 = vunpack.c.h.b16 %v6402
  %v6490 = vunpack.c.l.b16 %v6403
  %v6491 = vunpack.c.h.b16 %v6403
  %v6492 = vunpack.c.l.b16 %v6404
  %v6493 = vunpack.c.h.b16 %v6404
  %v6494 = vunpack.c.l.b16 %v6405
  %v6495 = vunpack.c.h.b16 %v6405
  %v6496 = vunpack.c.l.b16 %v6406
  %v6497 = vunpack.c.h.b16 %v6406
  %v6498 = vunpack.c.l.b16 %v6407
  %v6499 = vunpack.c.h.b16 %v6407
  %v6500 = vunpack.c.l.b16 %v6408
  %v6501 = vunpack.c.h.b16 %v6408
  %v6502 = vunpack.c.l.b16 %v6409
  %v6503 = vunpack.c.h.b16 %v6409
  %v6504 = vunpack.c.l.b16 %v6410
  %v6505 = vunpack.c.h.b16 %v6410
  %v6506 = vunpack.c.l.b16 %v6411
  %v6507 = vunpack.c.h.b16 %v6411
  %v6508 = vunpack.c.l.b16 %v6412
  %v6509 = vunpack.c.h.b16 %v6412
  %v6510 = vunpack.c.l.b16 %v6413
  %v6511 = vunpack.c.h.b16 %v6413
  %v6512 = vunpack.c.l.b16 %v6414
  %v6513 = vunpack.c.h.b16 %v6414
  %v6514 = vunpack.c.l.b16 %v6415
  %v6515 = vunpack.c.h.b16 %v6415
  %v6516 = vunpack.c.l.b16 %v6416
  %v6517 = vunpack.c.h.b16 %v6416
  %v6518 = vunpack.c.l.b16 %v6417
  %v6519 = vunpack.c.h.b16 %v6417
  %v6520 = vunpack.c.l.b16 %v6418
  %v6521 = vunpack.c.h.b16 %v6418
  %v6522 = vpack.c.b16 %v6460, %v6458
  %v6523 = vpack.c.b16 %v6461, %v6459
  %v6524 = vpack.c.b16 %v6464, %v6462
  %v6525 = vpack.c.b16 %v6465, %v6463
  %v6526 = vpack.c.b16 %v6468, %v6466
  %v6527 = vpack.c.b16 %v6469, %v6467
  %v6528 = vpack.c.b16 %v6472, %v6470
  %v6529 = vpack.c.b16 %v6473, %v6471
  %v6530 = vpack.c.b16 %v6476, %v6474
  %v6531 = vpack.c.b16 %v6477, %v6475
  %v6532 = vpack.c.b16 %v6480, %v6478
  %v6533 = vpack.c.b16 %v6481, %v6479
  %v6534 = vpack.c.b16 %v6484, %v6482
  %v6535 = vpack.c.b16 %v6485, %v6483
  %v6536 = vpack.c.b16 %v6488, %v6486
  %v6537 = vpack.c.b16 %v6489, %v6487
  %v6538 = vpack.c.b16 %v6492, %v6490
  %v6539 = vpack.c.b16 %v6493, %v6491
  %v6540 = vpack.c.b16 %v6496, %v6494
  %v6541 = vpack.c.b16 %v6497, %v6495
  %v6542 = vpack.c.b16 %v6500, %v6498
  %v6543 = vpack.c.b16 %v6501, %v6499
  %v6544 = vpack.c.b16 %v6504, %v6502
  %v6545 = vpack.c.b16 %v6505, %v6503
  %v6546 = vpack.c.b16 %v6508, %v6506
  %v6547 = vpack.c.b16 %v6509, %v6507
  %v6548 = vpack.c.b16 %v6512, %v6510
  %v6549 = vpack.c.b16 %v6513, %v6511
  %v6550 = vpack.c.b16 %v6516, %v6514
  %v6551 = vpack.c.b16 %v6517, %v6515
  %v6552 = vpack.c.b16 %v6520, %v6518
  %v6553 = vpack.c.b16 %v6521, %v6519
  %6586 = vmatpush.bf16.msra.mxu0 %v6536
  %6587 = vmatpush.bf16.msra.mxu0 %v6534
  %6588 = vmatpush.bf16.msra.mxu0 %v6532
  %6589 = vmatpush.bf16.msra.mxu0 %v6530
  %6590 = vmatpush.bf16.msra.mxu0 %v6528
  %6591 = vmatpush.bf16.msra.mxu0 %v6526
  %6592 = vmatpush.bf16.msra.mxu0 %v6524
  %6593 = vmatpush.bf16.msra.mxu0 %v6522
  %6594 = vmatmul.bf16.gmra.mxu0 %v6370
  %v6595 = vpop.f32.mrf.mxu0
  %v6596 = vadd.f32 %v6422, %v6595
  %v6597 = vpop.f32.mrf.mxu0
  %v6598 = vadd.f32 %v6422, %v6597
  %6599 = vmatmul.bf16.gmra.mxu0 %v6372
  %v6600 = vpop.f32.mrf.mxu0
  %v6601 = vadd.f32 %v6422, %v6600
  %v6602 = vpop.f32.mrf.mxu0
  %v6603 = vadd.f32 %v6422, %v6602
  %6604 = vmatmul.bf16.gmra.mxu0 %v6374
  %v6605 = vpop.f32.mrf.mxu0
  %v6606 = vadd.f32 %v6422, %v6605
  %v6607 = vpop.f32.mrf.mxu0
  %v6608 = vadd.f32 %v6422, %v6607
  %6609 = vmatmul.bf16.gmra.mxu0 %v6376
  %v6610 = vpop.f32.mrf.mxu0
  %v6611 = vadd.f32 %v6422, %v6610
  %v6612 = vpop.f32.mrf.mxu0
  %v6613 = vadd.f32 %v6422, %v6612
  %6614 = vmatmul.bf16.gmra.mxu0 %v6378
  %v6615 = vpop.f32.mrf.mxu0
  %v6616 = vadd.f32 %v6422, %v6615
  %v6617 = vpop.f32.mrf.mxu0
  %v6618 = vadd.f32 %v6422, %v6617
  %6619 = vmatmul.bf16.gmra.mxu0 %v6380
  %v6620 = vpop.f32.mrf.mxu0
  %v6621 = vadd.f32 %v6422, %v6620
  %v6622 = vpop.f32.mrf.mxu0
  %v6623 = vadd.f32 %v6422, %v6622
  %6624 = vmatmul.bf16.gmra.mxu0 %v6382
  %v6625 = vpop.f32.mrf.mxu0
  %v6626 = vadd.f32 %v6422, %v6625
  %v6627 = vpop.f32.mrf.mxu0
  %v6628 = vadd.f32 %v6422, %v6627
  %6629 = vmatmul.bf16.gmra.mxu0 %v6384
  %v6630 = vpop.f32.mrf.mxu0
  %v6631 = vadd.f32 %v6422, %v6630
  %v6632 = vpop.f32.mrf.mxu0
  %v6633 = vadd.f32 %v6422, %v6632
  %6634 = vdwg.mxu0
  %6635 = vmatpush.bf16.msra.mxu0 %v6552
  %6636 = vmatpush.bf16.msra.mxu0 %v6550
  %6637 = vmatpush.bf16.msra.mxu0 %v6548
  %6638 = vmatpush.bf16.msra.mxu0 %v6546
  %6639 = vmatpush.bf16.msra.mxu0 %v6544
  %6640 = vmatpush.bf16.msra.mxu0 %v6542
  %6641 = vmatpush.bf16.msra.mxu0 %v6540
  %6642 = vmatpush.bf16.msra.mxu0 %v6538
  %6643 = vmatmul.bf16.gmra.mxu0 %v6371
  %v6644 = vpop.f32.mrf.mxu0
  %v6645 = vadd.f32 %v6596, %v6644
  %v6646 = vpop.f32.mrf.mxu0
  %v6647 = vadd.f32 %v6598, %v6646
  %6648 = vmatmul.bf16.gmra.mxu0 %v6373
  %v6649 = vpop.f32.mrf.mxu0
  %v6650 = vadd.f32 %v6601, %v6649
  %v6651 = vpop.f32.mrf.mxu0
  %v6652 = vadd.f32 %v6603, %v6651
  %6653 = vmatmul.bf16.gmra.mxu0 %v6375
  %v6654 = vpop.f32.mrf.mxu0
  %v6655 = vadd.f32 %v6606, %v6654
  %v6656 = vpop.f32.mrf.mxu0
  %v6657 = vadd.f32 %v6608, %v6656
  %6658 = vmatmul.bf16.gmra.mxu0 %v6377
  %v6659 = vpop.f32.mrf.mxu0
  %v6660 = vadd.f32 %v6611, %v6659
  %v6661 = vpop.f32.mrf.mxu0
  %v6662 = vadd.f32 %v6613, %v6661
  %6663 = vmatmul.bf16.gmra.mxu0 %v6379
  %v6664 = vpop.f32.mrf.mxu0
  %v6665 = vadd.f32 %v6616, %v6664
  %v6666 = vpop.f32.mrf.mxu0
  %v6667 = vadd.f32 %v6618, %v6666
  %6668 = vmatmul.bf16.gmra.mxu0 %v6381
  %v6669 = vpop.f32.mrf.mxu0
  %v6670 = vadd.f32 %v6621, %v6669
  %v6671 = vpop.f32.mrf.mxu0
  %v6672 = vadd.f32 %v6623, %v6671
  %6673 = vmatmul.bf16.gmra.mxu0 %v6383
  %v6674 = vpop.f32.mrf.mxu0
  %v6675 = vadd.f32 %v6626, %v6674
  %v6676 = vpop.f32.mrf.mxu0
  %v6677 = vadd.f32 %v6628, %v6676
  %6678 = vmatmul.bf16.gmra.mxu0 %v6385
  %v6679 = vpop.f32.mrf.mxu0
  %v6680 = vadd.f32 %v6631, %v6679
  %v6681 = vpop.f32.mrf.mxu0
  %v6682 = vadd.f32 %v6633, %v6681
  %6683 = vdwg.mxu0
  %6684 = vmatpush.bf16.msra.mxu0 %v6537
  %6685 = vmatpush.bf16.msra.mxu0 %v6535
  %6686 = vmatpush.bf16.msra.mxu0 %v6533
  %6687 = vmatpush.bf16.msra.mxu0 %v6531
  %6688 = vmatpush.bf16.msra.mxu0 %v6529
  %6689 = vmatpush.bf16.msra.mxu0 %v6527
  %6690 = vmatpush.bf16.msra.mxu0 %v6525
  %6691 = vmatpush.bf16.msra.mxu0 %v6523
  %6692 = vmatmul.bf16.gmra.mxu0 %v6370
  %v6693 = vpop.f32.mrf.mxu0
  %v6694 = vadd.f32 %v6423, %v6693
  %v6695 = vpop.f32.mrf.mxu0
  %v6696 = vadd.f32 %v6423, %v6695
  %6697 = vmatmul.bf16.gmra.mxu0 %v6372
  %v6698 = vpop.f32.mrf.mxu0
  %v6699 = vadd.f32 %v6423, %v6698
  %v6700 = vpop.f32.mrf.mxu0
  %v6701 = vadd.f32 %v6423, %v6700
  %6702 = vmatmul.bf16.gmra.mxu0 %v6374
  %v6703 = vpop.f32.mrf.mxu0
  %v6704 = vadd.f32 %v6423, %v6703
  %v6705 = vpop.f32.mrf.mxu0
  %v6706 = vadd.f32 %v6423, %v6705
  %6707 = vmatmul.bf16.gmra.mxu0 %v6376
  %v6708 = vpop.f32.mrf.mxu0
  %v6709 = vadd.f32 %v6423, %v6708
  %v6710 = vpop.f32.mrf.mxu0
  %v6711 = vadd.f32 %v6423, %v6710
  %6712 = vmatmul.bf16.gmra.mxu0 %v6378
  %v6713 = vpop.f32.mrf.mxu0
  %v6714 = vadd.f32 %v6423, %v6713
  %v6715 = vpop.f32.mrf.mxu0
  %v6716 = vadd.f32 %v6423, %v6715
  %6717 = vmatmul.bf16.gmra.mxu0 %v6380
  %v6718 = vpop.f32.mrf.mxu0
  %v6719 = vadd.f32 %v6423, %v6718
  %v6720 = vpop.f32.mrf.mxu0
  %v6721 = vadd.f32 %v6423, %v6720
  %6722 = vmatmul.bf16.gmra.mxu0 %v6382
  %v6723 = vpop.f32.mrf.mxu0
  %v6724 = vadd.f32 %v6423, %v6723
  %v6725 = vpop.f32.mrf.mxu0
  %v6726 = vadd.f32 %v6423, %v6725
  %6727 = vmatmul.bf16.gmra.mxu0 %v6384
  %v6728 = vpop.f32.mrf.mxu0
  %v6729 = vadd.f32 %v6423, %v6728
  %v6730 = vpop.f32.mrf.mxu0
  %v6731 = vadd.f32 %v6423, %v6730
  %6732 = vdwg.mxu0
  %6733 = vmatpush.bf16.msra.mxu0 %v6553
  %6734 = vmatpush.bf16.msra.mxu0 %v6551
  %6735 = vmatpush.bf16.msra.mxu0 %v6549
  %6736 = vmatpush.bf16.msra.mxu0 %v6547
  %6737 = vmatpush.bf16.msra.mxu0 %v6545
  %6738 = vmatpush.bf16.msra.mxu0 %v6543
  %6739 = vmatpush.bf16.msra.mxu0 %v6541
  %6740 = vmatpush.bf16.msra.mxu0 %v6539
  %6741 = vmatmul.bf16.gmra.mxu0 %v6371
  %v6742 = vpop.f32.mrf.mxu0
  %v6743 = vadd.f32 %v6694, %v6742
  %v6744 = vpop.f32.mrf.mxu0
  %v6745 = vadd.f32 %v6696, %v6744
  %6746 = vmatmul.bf16.gmra.mxu0 %v6373
  %v6747 = vpop.f32.mrf.mxu0
  %v6748 = vadd.f32 %v6699, %v6747
  %v6749 = vpop.f32.mrf.mxu0
  %v6750 = vadd.f32 %v6701, %v6749
  %6751 = vmatmul.bf16.gmra.mxu0 %v6375
  %v6752 = vpop.f32.mrf.mxu0
  %v6753 = vadd.f32 %v6704, %v6752
  %v6754 = vpop.f32.mrf.mxu0
  %v6755 = vadd.f32 %v6706, %v6754
  %6756 = vmatmul.bf16.gmra.mxu0 %v6377
  %v6757 = vpop.f32.mrf.mxu0
  %v6758 = vadd.f32 %v6709, %v6757
  %v6759 = vpop.f32.mrf.mxu0
  %v6760 = vadd.f32 %v6711, %v6759
  %6761 = vmatmul.bf16.gmra.mxu0 %v6379
  %v6762 = vpop.f32.mrf.mxu0
  %v6763 = vadd.f32 %v6714, %v6762
  %v6764 = vpop.f32.mrf.mxu0
  %v6765 = vadd.f32 %v6716, %v6764
  %6766 = vmatmul.bf16.gmra.mxu0 %v6381
  %v6767 = vpop.f32.mrf.mxu0
  %v6768 = vadd.f32 %v6719, %v6767
  %v6769 = vpop.f32.mrf.mxu0
  %v6770 = vadd.f32 %v6721, %v6769
  %6771 = vmatmul.bf16.gmra.mxu0 %v6383
  %v6772 = vpop.f32.mrf.mxu0
  %v6773 = vadd.f32 %v6724, %v6772
  %v6774 = vpop.f32.mrf.mxu0
  %v6775 = vadd.f32 %v6726, %v6774
  %6776 = vmatmul.bf16.gmra.mxu0 %v6385
  %v6777 = vpop.f32.mrf.mxu0
  %v6778 = vadd.f32 %v6729, %v6777
  %v6779 = vpop.f32.mrf.mxu0
  %v6780 = vadd.f32 %v6731, %v6779
  %6781 = vdwg.mxu0
  %v6782 = vadd.f32 %v4225, %v6645
  %v6783 = vadd.f32 %v4226, %v6743
  %v6784 = vadd.f32 %v4227, %v6647
  %v6785 = vadd.f32 %v4228, %v6745
  %v6786 = vadd.f32 %v4229, %v6650
  %v6787 = vadd.f32 %v4230, %v6748
  %v6788 = vadd.f32 %v4231, %v6652
  %v6789 = vadd.f32 %v4232, %v6750
  %v6790 = vadd.f32 %v4233, %v6655
  %v6791 = vadd.f32 %v4234, %v6753
  %v6792 = vadd.f32 %v4235, %v6657
  %v6793 = vadd.f32 %v4236, %v6755
  %v6794 = vadd.f32 %v4237, %v6660
  %v6795 = vadd.f32 %v4238, %v6758
  %v6796 = vadd.f32 %v4239, %v6662
  %v6797 = vadd.f32 %v4240, %v6760
  %v6798 = vadd.f32 %v4241, %v6665
  %v6799 = vadd.f32 %v4242, %v6763
  %v6800 = vadd.f32 %v4243, %v6667
  %v6801 = vadd.f32 %v4244, %v6765
  %v6802 = vadd.f32 %v4245, %v6670
  %v6803 = vadd.f32 %v4246, %v6768
  %v6804 = vadd.f32 %v4247, %v6672
  %v6805 = vadd.f32 %v4248, %v6770
  %v6806 = vadd.f32 %v4249, %v6675
  %v6807 = vadd.f32 %v4250, %v6773
  %v6808 = vadd.f32 %v4251, %v6677
  %v6809 = vadd.f32 %v4252, %v6775
  %v6810 = vadd.f32 %v4253, %v6680
  %v6811 = vadd.f32 %v4254, %v6778
  %v6812 = vadd.f32 %v4255, %v6682
  %v6813 = vadd.f32 %v4256, %v6780
  %v6814 = vpack.c.bf16 %v6784, %v6782
  %v6815 = vpack.c.bf16 %v6785, %v6783
  %v6816 = vpack.c.bf16 %v6788, %v6786
  %v6817 = vpack.c.bf16 %v6789, %v6787
  %v6818 = vpack.c.bf16 %v6792, %v6790
  %v6819 = vpack.c.bf16 %v6793, %v6791
  %v6820 = vpack.c.bf16 %v6796, %v6794
  %v6821 = vpack.c.bf16 %v6797, %v6795
  %v6822 = vpack.c.bf16 %v6800, %v6798
  %v6823 = vpack.c.bf16 %v6801, %v6799
  %v6824 = vpack.c.bf16 %v6804, %v6802
  %v6825 = vpack.c.bf16 %v6805, %v6803
  %v6826 = vpack.c.bf16 %v6808, %v6806
  %v6827 = vpack.c.bf16 %v6809, %v6807
  %v6828 = vpack.c.bf16 %v6812, %v6810
  %v6829 = vpack.c.bf16 %v6813, %v6811
  %s6830 = scalar_lea.vmem %s2, 2048
  %v6831 = vld [vmem:[%s6830] sm:$0xff]
  %v6832 = vld [vmem:[%s6830 + $0x8] sm:$0xff]
  %v6833 = vld [vmem:[%s6830 + $0x10] sm:$0xff]
  %v6834 = vld [vmem:[%s6830 + $0x18] sm:$0xff]
  %v6835 = vld [vmem:[%s6830 + $0x20] sm:$0xff]
  %v6836 = vld [vmem:[%s6830 + $0x28] sm:$0xff]
  %v6837 = vld [vmem:[%s6830 + $0x30] sm:$0xff]
  %v6838 = vld [vmem:[%s6830 + $0x38] sm:$0xff]
  %v6839 = vld [vmem:[%s6830 + $0x40] sm:$0xff]
  %v6840 = vld [vmem:[%s6830 + $0x48] sm:$0xff]
  %v6841 = vld [vmem:[%s6830 + $0x50] sm:$0xff]
  %v6842 = vld [vmem:[%s6830 + $0x58] sm:$0xff]
  %v6843 = vld [vmem:[%s6830 + $0x60] sm:$0xff]
  %v6844 = vld [vmem:[%s6830 + $0x68] sm:$0xff]
  %v6845 = vld [vmem:[%s6830 + $0x70] sm:$0xff]
  %v6846 = vld [vmem:[%s6830 + $0x78] sm:$0xff]
  %v6847 = vld [vmem:[%s6830 + $0x80] sm:$0xff]
  %v6848 = vld [vmem:[%s6830 + $0x88] sm:$0xff]
  %v6849 = vld [vmem:[%s6830 + $0x90] sm:$0xff]
  %v6850 = vld [vmem:[%s6830 + $0x98] sm:$0xff]
  %v6851 = vld [vmem:[%s6830 + $0xa0] sm:$0xff]
  %v6852 = vld [vmem:[%s6830 + $0xa8] sm:$0xff]
  %v6853 = vld [vmem:[%s6830 + $0xb0] sm:$0xff]
  %v6854 = vld [vmem:[%s6830 + $0xb8] sm:$0xff]
  %v6855 = vld [vmem:[%s6830 + $0xc0] sm:$0xff]
  %v6856 = vld [vmem:[%s6830 + $0xc8] sm:$0xff]
  %v6857 = vld [vmem:[%s6830 + $0xd0] sm:$0xff]
  %v6858 = vld [vmem:[%s6830 + $0xd8] sm:$0xff]
  %v6859 = vld [vmem:[%s6830 + $0xe0] sm:$0xff]
  %v6860 = vld [vmem:[%s6830 + $0xe8] sm:$0xff]
  %v6861 = vld [vmem:[%s6830 + $0xf0] sm:$0xff]
  %v6862 = vld [vmem:[%s6830 + $0xf8] sm:$0xff]
  %v6895 = vunpack.c.l.b16 %v6831
  %v6896 = vunpack.c.l.b16 %v6832
  %v6897 = vunpack.c.l.b16 %v6833
  %v6898 = vunpack.c.l.b16 %v6834
  %v6899 = vunpack.c.l.b16 %v6835
  %v6900 = vunpack.c.l.b16 %v6836
  %v6901 = vunpack.c.l.b16 %v6837
  %v6902 = vunpack.c.l.b16 %v6838
  %v6903 = vunpack.c.l.b16 %v6839
  %v6904 = vunpack.c.l.b16 %v6840
  %v6905 = vunpack.c.l.b16 %v6841
  %v6906 = vunpack.c.l.b16 %v6842
  %v6907 = vunpack.c.l.b16 %v6843
  %v6908 = vunpack.c.l.b16 %v6844
  %v6909 = vunpack.c.l.b16 %v6845
  %v6910 = vunpack.c.l.b16 %v6846
  %v6911 = vunpack.c.l.b16 %v6847
  %v6912 = vunpack.c.l.b16 %v6848
  %v6913 = vunpack.c.l.b16 %v6849
  %v6914 = vunpack.c.l.b16 %v6850
  %v6915 = vunpack.c.l.b16 %v6851
  %v6916 = vunpack.c.l.b16 %v6852
  %v6917 = vunpack.c.l.b16 %v6853
  %v6918 = vunpack.c.l.b16 %v6854
  %v6919 = vunpack.c.l.b16 %v6855
  %v6920 = vunpack.c.l.b16 %v6856
  %v6921 = vunpack.c.l.b16 %v6857
  %v6922 = vunpack.c.l.b16 %v6858
  %v6923 = vunpack.c.l.b16 %v6859
  %v6924 = vunpack.c.l.b16 %v6860
  %v6925 = vunpack.c.l.b16 %v6861
  %v6926 = vunpack.c.l.b16 %v6862
  %v6927 = vpack.c.b16 %v6896, %v6895
  %v6928 = vpack.c.b16 %v6898, %v6897
  %v6929 = vpack.c.b16 %v6900, %v6899
  %v6930 = vpack.c.b16 %v6902, %v6901
  %v6931 = vpack.c.b16 %v6904, %v6903
  %v6932 = vpack.c.b16 %v6906, %v6905
  %v6933 = vpack.c.b16 %v6908, %v6907
  %v6934 = vpack.c.b16 %v6910, %v6909
  %v6935 = vpack.c.b16 %v6912, %v6911
  %v6936 = vpack.c.b16 %v6914, %v6913
  %v6937 = vpack.c.b16 %v6916, %v6915
  %v6938 = vpack.c.b16 %v6918, %v6917
  %v6939 = vpack.c.b16 %v6920, %v6919
  %v6940 = vpack.c.b16 %v6922, %v6921
  %v6941 = vpack.c.b16 %v6924, %v6923
  %v6942 = vpack.c.b16 %v6926, %v6925
  %6959 = vmatpush.bf16.msra.mxu0 %v6934
  %6960 = vmatpush.bf16.msra.mxu0 %v6933
  %6961 = vmatpush.bf16.msra.mxu0 %v6932
  %6962 = vmatpush.bf16.msra.mxu0 %v6931
  %6963 = vmatpush.bf16.msra.mxu0 %v6930
  %6964 = vmatpush.bf16.msra.mxu0 %v6929
  %6965 = vmatpush.bf16.msra.mxu0 %v6928
  %6966 = vmatpush.bf16.msra.mxu0 %v6927
  %6967 = vmatmul.bf16.gmra.mxu0 %v6814
  %v6968 = vpop.f32.mrf.mxu0
  %v6969 = vadd.f32 0.0, %v6968
  %v6970 = vpop.f32.mrf.mxu0
  %v6971 = vadd.f32 0.0, %v6970
  %6972 = vmatmul.bf16.gmra.mxu0 %v6816
  %v6973 = vpop.f32.mrf.mxu0
  %v6974 = vadd.f32 0.0, %v6973
  %v6975 = vpop.f32.mrf.mxu0
  %v6976 = vadd.f32 0.0, %v6975
  %6977 = vmatmul.bf16.gmra.mxu0 %v6818
  %v6978 = vpop.f32.mrf.mxu0
  %v6979 = vadd.f32 0.0, %v6978
  %v6980 = vpop.f32.mrf.mxu0
  %v6981 = vadd.f32 0.0, %v6980
  %6982 = vmatmul.bf16.gmra.mxu0 %v6820
  %v6983 = vpop.f32.mrf.mxu0
  %v6984 = vadd.f32 0.0, %v6983
  %v6985 = vpop.f32.mrf.mxu0
  %v6986 = vadd.f32 0.0, %v6985
  %6987 = vmatmul.bf16.gmra.mxu0 %v6822
  %v6988 = vpop.f32.mrf.mxu0
  %v6989 = vadd.f32 0.0, %v6988
  %v6990 = vpop.f32.mrf.mxu0
  %v6991 = vadd.f32 0.0, %v6990
  %6992 = vmatmul.bf16.gmra.mxu0 %v6824
  %v6993 = vpop.f32.mrf.mxu0
  %v6994 = vadd.f32 0.0, %v6993
  %v6995 = vpop.f32.mrf.mxu0
  %v6996 = vadd.f32 0.0, %v6995
  %6997 = vmatmul.bf16.gmra.mxu0 %v6826
  %v6998 = vpop.f32.mrf.mxu0
  %v6999 = vadd.f32 0.0, %v6998
  %v7000 = vpop.f32.mrf.mxu0
  %v7001 = vadd.f32 0.0, %v7000
  %7002 = vmatmul.bf16.gmra.mxu0 %v6828
  %v7003 = vpop.f32.mrf.mxu0
  %v7004 = vadd.f32 0.0, %v7003
  %v7005 = vpop.f32.mrf.mxu0
  %v7006 = vadd.f32 0.0, %v7005
  %7007 = vdwg.mxu0
  %7008 = vmatpush.bf16.msra.mxu0 %v6942
  %7009 = vmatpush.bf16.msra.mxu0 %v6941
  %7010 = vmatpush.bf16.msra.mxu0 %v6940
  %7011 = vmatpush.bf16.msra.mxu0 %v6939
  %7012 = vmatpush.bf16.msra.mxu0 %v6938
  %7013 = vmatpush.bf16.msra.mxu0 %v6937
  %7014 = vmatpush.bf16.msra.mxu0 %v6936
  %7015 = vmatpush.bf16.msra.mxu0 %v6935
  %7016 = vmatmul.bf16.gmra.mxu0 %v6815
  %v7017 = vpop.f32.mrf.mxu0
  %v7018 = vadd.f32 %v6969, %v7017
  %v7019 = vpop.f32.mrf.mxu0
  %v7020 = vadd.f32 %v6971, %v7019
  %7021 = vmatmul.bf16.gmra.mxu0 %v6817
  %v7022 = vpop.f32.mrf.mxu0
  %v7023 = vadd.f32 %v6974, %v7022
  %v7024 = vpop.f32.mrf.mxu0
  %v7025 = vadd.f32 %v6976, %v7024
  %7026 = vmatmul.bf16.gmra.mxu0 %v6819
  %v7027 = vpop.f32.mrf.mxu0
  %v7028 = vadd.f32 %v6979, %v7027
  %v7029 = vpop.f32.mrf.mxu0
  %v7030 = vadd.f32 %v6981, %v7029
  %7031 = vmatmul.bf16.gmra.mxu0 %v6821
  %v7032 = vpop.f32.mrf.mxu0
  %v7033 = vadd.f32 %v6984, %v7032
  %v7034 = vpop.f32.mrf.mxu0
  %v7035 = vadd.f32 %v6986, %v7034
  %7036 = vmatmul.bf16.gmra.mxu0 %v6823
  %v7037 = vpop.f32.mrf.mxu0
  %v7038 = vadd.f32 %v6989, %v7037
  %v7039 = vpop.f32.mrf.mxu0
  %v7040 = vadd.f32 %v6991, %v7039
  %7041 = vmatmul.bf16.gmra.mxu0 %v6825
  %v7042 = vpop.f32.mrf.mxu0
  %v7043 = vadd.f32 %v6994, %v7042
  %v7044 = vpop.f32.mrf.mxu0
  %v7045 = vadd.f32 %v6996, %v7044
  %7046 = vmatmul.bf16.gmra.mxu0 %v6827
  %v7047 = vpop.f32.mrf.mxu0
  %v7048 = vadd.f32 %v6999, %v7047
  %v7049 = vpop.f32.mrf.mxu0
  %v7050 = vadd.f32 %v7001, %v7049
  %7051 = vmatmul.bf16.gmra.mxu0 %v6829
  %v7052 = vpop.f32.mrf.mxu0
  %v7053 = vadd.f32 %v7004, %v7052
  %v7054 = vpop.f32.mrf.mxu0
  %v7055 = vadd.f32 %v7006, %v7054
  %7056 = vdwg.mxu0
  %v7057 = vld [vmem:[%s3 + $0x6] ss:$0 sm:$0xff]
  %v7058 = vadd.f32 %v7018, %v7057
  %v7059 = vadd.f32 %v7020, %v7057
  %v7060 = vadd.f32 %v7023, %v7057
  %v7061 = vadd.f32 %v7025, %v7057
  %v7062 = vadd.f32 %v7028, %v7057
  %v7063 = vadd.f32 %v7030, %v7057
  %v7064 = vadd.f32 %v7033, %v7057
  %v7065 = vadd.f32 %v7035, %v7057
  %v7066 = vadd.f32 %v7038, %v7057
  %v7067 = vadd.f32 %v7040, %v7057
  %v7068 = vadd.f32 %v7043, %v7057
  %v7069 = vadd.f32 %v7045, %v7057
  %v7070 = vadd.f32 %v7048, %v7057
  %v7071 = vadd.f32 %v7050, %v7057
  %v7072 = vadd.f32 %v7053, %v7057
  %v7073 = vadd.f32 %v7055, %v7057
  %v7074 = vlaneseq
  %v7075 = vshrl.u32 %v7074, 7
  %v7076 = vadd.s32 %v7075, 8
  %v7077 = vadd.s32 %v7075, 16
  %v7078 = vadd.s32 %v7075, 24
  %v7079 = vadd.s32 %v7075, 32
  %v7080 = vadd.s32 %v7075, 40
  %v7081 = vadd.s32 %v7075, 48
  %v7082 = vadd.s32 %v7075, 56
  %v7083 = vadd.s32 %v7075, 64
  %v7084 = vadd.s32 %v7075, 72
  %v7085 = vadd.s32 %v7075, 80
  %v7086 = vadd.s32 %v7075, 88
  %v7087 = vadd.s32 %v7075, 96
  %v7088 = vadd.s32 %v7075, 104
  %v7089 = vadd.s32 %v7075, 112
  %v7090 = vadd.s32 %v7075, 120
  %s7091 = smul.u32 0, 128
  %v7092 = vstv %s7091
  %v7093 = vadd.s32 %v7075, %v7092
  %v7094 = vadd.s32 %v7076, %v7092
  %v7095 = vadd.s32 %v7077, %v7092
  %v7096 = vadd.s32 %v7078, %v7092
  %v7097 = vadd.s32 %v7079, %v7092
  %v7098 = vadd.s32 %v7080, %v7092
  %v7099 = vadd.s32 %v7081, %v7092
  %v7100 = vadd.s32 %v7082, %v7092
  %v7101 = vadd.s32 %v7083, %v7092
  %v7102 = vadd.s32 %v7084, %v7092
  %v7103 = vadd.s32 %v7085, %v7092
  %v7104 = vadd.s32 %v7086, %v7092
  %v7105 = vadd.s32 %v7087, %v7092
  %v7106 = vadd.s32 %v7088, %v7092
  %v7107 = vadd.s32 %v7089, %v7092
  %v7108 = vadd.s32 %v7090, %v7092
  %vm7109 = vcmp.lt.s32.totalorder %v7093, 128
  %vm7110 = vcmp.lt.s32.totalorder %v7094, 128
  %vm7111 = vcmp.lt.s32.totalorder %v7095, 128
  %vm7112 = vcmp.lt.s32.totalorder %v7096, 128
  %vm7113 = vcmp.lt.s32.totalorder %v7097, 128
  %vm7114 = vcmp.lt.s32.totalorder %v7098, 128
  %vm7115 = vcmp.lt.s32.totalorder %v7099, 128
  %vm7116 = vcmp.lt.s32.totalorder %v7100, 128
  %vm7117 = vcmp.lt.s32.totalorder %v7101, 128
  %vm7118 = vcmp.lt.s32.totalorder %v7102, 128
  %vm7119 = vcmp.lt.s32.totalorder %v7103, 128
  %vm7120 = vcmp.lt.s32.totalorder %v7104, 128
  %vm7121 = vcmp.lt.s32.totalorder %v7105, 128
  %vm7122 = vcmp.lt.s32.totalorder %v7106, 128
  %vm7123 = vcmp.lt.s32.totalorder %v7107, 128
  %vm7124 = vcmp.lt.s32.totalorder %v7108, 128
  %v7125 = vsub.f32 %v7058, %v568
  %v7126 = vsub.f32 %v7059, %v569
  %v7127 = vsub.f32 %v7060, %v570
  %v7128 = vsub.f32 %v7061, %v571
  %v7129 = vsub.f32 %v7062, %v572
  %v7130 = vsub.f32 %v7063, %v573
  %v7131 = vsub.f32 %v7064, %v574
  %v7132 = vsub.f32 %v7065, %v575
  %v7133 = vsub.f32 %v7066, %v576
  %v7134 = vsub.f32 %v7067, %v577
  %v7135 = vsub.f32 %v7068, %v578
  %v7136 = vsub.f32 %v7069, %v579
  %v7137 = vsub.f32 %v7070, %v580
  %v7138 = vsub.f32 %v7071, %v581
  %v7139 = vsub.f32 %v7072, %v582
  %v7140 = vsub.f32 %v7073, %v583
  %v7141 = vsel %vm7109, %v7125, 0.0
  %v7142 = vsel %vm7110, %v7126, 0.0
  %v7143 = vsel %vm7111, %v7127, 0.0
  %v7144 = vsel %vm7112, %v7128, 0.0
  %v7145 = vsel %vm7113, %v7129, 0.0
  %v7146 = vsel %vm7114, %v7130, 0.0
  %v7147 = vsel %vm7115, %v7131, 0.0
  %v7148 = vsel %vm7116, %v7132, 0.0
  %v7149 = vsel %vm7117, %v7133, 0.0
  %v7150 = vsel %vm7118, %v7134, 0.0
  %v7151 = vsel %vm7119, %v7135, 0.0
  %v7152 = vsel %vm7120, %v7136, 0.0
  %v7153 = vsel %vm7121, %v7137, 0.0
  %v7154 = vsel %vm7122, %v7138, 0.0
  %v7155 = vsel %vm7123, %v7139, 0.0
  %v7156 = vsel %vm7124, %v7140, 0.0
  %v7157 = vmul.f32 %v7141, %v7141
  %v7158 = vmul.f32 %v7142, %v7142
  %v7159 = vmul.f32 %v7143, %v7143
  %v7160 = vmul.f32 %v7144, %v7144
  %v7161 = vmul.f32 %v7145, %v7145
  %v7162 = vmul.f32 %v7146, %v7146
  %v7163 = vmul.f32 %v7147, %v7147
  %v7164 = vmul.f32 %v7148, %v7148
  %v7165 = vmul.f32 %v7149, %v7149
  %v7166 = vmul.f32 %v7150, %v7150
  %v7167 = vmul.f32 %v7151, %v7151
  %v7168 = vmul.f32 %v7152, %v7152
  %v7169 = vmul.f32 %v7153, %v7153
  %v7170 = vmul.f32 %v7154, %v7154
  %v7171 = vmul.f32 %v7155, %v7155
  %v7172 = vmul.f32 %v7156, %v7156
  %v7173 = vadd.f32 %v7157, %v7158
  %v7174 = vadd.f32 %v7173, %v7159
  %v7175 = vadd.f32 %v7174, %v7160
  %v7176 = vadd.f32 %v7175, %v7161
  %v7177 = vadd.f32 %v7176, %v7162
  %v7178 = vadd.f32 %v7177, %v7163
  %v7179 = vadd.f32 %v7178, %v7164
  %v7180 = vadd.f32 %v7179, %v7165
  %v7181 = vadd.f32 %v7180, %v7166
  %v7182 = vadd.f32 %v7181, %v7167
  %v7183 = vadd.f32 %v7182, %v7168
  %v7184 = vadd.f32 %v7183, %v7169
  %v7185 = vadd.f32 %v7184, %v7170
  %v7186 = vadd.f32 %v7185, %v7171
  %v7187 = vadd.f32 %v7186, %v7172
  %v7188 = vrot.slane %v7187, 4
  %v7189 = vadd.f32 %v7187, %v7188
  %v7190 = vrot.slane %v7189, 2
  %v7191 = vadd.f32 %v7189, %v7190
  %v7192 = vrot.slane %v7191, 1
  %v7193 = vadd.f32 %v7191, %v7192
  %7194 = vst [vmem:[%s4] sm:$0xff] %v7193
  // Predicated region
  $region18: #{task_model_forward.1} parent=0 // pred_check
    _
  $region19: #{task_model_forward.1} parent=0 // pred_check_branch
    %7196 = sbr.rel (0) target = $region21
  $region20: #{task_model_forward.1} parent=0 // pred_region
    _
  $region21: #{task_model_forward.1} parent=0 // pred_fallthru
    _
  // Predicated region
  $region22: #{task_model_forward.1} parent=0 // pred_check
    _
  $region23: #{task_model_forward.1} parent=0 // pred_check_branch
    %7198 = sbr.rel (0) target = $region25
  $region24: #{task_model_forward.1} parent=0 // pred_region
    _
  $region25: #{task_model_forward.1} parent=0 // pred_fallthru
    _

</llo_original>
